<compile_context>
chip_gen: v5e
topology: v5e:2x2
jax: 0.10.0
libtpu: 0.0.40
codegen_flags: <defaults>
</compile_context>

<pallas_src>
from functools import partial

import jax
import jax.numpy as jnp
from jax.experimental import pallas as pl
from jax.experimental.pallas import tpu as pltpu

INPUT_SIZE = 3 * 64 * 64      # 12288
HIDDEN = 250
OUT = 6

# padded (lane-aligned) sizes
HIDDEN_P = 256                # 250 -> 256 (multiple of 128)
OUT_P = 128                   # 6   -> 128


def mlp_kernel(x_ref, w1_ref, s1_ref, b1_ref, w2_ref, b2_ref, out_ref, h_acc):
    """Fused MLP forward.

    Grid: (M blocks ["parallel"], K chunks ["arbitrary"]).  The K axis walks the
    fc1 reduction dimension; partial int8 W1 chunks are cast to bf16 (exact) and
    accumulated into an f32 VMEM scratch.  On the last K step we apply the
    per-channel dequant scale, bias + ReLU, and the tiny bf16 fc2 matmul + bias.
    """
    k = pl.program_id(1)

    @pl.when(k == 0)
    def _():
        h_acc[...] = jnp.zeros_like(h_acc)

    # int8 -> bf16 is exact for values in [-127, 127]; scale applied post-matmul.
    w1_bf = w1_ref[...].astype(jnp.bfloat16)
    h_acc[...] += jnp.dot(x_ref[...], w1_bf,
                          preferred_element_type=jnp.float32)

    @pl.when(k == pl.num_programs(1) - 1)
    def _():
        h = jnp.maximum(h_acc[...] * s1_ref[...] + b1_ref[...], 0.0)   # dequant + bias + ReLU
        o = jnp.dot(h.astype(jnp.bfloat16), w2_ref[...],
                    preferred_element_type=jnp.float32)
        out_ref[...] = (o + b2_ref[...]).astype(out_ref.dtype)


def prepare_params(w1, b1, w2, b2):
    """One-time weight preparation (persistent arrays).

    W1: symmetric per-output-channel int8 quantization, transposed to (in, out),
        zero-padded to HIDDEN_P lanes.  Scales kept as an (1, HIDDEN_P) f32 row.
    W2: transposed, zero-padded, cast to bf16.  Biases zero-padded f32 rows.
    Padded hidden/output lanes are inert (zero weights / zero bias)."""
    max_abs = jnp.max(jnp.abs(w1), axis=1)                               # (HIDDEN,)
    scale = jnp.where(max_abs > 0, max_abs / 127.0, 1.0)                 # (HIDDEN,)
    w1_q = jnp.clip(jnp.round(w1 / scale[:, None]), -127, 127).astype(jnp.int8)

    w1_t = (jnp.zeros((INPUT_SIZE, HIDDEN_P), jnp.int8)
            .at[:, :HIDDEN].set(w1_q.T))
    s1_p = jnp.ones((1, HIDDEN_P), jnp.float32).at[0, :HIDDEN].set(scale)
    b1_p = jnp.zeros((1, HIDDEN_P), jnp.float32).at[0, :HIDDEN].set(b1)
    w2_t = (jnp.zeros((HIDDEN_P, OUT_P), jnp.bfloat16)
            .at[:HIDDEN, :OUT].set(w2.T.astype(jnp.bfloat16)))
    b2_p = jnp.zeros((1, OUT_P), jnp.float32).at[0, :OUT].set(b2)
    return w1_t, s1_p, b1_p, w2_t, b2_p


@partial(jax.jit, static_argnames=("tk", "bm"))
def mlp_forward(x_nchw, w1_t, s1_p, b1_p, w2_t, b2_p, tk=6144, bm=128):
    """x_nchw: (B, 3, 64, 64) f32.  Other args from prepare_params()."""
    B = x_nchw.shape[0]
    x = x_nchw.reshape(B, -1).astype(jnp.bfloat16)                # == x.view(B, -1)
    assert x.shape[1] == INPUT_SIZE and INPUT_SIZE % tk == 0

    # pad batch to a multiple of 16 (packed bf16 sublane tile); make the M grid
    # axis divide evenly; skip the materialized pad copy when already aligned.
    Bp = max(16, ((B + 15) // 16) * 16)
    bm_eff = min(bm, Bp)
    Bp = ((Bp + bm_eff - 1) // bm_eff) * bm_eff
    if Bp == B:
        x_p = x
    else:
        x_p = jnp.zeros((Bp, INPUT_SIZE), jnp.bfloat16).at[:B, :].set(x)

    grid = (Bp // bm_eff, INPUT_SIZE // tk)                       # (M, K) -> (1, 2) here

    out_p = pl.pallas_call(
        mlp_kernel,
        out_shape=jax.ShapeDtypeStruct((Bp, OUT_P), jnp.float32),
        grid_spec=pltpu.PrefetchScalarGridSpec(
            num_scalar_prefetch=0,
            grid=grid,
            in_specs=[
                pl.BlockSpec((bm_eff, tk), lambda m, k: (m, k)),       # x chunk   (bf16)
                pl.BlockSpec((tk, HIDDEN_P), lambda m, k: (k, 0)),     # W1 chunk  (int8)
                pl.BlockSpec((1, HIDDEN_P), lambda m, k: (0, 0)),      # W1 scales (f32)
                pl.BlockSpec((1, HIDDEN_P), lambda m, k: (0, 0)),      # b1        (f32)
                pl.BlockSpec((HIDDEN_P, OUT_P), lambda m, k: (0, 0)),  # W2        (bf16)
                pl.BlockSpec((1, OUT_P), lambda m, k: (0, 0)),         # b2        (f32)
            ],
            out_specs=pl.BlockSpec((bm_eff, OUT_P), lambda m, k: (m, 0)),
            scratch_shapes=[pltpu.VMEM((bm_eff, HIDDEN_P), jnp.float32)],
        ),
        compiler_params=pltpu.CompilerParams(
            dimension_semantics=("parallel", "arbitrary")),       # M parallel, K reduction
    )(x_p, w1_t, s1_p, b1_p, w2_t, b2_p)

    return out_p[:B, :OUT]                                        # (B, 6)


def _init_params(key):
    """Deterministic init mimicking PyTorch nn.Linear (uniform +-1/sqrt(fan_in))."""
    k1, k2, k3, k4 = jax.random.split(key, 4)
    bound1 = 1.0 / jnp.sqrt(INPUT_SIZE)
    bound2 = 1.0 / jnp.sqrt(HIDDEN)
    w1 = jax.random.uniform(k1, (HIDDEN, INPUT_SIZE), jnp.float32, -bound1, bound1)
    b1 = jax.random.uniform(k2, (HIDDEN,), jnp.float32, -bound1, bound1)
    w2 = jax.random.uniform(k3, (OUT, HIDDEN), jnp.float32, -bound2, bound2)
    b2 = jax.random.uniform(k4, (OUT,), jnp.float32, -bound2, bound2)
    return w1, b1, w2, b2


if __name__ == "__main__":
    key = jax.random.PRNGKey(0)
    kx, kp = jax.random.split(key)
    B = 2
    x = jax.random.normal(kx, (B, 3, 64, 64), jnp.float32)        # NCHW, like PyTorch
    w1, b1, w2, b2 = _init_params(kp)

    # one-time weight preparation (int8 W1 + scales, bf16 W2) -- persistent arrays
    w1_t, s1_p, b1_p, w2_t, b2_p = prepare_params(w1, b1, w2, b2)

    out = mlp_forward(x, w1_t, s1_p, b1_p, w2_t, b2_p)
    out = jax.block_until_ready(out)

    # Reference 1: same quantization / rounding scheme as the kernel (tight tol).
    xf = x.reshape(B, -1)
    x_bf = xf.astype(jnp.bfloat16)
    max_abs = jnp.max(jnp.abs(w1), axis=1)
    scale = jnp.where(max_abs > 0, max_abs / 127.0, 1.0)
    w1_q = jnp.clip(jnp.round(w1 / scale[:, None]), -127, 127).astype(jnp.int8)
    h_q = jnp.dot(x_bf, w1_q.T.astype(jnp.bfloat16),
                  preferred_element_type=jnp.float32) * scale[None, :] + b1
    h_q = jnp.maximum(h_q, 0.0)
    ref_q = jnp.dot(h_q.astype(jnp.bfloat16), w2.T.astype(jnp.bfloat16),
                    preferred_element_type=jnp.float32) + b2

    # Reference 2: original f32 PyTorch-equivalent model (bounds total quant error).
    h_f = jnp.maximum(xf @ w1.T + b1, 0.0)
    ref_f = h_f @ w2.T + b2

    assert out.shape == (B, OUT)
    assert jnp.allclose(out, ref_q, atol=2e-3, rtol=2e-3), "mismatch vs quantized reference"
    assert jnp.allclose(out, ref_f, atol=5e-2, rtol=5e-2), "quantization error too large vs f32 model"

    print("KERNEL_OK")
</pallas_src>

<mosaic_0001>
module attributes {stable_mosaic.version = 11 : i64} {
  func.func @mlp_kernel(%arg0: i32, %arg1: i32, %arg2: memref<16x6144xbf16, #tpu.memory_space<vmem>>, %arg3: memref<6144x256xi8, #tpu.memory_space<vmem>>, %arg4: memref<1x256xf32, #tpu.memory_space<vmem>>, %arg5: memref<1x256xf32, #tpu.memory_space<vmem>>, %arg6: memref<256x128xbf16, #tpu.memory_space<vmem>>, %arg7: memref<1x128xf32, #tpu.memory_space<vmem>>, %arg8: memref<16x128xf32, #tpu.memory_space<vmem>>, %arg9: memref<16x256xf32, #tpu.memory_space<vmem>>) attributes {dimension_semantics = [#tpu.dimension_semantics<parallel>, #tpu.dimension_semantics<arbitrary>], iteration_bounds = array<i64: 1, 2>, scalar_prefetch = 0 : i64, scratch_operands = 1 : i64, tpu.core_type = #tpu.core_type<tc>, window_params = [{transform_indices = @transform_0, window_bounds = array<i64: 16, 6144>}, {transform_indices = @transform_1, window_bounds = array<i64: 6144, 256>}, {pipeline_mode = #tpu.pipeline_mode<synchronous>, transform_indices = @transform_2, window_bounds = array<i64: 1, 256>}, {pipeline_mode = #tpu.pipeline_mode<synchronous>, transform_indices = @transform_3, window_bounds = array<i64: 1, 256>}, {pipeline_mode = #tpu.pipeline_mode<synchronous>, transform_indices = @transform_4, window_bounds = array<i64: 256, 128>}, {pipeline_mode = #tpu.pipeline_mode<synchronous>, transform_indices = @transform_5, window_bounds = array<i64: 1, 128>}, {transform_indices = @transform_6, window_bounds = array<i64: 16, 128>}]} {
    %c0_i32 = arith.constant 0 : i32
    %0 = arith.cmpi eq, %arg1, %c0_i32 : i32
    %1 = arith.extui %0 : i1 to i32
    %c0_i32_0 = arith.constant 0 : i32
    %2 = arith.cmpi ne, %1, %c0_i32_0 : i32
    scf.if %2 {
      %cst_9 = arith.constant 0.000000e+00 : f32
      %13 = vector.broadcast %cst_9 : f32 to vector<16x256xf32>
      %c0_10 = arith.constant 0 : index
      %c0_11 = arith.constant 0 : index
      %14 = vector.load %arg9[%c0_10, %c0_11] : memref<16x256xf32, #tpu.memory_space<vmem>>, vector<16x256xf32>
      tpu.vector_store %arg9[%c0_10, %c0_11], %13 {strides = array<i32>} : memref<16x256xf32, #tpu.memory_space<vmem>>, vector<16x256xf32>,
    } else {
    }
    %c0 = arith.constant 0 : index
    %c0_1 = arith.constant 0 : index
    %3 = vector.load %arg3[%c0, %c0_1] : memref<6144x256xi8, #tpu.memory_space<vmem>>, vector<6144x256xi8>
    %4 = arith.sitofp %3 : vector<6144x256xi8> to vector<6144x256xbf16>
    %c0_2 = arith.constant 0 : index
    %c0_3 = arith.constant 0 : index
    %5 = vector.load %arg9[%c0_2, %c0_3] : memref<16x256xf32, #tpu.memory_space<vmem>>, vector<16x256xf32>
    %c0_4 = arith.constant 0 : index
    %c0_5 = arith.constant 0 : index
    %6 = vector.load %arg2[%c0_4, %c0_5] : memref<16x6144xbf16, #tpu.memory_space<vmem>>, vector<16x6144xbf16>
    %cst = arith.constant dense<0.000000e+00> : vector<16x256xf32>
    %7 = tpu.matmul %6, %4, %cst {dimension_numbers = #tpu.dot_dimension_numbers<[1], [0], [0], [1], [0, 0, 1, 1], [], []>} : vector<16x6144xbf16>, vector<6144x256xbf16>, vector<16x256xf32> -> vector<16x256xf32>
    %8 = arith.addf %5, %7 : vector<16x256xf32>
    %c0_6 = arith.constant 0 : index
    %c0_7 = arith.constant 0 : index
    %9 = vector.load %arg9[%c0_6, %c0_7] : memref<16x256xf32, #tpu.memory_space<vmem>>, vector<16x256xf32>
    tpu.vector_store %arg9[%c0_6, %c0_7], %8 {strides = array<i32>} : memref<16x256xf32, #tpu.memory_space<vmem>>, vector<16x256xf32>,
    %c1_i32 = arith.constant 1 : i32
    %10 = arith.cmpi eq, %arg1, %c1_i32 : i32
    %11 = arith.extui %10 : i1 to i32
    %c0_i32_8 = arith.constant 0 : i32
    %12 = arith.cmpi ne, %11, %c0_i32_8 : i32
    scf.if %12 {
      %c0_9 = arith.constant 0 : index
      %c0_10 = arith.constant 0 : index
      %13 = vector.load %arg9[%c0_9, %c0_10] : memref<16x256xf32, #tpu.memory_space<vmem>>, vector<16x256xf32>
      %c0_11 = arith.constant 0 : index
      %c0_12 = arith.constant 0 : index
      %14 = vector.load %arg4[%c0_11, %c0_12] : memref<1x256xf32, #tpu.memory_space<vmem>>, vector<1x256xf32>
      %15 = vector.broadcast %14 : vector<1x256xf32> to vector<16x256xf32>
      %16 = arith.mulf %13, %15 : vector<16x256xf32>
      %c0_13 = arith.constant 0 : index
      %c0_14 = arith.constant 0 : index
      %17 = vector.load %arg5[%c0_13, %c0_14] : memref<1x256xf32, #tpu.memory_space<vmem>>, vector<1x256xf32>
      %18 = vector.broadcast %17 : vector<1x256xf32> to vector<16x256xf32>
      %19 = arith.addf %16, %18 : vector<16x256xf32>
      %cst_15 = arith.constant 0.000000e+00 : f32
      %20 = vector.broadcast %cst_15 : f32 to vector<16x256xf32>
      %21 = arith.maximumf %19, %20 : vector<16x256xf32>
      %22 = arith.truncf %21 : vector<16x256xf32> to vector<16x256xbf16>
      %c0_16 = arith.constant 0 : index
      %c0_17 = arith.constant 0 : index
      %23 = vector.load %arg6[%c0_16, %c0_17] : memref<256x128xbf16, #tpu.memory_space<vmem>>, vector<256x128xbf16>
      %cst_18 = arith.constant dense<0.000000e+00> : vector<16x128xf32>
      %24 = tpu.matmul %22, %23, %cst_18 {dimension_numbers = #tpu.dot_dimension_numbers<[1], [0], [0], [1], [0, 0, 1, 1], [], []>} : vector<16x256xbf16>, vector<256x128xbf16>, vector<16x128xf32> -> vector<16x128xf32>
      %c0_19 = arith.constant 0 : index
      %c0_20 = arith.constant 0 : index
      %25 = vector.load %arg7[%c0_19, %c0_20] : memref<1x128xf32, #tpu.memory_space<vmem>>, vector<1x128xf32>
      %26 = vector.broadcast %25 : vector<1x128xf32> to vector<16x128xf32>
      %27 = arith.addf %24, %26 : vector<16x128xf32>
      %c0_21 = arith.constant 0 : index
      %c0_22 = arith.constant 0 : index
      %28 = vector.load %arg8[%c0_21, %c0_22] : memref<16x128xf32, #tpu.memory_space<vmem>>, vector<16x128xf32>
      tpu.vector_store %arg8[%c0_21, %c0_22], %27 {strides = array<i32>} : memref<16x128xf32, #tpu.memory_space<vmem>>, vector<16x128xf32>,
    } else {
    }
    return
  }
  func.func @transform_0(%arg0: i32, %arg1: i32) -> (i32, i32) {
    %c0_i32 = arith.constant 0 : i32
    return %arg0, %arg1 : i32, i32
  }
  func.func @transform_1(%arg0: i32, %arg1: i32) -> (i32, i32) {
    %c0_i32 = arith.constant 0 : i32
    %c0_i32_0 = arith.constant 0 : i32
    return %arg1, %c0_i32 : i32, i32
  }
  func.func @transform_2(%arg0: i32, %arg1: i32) -> (i32, i32) {
    %c0_i32 = arith.constant 0 : i32
    %c0_i32_0 = arith.constant 0 : i32
    %c0_i32_1 = arith.constant 0 : i32
    return %c0_i32, %c0_i32_0 : i32, i32
  }
  func.func @transform_3(%arg0: i32, %arg1: i32) -> (i32, i32) {
    %c0_i32 = arith.constant 0 : i32
    %c0_i32_0 = arith.constant 0 : i32
    %c0_i32_1 = arith.constant 0 : i32
    return %c0_i32, %c0_i32_0 : i32, i32
  }
  func.func @transform_4(%arg0: i32, %arg1: i32) -> (i32, i32) {
    %c0_i32 = arith.constant 0 : i32
    %c0_i32_0 = arith.constant 0 : i32
    %c0_i32_1 = arith.constant 0 : i32
    return %c0_i32, %c0_i32_0 : i32, i32
  }
  func.func @transform_5(%arg0: i32, %arg1: i32) -> (i32, i32) {
    %c0_i32 = arith.constant 0 : i32
    %c0_i32_0 = arith.constant 0 : i32
    %c0_i32_1 = arith.constant 0 : i32
    return %c0_i32, %c0_i32_0 : i32, i32
  }
  func.func @transform_6(%arg0: i32, %arg1: i32) -> (i32, i32) {
    %c0_i32 = arith.constant 0 : i32
    %c0_i32_0 = arith.constant 0 : i32
    return %arg0, %c0_i32 : i32, i32
  }
}

</mosaic_0001>

<llo_original>
// kernel: mlp_forward.1
$region0: #{mlp_forward.1}
  #allocation0 [shape = 'u32[]', space=smem, size = 0x4, offset = 0x4, fixed_abs, tag = 'smem constant byte address 0x4 - core index']
  #allocation1 [shape = 'u32[72,128]{1,0:T(1,128)}', space=vmem, size = 0x9000, scoped, tag = 'internal scratch']
  #allocation2 [shape = 'f32[16,256]{1,0:T(8,128)}', space=vmem, size = 0x4000, scoped, tag = 'scratch operand']
  %s0 = inlined_call_operand.vmem [shape: bf16[16,12288], index: 0, kind: input, shape index: {}]
  %s1 = inlined_call_operand.hbm [shape: s8[12288,256], index: 1, kind: input, shape index: {}]
  %s2 = inlined_call_operand.hbm [shape: f32[1,256], index: 2, kind: input, shape index: {}]
  %s3 = inlined_call_operand.hbm [shape: f32[1,256], index: 3, kind: input, shape index: {}]
  %s4 = inlined_call_operand.hbm [shape: bf16[256,128], index: 4, kind: input, shape index: {}]
  %s5 = inlined_call_operand.hbm [shape: f32[1,128], index: 5, kind: input, shape index: {}]
  %s6 = inlined_call_operand.vmem [shape: f32[16,128], index: 6, kind: output, shape index: {}]
  %s7 = sld [smem:[#allocation0]]
  $region108: #{mlp_forward.1} parent=0
    _
  %s9 = ssub.s32 1, %s7
  %s10 = scalar_select 0, %s9, %s7
  $region1: #{mlp_forward.1} parent=0
    #allocation3 [shape = 'u8[393216]{0}', space=vmem, size = 0x60000, scoped, tag = 'input window, operand 0']
    #allocation4 [shape = 'u8[3145728]{0}', space=vmem, size = 0x300000, scoped, tag = 'input window, operand 1']
    #allocation5 [shape = 's32[2]{0}', space=sflag, size = 0x8, scoped, tag = 'scoped memory for mlp_forward.1']
    #allocation6 [shape = 'u8[1024]{0}', space=vmem, size = 0x400, scoped, tag = 'input window, operand 2, single buffered']
    #allocation7 [shape = 's32[1]{0}', space=sflag, size = 0x4, scoped, tag = 'scoped memory for mlp_forward.1']
    #allocation8 [shape = 'u8[1024]{0}', space=vmem, size = 0x400, scoped, tag = 'input window, operand 3, single buffered']
    #allocation9 [shape = 'u8[65536]{0}', space=vmem, size = 0x10000, scoped, tag = 'input window, operand 4, single buffered']
    #allocation10 [shape = 's32[1]{0}', space=sflag, size = 0x4, scoped, tag = 'scoped memory for mlp_forward.1']
    #allocation11 [shape = 'u8[512]{0}', space=vmem, size = 0x400, scoped, tag = 'input window, operand 5, single buffered']
    %11 = vsyncpa [#allocation5], 0
    %s12 = scalar_lea.sflag [#allocation5], 1
    %13 = vsyncpa %s12, 0
    %14 = vsyncpa [#allocation7], 0
    %15 = vsyncpa [#allocation10], 0
    loop: start=0, step=1, limit=4
    $region2: #{mlp_forward.1} parent=1 // loop_pre_header
      _
    $region3: #{mlp_forward.1} parent=1 // loop_header
      %s17 = sphi 0, %s21
      %p18 = scmp.ge.s32.totalorder %s17, 4
      %s24 = sphi 0, %s36
      %s25 = sphi 0, %s32
      %s26 = sphi 0, %s24
      %s27 = sphi 0, %s25
      %s28 = sphi 0, %s26
      %s29 = sphi 0, %s27
      %s41 = sphi 0, %s43
      %s44 = sphi 0, %s41
      %s45 = sphi 0, %s44
      %s61 = sphi 0, %s45
      %s67 = sphi 0, %s69
      %s70 = sphi 0, %s67
      %s71 = sphi 0, %s70
      %s87 = sphi 0, %s71
      %s91 = sphi 0, %s91
      %s93 = sphi 0, %s91
      %s94 = sphi 0, %s93
      %s108 = sphi 0, %s94
      %s112 = sphi 0, %s112
      %s114 = sphi 0, %s112
      %s115 = sphi 0, %s114
      %s129 = sphi 0, %s115
      %s133 = sphi 0, %s133
      %s135 = sphi 0, %s133
      %s136 = sphi 0, %s135
      %s150 = sphi 0, %s136
      %s154 = sphi 0, %s154
      %s156 = sphi 0, %s154
      %s157 = sphi 0, %s156
      %s171 = sphi 0, %s157
      %s177 = sphi 0, %s179
      %s180 = sphi 0, %s177
      %s181 = sphi 0, %s180
      %s197 = sphi 0, %s181
    $region4: #{mlp_forward.1} parent=1 // loop_header_branch
      %20 = sbr.rel (%p18) target = $region8
    $region5: #{mlp_forward.1} parent=1 // loop_body
      %s22 = ssub.s32 %s17, 1
      %s23 = ssub.s32 %s17, 2
      %s30 = sadd.s32 1, %s25
      %p31 = scmp.ge.s32.totalorder %s30, 2
      %s32 = scalar_select %p31, 0, %s30
      %s33 = sadd.s32 1, %s24
      %s34 = scalar_select %p31, %s33, %s24
      %p35 = scmp.ge.s32.totalorder %s34, 1
      %s36 = scalar_select %p35, 0, %s34
      %s37 = ssub.s32 %s24, %s36
      %s38 = ssub.s32 %s25, %s32
      %s39 = sor.u32 %s37, %s38
      %p40 = scmp.eq.s32.totalorder %s39, 0
      %s42 = sadd.s32 %s41, 1
      %s43 = scalar_select %p40, %s41, %s42
      %p46 = pneg %p40
      %p47 = scmp.eq.s32.totalorder %s17, 1
      %p48 = por %p46, %p47
      %p49 = scmp.ne.s32.totalorder %s41, %s44
      %p50 = scmp.eq.s32.totalorder %s17, 0
      %p51 = por %p49, %p50
      %p52 = scmp.ne.s32.totalorder %s41, %s44
      %p53 = scmp.eq.s32.totalorder %s22, 1
      %p54 = por %p52, %p53
      %p55 = scmp.ne.s32.totalorder %s44, %s45
      %p56 = scmp.eq.s32.totalorder %s22, 0
      %p57 = por %p55, %p56
      %p58 = scmp.ne.s32.totalorder %s44, %s45
      %p59 = scmp.eq.s32.totalorder %s23, 1
      %p60 = por %p58, %p59
      %p62 = scmp.ne.s32.totalorder %s45, %s61
      %p63 = scmp.eq.s32.totalorder %s23, 0
      %p64 = por %p62, %p63
      %s65 = ssub.s32 %s25, %s32
      %p66 = scmp.eq.s32.totalorder %s65, 0
      %s68 = sadd.s32 %s67, 1
      %s69 = scalar_select %p66, %s67, %s68
      %p72 = pneg %p66
      %p73 = scmp.eq.s32.totalorder %s17, 1
      %p74 = por %p72, %p73
      %p75 = scmp.ne.s32.totalorder %s67, %s70
      %p76 = scmp.eq.s32.totalorder %s17, 0
      %p77 = por %p75, %p76
      %p78 = scmp.ne.s32.totalorder %s67, %s70
      %p79 = scmp.eq.s32.totalorder %s22, 1
      %p80 = por %p78, %p79
      %p81 = scmp.ne.s32.totalorder %s70, %s71
      %p82 = scmp.eq.s32.totalorder %s22, 0
      %p83 = por %p81, %p82
      %p84 = scmp.ne.s32.totalorder %s70, %s71
      %p85 = scmp.eq.s32.totalorder %s23, 1
      %p86 = por %p84, %p85
      %p88 = scmp.ne.s32.totalorder %s71, %s87
      %p89 = scmp.eq.s32.totalorder %s23, 0
      %p90 = por %p88, %p89
      %s92 = sadd.s32 %s91, 1
      %p95 = scmp.eq.s32.totalorder %s17, 1
      %p96 = scmp.ne.s32.totalorder %s91, %s93
      %p97 = scmp.eq.s32.totalorder %s17, 0
      %p98 = por %p96, %p97
      %p99 = scmp.ne.s32.totalorder %s91, %s93
      %p100 = scmp.eq.s32.totalorder %s22, 1
      %p101 = por %p99, %p100
      %p102 = scmp.ne.s32.totalorder %s93, %s94
      %p103 = scmp.eq.s32.totalorder %s22, 0
      %p104 = por %p102, %p103
      %p105 = scmp.ne.s32.totalorder %s93, %s94
      %p106 = scmp.eq.s32.totalorder %s23, 1
      %p107 = por %p105, %p106
      %p109 = scmp.ne.s32.totalorder %s94, %s108
      %p110 = scmp.eq.s32.totalorder %s23, 0
      %p111 = por %p109, %p110
      %s113 = sadd.s32 %s112, 1
      %p116 = scmp.eq.s32.totalorder %s17, 1
      %p117 = scmp.ne.s32.totalorder %s112, %s114
      %p118 = scmp.eq.s32.totalorder %s17, 0
      %p119 = por %p117, %p118
      %p120 = scmp.ne.s32.totalorder %s112, %s114
      %p121 = scmp.eq.s32.totalorder %s22, 1
      %p122 = por %p120, %p121
      %p123 = scmp.ne.s32.totalorder %s114, %s115
      %p124 = scmp.eq.s32.totalorder %s22, 0
      %p125 = por %p123, %p124
      %p126 = scmp.ne.s32.totalorder %s114, %s115
      %p127 = scmp.eq.s32.totalorder %s23, 1
      %p128 = por %p126, %p127
      %p130 = scmp.ne.s32.totalorder %s115, %s129
      %p131 = scmp.eq.s32.totalorder %s23, 0
      %p132 = por %p130, %p131
      %s134 = sadd.s32 %s133, 1
      %p137 = scmp.eq.s32.totalorder %s17, 1
      %p138 = scmp.ne.s32.totalorder %s133, %s135
      %p139 = scmp.eq.s32.totalorder %s17, 0
      %p140 = por %p138, %p139
      %p141 = scmp.ne.s32.totalorder %s133, %s135
      %p142 = scmp.eq.s32.totalorder %s22, 1
      %p143 = por %p141, %p142
      %p144 = scmp.ne.s32.totalorder %s135, %s136
      %p145 = scmp.eq.s32.totalorder %s22, 0
      %p146 = por %p144, %p145
      %p147 = scmp.ne.s32.totalorder %s135, %s136
      %p148 = scmp.eq.s32.totalorder %s23, 1
      %p149 = por %p147, %p148
      %p151 = scmp.ne.s32.totalorder %s136, %s150
      %p152 = scmp.eq.s32.totalorder %s23, 0
      %p153 = por %p151, %p152
      %s155 = sadd.s32 %s154, 1
      %p158 = scmp.eq.s32.totalorder %s17, 1
      %p159 = scmp.ne.s32.totalorder %s154, %s156
      %p160 = scmp.eq.s32.totalorder %s17, 0
      %p161 = por %p159, %p160
      %p162 = scmp.ne.s32.totalorder %s154, %s156
      %p163 = scmp.eq.s32.totalorder %s22, 1
      %p164 = por %p162, %p163
      %p165 = scmp.ne.s32.totalorder %s156, %s157
      %p166 = scmp.eq.s32.totalorder %s22, 0
      %p167 = por %p165, %p166
      %p168 = scmp.ne.s32.totalorder %s156, %s157
      %p169 = scmp.eq.s32.totalorder %s23, 1
      %p170 = por %p168, %p169
      %p172 = scmp.ne.s32.totalorder %s157, %s171
      %p173 = scmp.eq.s32.totalorder %s23, 0
      %p174 = por %p172, %p173
      %s175 = ssub.s32 %s24, %s36
      %p176 = scmp.eq.s32.totalorder %s175, 0
      %s178 = sadd.s32 %s177, 1
      %s179 = scalar_select %p176, %s177, %s178
      %p182 = pneg %p176
      %p183 = scmp.eq.s32.totalorder %s17, 1
      %p184 = por %p182, %p183
      %p185 = scmp.ne.s32.totalorder %s177, %s180
      %p186 = scmp.eq.s32.totalorder %s17, 0
      %p187 = por %p185, %p186
      %p188 = scmp.ne.s32.totalorder %s177, %s180
      %p189 = scmp.eq.s32.totalorder %s22, 1
      %p190 = por %p188, %p189
      %p191 = scmp.ne.s32.totalorder %s180, %s181
      %p192 = scmp.eq.s32.totalorder %s22, 0
      %p193 = por %p191, %p192
      %p194 = scmp.ne.s32.totalorder %s180, %s181
      %p195 = scmp.eq.s32.totalorder %s23, 1
      %p196 = por %p194, %p195
      %p198 = scmp.ne.s32.totalorder %s181, %s197
      %p199 = scmp.eq.s32.totalorder %s23, 0
      %p200 = por %p198, %p199
      %p201 = scmp.le.s32.totalorder 1, %s17
      %p202 = scmp.lt.s32.totalorder %s17, 3
      %p203 = pnand %p201, %p202
      %p204 = pneg %p203
      // Predicated region
      $region9: #{mlp_forward.1} parent=5 // pred_check
        _
      $region10: #{mlp_forward.1} parent=5 // pred_check_branch
        %206 = sbr.rel (%p203) target = $region12
      $region11: #{mlp_forward.1} parent=5 // pred_region
        %s207 = ssub.s32 %s17, 1
        // Predicated region
        $region13: #{mlp_forward.1} parent=11 // pred_check
          %p208 = pneg %p104
        $region14: #{mlp_forward.1} parent=11 // pred_check_branch
          %210 = sbr.rel (%p208) target = $region16
        $region15: #{mlp_forward.1} parent=11 // pred_region
          %212 = vsyncadd [#allocation7], 0
          %s214 = sshll.u32 %s2, 4
          %s215 = int_to_ptr.hbm [resolvable:$true] %s214
          %s216 = sshll.u32 [#allocation6], 4
          %s217 = int_to_ptr.vmem [resolvable:$true] %s216
          %219 = dma.hbm_to_vmem [thread:$0]  %s215, 32, %s217, [#allocation7]
        $region16: #{mlp_forward.1} parent=11 // pred_fallthru
          _
        // Predicated region
        $region17: #{mlp_forward.1} parent=11 // pred_check
          %p220 = pneg %p125
        $region18: #{mlp_forward.1} parent=11 // pred_check_branch
          %222 = sbr.rel (%p220) target = $region20
        $region19: #{mlp_forward.1} parent=11 // pred_region
          %224 = vsyncadd [#allocation7], 0
          %s226 = sshll.u32 %s3, 4
          %s227 = int_to_ptr.hbm [resolvable:$true] %s226
          %s228 = sshll.u32 [#allocation8], 4
          %s229 = int_to_ptr.vmem [resolvable:$true] %s228
          %231 = dma.hbm_to_vmem [thread:$0]  %s227, 32, %s229, [#allocation7]
        $region20: #{mlp_forward.1} parent=11 // pred_fallthru
          _
        // Predicated region
        $region21: #{mlp_forward.1} parent=11 // pred_check
          %p232 = pneg %p146
        $region22: #{mlp_forward.1} parent=11 // pred_check_branch
          %234 = sbr.rel (%p232) target = $region24
        $region23: #{mlp_forward.1} parent=11 // pred_region
          %236 = vsyncadd [#allocation10], 0
          %s237 = sshll.u32 %s4, 4
          %s238 = int_to_ptr.hbm [resolvable:$true] %s237
          %s239 = sshll.u32 [#allocation9], 4
          %s240 = int_to_ptr.vmem [resolvable:$true] %s239
          %245 = dma.hbm_to_vmem [thread:$0]  %s238, 2048, %s240, [#allocation10], 64, 64, 4
        $region24: #{mlp_forward.1} parent=11 // pred_fallthru
          _
        // Predicated region
        $region25: #{mlp_forward.1} parent=11 // pred_check
          %p246 = pneg %p167
        $region26: #{mlp_forward.1} parent=11 // pred_check_branch
          %248 = sbr.rel (%p246) target = $region28
        $region27: #{mlp_forward.1} parent=11 // pred_region
          %250 = vsyncadd [#allocation10], 0
          %s252 = sshll.u32 %s5, 4
          %s253 = int_to_ptr.hbm [resolvable:$true] %s252
          %s254 = sshll.u32 [#allocation11], 4
          %s255 = int_to_ptr.vmem [resolvable:$true] %s254
          %257 = dma.hbm_to_vmem [thread:$0]  %s253, 16, %s255, [#allocation10]
        $region28: #{mlp_forward.1} parent=11 // pred_fallthru
          _
      $region12: #{mlp_forward.1} parent=5 // pred_fallthru
        _
      %p258 = scmp.lt.s32.totalorder %s17, 2
      // Predicated region
      $region29: #{mlp_forward.1} parent=5 // pred_check
        %p259 = pneg %p258
      $region30: #{mlp_forward.1} parent=5 // pred_check_branch
        %261 = sbr.rel (%p259) target = $region32
      $region31: #{mlp_forward.1} parent=5 // pred_region
        // Predicated region
        $region33: #{mlp_forward.1} parent=31 // pred_check
          %p262 = pneg %p51
        $region34: #{mlp_forward.1} parent=31 // pred_check_branch
          %264 = sbr.rel (%p262) target = $region36
        $region35: #{mlp_forward.1} parent=31 // pred_region
          %s265 = sand.u32 %s41, 1
          %s266 = sand.u32 %s41, 1
          %s267 = smul.addr %s266, 384
          %s268 = scalar_lea.vmem [#allocation3], %s267
          %s269 = smul.u32 2, %s24
          %s270 = smul.u32 48, %s25
          %s271 = smul.addr %s269, 96
          %s272 = sadd.s32 %s270, %s271
          %s273 = smul.addr %s272, 4
          %s274 = scalar_lea.vmem %s0, %s273
          // Predicated region
          $region37: #{mlp_forward.1} parent=35 // pred_check
            _
          $region38: #{mlp_forward.1} parent=35 // pred_check_branch
            %276 = sbr.rel (0) target = $region40
          $region39: #{mlp_forward.1} parent=35 // pred_region
            // Predicated region
            $region41: #{mlp_forward.1} parent=39 // pred_check
              _
            $region42: #{mlp_forward.1} parent=39 // pred_check_branch
              %278 = sbr.rel (0) target = $region44
            $region43: #{mlp_forward.1} parent=39 // pred_region
              loop: start=0, step=1, limit=1
              $region45: #{mlp_forward.1} parent=43 // loop_pre_header
                _
              $region46: #{mlp_forward.1} parent=43 // loop_header
                %s280 = sphi 0, %s284
                %p281 = scmp.ge.s32.totalorder %s280, 1
                %s285 = sphi %s274, %s274
                %s286 = sphi %s268, %s268
              $region47: #{mlp_forward.1} parent=43 // loop_header_branch
                %283 = sbr.rel (%p281) target = $region51
              $region48: #{mlp_forward.1} parent=43 // loop_body
                %v287 = vld [vmem:[%s285] sm:$0xff]
                %288 = vst [vmem:[%s286] sm:$0xff] %v287
                %v289 = vld [vmem:[%s285 + $0x8] sm:$0xff]
                %290 = vst [vmem:[%s286 + $0x8] sm:$0xff] %v289
                %v291 = vld [vmem:[%s285 + $0x10] sm:$0xff]
                %292 = vst [vmem:[%s286 + $0x10] sm:$0xff] %v291
                %v293 = vld [vmem:[%s285 + $0x18] sm:$0xff]
                %294 = vst [vmem:[%s286 + $0x18] sm:$0xff] %v293
                %v295 = vld [vmem:[%s285 + $0x20] sm:$0xff]
                %296 = vst [vmem:[%s286 + $0x20] sm:$0xff] %v295
                %v297 = vld [vmem:[%s285 + $0x28] sm:$0xff]
                %298 = vst [vmem:[%s286 + $0x28] sm:$0xff] %v297
                %v299 = vld [vmem:[%s285 + $0x30] sm:$0xff]
                %300 = vst [vmem:[%s286 + $0x30] sm:$0xff] %v299
                %v301 = vld [vmem:[%s285 + $0x38] sm:$0xff]
                %302 = vst [vmem:[%s286 + $0x38] sm:$0xff] %v301
                %v303 = vld [vmem:[%s285 + $0x40] sm:$0xff]
                %304 = vst [vmem:[%s286 + $0x40] sm:$0xff] %v303
                %v305 = vld [vmem:[%s285 + $0x48] sm:$0xff]
                %306 = vst [vmem:[%s286 + $0x48] sm:$0xff] %v305
                %v307 = vld [vmem:[%s285 + $0x50] sm:$0xff]
                %308 = vst [vmem:[%s286 + $0x50] sm:$0xff] %v307
                %v309 = vld [vmem:[%s285 + $0x58] sm:$0xff]
                %310 = vst [vmem:[%s286 + $0x58] sm:$0xff] %v309
                %v311 = vld [vmem:[%s285 + $0x60] sm:$0xff]
                %312 = vst [vmem:[%s286 + $0x60] sm:$0xff] %v311
                %v313 = vld [vmem:[%s285 + $0x68] sm:$0xff]
                %314 = vst [vmem:[%s286 + $0x68] sm:$0xff] %v313
                %v315 = vld [vmem:[%s285 + $0x70] sm:$0xff]
                %316 = vst [vmem:[%s286 + $0x70] sm:$0xff] %v315
                %v317 = vld [vmem:[%s285 + $0x78] sm:$0xff]
                %318 = vst [vmem:[%s286 + $0x78] sm:$0xff] %v317
                %v319 = vld [vmem:[%s285 + $0x80] sm:$0xff]
                %320 = vst [vmem:[%s286 + $0x80] sm:$0xff] %v319
                %v321 = vld [vmem:[%s285 + $0x88] sm:$0xff]
                %322 = vst [vmem:[%s286 + $0x88] sm:$0xff] %v321
                %v323 = vld [vmem:[%s285 + $0x90] sm:$0xff]
                %324 = vst [vmem:[%s286 + $0x90] sm:$0xff] %v323
                %v325 = vld [vmem:[%s285 + $0x98] sm:$0xff]
                %326 = vst [vmem:[%s286 + $0x98] sm:$0xff] %v325
                %v327 = vld [vmem:[%s285 + $0xa0] sm:$0xff]
                %328 = vst [vmem:[%s286 + $0xa0] sm:$0xff] %v327
                %v329 = vld [vmem:[%s285 + $0xa8] sm:$0xff]
                %330 = vst [vmem:[%s286 + $0xa8] sm:$0xff] %v329
                %v331 = vld [vmem:[%s285 + $0xb0] sm:$0xff]
                %332 = vst [vmem:[%s286 + $0xb0] sm:$0xff] %v331
                %v333 = vld [vmem:[%s285 + $0xb8] sm:$0xff]
                %334 = vst [vmem:[%s286 + $0xb8] sm:$0xff] %v333
                %v335 = vld [vmem:[%s285 + $0x180] sm:$0xff]
                %336 = vst [vmem:[%s286 + $0xc0] sm:$0xff] %v335
                %v337 = vld [vmem:[%s285 + $0x188] sm:$0xff]
                %338 = vst [vmem:[%s286 + $0xc8] sm:$0xff] %v337
                %v339 = vld [vmem:[%s285 + $0x190] sm:$0xff]
                %340 = vst [vmem:[%s286 + $0xd0] sm:$0xff] %v339
                %v341 = vld [vmem:[%s285 + $0x198] sm:$0xff]
                %342 = vst [vmem:[%s286 + $0xd8] sm:$0xff] %v341
                %v343 = vld [vmem:[%s285 + $0x1a0] sm:$0xff]
                %344 = vst [vmem:[%s286 + $0xe0] sm:$0xff] %v343
                %v345 = vld [vmem:[%s285 + $0x1a8] sm:$0xff]
                %346 = vst [vmem:[%s286 + $0xe8] sm:$0xff] %v345
                %v347 = vld [vmem:[%s285 + $0x1b0] sm:$0xff]
                %348 = vst [vmem:[%s286 + $0xf0] sm:$0xff] %v347
                %v349 = vld [vmem:[%s285 + $0x1b8] sm:$0xff]
                %350 = vst [vmem:[%s286 + $0xf8] sm:$0xff] %v349
                %v351 = vld [vmem:[%s285 + $0x1c0] sm:$0xff]
                %352 = vst [vmem:[%s286 + $0x100] sm:$0xff] %v351
                %v353 = vld [vmem:[%s285 + $0x1c8] sm:$0xff]
                %354 = vst [vmem:[%s286 + $0x108] sm:$0xff] %v353
                %v355 = vld [vmem:[%s285 + $0x1d0] sm:$0xff]
                %356 = vst [vmem:[%s286 + $0x110] sm:$0xff] %v355
                %v357 = vld [vmem:[%s285 + $0x1d8] sm:$0xff]
                %358 = vst [vmem:[%s286 + $0x118] sm:$0xff] %v357
                %v359 = vld [vmem:[%s285 + $0x1e0] sm:$0xff]
                %360 = vst [vmem:[%s286 + $0x120] sm:$0xff] %v359
                %v361 = vld [vmem:[%s285 + $0x1e8] sm:$0xff]
                %362 = vst [vmem:[%s286 + $0x128] sm:$0xff] %v361
                %v363 = vld [vmem:[%s285 + $0x1f0] sm:$0xff]
                %364 = vst [vmem:[%s286 + $0x130] sm:$0xff] %v363
                %v365 = vld [vmem:[%s285 + $0x1f8] sm:$0xff]
                %366 = vst [vmem:[%s286 + $0x138] sm:$0xff] %v365
                %v367 = vld [vmem:[%s285 + $0x200] sm:$0xff]
                %368 = vst [vmem:[%s286 + $0x140] sm:$0xff] %v367
                %v369 = vld [vmem:[%s285 + $0x208] sm:$0xff]
                %370 = vst [vmem:[%s286 + $0x148] sm:$0xff] %v369
                %v371 = vld [vmem:[%s285 + $0x210] sm:$0xff]
                %372 = vst [vmem:[%s286 + $0x150] sm:$0xff] %v371
                %v373 = vld [vmem:[%s285 + $0x218] sm:$0xff]
                %374 = vst [vmem:[%s286 + $0x158] sm:$0xff] %v373
                %v375 = vld [vmem:[%s285 + $0x220] sm:$0xff]
                %376 = vst [vmem:[%s286 + $0x160] sm:$0xff] %v375
                %v377 = vld [vmem:[%s285 + $0x228] sm:$0xff]
                %378 = vst [vmem:[%s286 + $0x168] sm:$0xff] %v377
                %v379 = vld [vmem:[%s285 + $0x230] sm:$0xff]
                %380 = vst [vmem:[%s286 + $0x170] sm:$0xff] %v379
                %v381 = vld [vmem:[%s285 + $0x238] sm:$0xff]
                %382 = vst [vmem:[%s286 + $0x178] sm:$0xff] %v381
              $region49: #{mlp_forward.1} parent=43 // loop_footer
                %s284 = sadd.s32 1, %s280
              $region50: #{mlp_forward.1} parent=43 // loop_footer_branch
                %279 = sbr.rel target = $region46
              $region51: #{mlp_forward.1} parent=43 // loop_exit
                _
            $region44: #{mlp_forward.1} parent=39 // pred_fallthru
              _
            // Predicated region
            $region52: #{mlp_forward.1} parent=39 // pred_check
              _
            $region53: #{mlp_forward.1} parent=39 // pred_check_branch
              %384 = sbr.rel target = $region55
            $region54: #{mlp_forward.1} parent=39 // pred_region
              _
            $region55: #{mlp_forward.1} parent=39 // pred_fallthru
              _
          $region40: #{mlp_forward.1} parent=35 // pred_fallthru
            _
          %385 = vnop
        $region36: #{mlp_forward.1} parent=31 // pred_fallthru
          _
        // Predicated region
        $region56: #{mlp_forward.1} parent=31 // pred_check
          %p386 = pneg %p77
        $region57: #{mlp_forward.1} parent=31 // pred_check_branch
          %388 = sbr.rel (%p386) target = $region59
        $region58: #{mlp_forward.1} parent=31 // pred_region
          %s389 = sand.u32 %s67, 1
          %s390 = scalar_lea.sflag [#allocation5], %s389
          %s391 = sand.u32 %s67, 1
          %s392 = smul.addr %s391, 3072
          %s393 = scalar_lea.vmem [#allocation4], %s392
          %s394 = smul.u32 192, %s25
          %396 = vsyncadd %s390, 0
          %s397 = smul.addr %s394, 2
          %s398 = smul.addr %s397, 8
          %s399 = scalar_lea.hbm %s1, %s398
          %s400 = sshll.u32 %s399, 4
          %s401 = int_to_ptr.hbm [resolvable:$true] %s400
          %s402 = sshll.u32 %s393, 4
          %s403 = int_to_ptr.vmem [resolvable:$true] %s402
          %408 = dma.hbm_to_vmem [thread:$0]  %s401, 49152, %s403, %s390, 256, 256, 16
        $region59: #{mlp_forward.1} parent=31 // pred_fallthru
          _
      $region32: #{mlp_forward.1} parent=5 // pred_fallthru
        _
      %p409 = scmp.le.s32.totalorder 1, %s17
      %p410 = scmp.lt.s32.totalorder %s17, 3
      %p411 = pnand %p409, %p410
      %p412 = pneg %p411
      // Predicated region
      $region60: #{mlp_forward.1} parent=5 // pred_check
        _
      $region61: #{mlp_forward.1} parent=5 // pred_check_branch
        %414 = sbr.rel (%p411) target = $region63
      $region62: #{mlp_forward.1} parent=5 // pred_region
        %s415 = ssub.s32 %s17, 1
        %s416 = sand.u32 %s44, 1
        %s417 = sand.u32 %s44, 1
        %s418 = smul.addr %s417, 384
        %s419 = scalar_lea.vmem [#allocation3], %s418
        // Predicated region
        $region64: #{mlp_forward.1} parent=62 // pred_check
          %p420 = pneg %p57
        $region65: #{mlp_forward.1} parent=62 // pred_check_branch
          %422 = sbr.rel (%p420) target = $region67
        $region66: #{mlp_forward.1} parent=62 // pred_region
          _
        $region67: #{mlp_forward.1} parent=62 // pred_fallthru
          _
        %s423 = sand.u32 %s70, 1
        %s424 = scalar_lea.sflag [#allocation5], %s423
        %s425 = sand.u32 %s70, 1
        %s426 = smul.addr %s425, 3072
        %s427 = scalar_lea.vmem [#allocation4], %s426
        // Predicated region
        $region68: #{mlp_forward.1} parent=62 // pred_check
          %p428 = pneg %p83
        $region69: #{mlp_forward.1} parent=62 // pred_check_branch
          %430 = sbr.rel (%p428) target = $region71
        $region70: #{mlp_forward.1} parent=62 // pred_region
          %432 = dma.done %s424, 49152
        $region71: #{mlp_forward.1} parent=62 // pred_fallthru
          _
        // Predicated region
        $region72: #{mlp_forward.1} parent=62 // pred_check
          %p433 = pneg %p104
        $region73: #{mlp_forward.1} parent=62 // pred_check_branch
          %435 = sbr.rel (%p433) target = $region75
        $region74: #{mlp_forward.1} parent=62 // pred_region
          %437 = dma.done [#allocation7], 32
        $region75: #{mlp_forward.1} parent=62 // pred_fallthru
          _
        // Predicated region
        $region76: #{mlp_forward.1} parent=62 // pred_check
          %p438 = pneg %p125
        $region77: #{mlp_forward.1} parent=62 // pred_check_branch
          %440 = sbr.rel (%p438) target = $region79
        $region78: #{mlp_forward.1} parent=62 // pred_region
          %442 = dma.done [#allocation7], 32
        $region79: #{mlp_forward.1} parent=62 // pred_fallthru
          _
        // Predicated region
        $region80: #{mlp_forward.1} parent=62 // pred_check
          %p443 = pneg %p146
        $region81: #{mlp_forward.1} parent=62 // pred_check_branch
          %445 = sbr.rel (%p443) target = $region83
        $region82: #{mlp_forward.1} parent=62 // pred_region
          %447 = dma.done [#allocation10], 2048
        $region83: #{mlp_forward.1} parent=62 // pred_fallthru
          _
        // Predicated region
        $region84: #{mlp_forward.1} parent=62 // pred_check
          %p448 = pneg %p167
        $region85: #{mlp_forward.1} parent=62 // pred_check_branch
          %450 = sbr.rel (%p448) target = $region87
        $region86: #{mlp_forward.1} parent=62 // pred_region
          %452 = dma.done [#allocation10], 16
        $region87: #{mlp_forward.1} parent=62 // pred_fallthru
          _
        %s453 = sand.u32 %s44, 1
        %s454 = sand.u32 %s44, 1
        %s455 = smul.addr %s454, 384
        %s456 = scalar_lea.vmem [#allocation3], %s455
        %p457 = pneg %p57
        %p458 = pneg %p54
        %s459 = sand.u32 %s70, 1
        %s460 = scalar_lea.sflag [#allocation5], %s459
        %s461 = sand.u32 %s70, 1
        %s462 = smul.addr %s461, 3072
        %s463 = scalar_lea.vmem [#allocation4], %s462
        %p464 = pneg %p83
        %p465 = pneg %p80
        %p466 = pneg %p104
        %p467 = pneg %p101
        %p468 = pneg %p125
        %p469 = pneg %p122
        %p470 = pneg %p146
        %p471 = pneg %p143
        %p472 = pneg %p167
        %p473 = pneg %p164
        %p474 = pneg %p193
        %p475 = pneg %p190
        %s476 = smul.u32 2, %s26
        %p477 = scmp.lt.s32.totalorder %s476, 1
        %s478 = scalar_select %p477, %s476, 1
        %s479 = smul.addr %s478, 8
        %s480 = scalar_lea.vmem %s6, %s479
        %s481 = smul.u32 2, %s26
        %s482 = smul.u32 48, %s27
        %s483 = smul.u32 192, %s27
        %s484 = smul.u32 2, %s26
        %p485 = scmp.lt.s32.totalorder %s484, 1
        %s486 = scalar_select %p485, %s484, 1
        %s487 = smul.addr %s486, 8
        %s488 = scalar_lea.vmem %s6, %s487
        %s489 = smul.u32 2, %s26
        %p490 = scmp.eq.s32.totalorder %s27, 0
        // Predicated region
        $region88: #{mlp_forward.1} parent=62 // pred_check
          %p491 = pneg %p490
        $region89: #{mlp_forward.1} parent=62 // pred_check_branch
          %493 = sbr.rel (%p491) target = $region91
        $region90: #{mlp_forward.1} parent=62 // pred_region
          %494 = vst [vmem:[#allocation2] sm:$0xff] 0.0
          %495 = vst [vmem:[#allocation2 + $0x8] sm:$0xff] 0.0
          %496 = vst [vmem:[#allocation2 + $0x10] sm:$0xff] 0.0
          %497 = vst [vmem:[#allocation2 + $0x18] sm:$0xff] 0.0
        $region91: #{mlp_forward.1} parent=62 // pred_fallthru
          _
        %v498 = vld [vmem:[%s427] sm:$0xff]
        %v499 = vld [vmem:[%s427 + $0x8] sm:$0xff]
        %v500 = vld [vmem:[%s427 + $0x10] sm:$0xff]
        %v501 = vld [vmem:[%s427 + $0x18] sm:$0xff]
        %v502 = vld [vmem:[%s427 + $0x20] sm:$0xff]
        %v503 = vld [vmem:[%s427 + $0x28] sm:$0xff]
        %v504 = vld [vmem:[%s427 + $0x30] sm:$0xff]
        %v505 = vld [vmem:[%s427 + $0x38] sm:$0xff]
        %v506 = vld [vmem:[%s427 + $0x40] sm:$0xff]
        %v507 = vld [vmem:[%s427 + $0x48] sm:$0xff]
        %v508 = vld [vmem:[%s427 + $0x50] sm:$0xff]
        %v509 = vld [vmem:[%s427 + $0x58] sm:$0xff]
        %v510 = vld [vmem:[%s427 + $0x60] sm:$0xff]
        %v511 = vld [vmem:[%s427 + $0x68] sm:$0xff]
        %v512 = vld [vmem:[%s427 + $0x70] sm:$0xff]
        %v513 = vld [vmem:[%s427 + $0x78] sm:$0xff]
        %v514 = vld [vmem:[%s427 + $0x80] sm:$0xff]
        %v515 = vld [vmem:[%s427 + $0x88] sm:$0xff]
        %v516 = vld [vmem:[%s427 + $0x90] sm:$0xff]
        %v517 = vld [vmem:[%s427 + $0x98] sm:$0xff]
        %v518 = vld [vmem:[%s427 + $0xa0] sm:$0xff]
        %v519 = vld [vmem:[%s427 + $0xa8] sm:$0xff]
        %v520 = vld [vmem:[%s427 + $0xb0] sm:$0xff]
        %v521 = vld [vmem:[%s427 + $0xb8] sm:$0xff]
        %v522 = vld [vmem:[%s427 + $0xc0] sm:$0xff]
        %v523 = vld [vmem:[%s427 + $0xc8] sm:$0xff]
        %v524 = vld [vmem:[%s427 + $0xd0] sm:$0xff]
        %v525 = vld [vmem:[%s427 + $0xd8] sm:$0xff]
        %v526 = vld [vmem:[%s427 + $0xe0] sm:$0xff]
        %v527 = vld [vmem:[%s427 + $0xe8] sm:$0xff]
        %v528 = vld [vmem:[%s427 + $0xf0] sm:$0xff]
        %v529 = vld [vmem:[%s427 + $0xf8] sm:$0xff]
        %v530 = vld [vmem:[%s427 + $0x100] sm:$0xff]
        %v531 = vld [vmem:[%s427 + $0x108] sm:$0xff]
        %v532 = vld [vmem:[%s427 + $0x110] sm:$0xff]
        %v533 = vld [vmem:[%s427 + $0x118] sm:$0xff]
        %v534 = vld [vmem:[%s427 + $0x120] sm:$0xff]
        %v535 = vld [vmem:[%s427 + $0x128] sm:$0xff]
        %v536 = vld [vmem:[%s427 + $0x130] sm:$0xff]
        %v537 = vld [vmem:[%s427 + $0x138] sm:$0xff]
        %v538 = vld [vmem:[%s427 + $0x140] sm:$0xff]
        %v539 = vld [vmem:[%s427 + $0x148] sm:$0xff]
        %v540 = vld [vmem:[%s427 + $0x150] sm:$0xff]
        %v541 = vld [vmem:[%s427 + $0x158] sm:$0xff]
        %v542 = vld [vmem:[%s427 + $0x160] sm:$0xff]
        %v543 = vld [vmem:[%s427 + $0x168] sm:$0xff]
        %v544 = vld [vmem:[%s427 + $0x170] sm:$0xff]
        %v545 = vld [vmem:[%s427 + $0x178] sm:$0xff]
        %v546 = vld [vmem:[%s427 + $0x180] sm:$0xff]
        %v547 = vld [vmem:[%s427 + $0x188] sm:$0xff]
        %v548 = vld [vmem:[%s427 + $0x190] sm:$0xff]
        %v549 = vld [vmem:[%s427 + $0x198] sm:$0xff]
        %v550 = vld [vmem:[%s427 + $0x1a0] sm:$0xff]
        %v551 = vld [vmem:[%s427 + $0x1a8] sm:$0xff]
        %v552 = vld [vmem:[%s427 + $0x1b0] sm:$0xff]
        %v553 = vld [vmem:[%s427 + $0x1b8] sm:$0xff]
        %v554 = vld [vmem:[%s427 + $0x1c0] sm:$0xff]
        %v555 = vld [vmem:[%s427 + $0x1c8] sm:$0xff]
        %v556 = vld [vmem:[%s427 + $0x1d0] sm:$0xff]
        %v557 = vld [vmem:[%s427 + $0x1d8] sm:$0xff]
        %v558 = vld [vmem:[%s427 + $0x1e0] sm:$0xff]
        %v559 = vld [vmem:[%s427 + $0x1e8] sm:$0xff]
        %v560 = vld [vmem:[%s427 + $0x1f0] sm:$0xff]
        %v561 = vld [vmem:[%s427 + $0x1f8] sm:$0xff]
        %v562 = vld [vmem:[%s427 + $0x200] sm:$0xff]
        %v563 = vld [vmem:[%s427 + $0x208] sm:$0xff]
        %v564 = vld [vmem:[%s427 + $0x210] sm:$0xff]
        %v565 = vld [vmem:[%s427 + $0x218] sm:$0xff]
        %v566 = vld [vmem:[%s427 + $0x220] sm:$0xff]
        %v567 = vld [vmem:[%s427 + $0x228] sm:$0xff]
        %v568 = vld [vmem:[%s427 + $0x230] sm:$0xff]
        %v569 = vld [vmem:[%s427 + $0x238] sm:$0xff]
        %v570 = vld [vmem:[%s427 + $0x240] sm:$0xff]
        %v571 = vld [vmem:[%s427 + $0x248] sm:$0xff]
        %v572 = vld [vmem:[%s427 + $0x250] sm:$0xff]
        %v573 = vld [vmem:[%s427 + $0x258] sm:$0xff]
        %v574 = vld [vmem:[%s427 + $0x260] sm:$0xff]
        %v575 = vld [vmem:[%s427 + $0x268] sm:$0xff]
        %v576 = vld [vmem:[%s427 + $0x270] sm:$0xff]
        %v577 = vld [vmem:[%s427 + $0x278] sm:$0xff]
        %v578 = vld [vmem:[%s427 + $0x280] sm:$0xff]
        %v579 = vld [vmem:[%s427 + $0x288] sm:$0xff]
        %v580 = vld [vmem:[%s427 + $0x290] sm:$0xff]
        %v581 = vld [vmem:[%s427 + $0x298] sm:$0xff]
        %v582 = vld [vmem:[%s427 + $0x2a0] sm:$0xff]
        %v583 = vld [vmem:[%s427 + $0x2a8] sm:$0xff]
        %v584 = vld [vmem:[%s427 + $0x2b0] sm:$0xff]
        %v585 = vld [vmem:[%s427 + $0x2b8] sm:$0xff]
        %v586 = vld [vmem:[%s427 + $0x2c0] sm:$0xff]
        %v587 = vld [vmem:[%s427 + $0x2c8] sm:$0xff]
        %v588 = vld [vmem:[%s427 + $0x2d0] sm:$0xff]
        %v589 = vld [vmem:[%s427 + $0x2d8] sm:$0xff]
        %v590 = vld [vmem:[%s427 + $0x2e0] sm:$0xff]
        %v591 = vld [vmem:[%s427 + $0x2e8] sm:$0xff]
        %v592 = vld [vmem:[%s427 + $0x2f0] sm:$0xff]
        %v593 = vld [vmem:[%s427 + $0x2f8] sm:$0xff]
        %v594 = vld [vmem:[%s427 + $0x300] sm:$0xff]
        %v595 = vld [vmem:[%s427 + $0x308] sm:$0xff]
        %v596 = vld [vmem:[%s427 + $0x310] sm:$0xff]
        %v597 = vld [vmem:[%s427 + $0x318] sm:$0xff]
        %v598 = vld [vmem:[%s427 + $0x320] sm:$0xff]
        %v599 = vld [vmem:[%s427 + $0x328] sm:$0xff]
        %v600 = vld [vmem:[%s427 + $0x330] sm:$0xff]
        %v601 = vld [vmem:[%s427 + $0x338] sm:$0xff]
        %v602 = vld [vmem:[%s427 + $0x340] sm:$0xff]
        %v603 = vld [vmem:[%s427 + $0x348] sm:$0xff]
        %v604 = vld [vmem:[%s427 + $0x350] sm:$0xff]
        %v605 = vld [vmem:[%s427 + $0x358] sm:$0xff]
        %v606 = vld [vmem:[%s427 + $0x360] sm:$0xff]
        %v607 = vld [vmem:[%s427 + $0x368] sm:$0xff]
        %v608 = vld [vmem:[%s427 + $0x370] sm:$0xff]
        %v609 = vld [vmem:[%s427 + $0x378] sm:$0xff]
        %v610 = vld [vmem:[%s427 + $0x380] sm:$0xff]
        %v611 = vld [vmem:[%s427 + $0x388] sm:$0xff]
        %v612 = vld [vmem:[%s427 + $0x390] sm:$0xff]
        %v613 = vld [vmem:[%s427 + $0x398] sm:$0xff]
        %v614 = vld [vmem:[%s427 + $0x3a0] sm:$0xff]
        %v615 = vld [vmem:[%s427 + $0x3a8] sm:$0xff]
        %v616 = vld [vmem:[%s427 + $0x3b0] sm:$0xff]
        %v617 = vld [vmem:[%s427 + $0x3b8] sm:$0xff]
        %v618 = vld [vmem:[%s427 + $0x3c0] sm:$0xff]
        %v619 = vld [vmem:[%s427 + $0x3c8] sm:$0xff]
        %v620 = vld [vmem:[%s427 + $0x3d0] sm:$0xff]
        %v621 = vld [vmem:[%s427 + $0x3d8] sm:$0xff]
        %v622 = vld [vmem:[%s427 + $0x3e0] sm:$0xff]
        %v623 = vld [vmem:[%s427 + $0x3e8] sm:$0xff]
        %v624 = vld [vmem:[%s427 + $0x3f0] sm:$0xff]
        %v625 = vld [vmem:[%s427 + $0x3f8] sm:$0xff]
        %v626 = vld [vmem:[%s427 + $0x400] sm:$0xff]
        %v627 = vld [vmem:[%s427 + $0x408] sm:$0xff]
        %v628 = vld [vmem:[%s427 + $0x410] sm:$0xff]
        %v629 = vld [vmem:[%s427 + $0x418] sm:$0xff]
        %v630 = vld [vmem:[%s427 + $0x420] sm:$0xff]
        %v631 = vld [vmem:[%s427 + $0x428] sm:$0xff]
        %v632 = vld [vmem:[%s427 + $0x430] sm:$0xff]
        %v633 = vld [vmem:[%s427 + $0x438] sm:$0xff]
        %v634 = vld [vmem:[%s427 + $0x440] sm:$0xff]
        %v635 = vld [vmem:[%s427 + $0x448] sm:$0xff]
        %v636 = vld [vmem:[%s427 + $0x450] sm:$0xff]
        %v637 = vld [vmem:[%s427 + $0x458] sm:$0xff]
        %v638 = vld [vmem:[%s427 + $0x460] sm:$0xff]
        %v639 = vld [vmem:[%s427 + $0x468] sm:$0xff]
        %v640 = vld [vmem:[%s427 + $0x470] sm:$0xff]
        %v641 = vld [vmem:[%s427 + $0x478] sm:$0xff]
        %v642 = vld [vmem:[%s427 + $0x480] sm:$0xff]
        %v643 = vld [vmem:[%s427 + $0x488] sm:$0xff]
        %v644 = vld [vmem:[%s427 + $0x490] sm:$0xff]
        %v645 = vld [vmem:[%s427 + $0x498] sm:$0xff]
        %v646 = vld [vmem:[%s427 + $0x4a0] sm:$0xff]
        %v647 = vld [vmem:[%s427 + $0x4a8] sm:$0xff]
        %v648 = vld [vmem:[%s427 + $0x4b0] sm:$0xff]
        %v649 = vld [vmem:[%s427 + $0x4b8] sm:$0xff]
        %v650 = vld [vmem:[%s427 + $0x4c0] sm:$0xff]
        %v651 = vld [vmem:[%s427 + $0x4c8] sm:$0xff]
        %v652 = vld [vmem:[%s427 + $0x4d0] sm:$0xff]
        %v653 = vld [vmem:[%s427 + $0x4d8] sm:$0xff]
        %v654 = vld [vmem:[%s427 + $0x4e0] sm:$0xff]
        %v655 = vld [vmem:[%s427 + $0x4e8] sm:$0xff]
        %v656 = vld [vmem:[%s427 + $0x4f0] sm:$0xff]
        %v657 = vld [vmem:[%s427 + $0x4f8] sm:$0xff]
        %v658 = vld [vmem:[%s427 + $0x500] sm:$0xff]
        %v659 = vld [vmem:[%s427 + $0x508] sm:$0xff]
        %v660 = vld [vmem:[%s427 + $0x510] sm:$0xff]
        %v661 = vld [vmem:[%s427 + $0x518] sm:$0xff]
        %v662 = vld [vmem:[%s427 + $0x520] sm:$0xff]
        %v663 = vld [vmem:[%s427 + $0x528] sm:$0xff]
        %v664 = vld [vmem:[%s427 + $0x530] sm:$0xff]
        %v665 = vld [vmem:[%s427 + $0x538] sm:$0xff]
        %v666 = vld [vmem:[%s427 + $0x540] sm:$0xff]
        %v667 = vld [vmem:[%s427 + $0x548] sm:$0xff]
        %v668 = vld [vmem:[%s427 + $0x550] sm:$0xff]
        %v669 = vld [vmem:[%s427 + $0x558] sm:$0xff]
        %v670 = vld [vmem:[%s427 + $0x560] sm:$0xff]
        %v671 = vld [vmem:[%s427 + $0x568] sm:$0xff]
        %v672 = vld [vmem:[%s427 + $0x570] sm:$0xff]
        %v673 = vld [vmem:[%s427 + $0x578] sm:$0xff]
        %v674 = vld [vmem:[%s427 + $0x580] sm:$0xff]
        %v675 = vld [vmem:[%s427 + $0x588] sm:$0xff]
        %v676 = vld [vmem:[%s427 + $0x590] sm:$0xff]
        %v677 = vld [vmem:[%s427 + $0x598] sm:$0xff]
        %v678 = vld [vmem:[%s427 + $0x5a0] sm:$0xff]
        %v679 = vld [vmem:[%s427 + $0x5a8] sm:$0xff]
        %v680 = vld [vmem:[%s427 + $0x5b0] sm:$0xff]
        %v681 = vld [vmem:[%s427 + $0x5b8] sm:$0xff]
        %v682 = vld [vmem:[%s427 + $0x5c0] sm:$0xff]
        %v683 = vld [vmem:[%s427 + $0x5c8] sm:$0xff]
        %v684 = vld [vmem:[%s427 + $0x5d0] sm:$0xff]
        %v685 = vld [vmem:[%s427 + $0x5d8] sm:$0xff]
        %v686 = vld [vmem:[%s427 + $0x5e0] sm:$0xff]
        %v687 = vld [vmem:[%s427 + $0x5e8] sm:$0xff]
        %v688 = vld [vmem:[%s427 + $0x5f0] sm:$0xff]
        %v689 = vld [vmem:[%s427 + $0x5f8] sm:$0xff]
        %v690 = vld [vmem:[%s427 + $0x600] sm:$0xff]
        %v691 = vld [vmem:[%s427 + $0x608] sm:$0xff]
        %v692 = vld [vmem:[%s427 + $0x610] sm:$0xff]
        %v693 = vld [vmem:[%s427 + $0x618] sm:$0xff]
        %v694 = vld [vmem:[%s427 + $0x620] sm:$0xff]
        %v695 = vld [vmem:[%s427 + $0x628] sm:$0xff]
        %v696 = vld [vmem:[%s427 + $0x630] sm:$0xff]
        %v697 = vld [vmem:[%s427 + $0x638] sm:$0xff]
        %v698 = vld [vmem:[%s427 + $0x640] sm:$0xff]
        %v699 = vld [vmem:[%s427 + $0x648] sm:$0xff]
        %v700 = vld [vmem:[%s427 + $0x650] sm:$0xff]
        %v701 = vld [vmem:[%s427 + $0x658] sm:$0xff]
        %v702 = vld [vmem:[%s427 + $0x660] sm:$0xff]
        %v703 = vld [vmem:[%s427 + $0x668] sm:$0xff]
        %v704 = vld [vmem:[%s427 + $0x670] sm:$0xff]
        %v705 = vld [vmem:[%s427 + $0x678] sm:$0xff]
        %v706 = vld [vmem:[%s427 + $0x680] sm:$0xff]
        %v707 = vld [vmem:[%s427 + $0x688] sm:$0xff]
        %v708 = vld [vmem:[%s427 + $0x690] sm:$0xff]
        %v709 = vld [vmem:[%s427 + $0x698] sm:$0xff]
        %v710 = vld [vmem:[%s427 + $0x6a0] sm:$0xff]
        %v711 = vld [vmem:[%s427 + $0x6a8] sm:$0xff]
        %v712 = vld [vmem:[%s427 + $0x6b0] sm:$0xff]
        %v713 = vld [vmem:[%s427 + $0x6b8] sm:$0xff]
        %v714 = vld [vmem:[%s427 + $0x6c0] sm:$0xff]
        %v715 = vld [vmem:[%s427 + $0x6c8] sm:$0xff]
        %v716 = vld [vmem:[%s427 + $0x6d0] sm:$0xff]
        %v717 = vld [vmem:[%s427 + $0x6d8] sm:$0xff]
        %v718 = vld [vmem:[%s427 + $0x6e0] sm:$0xff]
        %v719 = vld [vmem:[%s427 + $0x6e8] sm:$0xff]
        %v720 = vld [vmem:[%s427 + $0x6f0] sm:$0xff]
        %v721 = vld [vmem:[%s427 + $0x6f8] sm:$0xff]
        %v722 = vld [vmem:[%s427 + $0x700] sm:$0xff]
        %v723 = vld [vmem:[%s427 + $0x708] sm:$0xff]
        %v724 = vld [vmem:[%s427 + $0x710] sm:$0xff]
        %v725 = vld [vmem:[%s427 + $0x718] sm:$0xff]
        %v726 = vld [vmem:[%s427 + $0x720] sm:$0xff]
        %v727 = vld [vmem:[%s427 + $0x728] sm:$0xff]
        %v728 = vld [vmem:[%s427 + $0x730] sm:$0xff]
        %v729 = vld [vmem:[%s427 + $0x738] sm:$0xff]
        %v730 = vld [vmem:[%s427 + $0x740] sm:$0xff]
        %v731 = vld [vmem:[%s427 + $0x748] sm:$0xff]
        %v732 = vld [vmem:[%s427 + $0x750] sm:$0xff]
        %v733 = vld [vmem:[%s427 + $0x758] sm:$0xff]
        %v734 = vld [vmem:[%s427 + $0x760] sm:$0xff]
        %v735 = vld [vmem:[%s427 + $0x768] sm:$0xff]
        %v736 = vld [vmem:[%s427 + $0x770] sm:$0xff]
        %v737 = vld [vmem:[%s427 + $0x778] sm:$0xff]
        %v738 = vld [vmem:[%s427 + $0x780] sm:$0xff]
        %v739 = vld [vmem:[%s427 + $0x788] sm:$0xff]
        %v740 = vld [vmem:[%s427 + $0x790] sm:$0xff]
        %v741 = vld [vmem:[%s427 + $0x798] sm:$0xff]
        %v742 = vld [vmem:[%s427 + $0x7a0] sm:$0xff]
        %v743 = vld [vmem:[%s427 + $0x7a8] sm:$0xff]
        %v744 = vld [vmem:[%s427 + $0x7b0] sm:$0xff]
        %v745 = vld [vmem:[%s427 + $0x7b8] sm:$0xff]
        %v746 = vld [vmem:[%s427 + $0x7c0] sm:$0xff]
        %v747 = vld [vmem:[%s427 + $0x7c8] sm:$0xff]
        %v748 = vld [vmem:[%s427 + $0x7d0] sm:$0xff]
        %v749 = vld [vmem:[%s427 + $0x7d8] sm:$0xff]
        %v750 = vld [vmem:[%s427 + $0x7e0] sm:$0xff]
        %v751 = vld [vmem:[%s427 + $0x7e8] sm:$0xff]
        %v752 = vld [vmem:[%s427 + $0x7f0] sm:$0xff]
        %v753 = vld [vmem:[%s427 + $0x7f8] sm:$0xff]
        %v754 = vld [vmem:[%s427 + $0x800] sm:$0xff]
        %v755 = vld [vmem:[%s427 + $0x808] sm:$0xff]
        %v756 = vld [vmem:[%s427 + $0x810] sm:$0xff]
        %v757 = vld [vmem:[%s427 + $0x818] sm:$0xff]
        %v758 = vld [vmem:[%s427 + $0x820] sm:$0xff]
        %v759 = vld [vmem:[%s427 + $0x828] sm:$0xff]
        %v760 = vld [vmem:[%s427 + $0x830] sm:$0xff]
        %v761 = vld [vmem:[%s427 + $0x838] sm:$0xff]
        %v762 = vld [vmem:[%s427 + $0x840] sm:$0xff]
        %v763 = vld [vmem:[%s427 + $0x848] sm:$0xff]
        %v764 = vld [vmem:[%s427 + $0x850] sm:$0xff]
        %v765 = vld [vmem:[%s427 + $0x858] sm:$0xff]
        %v766 = vld [vmem:[%s427 + $0x860] sm:$0xff]
        %v767 = vld [vmem:[%s427 + $0x868] sm:$0xff]
        %v768 = vld [vmem:[%s427 + $0x870] sm:$0xff]
        %v769 = vld [vmem:[%s427 + $0x878] sm:$0xff]
        %v770 = vld [vmem:[%s427 + $0x880] sm:$0xff]
        %v771 = vld [vmem:[%s427 + $0x888] sm:$0xff]
        %v772 = vld [vmem:[%s427 + $0x890] sm:$0xff]
        %v773 = vld [vmem:[%s427 + $0x898] sm:$0xff]
        %v774 = vld [vmem:[%s427 + $0x8a0] sm:$0xff]
        %v775 = vld [vmem:[%s427 + $0x8a8] sm:$0xff]
        %v776 = vld [vmem:[%s427 + $0x8b0] sm:$0xff]
        %v777 = vld [vmem:[%s427 + $0x8b8] sm:$0xff]
        %v778 = vld [vmem:[%s427 + $0x8c0] sm:$0xff]
        %v779 = vld [vmem:[%s427 + $0x8c8] sm:$0xff]
        %v780 = vld [vmem:[%s427 + $0x8d0] sm:$0xff]
        %v781 = vld [vmem:[%s427 + $0x8d8] sm:$0xff]
        %v782 = vld [vmem:[%s427 + $0x8e0] sm:$0xff]
        %v783 = vld [vmem:[%s427 + $0x8e8] sm:$0xff]
        %v784 = vld [vmem:[%s427 + $0x8f0] sm:$0xff]
        %v785 = vld [vmem:[%s427 + $0x8f8] sm:$0xff]
        %v786 = vld [vmem:[%s427 + $0x900] sm:$0xff]
        %v787 = vld [vmem:[%s427 + $0x908] sm:$0xff]
        %v788 = vld [vmem:[%s427 + $0x910] sm:$0xff]
        %v789 = vld [vmem:[%s427 + $0x918] sm:$0xff]
        %v790 = vld [vmem:[%s427 + $0x920] sm:$0xff]
        %v791 = vld [vmem:[%s427 + $0x928] sm:$0xff]
        %v792 = vld [vmem:[%s427 + $0x930] sm:$0xff]
        %v793 = vld [vmem:[%s427 + $0x938] sm:$0xff]
        %v794 = vld [vmem:[%s427 + $0x940] sm:$0xff]
        %v795 = vld [vmem:[%s427 + $0x948] sm:$0xff]
        %v796 = vld [vmem:[%s427 + $0x950] sm:$0xff]
        %v797 = vld [vmem:[%s427 + $0x958] sm:$0xff]
        %v798 = vld [vmem:[%s427 + $0x960] sm:$0xff]
        %v799 = vld [vmem:[%s427 + $0x968] sm:$0xff]
        %v800 = vld [vmem:[%s427 + $0x970] sm:$0xff]
        %v801 = vld [vmem:[%s427 + $0x978] sm:$0xff]
        %v802 = vld [vmem:[%s427 + $0x980] sm:$0xff]
        %v803 = vld [vmem:[%s427 + $0x988] sm:$0xff]
        %v804 = vld [vmem:[%s427 + $0x990] sm:$0xff]
        %v805 = vld [vmem:[%s427 + $0x998] sm:$0xff]
        %v806 = vld [vmem:[%s427 + $0x9a0] sm:$0xff]
        %v807 = vld [vmem:[%s427 + $0x9a8] sm:$0xff]
        %v808 = vld [vmem:[%s427 + $0x9b0] sm:$0xff]
        %v809 = vld [vmem:[%s427 + $0x9b8] sm:$0xff]
        %v810 = vld [vmem:[%s427 + $0x9c0] sm:$0xff]
        %v811 = vld [vmem:[%s427 + $0x9c8] sm:$0xff]
        %v812 = vld [vmem:[%s427 + $0x9d0] sm:$0xff]
        %v813 = vld [vmem:[%s427 + $0x9d8] sm:$0xff]
        %v814 = vld [vmem:[%s427 + $0x9e0] sm:$0xff]
        %v815 = vld [vmem:[%s427 + $0x9e8] sm:$0xff]
        %v816 = vld [vmem:[%s427 + $0x9f0] sm:$0xff]
        %v817 = vld [vmem:[%s427 + $0x9f8] sm:$0xff]
        %v818 = vld [vmem:[%s427 + $0xa00] sm:$0xff]
        %v819 = vld [vmem:[%s427 + $0xa08] sm:$0xff]
        %v820 = vld [vmem:[%s427 + $0xa10] sm:$0xff]
        %v821 = vld [vmem:[%s427 + $0xa18] sm:$0xff]
        %v822 = vld [vmem:[%s427 + $0xa20] sm:$0xff]
        %v823 = vld [vmem:[%s427 + $0xa28] sm:$0xff]
        %v824 = vld [vmem:[%s427 + $0xa30] sm:$0xff]
        %v825 = vld [vmem:[%s427 + $0xa38] sm:$0xff]
        %v826 = vld [vmem:[%s427 + $0xa40] sm:$0xff]
        %v827 = vld [vmem:[%s427 + $0xa48] sm:$0xff]
        %v828 = vld [vmem:[%s427 + $0xa50] sm:$0xff]
        %v829 = vld [vmem:[%s427 + $0xa58] sm:$0xff]
        %v830 = vld [vmem:[%s427 + $0xa60] sm:$0xff]
        %v831 = vld [vmem:[%s427 + $0xa68] sm:$0xff]
        %v832 = vld [vmem:[%s427 + $0xa70] sm:$0xff]
        %v833 = vld [vmem:[%s427 + $0xa78] sm:$0xff]
        %v834 = vld [vmem:[%s427 + $0xa80] sm:$0xff]
        %v835 = vld [vmem:[%s427 + $0xa88] sm:$0xff]
        %v836 = vld [vmem:[%s427 + $0xa90] sm:$0xff]
        %v837 = vld [vmem:[%s427 + $0xa98] sm:$0xff]
        %v838 = vld [vmem:[%s427 + $0xaa0] sm:$0xff]
        %v839 = vld [vmem:[%s427 + $0xaa8] sm:$0xff]
        %v840 = vld [vmem:[%s427 + $0xab0] sm:$0xff]
        %v841 = vld [vmem:[%s427 + $0xab8] sm:$0xff]
        %v842 = vld [vmem:[%s427 + $0xac0] sm:$0xff]
        %v843 = vld [vmem:[%s427 + $0xac8] sm:$0xff]
        %v844 = vld [vmem:[%s427 + $0xad0] sm:$0xff]
        %v845 = vld [vmem:[%s427 + $0xad8] sm:$0xff]
        %v846 = vld [vmem:[%s427 + $0xae0] sm:$0xff]
        %v847 = vld [vmem:[%s427 + $0xae8] sm:$0xff]
        %v848 = vld [vmem:[%s427 + $0xaf0] sm:$0xff]
        %v849 = vld [vmem:[%s427 + $0xaf8] sm:$0xff]
        %v850 = vld [vmem:[%s427 + $0xb00] sm:$0xff]
        %v851 = vld [vmem:[%s427 + $0xb08] sm:$0xff]
        %v852 = vld [vmem:[%s427 + $0xb10] sm:$0xff]
        %v853 = vld [vmem:[%s427 + $0xb18] sm:$0xff]
        %v854 = vld [vmem:[%s427 + $0xb20] sm:$0xff]
        %v855 = vld [vmem:[%s427 + $0xb28] sm:$0xff]
        %v856 = vld [vmem:[%s427 + $0xb30] sm:$0xff]
        %v857 = vld [vmem:[%s427 + $0xb38] sm:$0xff]
        %v858 = vld [vmem:[%s427 + $0xb40] sm:$0xff]
        %v859 = vld [vmem:[%s427 + $0xb48] sm:$0xff]
        %v860 = vld [vmem:[%s427 + $0xb50] sm:$0xff]
        %v861 = vld [vmem:[%s427 + $0xb58] sm:$0xff]
        %v862 = vld [vmem:[%s427 + $0xb60] sm:$0xff]
        %v863 = vld [vmem:[%s427 + $0xb68] sm:$0xff]
        %v864 = vld [vmem:[%s427 + $0xb70] sm:$0xff]
        %v865 = vld [vmem:[%s427 + $0xb78] sm:$0xff]
        %v866 = vld [vmem:[%s427 + $0xb80] sm:$0xff]
        %v867 = vld [vmem:[%s427 + $0xb88] sm:$0xff]
        %v868 = vld [vmem:[%s427 + $0xb90] sm:$0xff]
        %v869 = vld [vmem:[%s427 + $0xb98] sm:$0xff]
        %v870 = vld [vmem:[%s427 + $0xba0] sm:$0xff]
        %v871 = vld [vmem:[%s427 + $0xba8] sm:$0xff]
        %v872 = vld [vmem:[%s427 + $0xbb0] sm:$0xff]
        %v873 = vld [vmem:[%s427 + $0xbb8] sm:$0xff]
        %v874 = vld [vmem:[%s427 + $0xbc0] sm:$0xff]
        %v875 = vld [vmem:[%s427 + $0xbc8] sm:$0xff]
        %v876 = vld [vmem:[%s427 + $0xbd0] sm:$0xff]
        %v877 = vld [vmem:[%s427 + $0xbd8] sm:$0xff]
        %v878 = vld [vmem:[%s427 + $0xbe0] sm:$0xff]
        %v879 = vld [vmem:[%s427 + $0xbe8] sm:$0xff]
        %v880 = vld [vmem:[%s427 + $0xbf0] sm:$0xff]
        %v881 = vld [vmem:[%s427 + $0xbf8] sm:$0xff]
        %v882 = vunpack.c.0.s8 %v498
        %v883 = vunpack.c.0.s8 %v499
        %v884 = vunpack.c.1.s8 %v498
        %v885 = vunpack.c.1.s8 %v499
        %v886 = vunpack.c.2.s8 %v498
        %v887 = vunpack.c.2.s8 %v499
        %v888 = vunpack.c.3.s8 %v498
        %v889 = vunpack.c.3.s8 %v499
        %v890 = vunpack.c.0.s8 %v500
        %v891 = vunpack.c.0.s8 %v501
        %v892 = vunpack.c.1.s8 %v500
        %v893 = vunpack.c.1.s8 %v501
        %v894 = vunpack.c.2.s8 %v500
        %v895 = vunpack.c.2.s8 %v501
        %v896 = vunpack.c.3.s8 %v500
        %v897 = vunpack.c.3.s8 %v501
        %v898 = vunpack.c.0.s8 %v502
        %v899 = vunpack.c.0.s8 %v503
        %v900 = vunpack.c.1.s8 %v502
        %v901 = vunpack.c.1.s8 %v503
        %v902 = vunpack.c.2.s8 %v502
        %v903 = vunpack.c.2.s8 %v503
        %v904 = vunpack.c.3.s8 %v502
        %v905 = vunpack.c.3.s8 %v503
        %v906 = vunpack.c.0.s8 %v504
        %v907 = vunpack.c.0.s8 %v505
        %v908 = vunpack.c.1.s8 %v504
        %v909 = vunpack.c.1.s8 %v505
        %v910 = vunpack.c.2.s8 %v504
        %v911 = vunpack.c.2.s8 %v505
        %v912 = vunpack.c.3.s8 %v504
        %v913 = vunpack.c.3.s8 %v505
        %v914 = vunpack.c.0.s8 %v506
        %v915 = vunpack.c.0.s8 %v507
        %v916 = vunpack.c.1.s8 %v506
        %v917 = vunpack.c.1.s8 %v507
        %v918 = vunpack.c.2.s8 %v506
        %v919 = vunpack.c.2.s8 %v507
        %v920 = vunpack.c.3.s8 %v506
        %v921 = vunpack.c.3.s8 %v507
        %v922 = vunpack.c.0.s8 %v508
        %v923 = vunpack.c.0.s8 %v509
        %v924 = vunpack.c.1.s8 %v508
        %v925 = vunpack.c.1.s8 %v509
        %v926 = vunpack.c.2.s8 %v508
        %v927 = vunpack.c.2.s8 %v509
        %v928 = vunpack.c.3.s8 %v508
        %v929 = vunpack.c.3.s8 %v509
        %v930 = vunpack.c.0.s8 %v510
        %v931 = vunpack.c.0.s8 %v511
        %v932 = vunpack.c.1.s8 %v510
        %v933 = vunpack.c.1.s8 %v511
        %v934 = vunpack.c.2.s8 %v510
        %v935 = vunpack.c.2.s8 %v511
        %v936 = vunpack.c.3.s8 %v510
        %v937 = vunpack.c.3.s8 %v511
        %v938 = vunpack.c.0.s8 %v512
        %v939 = vunpack.c.0.s8 %v513
        %v940 = vunpack.c.1.s8 %v512
        %v941 = vunpack.c.1.s8 %v513
        %v942 = vunpack.c.2.s8 %v512
        %v943 = vunpack.c.2.s8 %v513
        %v944 = vunpack.c.3.s8 %v512
        %v945 = vunpack.c.3.s8 %v513
        %v946 = vunpack.c.0.s8 %v514
        %v947 = vunpack.c.0.s8 %v515
        %v948 = vunpack.c.1.s8 %v514
        %v949 = vunpack.c.1.s8 %v515
        %v950 = vunpack.c.2.s8 %v514
        %v951 = vunpack.c.2.s8 %v515
        %v952 = vunpack.c.3.s8 %v514
        %v953 = vunpack.c.3.s8 %v515
        %v954 = vunpack.c.0.s8 %v516
        %v955 = vunpack.c.0.s8 %v517
        %v956 = vunpack.c.1.s8 %v516
        %v957 = vunpack.c.1.s8 %v517
        %v958 = vunpack.c.2.s8 %v516
        %v959 = vunpack.c.2.s8 %v517
        %v960 = vunpack.c.3.s8 %v516
        %v961 = vunpack.c.3.s8 %v517
        %v962 = vunpack.c.0.s8 %v518
        %v963 = vunpack.c.0.s8 %v519
        %v964 = vunpack.c.1.s8 %v518
        %v965 = vunpack.c.1.s8 %v519
        %v966 = vunpack.c.2.s8 %v518
        %v967 = vunpack.c.2.s8 %v519
        %v968 = vunpack.c.3.s8 %v518
        %v969 = vunpack.c.3.s8 %v519
        %v970 = vunpack.c.0.s8 %v520
        %v971 = vunpack.c.0.s8 %v521
        %v972 = vunpack.c.1.s8 %v520
        %v973 = vunpack.c.1.s8 %v521
        %v974 = vunpack.c.2.s8 %v520
        %v975 = vunpack.c.2.s8 %v521
        %v976 = vunpack.c.3.s8 %v520
        %v977 = vunpack.c.3.s8 %v521
        %v978 = vunpack.c.0.s8 %v522
        %v979 = vunpack.c.0.s8 %v523
        %v980 = vunpack.c.1.s8 %v522
        %v981 = vunpack.c.1.s8 %v523
        %v982 = vunpack.c.2.s8 %v522
        %v983 = vunpack.c.2.s8 %v523
        %v984 = vunpack.c.3.s8 %v522
        %v985 = vunpack.c.3.s8 %v523
        %v986 = vunpack.c.0.s8 %v524
        %v987 = vunpack.c.0.s8 %v525
        %v988 = vunpack.c.1.s8 %v524
        %v989 = vunpack.c.1.s8 %v525
        %v990 = vunpack.c.2.s8 %v524
        %v991 = vunpack.c.2.s8 %v525
        %v992 = vunpack.c.3.s8 %v524
        %v993 = vunpack.c.3.s8 %v525
        %v994 = vunpack.c.0.s8 %v526
        %v995 = vunpack.c.0.s8 %v527
        %v996 = vunpack.c.1.s8 %v526
        %v997 = vunpack.c.1.s8 %v527
        %v998 = vunpack.c.2.s8 %v526
        %v999 = vunpack.c.2.s8 %v527
        %v1000 = vunpack.c.3.s8 %v526
        %v1001 = vunpack.c.3.s8 %v527
        %v1002 = vunpack.c.0.s8 %v528
        %v1003 = vunpack.c.0.s8 %v529
        %v1004 = vunpack.c.1.s8 %v528
        %v1005 = vunpack.c.1.s8 %v529
        %v1006 = vunpack.c.2.s8 %v528
        %v1007 = vunpack.c.2.s8 %v529
        %v1008 = vunpack.c.3.s8 %v528
        %v1009 = vunpack.c.3.s8 %v529
        %v1010 = vunpack.c.0.s8 %v530
        %v1011 = vunpack.c.0.s8 %v531
        %v1012 = vunpack.c.1.s8 %v530
        %v1013 = vunpack.c.1.s8 %v531
        %v1014 = vunpack.c.2.s8 %v530
        %v1015 = vunpack.c.2.s8 %v531
        %v1016 = vunpack.c.3.s8 %v530
        %v1017 = vunpack.c.3.s8 %v531
        %v1018 = vunpack.c.0.s8 %v532
        %v1019 = vunpack.c.0.s8 %v533
        %v1020 = vunpack.c.1.s8 %v532
        %v1021 = vunpack.c.1.s8 %v533
        %v1022 = vunpack.c.2.s8 %v532
        %v1023 = vunpack.c.2.s8 %v533
        %v1024 = vunpack.c.3.s8 %v532
        %v1025 = vunpack.c.3.s8 %v533
        %v1026 = vunpack.c.0.s8 %v534
        %v1027 = vunpack.c.0.s8 %v535
        %v1028 = vunpack.c.1.s8 %v534
        %v1029 = vunpack.c.1.s8 %v535
        %v1030 = vunpack.c.2.s8 %v534
        %v1031 = vunpack.c.2.s8 %v535
        %v1032 = vunpack.c.3.s8 %v534
        %v1033 = vunpack.c.3.s8 %v535
        %v1034 = vunpack.c.0.s8 %v536
        %v1035 = vunpack.c.0.s8 %v537
        %v1036 = vunpack.c.1.s8 %v536
        %v1037 = vunpack.c.1.s8 %v537
        %v1038 = vunpack.c.2.s8 %v536
        %v1039 = vunpack.c.2.s8 %v537
        %v1040 = vunpack.c.3.s8 %v536
        %v1041 = vunpack.c.3.s8 %v537
        %v1042 = vunpack.c.0.s8 %v538
        %v1043 = vunpack.c.0.s8 %v539
        %v1044 = vunpack.c.1.s8 %v538
        %v1045 = vunpack.c.1.s8 %v539
        %v1046 = vunpack.c.2.s8 %v538
        %v1047 = vunpack.c.2.s8 %v539
        %v1048 = vunpack.c.3.s8 %v538
        %v1049 = vunpack.c.3.s8 %v539
        %v1050 = vunpack.c.0.s8 %v540
        %v1051 = vunpack.c.0.s8 %v541
        %v1052 = vunpack.c.1.s8 %v540
        %v1053 = vunpack.c.1.s8 %v541
        %v1054 = vunpack.c.2.s8 %v540
        %v1055 = vunpack.c.2.s8 %v541
        %v1056 = vunpack.c.3.s8 %v540
        %v1057 = vunpack.c.3.s8 %v541
        %v1058 = vunpack.c.0.s8 %v542
        %v1059 = vunpack.c.0.s8 %v543
        %v1060 = vunpack.c.1.s8 %v542
        %v1061 = vunpack.c.1.s8 %v543
        %v1062 = vunpack.c.2.s8 %v542
        %v1063 = vunpack.c.2.s8 %v543
        %v1064 = vunpack.c.3.s8 %v542
        %v1065 = vunpack.c.3.s8 %v543
        %v1066 = vunpack.c.0.s8 %v544
        %v1067 = vunpack.c.0.s8 %v545
        %v1068 = vunpack.c.1.s8 %v544
        %v1069 = vunpack.c.1.s8 %v545
        %v1070 = vunpack.c.2.s8 %v544
        %v1071 = vunpack.c.2.s8 %v545
        %v1072 = vunpack.c.3.s8 %v544
        %v1073 = vunpack.c.3.s8 %v545
        %v1074 = vunpack.c.0.s8 %v546
        %v1075 = vunpack.c.0.s8 %v547
        %v1076 = vunpack.c.1.s8 %v546
        %v1077 = vunpack.c.1.s8 %v547
        %v1078 = vunpack.c.2.s8 %v546
        %v1079 = vunpack.c.2.s8 %v547
        %v1080 = vunpack.c.3.s8 %v546
        %v1081 = vunpack.c.3.s8 %v547
        %v1082 = vunpack.c.0.s8 %v548
        %v1083 = vunpack.c.0.s8 %v549
        %v1084 = vunpack.c.1.s8 %v548
        %v1085 = vunpack.c.1.s8 %v549
        %v1086 = vunpack.c.2.s8 %v548
        %v1087 = vunpack.c.2.s8 %v549
        %v1088 = vunpack.c.3.s8 %v548
        %v1089 = vunpack.c.3.s8 %v549
        %v1090 = vunpack.c.0.s8 %v550
        %v1091 = vunpack.c.0.s8 %v551
        %v1092 = vunpack.c.1.s8 %v550
        %v1093 = vunpack.c.1.s8 %v551
        %v1094 = vunpack.c.2.s8 %v550
        %v1095 = vunpack.c.2.s8 %v551
        %v1096 = vunpack.c.3.s8 %v550
        %v1097 = vunpack.c.3.s8 %v551
        %v1098 = vunpack.c.0.s8 %v552
        %v1099 = vunpack.c.0.s8 %v553
        %v1100 = vunpack.c.1.s8 %v552
        %v1101 = vunpack.c.1.s8 %v553
        %v1102 = vunpack.c.2.s8 %v552
        %v1103 = vunpack.c.2.s8 %v553
        %v1104 = vunpack.c.3.s8 %v552
        %v1105 = vunpack.c.3.s8 %v553
        %v1106 = vunpack.c.0.s8 %v554
        %v1107 = vunpack.c.0.s8 %v555
        %v1108 = vunpack.c.1.s8 %v554
        %v1109 = vunpack.c.1.s8 %v555
        %v1110 = vunpack.c.2.s8 %v554
        %v1111 = vunpack.c.2.s8 %v555
        %v1112 = vunpack.c.3.s8 %v554
        %v1113 = vunpack.c.3.s8 %v555
        %v1114 = vunpack.c.0.s8 %v556
        %v1115 = vunpack.c.0.s8 %v557
        %v1116 = vunpack.c.1.s8 %v556
        %v1117 = vunpack.c.1.s8 %v557
        %v1118 = vunpack.c.2.s8 %v556
        %v1119 = vunpack.c.2.s8 %v557
        %v1120 = vunpack.c.3.s8 %v556
        %v1121 = vunpack.c.3.s8 %v557
        %v1122 = vunpack.c.0.s8 %v558
        %v1123 = vunpack.c.0.s8 %v559
        %v1124 = vunpack.c.1.s8 %v558
        %v1125 = vunpack.c.1.s8 %v559
        %v1126 = vunpack.c.2.s8 %v558
        %v1127 = vunpack.c.2.s8 %v559
        %v1128 = vunpack.c.3.s8 %v558
        %v1129 = vunpack.c.3.s8 %v559
        %v1130 = vunpack.c.0.s8 %v560
        %v1131 = vunpack.c.0.s8 %v561
        %v1132 = vunpack.c.1.s8 %v560
        %v1133 = vunpack.c.1.s8 %v561
        %v1134 = vunpack.c.2.s8 %v560
        %v1135 = vunpack.c.2.s8 %v561
        %v1136 = vunpack.c.3.s8 %v560
        %v1137 = vunpack.c.3.s8 %v561
        %v1138 = vunpack.c.0.s8 %v562
        %v1139 = vunpack.c.0.s8 %v563
        %v1140 = vunpack.c.1.s8 %v562
        %v1141 = vunpack.c.1.s8 %v563
        %v1142 = vunpack.c.2.s8 %v562
        %v1143 = vunpack.c.2.s8 %v563
        %v1144 = vunpack.c.3.s8 %v562
        %v1145 = vunpack.c.3.s8 %v563
        %v1146 = vunpack.c.0.s8 %v564
        %v1147 = vunpack.c.0.s8 %v565
        %v1148 = vunpack.c.1.s8 %v564
        %v1149 = vunpack.c.1.s8 %v565
        %v1150 = vunpack.c.2.s8 %v564
        %v1151 = vunpack.c.2.s8 %v565
        %v1152 = vunpack.c.3.s8 %v564
        %v1153 = vunpack.c.3.s8 %v565
        %v1154 = vunpack.c.0.s8 %v566
        %v1155 = vunpack.c.0.s8 %v567
        %v1156 = vunpack.c.1.s8 %v566
        %v1157 = vunpack.c.1.s8 %v567
        %v1158 = vunpack.c.2.s8 %v566
        %v1159 = vunpack.c.2.s8 %v567
        %v1160 = vunpack.c.3.s8 %v566
        %v1161 = vunpack.c.3.s8 %v567
        %v1162 = vunpack.c.0.s8 %v568
        %v1163 = vunpack.c.0.s8 %v569
        %v1164 = vunpack.c.1.s8 %v568
        %v1165 = vunpack.c.1.s8 %v569
        %v1166 = vunpack.c.2.s8 %v568
        %v1167 = vunpack.c.2.s8 %v569
        %v1168 = vunpack.c.3.s8 %v568
        %v1169 = vunpack.c.3.s8 %v569
        %v1170 = vunpack.c.0.s8 %v570
        %v1171 = vunpack.c.0.s8 %v571
        %v1172 = vunpack.c.1.s8 %v570
        %v1173 = vunpack.c.1.s8 %v571
        %v1174 = vunpack.c.2.s8 %v570
        %v1175 = vunpack.c.2.s8 %v571
        %v1176 = vunpack.c.3.s8 %v570
        %v1177 = vunpack.c.3.s8 %v571
        %v1178 = vunpack.c.0.s8 %v572
        %v1179 = vunpack.c.0.s8 %v573
        %v1180 = vunpack.c.1.s8 %v572
        %v1181 = vunpack.c.1.s8 %v573
        %v1182 = vunpack.c.2.s8 %v572
        %v1183 = vunpack.c.2.s8 %v573
        %v1184 = vunpack.c.3.s8 %v572
        %v1185 = vunpack.c.3.s8 %v573
        %v1186 = vunpack.c.0.s8 %v574
        %v1187 = vunpack.c.0.s8 %v575
        %v1188 = vunpack.c.1.s8 %v574
        %v1189 = vunpack.c.1.s8 %v575
        %v1190 = vunpack.c.2.s8 %v574
        %v1191 = vunpack.c.2.s8 %v575
        %v1192 = vunpack.c.3.s8 %v574
        %v1193 = vunpack.c.3.s8 %v575
        %v1194 = vunpack.c.0.s8 %v576
        %v1195 = vunpack.c.0.s8 %v577
        %v1196 = vunpack.c.1.s8 %v576
        %v1197 = vunpack.c.1.s8 %v577
        %v1198 = vunpack.c.2.s8 %v576
        %v1199 = vunpack.c.2.s8 %v577
        %v1200 = vunpack.c.3.s8 %v576
        %v1201 = vunpack.c.3.s8 %v577
        %v1202 = vunpack.c.0.s8 %v578
        %v1203 = vunpack.c.0.s8 %v579
        %v1204 = vunpack.c.1.s8 %v578
        %v1205 = vunpack.c.1.s8 %v579
        %v1206 = vunpack.c.2.s8 %v578
        %v1207 = vunpack.c.2.s8 %v579
        %v1208 = vunpack.c.3.s8 %v578
        %v1209 = vunpack.c.3.s8 %v579
        %v1210 = vunpack.c.0.s8 %v580
        %v1211 = vunpack.c.0.s8 %v581
        %v1212 = vunpack.c.1.s8 %v580
        %v1213 = vunpack.c.1.s8 %v581
        %v1214 = vunpack.c.2.s8 %v580
        %v1215 = vunpack.c.2.s8 %v581
        %v1216 = vunpack.c.3.s8 %v580
        %v1217 = vunpack.c.3.s8 %v581
        %v1218 = vunpack.c.0.s8 %v582
        %v1219 = vunpack.c.0.s8 %v583
        %v1220 = vunpack.c.1.s8 %v582
        %v1221 = vunpack.c.1.s8 %v583
        %v1222 = vunpack.c.2.s8 %v582
        %v1223 = vunpack.c.2.s8 %v583
        %v1224 = vunpack.c.3.s8 %v582
        %v1225 = vunpack.c.3.s8 %v583
        %v1226 = vunpack.c.0.s8 %v584
        %v1227 = vunpack.c.0.s8 %v585
        %v1228 = vunpack.c.1.s8 %v584
        %v1229 = vunpack.c.1.s8 %v585
        %v1230 = vunpack.c.2.s8 %v584
        %v1231 = vunpack.c.2.s8 %v585
        %v1232 = vunpack.c.3.s8 %v584
        %v1233 = vunpack.c.3.s8 %v585
        %v1234 = vunpack.c.0.s8 %v586
        %v1235 = vunpack.c.0.s8 %v587
        %v1236 = vunpack.c.1.s8 %v586
        %v1237 = vunpack.c.1.s8 %v587
        %v1238 = vunpack.c.2.s8 %v586
        %v1239 = vunpack.c.2.s8 %v587
        %v1240 = vunpack.c.3.s8 %v586
        %v1241 = vunpack.c.3.s8 %v587
        %v1242 = vunpack.c.0.s8 %v588
        %v1243 = vunpack.c.0.s8 %v589
        %v1244 = vunpack.c.1.s8 %v588
        %v1245 = vunpack.c.1.s8 %v589
        %v1246 = vunpack.c.2.s8 %v588
        %v1247 = vunpack.c.2.s8 %v589
        %v1248 = vunpack.c.3.s8 %v588
        %v1249 = vunpack.c.3.s8 %v589
        %v1250 = vunpack.c.0.s8 %v590
        %v1251 = vunpack.c.0.s8 %v591
        %v1252 = vunpack.c.1.s8 %v590
        %v1253 = vunpack.c.1.s8 %v591
        %v1254 = vunpack.c.2.s8 %v590
        %v1255 = vunpack.c.2.s8 %v591
        %v1256 = vunpack.c.3.s8 %v590
        %v1257 = vunpack.c.3.s8 %v591
        %v1258 = vunpack.c.0.s8 %v592
        %v1259 = vunpack.c.0.s8 %v593
        %v1260 = vunpack.c.1.s8 %v592
        %v1261 = vunpack.c.1.s8 %v593
        %v1262 = vunpack.c.2.s8 %v592
        %v1263 = vunpack.c.2.s8 %v593
        %v1264 = vunpack.c.3.s8 %v592
        %v1265 = vunpack.c.3.s8 %v593
        %v1266 = vunpack.c.0.s8 %v594
        %v1267 = vunpack.c.0.s8 %v595
        %v1268 = vunpack.c.1.s8 %v594
        %v1269 = vunpack.c.1.s8 %v595
        %v1270 = vunpack.c.2.s8 %v594
        %v1271 = vunpack.c.2.s8 %v595
        %v1272 = vunpack.c.3.s8 %v594
        %v1273 = vunpack.c.3.s8 %v595
        %v1274 = vunpack.c.0.s8 %v596
        %v1275 = vunpack.c.0.s8 %v597
        %v1276 = vunpack.c.1.s8 %v596
        %v1277 = vunpack.c.1.s8 %v597
        %v1278 = vunpack.c.2.s8 %v596
        %v1279 = vunpack.c.2.s8 %v597
        %v1280 = vunpack.c.3.s8 %v596
        %v1281 = vunpack.c.3.s8 %v597
        %v1282 = vunpack.c.0.s8 %v598
        %v1283 = vunpack.c.0.s8 %v599
        %v1284 = vunpack.c.1.s8 %v598
        %v1285 = vunpack.c.1.s8 %v599
        %v1286 = vunpack.c.2.s8 %v598
        %v1287 = vunpack.c.2.s8 %v599
        %v1288 = vunpack.c.3.s8 %v598
        %v1289 = vunpack.c.3.s8 %v599
        %v1290 = vunpack.c.0.s8 %v600
        %v1291 = vunpack.c.0.s8 %v601
        %v1292 = vunpack.c.1.s8 %v600
        %v1293 = vunpack.c.1.s8 %v601
        %v1294 = vunpack.c.2.s8 %v600
        %v1295 = vunpack.c.2.s8 %v601
        %v1296 = vunpack.c.3.s8 %v600
        %v1297 = vunpack.c.3.s8 %v601
        %v1298 = vunpack.c.0.s8 %v602
        %v1299 = vunpack.c.0.s8 %v603
        %v1300 = vunpack.c.1.s8 %v602
        %v1301 = vunpack.c.1.s8 %v603
        %v1302 = vunpack.c.2.s8 %v602
        %v1303 = vunpack.c.2.s8 %v603
        %v1304 = vunpack.c.3.s8 %v602
        %v1305 = vunpack.c.3.s8 %v603
        %v1306 = vunpack.c.0.s8 %v604
        %v1307 = vunpack.c.0.s8 %v605
        %v1308 = vunpack.c.1.s8 %v604
        %v1309 = vunpack.c.1.s8 %v605
        %v1310 = vunpack.c.2.s8 %v604
        %v1311 = vunpack.c.2.s8 %v605
        %v1312 = vunpack.c.3.s8 %v604
        %v1313 = vunpack.c.3.s8 %v605
        %v1314 = vunpack.c.0.s8 %v606
        %v1315 = vunpack.c.0.s8 %v607
        %v1316 = vunpack.c.1.s8 %v606
        %v1317 = vunpack.c.1.s8 %v607
        %v1318 = vunpack.c.2.s8 %v606
        %v1319 = vunpack.c.2.s8 %v607
        %v1320 = vunpack.c.3.s8 %v606
        %v1321 = vunpack.c.3.s8 %v607
        %v1322 = vunpack.c.0.s8 %v608
        %v1323 = vunpack.c.0.s8 %v609
        %v1324 = vunpack.c.1.s8 %v608
        %v1325 = vunpack.c.1.s8 %v609
        %v1326 = vunpack.c.2.s8 %v608
        %v1327 = vunpack.c.2.s8 %v609
        %v1328 = vunpack.c.3.s8 %v608
        %v1329 = vunpack.c.3.s8 %v609
        %v1330 = vunpack.c.0.s8 %v610
        %v1331 = vunpack.c.0.s8 %v611
        %v1332 = vunpack.c.1.s8 %v610
        %v1333 = vunpack.c.1.s8 %v611
        %v1334 = vunpack.c.2.s8 %v610
        %v1335 = vunpack.c.2.s8 %v611
        %v1336 = vunpack.c.3.s8 %v610
        %v1337 = vunpack.c.3.s8 %v611
        %v1338 = vunpack.c.0.s8 %v612
        %v1339 = vunpack.c.0.s8 %v613
        %v1340 = vunpack.c.1.s8 %v612
        %v1341 = vunpack.c.1.s8 %v613
        %v1342 = vunpack.c.2.s8 %v612
        %v1343 = vunpack.c.2.s8 %v613
        %v1344 = vunpack.c.3.s8 %v612
        %v1345 = vunpack.c.3.s8 %v613
        %v1346 = vunpack.c.0.s8 %v614
        %v1347 = vunpack.c.0.s8 %v615
        %v1348 = vunpack.c.1.s8 %v614
        %v1349 = vunpack.c.1.s8 %v615
        %v1350 = vunpack.c.2.s8 %v614
        %v1351 = vunpack.c.2.s8 %v615
        %v1352 = vunpack.c.3.s8 %v614
        %v1353 = vunpack.c.3.s8 %v615
        %v1354 = vunpack.c.0.s8 %v616
        %v1355 = vunpack.c.0.s8 %v617
        %v1356 = vunpack.c.1.s8 %v616
        %v1357 = vunpack.c.1.s8 %v617
        %v1358 = vunpack.c.2.s8 %v616
        %v1359 = vunpack.c.2.s8 %v617
        %v1360 = vunpack.c.3.s8 %v616
        %v1361 = vunpack.c.3.s8 %v617
        %v1362 = vunpack.c.0.s8 %v618
        %v1363 = vunpack.c.0.s8 %v619
        %v1364 = vunpack.c.1.s8 %v618
        %v1365 = vunpack.c.1.s8 %v619
        %v1366 = vunpack.c.2.s8 %v618
        %v1367 = vunpack.c.2.s8 %v619
        %v1368 = vunpack.c.3.s8 %v618
        %v1369 = vunpack.c.3.s8 %v619
        %v1370 = vunpack.c.0.s8 %v620
        %v1371 = vunpack.c.0.s8 %v621
        %v1372 = vunpack.c.1.s8 %v620
        %v1373 = vunpack.c.1.s8 %v621
        %v1374 = vunpack.c.2.s8 %v620
        %v1375 = vunpack.c.2.s8 %v621
        %v1376 = vunpack.c.3.s8 %v620
        %v1377 = vunpack.c.3.s8 %v621
        %v1378 = vunpack.c.0.s8 %v622
        %v1379 = vunpack.c.0.s8 %v623
        %v1380 = vunpack.c.1.s8 %v622
        %v1381 = vunpack.c.1.s8 %v623
        %v1382 = vunpack.c.2.s8 %v622
        %v1383 = vunpack.c.2.s8 %v623
        %v1384 = vunpack.c.3.s8 %v622
        %v1385 = vunpack.c.3.s8 %v623
        %v1386 = vunpack.c.0.s8 %v624
        %v1387 = vunpack.c.0.s8 %v625
        %v1388 = vunpack.c.1.s8 %v624
        %v1389 = vunpack.c.1.s8 %v625
        %v1390 = vunpack.c.2.s8 %v624
        %v1391 = vunpack.c.2.s8 %v625
        %v1392 = vunpack.c.3.s8 %v624
        %v1393 = vunpack.c.3.s8 %v625
        %v1394 = vunpack.c.0.s8 %v626
        %v1395 = vunpack.c.0.s8 %v627
        %v1396 = vunpack.c.1.s8 %v626
        %v1397 = vunpack.c.1.s8 %v627
        %v1398 = vunpack.c.2.s8 %v626
        %v1399 = vunpack.c.2.s8 %v627
        %v1400 = vunpack.c.3.s8 %v626
        %v1401 = vunpack.c.3.s8 %v627
        %v1402 = vunpack.c.0.s8 %v628
        %v1403 = vunpack.c.0.s8 %v629
        %v1404 = vunpack.c.1.s8 %v628
        %v1405 = vunpack.c.1.s8 %v629
        %v1406 = vunpack.c.2.s8 %v628
        %v1407 = vunpack.c.2.s8 %v629
        %v1408 = vunpack.c.3.s8 %v628
        %v1409 = vunpack.c.3.s8 %v629
        %v1410 = vunpack.c.0.s8 %v630
        %v1411 = vunpack.c.0.s8 %v631
        %v1412 = vunpack.c.1.s8 %v630
        %v1413 = vunpack.c.1.s8 %v631
        %v1414 = vunpack.c.2.s8 %v630
        %v1415 = vunpack.c.2.s8 %v631
        %v1416 = vunpack.c.3.s8 %v630
        %v1417 = vunpack.c.3.s8 %v631
        %v1418 = vunpack.c.0.s8 %v632
        %v1419 = vunpack.c.0.s8 %v633
        %v1420 = vunpack.c.1.s8 %v632
        %v1421 = vunpack.c.1.s8 %v633
        %v1422 = vunpack.c.2.s8 %v632
        %v1423 = vunpack.c.2.s8 %v633
        %v1424 = vunpack.c.3.s8 %v632
        %v1425 = vunpack.c.3.s8 %v633
        %v1426 = vunpack.c.0.s8 %v634
        %v1427 = vunpack.c.0.s8 %v635
        %v1428 = vunpack.c.1.s8 %v634
        %v1429 = vunpack.c.1.s8 %v635
        %v1430 = vunpack.c.2.s8 %v634
        %v1431 = vunpack.c.2.s8 %v635
        %v1432 = vunpack.c.3.s8 %v634
        %v1433 = vunpack.c.3.s8 %v635
        %v1434 = vunpack.c.0.s8 %v636
        %v1435 = vunpack.c.0.s8 %v637
        %v1436 = vunpack.c.1.s8 %v636
        %v1437 = vunpack.c.1.s8 %v637
        %v1438 = vunpack.c.2.s8 %v636
        %v1439 = vunpack.c.2.s8 %v637
        %v1440 = vunpack.c.3.s8 %v636
        %v1441 = vunpack.c.3.s8 %v637
        %v1442 = vunpack.c.0.s8 %v638
        %v1443 = vunpack.c.0.s8 %v639
        %v1444 = vunpack.c.1.s8 %v638
        %v1445 = vunpack.c.1.s8 %v639
        %v1446 = vunpack.c.2.s8 %v638
        %v1447 = vunpack.c.2.s8 %v639
        %v1448 = vunpack.c.3.s8 %v638
        %v1449 = vunpack.c.3.s8 %v639
        %v1450 = vunpack.c.0.s8 %v640
        %v1451 = vunpack.c.0.s8 %v641
        %v1452 = vunpack.c.1.s8 %v640
        %v1453 = vunpack.c.1.s8 %v641
        %v1454 = vunpack.c.2.s8 %v640
        %v1455 = vunpack.c.2.s8 %v641
        %v1456 = vunpack.c.3.s8 %v640
        %v1457 = vunpack.c.3.s8 %v641
        %v1458 = vunpack.c.0.s8 %v642
        %v1459 = vunpack.c.0.s8 %v643
        %v1460 = vunpack.c.1.s8 %v642
        %v1461 = vunpack.c.1.s8 %v643
        %v1462 = vunpack.c.2.s8 %v642
        %v1463 = vunpack.c.2.s8 %v643
        %v1464 = vunpack.c.3.s8 %v642
        %v1465 = vunpack.c.3.s8 %v643
        %v1466 = vunpack.c.0.s8 %v644
        %v1467 = vunpack.c.0.s8 %v645
        %v1468 = vunpack.c.1.s8 %v644
        %v1469 = vunpack.c.1.s8 %v645
        %v1470 = vunpack.c.2.s8 %v644
        %v1471 = vunpack.c.2.s8 %v645
        %v1472 = vunpack.c.3.s8 %v644
        %v1473 = vunpack.c.3.s8 %v645
        %v1474 = vunpack.c.0.s8 %v646
        %v1475 = vunpack.c.0.s8 %v647
        %v1476 = vunpack.c.1.s8 %v646
        %v1477 = vunpack.c.1.s8 %v647
        %v1478 = vunpack.c.2.s8 %v646
        %v1479 = vunpack.c.2.s8 %v647
        %v1480 = vunpack.c.3.s8 %v646
        %v1481 = vunpack.c.3.s8 %v647
        %v1482 = vunpack.c.0.s8 %v648
        %v1483 = vunpack.c.0.s8 %v649
        %v1484 = vunpack.c.1.s8 %v648
        %v1485 = vunpack.c.1.s8 %v649
        %v1486 = vunpack.c.2.s8 %v648
        %v1487 = vunpack.c.2.s8 %v649
        %v1488 = vunpack.c.3.s8 %v648
        %v1489 = vunpack.c.3.s8 %v649
        %v1490 = vunpack.c.0.s8 %v650
        %v1491 = vunpack.c.0.s8 %v651
        %v1492 = vunpack.c.1.s8 %v650
        %v1493 = vunpack.c.1.s8 %v651
        %v1494 = vunpack.c.2.s8 %v650
        %v1495 = vunpack.c.2.s8 %v651
        %v1496 = vunpack.c.3.s8 %v650
        %v1497 = vunpack.c.3.s8 %v651
        %v1498 = vunpack.c.0.s8 %v652
        %v1499 = vunpack.c.0.s8 %v653
        %v1500 = vunpack.c.1.s8 %v652
        %v1501 = vunpack.c.1.s8 %v653
        %v1502 = vunpack.c.2.s8 %v652
        %v1503 = vunpack.c.2.s8 %v653
        %v1504 = vunpack.c.3.s8 %v652
        %v1505 = vunpack.c.3.s8 %v653
        %v1506 = vunpack.c.0.s8 %v654
        %v1507 = vunpack.c.0.s8 %v655
        %v1508 = vunpack.c.1.s8 %v654
        %v1509 = vunpack.c.1.s8 %v655
        %v1510 = vunpack.c.2.s8 %v654
        %v1511 = vunpack.c.2.s8 %v655
        %v1512 = vunpack.c.3.s8 %v654
        %v1513 = vunpack.c.3.s8 %v655
        %v1514 = vunpack.c.0.s8 %v656
        %v1515 = vunpack.c.0.s8 %v657
        %v1516 = vunpack.c.1.s8 %v656
        %v1517 = vunpack.c.1.s8 %v657
        %v1518 = vunpack.c.2.s8 %v656
        %v1519 = vunpack.c.2.s8 %v657
        %v1520 = vunpack.c.3.s8 %v656
        %v1521 = vunpack.c.3.s8 %v657
        %v1522 = vunpack.c.0.s8 %v658
        %v1523 = vunpack.c.0.s8 %v659
        %v1524 = vunpack.c.1.s8 %v658
        %v1525 = vunpack.c.1.s8 %v659
        %v1526 = vunpack.c.2.s8 %v658
        %v1527 = vunpack.c.2.s8 %v659
        %v1528 = vunpack.c.3.s8 %v658
        %v1529 = vunpack.c.3.s8 %v659
        %v1530 = vunpack.c.0.s8 %v660
        %v1531 = vunpack.c.0.s8 %v661
        %v1532 = vunpack.c.1.s8 %v660
        %v1533 = vunpack.c.1.s8 %v661
        %v1534 = vunpack.c.2.s8 %v660
        %v1535 = vunpack.c.2.s8 %v661
        %v1536 = vunpack.c.3.s8 %v660
        %v1537 = vunpack.c.3.s8 %v661
        %v1538 = vunpack.c.0.s8 %v662
        %v1539 = vunpack.c.0.s8 %v663
        %v1540 = vunpack.c.1.s8 %v662
        %v1541 = vunpack.c.1.s8 %v663
        %v1542 = vunpack.c.2.s8 %v662
        %v1543 = vunpack.c.2.s8 %v663
        %v1544 = vunpack.c.3.s8 %v662
        %v1545 = vunpack.c.3.s8 %v663
        %v1546 = vunpack.c.0.s8 %v664
        %v1547 = vunpack.c.0.s8 %v665
        %v1548 = vunpack.c.1.s8 %v664
        %v1549 = vunpack.c.1.s8 %v665
        %v1550 = vunpack.c.2.s8 %v664
        %v1551 = vunpack.c.2.s8 %v665
        %v1552 = vunpack.c.3.s8 %v664
        %v1553 = vunpack.c.3.s8 %v665
        %v1554 = vunpack.c.0.s8 %v666
        %v1555 = vunpack.c.0.s8 %v667
        %v1556 = vunpack.c.1.s8 %v666
        %v1557 = vunpack.c.1.s8 %v667
        %v1558 = vunpack.c.2.s8 %v666
        %v1559 = vunpack.c.2.s8 %v667
        %v1560 = vunpack.c.3.s8 %v666
        %v1561 = vunpack.c.3.s8 %v667
        %v1562 = vunpack.c.0.s8 %v668
        %v1563 = vunpack.c.0.s8 %v669
        %v1564 = vunpack.c.1.s8 %v668
        %v1565 = vunpack.c.1.s8 %v669
        %v1566 = vunpack.c.2.s8 %v668
        %v1567 = vunpack.c.2.s8 %v669
        %v1568 = vunpack.c.3.s8 %v668
        %v1569 = vunpack.c.3.s8 %v669
        %v1570 = vunpack.c.0.s8 %v670
        %v1571 = vunpack.c.0.s8 %v671
        %v1572 = vunpack.c.1.s8 %v670
        %v1573 = vunpack.c.1.s8 %v671
        %v1574 = vunpack.c.2.s8 %v670
        %v1575 = vunpack.c.2.s8 %v671
        %v1576 = vunpack.c.3.s8 %v670
        %v1577 = vunpack.c.3.s8 %v671
        %v1578 = vunpack.c.0.s8 %v672
        %v1579 = vunpack.c.0.s8 %v673
        %v1580 = vunpack.c.1.s8 %v672
        %v1581 = vunpack.c.1.s8 %v673
        %v1582 = vunpack.c.2.s8 %v672
        %v1583 = vunpack.c.2.s8 %v673
        %v1584 = vunpack.c.3.s8 %v672
        %v1585 = vunpack.c.3.s8 %v673
        %v1586 = vunpack.c.0.s8 %v674
        %v1587 = vunpack.c.0.s8 %v675
        %v1588 = vunpack.c.1.s8 %v674
        %v1589 = vunpack.c.1.s8 %v675
        %v1590 = vunpack.c.2.s8 %v674
        %v1591 = vunpack.c.2.s8 %v675
        %v1592 = vunpack.c.3.s8 %v674
        %v1593 = vunpack.c.3.s8 %v675
        %v1594 = vunpack.c.0.s8 %v676
        %v1595 = vunpack.c.0.s8 %v677
        %v1596 = vunpack.c.1.s8 %v676
        %v1597 = vunpack.c.1.s8 %v677
        %v1598 = vunpack.c.2.s8 %v676
        %v1599 = vunpack.c.2.s8 %v677
        %v1600 = vunpack.c.3.s8 %v676
        %v1601 = vunpack.c.3.s8 %v677
        %v1602 = vunpack.c.0.s8 %v678
        %v1603 = vunpack.c.0.s8 %v679
        %v1604 = vunpack.c.1.s8 %v678
        %v1605 = vunpack.c.1.s8 %v679
        %v1606 = vunpack.c.2.s8 %v678
        %v1607 = vunpack.c.2.s8 %v679
        %v1608 = vunpack.c.3.s8 %v678
        %v1609 = vunpack.c.3.s8 %v679
        %v1610 = vunpack.c.0.s8 %v680
        %v1611 = vunpack.c.0.s8 %v681
        %v1612 = vunpack.c.1.s8 %v680
        %v1613 = vunpack.c.1.s8 %v681
        %v1614 = vunpack.c.2.s8 %v680
        %v1615 = vunpack.c.2.s8 %v681
        %v1616 = vunpack.c.3.s8 %v680
        %v1617 = vunpack.c.3.s8 %v681
        %v1618 = vunpack.c.0.s8 %v682
        %v1619 = vunpack.c.0.s8 %v683
        %v1620 = vunpack.c.1.s8 %v682
        %v1621 = vunpack.c.1.s8 %v683
        %v1622 = vunpack.c.2.s8 %v682
        %v1623 = vunpack.c.2.s8 %v683
        %v1624 = vunpack.c.3.s8 %v682
        %v1625 = vunpack.c.3.s8 %v683
        %v1626 = vunpack.c.0.s8 %v684
        %v1627 = vunpack.c.0.s8 %v685
        %v1628 = vunpack.c.1.s8 %v684
        %v1629 = vunpack.c.1.s8 %v685
        %v1630 = vunpack.c.2.s8 %v684
        %v1631 = vunpack.c.2.s8 %v685
        %v1632 = vunpack.c.3.s8 %v684
        %v1633 = vunpack.c.3.s8 %v685
        %v1634 = vunpack.c.0.s8 %v686
        %v1635 = vunpack.c.0.s8 %v687
        %v1636 = vunpack.c.1.s8 %v686
        %v1637 = vunpack.c.1.s8 %v687
        %v1638 = vunpack.c.2.s8 %v686
        %v1639 = vunpack.c.2.s8 %v687
        %v1640 = vunpack.c.3.s8 %v686
        %v1641 = vunpack.c.3.s8 %v687
        %v1642 = vunpack.c.0.s8 %v688
        %v1643 = vunpack.c.0.s8 %v689
        %v1644 = vunpack.c.1.s8 %v688
        %v1645 = vunpack.c.1.s8 %v689
        %v1646 = vunpack.c.2.s8 %v688
        %v1647 = vunpack.c.2.s8 %v689
        %v1648 = vunpack.c.3.s8 %v688
        %v1649 = vunpack.c.3.s8 %v689
        %v1650 = vunpack.c.0.s8 %v690
        %v1651 = vunpack.c.0.s8 %v691
        %v1652 = vunpack.c.1.s8 %v690
        %v1653 = vunpack.c.1.s8 %v691
        %v1654 = vunpack.c.2.s8 %v690
        %v1655 = vunpack.c.2.s8 %v691
        %v1656 = vunpack.c.3.s8 %v690
        %v1657 = vunpack.c.3.s8 %v691
        %v1658 = vunpack.c.0.s8 %v692
        %v1659 = vunpack.c.0.s8 %v693
        %v1660 = vunpack.c.1.s8 %v692
        %v1661 = vunpack.c.1.s8 %v693
        %v1662 = vunpack.c.2.s8 %v692
        %v1663 = vunpack.c.2.s8 %v693
        %v1664 = vunpack.c.3.s8 %v692
        %v1665 = vunpack.c.3.s8 %v693
        %v1666 = vunpack.c.0.s8 %v694
        %v1667 = vunpack.c.0.s8 %v695
        %v1668 = vunpack.c.1.s8 %v694
        %v1669 = vunpack.c.1.s8 %v695
        %v1670 = vunpack.c.2.s8 %v694
        %v1671 = vunpack.c.2.s8 %v695
        %v1672 = vunpack.c.3.s8 %v694
        %v1673 = vunpack.c.3.s8 %v695
        %v1674 = vunpack.c.0.s8 %v696
        %v1675 = vunpack.c.0.s8 %v697
        %v1676 = vunpack.c.1.s8 %v696
        %v1677 = vunpack.c.1.s8 %v697
        %v1678 = vunpack.c.2.s8 %v696
        %v1679 = vunpack.c.2.s8 %v697
        %v1680 = vunpack.c.3.s8 %v696
        %v1681 = vunpack.c.3.s8 %v697
        %v1682 = vunpack.c.0.s8 %v698
        %v1683 = vunpack.c.0.s8 %v699
        %v1684 = vunpack.c.1.s8 %v698
        %v1685 = vunpack.c.1.s8 %v699
        %v1686 = vunpack.c.2.s8 %v698
        %v1687 = vunpack.c.2.s8 %v699
        %v1688 = vunpack.c.3.s8 %v698
        %v1689 = vunpack.c.3.s8 %v699
        %v1690 = vunpack.c.0.s8 %v700
        %v1691 = vunpack.c.0.s8 %v701
        %v1692 = vunpack.c.1.s8 %v700
        %v1693 = vunpack.c.1.s8 %v701
        %v1694 = vunpack.c.2.s8 %v700
        %v1695 = vunpack.c.2.s8 %v701
        %v1696 = vunpack.c.3.s8 %v700
        %v1697 = vunpack.c.3.s8 %v701
        %v1698 = vunpack.c.0.s8 %v702
        %v1699 = vunpack.c.0.s8 %v703
        %v1700 = vunpack.c.1.s8 %v702
        %v1701 = vunpack.c.1.s8 %v703
        %v1702 = vunpack.c.2.s8 %v702
        %v1703 = vunpack.c.2.s8 %v703
        %v1704 = vunpack.c.3.s8 %v702
        %v1705 = vunpack.c.3.s8 %v703
        %v1706 = vunpack.c.0.s8 %v704
        %v1707 = vunpack.c.0.s8 %v705
        %v1708 = vunpack.c.1.s8 %v704
        %v1709 = vunpack.c.1.s8 %v705
        %v1710 = vunpack.c.2.s8 %v704
        %v1711 = vunpack.c.2.s8 %v705
        %v1712 = vunpack.c.3.s8 %v704
        %v1713 = vunpack.c.3.s8 %v705
        %v1714 = vunpack.c.0.s8 %v706
        %v1715 = vunpack.c.0.s8 %v707
        %v1716 = vunpack.c.1.s8 %v706
        %v1717 = vunpack.c.1.s8 %v707
        %v1718 = vunpack.c.2.s8 %v706
        %v1719 = vunpack.c.2.s8 %v707
        %v1720 = vunpack.c.3.s8 %v706
        %v1721 = vunpack.c.3.s8 %v707
        %v1722 = vunpack.c.0.s8 %v708
        %v1723 = vunpack.c.0.s8 %v709
        %v1724 = vunpack.c.1.s8 %v708
        %v1725 = vunpack.c.1.s8 %v709
        %v1726 = vunpack.c.2.s8 %v708
        %v1727 = vunpack.c.2.s8 %v709
        %v1728 = vunpack.c.3.s8 %v708
        %v1729 = vunpack.c.3.s8 %v709
        %v1730 = vunpack.c.0.s8 %v710
        %v1731 = vunpack.c.0.s8 %v711
        %v1732 = vunpack.c.1.s8 %v710
        %v1733 = vunpack.c.1.s8 %v711
        %v1734 = vunpack.c.2.s8 %v710
        %v1735 = vunpack.c.2.s8 %v711
        %v1736 = vunpack.c.3.s8 %v710
        %v1737 = vunpack.c.3.s8 %v711
        %v1738 = vunpack.c.0.s8 %v712
        %v1739 = vunpack.c.0.s8 %v713
        %v1740 = vunpack.c.1.s8 %v712
        %v1741 = vunpack.c.1.s8 %v713
        %v1742 = vunpack.c.2.s8 %v712
        %v1743 = vunpack.c.2.s8 %v713
        %v1744 = vunpack.c.3.s8 %v712
        %v1745 = vunpack.c.3.s8 %v713
        %v1746 = vunpack.c.0.s8 %v714
        %v1747 = vunpack.c.0.s8 %v715
        %v1748 = vunpack.c.1.s8 %v714
        %v1749 = vunpack.c.1.s8 %v715
        %v1750 = vunpack.c.2.s8 %v714
        %v1751 = vunpack.c.2.s8 %v715
        %v1752 = vunpack.c.3.s8 %v714
        %v1753 = vunpack.c.3.s8 %v715
        %v1754 = vunpack.c.0.s8 %v716
        %v1755 = vunpack.c.0.s8 %v717
        %v1756 = vunpack.c.1.s8 %v716
        %v1757 = vunpack.c.1.s8 %v717
        %v1758 = vunpack.c.2.s8 %v716
        %v1759 = vunpack.c.2.s8 %v717
        %v1760 = vunpack.c.3.s8 %v716
        %v1761 = vunpack.c.3.s8 %v717
        %v1762 = vunpack.c.0.s8 %v718
        %v1763 = vunpack.c.0.s8 %v719
        %v1764 = vunpack.c.1.s8 %v718
        %v1765 = vunpack.c.1.s8 %v719
        %v1766 = vunpack.c.2.s8 %v718
        %v1767 = vunpack.c.2.s8 %v719
        %v1768 = vunpack.c.3.s8 %v718
        %v1769 = vunpack.c.3.s8 %v719
        %v1770 = vunpack.c.0.s8 %v720
        %v1771 = vunpack.c.0.s8 %v721
        %v1772 = vunpack.c.1.s8 %v720
        %v1773 = vunpack.c.1.s8 %v721
        %v1774 = vunpack.c.2.s8 %v720
        %v1775 = vunpack.c.2.s8 %v721
        %v1776 = vunpack.c.3.s8 %v720
        %v1777 = vunpack.c.3.s8 %v721
        %v1778 = vunpack.c.0.s8 %v722
        %v1779 = vunpack.c.0.s8 %v723
        %v1780 = vunpack.c.1.s8 %v722
        %v1781 = vunpack.c.1.s8 %v723
        %v1782 = vunpack.c.2.s8 %v722
        %v1783 = vunpack.c.2.s8 %v723
        %v1784 = vunpack.c.3.s8 %v722
        %v1785 = vunpack.c.3.s8 %v723
        %v1786 = vunpack.c.0.s8 %v724
        %v1787 = vunpack.c.0.s8 %v725
        %v1788 = vunpack.c.1.s8 %v724
        %v1789 = vunpack.c.1.s8 %v725
        %v1790 = vunpack.c.2.s8 %v724
        %v1791 = vunpack.c.2.s8 %v725
        %v1792 = vunpack.c.3.s8 %v724
        %v1793 = vunpack.c.3.s8 %v725
        %v1794 = vunpack.c.0.s8 %v726
        %v1795 = vunpack.c.0.s8 %v727
        %v1796 = vunpack.c.1.s8 %v726
        %v1797 = vunpack.c.1.s8 %v727
        %v1798 = vunpack.c.2.s8 %v726
        %v1799 = vunpack.c.2.s8 %v727
        %v1800 = vunpack.c.3.s8 %v726
        %v1801 = vunpack.c.3.s8 %v727
        %v1802 = vunpack.c.0.s8 %v728
        %v1803 = vunpack.c.0.s8 %v729
        %v1804 = vunpack.c.1.s8 %v728
        %v1805 = vunpack.c.1.s8 %v729
        %v1806 = vunpack.c.2.s8 %v728
        %v1807 = vunpack.c.2.s8 %v729
        %v1808 = vunpack.c.3.s8 %v728
        %v1809 = vunpack.c.3.s8 %v729
        %v1810 = vunpack.c.0.s8 %v730
        %v1811 = vunpack.c.0.s8 %v731
        %v1812 = vunpack.c.1.s8 %v730
        %v1813 = vunpack.c.1.s8 %v731
        %v1814 = vunpack.c.2.s8 %v730
        %v1815 = vunpack.c.2.s8 %v731
        %v1816 = vunpack.c.3.s8 %v730
        %v1817 = vunpack.c.3.s8 %v731
        %v1818 = vunpack.c.0.s8 %v732
        %v1819 = vunpack.c.0.s8 %v733
        %v1820 = vunpack.c.1.s8 %v732
        %v1821 = vunpack.c.1.s8 %v733
        %v1822 = vunpack.c.2.s8 %v732
        %v1823 = vunpack.c.2.s8 %v733
        %v1824 = vunpack.c.3.s8 %v732
        %v1825 = vunpack.c.3.s8 %v733
        %v1826 = vunpack.c.0.s8 %v734
        %v1827 = vunpack.c.0.s8 %v735
        %v1828 = vunpack.c.1.s8 %v734
        %v1829 = vunpack.c.1.s8 %v735
        %v1830 = vunpack.c.2.s8 %v734
        %v1831 = vunpack.c.2.s8 %v735
        %v1832 = vunpack.c.3.s8 %v734
        %v1833 = vunpack.c.3.s8 %v735
        %v1834 = vunpack.c.0.s8 %v736
        %v1835 = vunpack.c.0.s8 %v737
        %v1836 = vunpack.c.1.s8 %v736
        %v1837 = vunpack.c.1.s8 %v737
        %v1838 = vunpack.c.2.s8 %v736
        %v1839 = vunpack.c.2.s8 %v737
        %v1840 = vunpack.c.3.s8 %v736
        %v1841 = vunpack.c.3.s8 %v737
        %v1842 = vunpack.c.0.s8 %v738
        %v1843 = vunpack.c.0.s8 %v739
        %v1844 = vunpack.c.1.s8 %v738
        %v1845 = vunpack.c.1.s8 %v739
        %v1846 = vunpack.c.2.s8 %v738
        %v1847 = vunpack.c.2.s8 %v739
        %v1848 = vunpack.c.3.s8 %v738
        %v1849 = vunpack.c.3.s8 %v739
        %v1850 = vunpack.c.0.s8 %v740
        %v1851 = vunpack.c.0.s8 %v741
        %v1852 = vunpack.c.1.s8 %v740
        %v1853 = vunpack.c.1.s8 %v741
        %v1854 = vunpack.c.2.s8 %v740
        %v1855 = vunpack.c.2.s8 %v741
        %v1856 = vunpack.c.3.s8 %v740
        %v1857 = vunpack.c.3.s8 %v741
        %v1858 = vunpack.c.0.s8 %v742
        %v1859 = vunpack.c.0.s8 %v743
        %v1860 = vunpack.c.1.s8 %v742
        %v1861 = vunpack.c.1.s8 %v743
        %v1862 = vunpack.c.2.s8 %v742
        %v1863 = vunpack.c.2.s8 %v743
        %v1864 = vunpack.c.3.s8 %v742
        %v1865 = vunpack.c.3.s8 %v743
        %v1866 = vunpack.c.0.s8 %v744
        %v1867 = vunpack.c.0.s8 %v745
        %v1868 = vunpack.c.1.s8 %v744
        %v1869 = vunpack.c.1.s8 %v745
        %v1870 = vunpack.c.2.s8 %v744
        %v1871 = vunpack.c.2.s8 %v745
        %v1872 = vunpack.c.3.s8 %v744
        %v1873 = vunpack.c.3.s8 %v745
        %v1874 = vunpack.c.0.s8 %v746
        %v1875 = vunpack.c.0.s8 %v747
        %v1876 = vunpack.c.1.s8 %v746
        %v1877 = vunpack.c.1.s8 %v747
        %v1878 = vunpack.c.2.s8 %v746
        %v1879 = vunpack.c.2.s8 %v747
        %v1880 = vunpack.c.3.s8 %v746
        %v1881 = vunpack.c.3.s8 %v747
        %v1882 = vunpack.c.0.s8 %v748
        %v1883 = vunpack.c.0.s8 %v749
        %v1884 = vunpack.c.1.s8 %v748
        %v1885 = vunpack.c.1.s8 %v749
        %v1886 = vunpack.c.2.s8 %v748
        %v1887 = vunpack.c.2.s8 %v749
        %v1888 = vunpack.c.3.s8 %v748
        %v1889 = vunpack.c.3.s8 %v749
        %v1890 = vunpack.c.0.s8 %v750
        %v1891 = vunpack.c.0.s8 %v751
        %v1892 = vunpack.c.1.s8 %v750
        %v1893 = vunpack.c.1.s8 %v751
        %v1894 = vunpack.c.2.s8 %v750
        %v1895 = vunpack.c.2.s8 %v751
        %v1896 = vunpack.c.3.s8 %v750
        %v1897 = vunpack.c.3.s8 %v751
        %v1898 = vunpack.c.0.s8 %v752
        %v1899 = vunpack.c.0.s8 %v753
        %v1900 = vunpack.c.1.s8 %v752
        %v1901 = vunpack.c.1.s8 %v753
        %v1902 = vunpack.c.2.s8 %v752
        %v1903 = vunpack.c.2.s8 %v753
        %v1904 = vunpack.c.3.s8 %v752
        %v1905 = vunpack.c.3.s8 %v753
        %v1906 = vunpack.c.0.s8 %v754
        %v1907 = vunpack.c.0.s8 %v755
        %v1908 = vunpack.c.1.s8 %v754
        %v1909 = vunpack.c.1.s8 %v755
        %v1910 = vunpack.c.2.s8 %v754
        %v1911 = vunpack.c.2.s8 %v755
        %v1912 = vunpack.c.3.s8 %v754
        %v1913 = vunpack.c.3.s8 %v755
        %v1914 = vunpack.c.0.s8 %v756
        %v1915 = vunpack.c.0.s8 %v757
        %v1916 = vunpack.c.1.s8 %v756
        %v1917 = vunpack.c.1.s8 %v757
        %v1918 = vunpack.c.2.s8 %v756
        %v1919 = vunpack.c.2.s8 %v757
        %v1920 = vunpack.c.3.s8 %v756
        %v1921 = vunpack.c.3.s8 %v757
        %v1922 = vunpack.c.0.s8 %v758
        %v1923 = vunpack.c.0.s8 %v759
        %v1924 = vunpack.c.1.s8 %v758
        %v1925 = vunpack.c.1.s8 %v759
        %v1926 = vunpack.c.2.s8 %v758
        %v1927 = vunpack.c.2.s8 %v759
        %v1928 = vunpack.c.3.s8 %v758
        %v1929 = vunpack.c.3.s8 %v759
        %v1930 = vunpack.c.0.s8 %v760
        %v1931 = vunpack.c.0.s8 %v761
        %v1932 = vunpack.c.1.s8 %v760
        %v1933 = vunpack.c.1.s8 %v761
        %v1934 = vunpack.c.2.s8 %v760
        %v1935 = vunpack.c.2.s8 %v761
        %v1936 = vunpack.c.3.s8 %v760
        %v1937 = vunpack.c.3.s8 %v761
        %v1938 = vunpack.c.0.s8 %v762
        %v1939 = vunpack.c.0.s8 %v763
        %v1940 = vunpack.c.1.s8 %v762
        %v1941 = vunpack.c.1.s8 %v763
        %v1942 = vunpack.c.2.s8 %v762
        %v1943 = vunpack.c.2.s8 %v763
        %v1944 = vunpack.c.3.s8 %v762
        %v1945 = vunpack.c.3.s8 %v763
        %v1946 = vunpack.c.0.s8 %v764
        %v1947 = vunpack.c.0.s8 %v765
        %v1948 = vunpack.c.1.s8 %v764
        %v1949 = vunpack.c.1.s8 %v765
        %v1950 = vunpack.c.2.s8 %v764
        %v1951 = vunpack.c.2.s8 %v765
        %v1952 = vunpack.c.3.s8 %v764
        %v1953 = vunpack.c.3.s8 %v765
        %v1954 = vunpack.c.0.s8 %v766
        %v1955 = vunpack.c.0.s8 %v767
        %v1956 = vunpack.c.1.s8 %v766
        %v1957 = vunpack.c.1.s8 %v767
        %v1958 = vunpack.c.2.s8 %v766
        %v1959 = vunpack.c.2.s8 %v767
        %v1960 = vunpack.c.3.s8 %v766
        %v1961 = vunpack.c.3.s8 %v767
        %v1962 = vunpack.c.0.s8 %v768
        %v1963 = vunpack.c.0.s8 %v769
        %v1964 = vunpack.c.1.s8 %v768
        %v1965 = vunpack.c.1.s8 %v769
        %v1966 = vunpack.c.2.s8 %v768
        %v1967 = vunpack.c.2.s8 %v769
        %v1968 = vunpack.c.3.s8 %v768
        %v1969 = vunpack.c.3.s8 %v769
        %v1970 = vunpack.c.0.s8 %v770
        %v1971 = vunpack.c.0.s8 %v771
        %v1972 = vunpack.c.1.s8 %v770
        %v1973 = vunpack.c.1.s8 %v771
        %v1974 = vunpack.c.2.s8 %v770
        %v1975 = vunpack.c.2.s8 %v771
        %v1976 = vunpack.c.3.s8 %v770
        %v1977 = vunpack.c.3.s8 %v771
        %v1978 = vunpack.c.0.s8 %v772
        %v1979 = vunpack.c.0.s8 %v773
        %v1980 = vunpack.c.1.s8 %v772
        %v1981 = vunpack.c.1.s8 %v773
        %v1982 = vunpack.c.2.s8 %v772
        %v1983 = vunpack.c.2.s8 %v773
        %v1984 = vunpack.c.3.s8 %v772
        %v1985 = vunpack.c.3.s8 %v773
        %v1986 = vunpack.c.0.s8 %v774
        %v1987 = vunpack.c.0.s8 %v775
        %v1988 = vunpack.c.1.s8 %v774
        %v1989 = vunpack.c.1.s8 %v775
        %v1990 = vunpack.c.2.s8 %v774
        %v1991 = vunpack.c.2.s8 %v775
        %v1992 = vunpack.c.3.s8 %v774
        %v1993 = vunpack.c.3.s8 %v775
        %v1994 = vunpack.c.0.s8 %v776
        %v1995 = vunpack.c.0.s8 %v777
        %v1996 = vunpack.c.1.s8 %v776
        %v1997 = vunpack.c.1.s8 %v777
        %v1998 = vunpack.c.2.s8 %v776
        %v1999 = vunpack.c.2.s8 %v777
        %v2000 = vunpack.c.3.s8 %v776
        %v2001 = vunpack.c.3.s8 %v777
        %v2002 = vunpack.c.0.s8 %v778
        %v2003 = vunpack.c.0.s8 %v779
        %v2004 = vunpack.c.1.s8 %v778
        %v2005 = vunpack.c.1.s8 %v779
        %v2006 = vunpack.c.2.s8 %v778
        %v2007 = vunpack.c.2.s8 %v779
        %v2008 = vunpack.c.3.s8 %v778
        %v2009 = vunpack.c.3.s8 %v779
        %v2010 = vunpack.c.0.s8 %v780
        %v2011 = vunpack.c.0.s8 %v781
        %v2012 = vunpack.c.1.s8 %v780
        %v2013 = vunpack.c.1.s8 %v781
        %v2014 = vunpack.c.2.s8 %v780
        %v2015 = vunpack.c.2.s8 %v781
        %v2016 = vunpack.c.3.s8 %v780
        %v2017 = vunpack.c.3.s8 %v781
        %v2018 = vunpack.c.0.s8 %v782
        %v2019 = vunpack.c.0.s8 %v783
        %v2020 = vunpack.c.1.s8 %v782
        %v2021 = vunpack.c.1.s8 %v783
        %v2022 = vunpack.c.2.s8 %v782
        %v2023 = vunpack.c.2.s8 %v783
        %v2024 = vunpack.c.3.s8 %v782
        %v2025 = vunpack.c.3.s8 %v783
        %v2026 = vunpack.c.0.s8 %v784
        %v2027 = vunpack.c.0.s8 %v785
        %v2028 = vunpack.c.1.s8 %v784
        %v2029 = vunpack.c.1.s8 %v785
        %v2030 = vunpack.c.2.s8 %v784
        %v2031 = vunpack.c.2.s8 %v785
        %v2032 = vunpack.c.3.s8 %v784
        %v2033 = vunpack.c.3.s8 %v785
        %v2034 = vunpack.c.0.s8 %v786
        %v2035 = vunpack.c.0.s8 %v787
        %v2036 = vunpack.c.1.s8 %v786
        %v2037 = vunpack.c.1.s8 %v787
        %v2038 = vunpack.c.2.s8 %v786
        %v2039 = vunpack.c.2.s8 %v787
        %v2040 = vunpack.c.3.s8 %v786
        %v2041 = vunpack.c.3.s8 %v787
        %v2042 = vunpack.c.0.s8 %v788
        %v2043 = vunpack.c.0.s8 %v789
        %v2044 = vunpack.c.1.s8 %v788
        %v2045 = vunpack.c.1.s8 %v789
        %v2046 = vunpack.c.2.s8 %v788
        %v2047 = vunpack.c.2.s8 %v789
        %v2048 = vunpack.c.3.s8 %v788
        %v2049 = vunpack.c.3.s8 %v789
        %v2050 = vunpack.c.0.s8 %v790
        %v2051 = vunpack.c.0.s8 %v791
        %v2052 = vunpack.c.1.s8 %v790
        %v2053 = vunpack.c.1.s8 %v791
        %v2054 = vunpack.c.2.s8 %v790
        %v2055 = vunpack.c.2.s8 %v791
        %v2056 = vunpack.c.3.s8 %v790
        %v2057 = vunpack.c.3.s8 %v791
        %v2058 = vunpack.c.0.s8 %v792
        %v2059 = vunpack.c.0.s8 %v793
        %v2060 = vunpack.c.1.s8 %v792
        %v2061 = vunpack.c.1.s8 %v793
        %v2062 = vunpack.c.2.s8 %v792
        %v2063 = vunpack.c.2.s8 %v793
        %v2064 = vunpack.c.3.s8 %v792
        %v2065 = vunpack.c.3.s8 %v793
        %v2066 = vunpack.c.0.s8 %v794
        %v2067 = vunpack.c.0.s8 %v795
        %v2068 = vunpack.c.1.s8 %v794
        %v2069 = vunpack.c.1.s8 %v795
        %v2070 = vunpack.c.2.s8 %v794
        %v2071 = vunpack.c.2.s8 %v795
        %v2072 = vunpack.c.3.s8 %v794
        %v2073 = vunpack.c.3.s8 %v795
        %v2074 = vunpack.c.0.s8 %v796
        %v2075 = vunpack.c.0.s8 %v797
        %v2076 = vunpack.c.1.s8 %v796
        %v2077 = vunpack.c.1.s8 %v797
        %v2078 = vunpack.c.2.s8 %v796
        %v2079 = vunpack.c.2.s8 %v797
        %v2080 = vunpack.c.3.s8 %v796
        %v2081 = vunpack.c.3.s8 %v797
        %v2082 = vunpack.c.0.s8 %v798
        %v2083 = vunpack.c.0.s8 %v799
        %v2084 = vunpack.c.1.s8 %v798
        %v2085 = vunpack.c.1.s8 %v799
        %v2086 = vunpack.c.2.s8 %v798
        %v2087 = vunpack.c.2.s8 %v799
        %v2088 = vunpack.c.3.s8 %v798
        %v2089 = vunpack.c.3.s8 %v799
        %v2090 = vunpack.c.0.s8 %v800
        %v2091 = vunpack.c.0.s8 %v801
        %v2092 = vunpack.c.1.s8 %v800
        %v2093 = vunpack.c.1.s8 %v801
        %v2094 = vunpack.c.2.s8 %v800
        %v2095 = vunpack.c.2.s8 %v801
        %v2096 = vunpack.c.3.s8 %v800
        %v2097 = vunpack.c.3.s8 %v801
        %v2098 = vunpack.c.0.s8 %v802
        %v2099 = vunpack.c.0.s8 %v803
        %v2100 = vunpack.c.1.s8 %v802
        %v2101 = vunpack.c.1.s8 %v803
        %v2102 = vunpack.c.2.s8 %v802
        %v2103 = vunpack.c.2.s8 %v803
        %v2104 = vunpack.c.3.s8 %v802
        %v2105 = vunpack.c.3.s8 %v803
        %v2106 = vunpack.c.0.s8 %v804
        %v2107 = vunpack.c.0.s8 %v805
        %v2108 = vunpack.c.1.s8 %v804
        %v2109 = vunpack.c.1.s8 %v805
        %v2110 = vunpack.c.2.s8 %v804
        %v2111 = vunpack.c.2.s8 %v805
        %v2112 = vunpack.c.3.s8 %v804
        %v2113 = vunpack.c.3.s8 %v805
        %v2114 = vunpack.c.0.s8 %v806
        %v2115 = vunpack.c.0.s8 %v807
        %v2116 = vunpack.c.1.s8 %v806
        %v2117 = vunpack.c.1.s8 %v807
        %v2118 = vunpack.c.2.s8 %v806
        %v2119 = vunpack.c.2.s8 %v807
        %v2120 = vunpack.c.3.s8 %v806
        %v2121 = vunpack.c.3.s8 %v807
        %v2122 = vunpack.c.0.s8 %v808
        %v2123 = vunpack.c.0.s8 %v809
        %v2124 = vunpack.c.1.s8 %v808
        %v2125 = vunpack.c.1.s8 %v809
        %v2126 = vunpack.c.2.s8 %v808
        %v2127 = vunpack.c.2.s8 %v809
        %v2128 = vunpack.c.3.s8 %v808
        %v2129 = vunpack.c.3.s8 %v809
        %v2130 = vunpack.c.0.s8 %v810
        %v2131 = vunpack.c.0.s8 %v811
        %v2132 = vunpack.c.1.s8 %v810
        %v2133 = vunpack.c.1.s8 %v811
        %v2134 = vunpack.c.2.s8 %v810
        %v2135 = vunpack.c.2.s8 %v811
        %v2136 = vunpack.c.3.s8 %v810
        %v2137 = vunpack.c.3.s8 %v811
        %v2138 = vunpack.c.0.s8 %v812
        %v2139 = vunpack.c.0.s8 %v813
        %v2140 = vunpack.c.1.s8 %v812
        %v2141 = vunpack.c.1.s8 %v813
        %v2142 = vunpack.c.2.s8 %v812
        %v2143 = vunpack.c.2.s8 %v813
        %v2144 = vunpack.c.3.s8 %v812
        %v2145 = vunpack.c.3.s8 %v813
        %v2146 = vunpack.c.0.s8 %v814
        %v2147 = vunpack.c.0.s8 %v815
        %v2148 = vunpack.c.1.s8 %v814
        %v2149 = vunpack.c.1.s8 %v815
        %v2150 = vunpack.c.2.s8 %v814
        %v2151 = vunpack.c.2.s8 %v815
        %v2152 = vunpack.c.3.s8 %v814
        %v2153 = vunpack.c.3.s8 %v815
        %v2154 = vunpack.c.0.s8 %v816
        %v2155 = vunpack.c.0.s8 %v817
        %v2156 = vunpack.c.1.s8 %v816
        %v2157 = vunpack.c.1.s8 %v817
        %v2158 = vunpack.c.2.s8 %v816
        %v2159 = vunpack.c.2.s8 %v817
        %v2160 = vunpack.c.3.s8 %v816
        %v2161 = vunpack.c.3.s8 %v817
        %v2162 = vunpack.c.0.s8 %v818
        %v2163 = vunpack.c.0.s8 %v819
        %v2164 = vunpack.c.1.s8 %v818
        %v2165 = vunpack.c.1.s8 %v819
        %v2166 = vunpack.c.2.s8 %v818
        %v2167 = vunpack.c.2.s8 %v819
        %v2168 = vunpack.c.3.s8 %v818
        %v2169 = vunpack.c.3.s8 %v819
        %v2170 = vunpack.c.0.s8 %v820
        %v2171 = vunpack.c.0.s8 %v821
        %v2172 = vunpack.c.1.s8 %v820
        %v2173 = vunpack.c.1.s8 %v821
        %v2174 = vunpack.c.2.s8 %v820
        %v2175 = vunpack.c.2.s8 %v821
        %v2176 = vunpack.c.3.s8 %v820
        %v2177 = vunpack.c.3.s8 %v821
        %v2178 = vunpack.c.0.s8 %v822
        %v2179 = vunpack.c.0.s8 %v823
        %v2180 = vunpack.c.1.s8 %v822
        %v2181 = vunpack.c.1.s8 %v823
        %v2182 = vunpack.c.2.s8 %v822
        %v2183 = vunpack.c.2.s8 %v823
        %v2184 = vunpack.c.3.s8 %v822
        %v2185 = vunpack.c.3.s8 %v823
        %v2186 = vunpack.c.0.s8 %v824
        %v2187 = vunpack.c.0.s8 %v825
        %v2188 = vunpack.c.1.s8 %v824
        %v2189 = vunpack.c.1.s8 %v825
        %v2190 = vunpack.c.2.s8 %v824
        %v2191 = vunpack.c.2.s8 %v825
        %v2192 = vunpack.c.3.s8 %v824
        %v2193 = vunpack.c.3.s8 %v825
        %v2194 = vunpack.c.0.s8 %v826
        %v2195 = vunpack.c.0.s8 %v827
        %v2196 = vunpack.c.1.s8 %v826
        %v2197 = vunpack.c.1.s8 %v827
        %v2198 = vunpack.c.2.s8 %v826
        %v2199 = vunpack.c.2.s8 %v827
        %v2200 = vunpack.c.3.s8 %v826
        %v2201 = vunpack.c.3.s8 %v827
        %v2202 = vunpack.c.0.s8 %v828
        %v2203 = vunpack.c.0.s8 %v829
        %v2204 = vunpack.c.1.s8 %v828
        %v2205 = vunpack.c.1.s8 %v829
        %v2206 = vunpack.c.2.s8 %v828
        %v2207 = vunpack.c.2.s8 %v829
        %v2208 = vunpack.c.3.s8 %v828
        %v2209 = vunpack.c.3.s8 %v829
        %v2210 = vunpack.c.0.s8 %v830
        %v2211 = vunpack.c.0.s8 %v831
        %v2212 = vunpack.c.1.s8 %v830
        %v2213 = vunpack.c.1.s8 %v831
        %v2214 = vunpack.c.2.s8 %v830
        %v2215 = vunpack.c.2.s8 %v831
        %v2216 = vunpack.c.3.s8 %v830
        %v2217 = vunpack.c.3.s8 %v831
        %v2218 = vunpack.c.0.s8 %v832
        %v2219 = vunpack.c.0.s8 %v833
        %v2220 = vunpack.c.1.s8 %v832
        %v2221 = vunpack.c.1.s8 %v833
        %v2222 = vunpack.c.2.s8 %v832
        %v2223 = vunpack.c.2.s8 %v833
        %v2224 = vunpack.c.3.s8 %v832
        %v2225 = vunpack.c.3.s8 %v833
        %v2226 = vunpack.c.0.s8 %v834
        %v2227 = vunpack.c.0.s8 %v835
        %v2228 = vunpack.c.1.s8 %v834
        %v2229 = vunpack.c.1.s8 %v835
        %v2230 = vunpack.c.2.s8 %v834
        %v2231 = vunpack.c.2.s8 %v835
        %v2232 = vunpack.c.3.s8 %v834
        %v2233 = vunpack.c.3.s8 %v835
        %v2234 = vunpack.c.0.s8 %v836
        %v2235 = vunpack.c.0.s8 %v837
        %v2236 = vunpack.c.1.s8 %v836
        %v2237 = vunpack.c.1.s8 %v837
        %v2238 = vunpack.c.2.s8 %v836
        %v2239 = vunpack.c.2.s8 %v837
        %v2240 = vunpack.c.3.s8 %v836
        %v2241 = vunpack.c.3.s8 %v837
        %v2242 = vunpack.c.0.s8 %v838
        %v2243 = vunpack.c.0.s8 %v839
        %v2244 = vunpack.c.1.s8 %v838
        %v2245 = vunpack.c.1.s8 %v839
        %v2246 = vunpack.c.2.s8 %v838
        %v2247 = vunpack.c.2.s8 %v839
        %v2248 = vunpack.c.3.s8 %v838
        %v2249 = vunpack.c.3.s8 %v839
        %v2250 = vunpack.c.0.s8 %v840
        %v2251 = vunpack.c.0.s8 %v841
        %v2252 = vunpack.c.1.s8 %v840
        %v2253 = vunpack.c.1.s8 %v841
        %v2254 = vunpack.c.2.s8 %v840
        %v2255 = vunpack.c.2.s8 %v841
        %v2256 = vunpack.c.3.s8 %v840
        %v2257 = vunpack.c.3.s8 %v841
        %v2258 = vunpack.c.0.s8 %v842
        %v2259 = vunpack.c.0.s8 %v843
        %v2260 = vunpack.c.1.s8 %v842
        %v2261 = vunpack.c.1.s8 %v843
        %v2262 = vunpack.c.2.s8 %v842
        %v2263 = vunpack.c.2.s8 %v843
        %v2264 = vunpack.c.3.s8 %v842
        %v2265 = vunpack.c.3.s8 %v843
        %v2266 = vunpack.c.0.s8 %v844
        %v2267 = vunpack.c.0.s8 %v845
        %v2268 = vunpack.c.1.s8 %v844
        %v2269 = vunpack.c.1.s8 %v845
        %v2270 = vunpack.c.2.s8 %v844
        %v2271 = vunpack.c.2.s8 %v845
        %v2272 = vunpack.c.3.s8 %v844
        %v2273 = vunpack.c.3.s8 %v845
        %v2274 = vunpack.c.0.s8 %v846
        %v2275 = vunpack.c.0.s8 %v847
        %v2276 = vunpack.c.1.s8 %v846
        %v2277 = vunpack.c.1.s8 %v847
        %v2278 = vunpack.c.2.s8 %v846
        %v2279 = vunpack.c.2.s8 %v847
        %v2280 = vunpack.c.3.s8 %v846
        %v2281 = vunpack.c.3.s8 %v847
        %v2282 = vunpack.c.0.s8 %v848
        %v2283 = vunpack.c.0.s8 %v849
        %v2284 = vunpack.c.1.s8 %v848
        %v2285 = vunpack.c.1.s8 %v849
        %v2286 = vunpack.c.2.s8 %v848
        %v2287 = vunpack.c.2.s8 %v849
        %v2288 = vunpack.c.3.s8 %v848
        %v2289 = vunpack.c.3.s8 %v849
        %v2290 = vunpack.c.0.s8 %v850
        %v2291 = vunpack.c.0.s8 %v851
        %v2292 = vunpack.c.1.s8 %v850
        %v2293 = vunpack.c.1.s8 %v851
        %v2294 = vunpack.c.2.s8 %v850
        %v2295 = vunpack.c.2.s8 %v851
        %v2296 = vunpack.c.3.s8 %v850
        %v2297 = vunpack.c.3.s8 %v851
        %v2298 = vunpack.c.0.s8 %v852
        %v2299 = vunpack.c.0.s8 %v853
        %v2300 = vunpack.c.1.s8 %v852
        %v2301 = vunpack.c.1.s8 %v853
        %v2302 = vunpack.c.2.s8 %v852
        %v2303 = vunpack.c.2.s8 %v853
        %v2304 = vunpack.c.3.s8 %v852
        %v2305 = vunpack.c.3.s8 %v853
        %v2306 = vunpack.c.0.s8 %v854
        %v2307 = vunpack.c.0.s8 %v855
        %v2308 = vunpack.c.1.s8 %v854
        %v2309 = vunpack.c.1.s8 %v855
        %v2310 = vunpack.c.2.s8 %v854
        %v2311 = vunpack.c.2.s8 %v855
        %v2312 = vunpack.c.3.s8 %v854
        %v2313 = vunpack.c.3.s8 %v855
        %v2314 = vunpack.c.0.s8 %v856
        %v2315 = vunpack.c.0.s8 %v857
        %v2316 = vunpack.c.1.s8 %v856
        %v2317 = vunpack.c.1.s8 %v857
        %v2318 = vunpack.c.2.s8 %v856
        %v2319 = vunpack.c.2.s8 %v857
        %v2320 = vunpack.c.3.s8 %v856
        %v2321 = vunpack.c.3.s8 %v857
        %v2322 = vunpack.c.0.s8 %v858
        %v2323 = vunpack.c.0.s8 %v859
        %v2324 = vunpack.c.1.s8 %v858
        %v2325 = vunpack.c.1.s8 %v859
        %v2326 = vunpack.c.2.s8 %v858
        %v2327 = vunpack.c.2.s8 %v859
        %v2328 = vunpack.c.3.s8 %v858
        %v2329 = vunpack.c.3.s8 %v859
        %v2330 = vunpack.c.0.s8 %v860
        %v2331 = vunpack.c.0.s8 %v861
        %v2332 = vunpack.c.1.s8 %v860
        %v2333 = vunpack.c.1.s8 %v861
        %v2334 = vunpack.c.2.s8 %v860
        %v2335 = vunpack.c.2.s8 %v861
        %v2336 = vunpack.c.3.s8 %v860
        %v2337 = vunpack.c.3.s8 %v861
        %v2338 = vunpack.c.0.s8 %v862
        %v2339 = vunpack.c.0.s8 %v863
        %v2340 = vunpack.c.1.s8 %v862
        %v2341 = vunpack.c.1.s8 %v863
        %v2342 = vunpack.c.2.s8 %v862
        %v2343 = vunpack.c.2.s8 %v863
        %v2344 = vunpack.c.3.s8 %v862
        %v2345 = vunpack.c.3.s8 %v863
        %v2346 = vunpack.c.0.s8 %v864
        %v2347 = vunpack.c.0.s8 %v865
        %v2348 = vunpack.c.1.s8 %v864
        %v2349 = vunpack.c.1.s8 %v865
        %v2350 = vunpack.c.2.s8 %v864
        %v2351 = vunpack.c.2.s8 %v865
        %v2352 = vunpack.c.3.s8 %v864
        %v2353 = vunpack.c.3.s8 %v865
        %v2354 = vunpack.c.0.s8 %v866
        %v2355 = vunpack.c.0.s8 %v867
        %v2356 = vunpack.c.1.s8 %v866
        %v2357 = vunpack.c.1.s8 %v867
        %v2358 = vunpack.c.2.s8 %v866
        %v2359 = vunpack.c.2.s8 %v867
        %v2360 = vunpack.c.3.s8 %v866
        %v2361 = vunpack.c.3.s8 %v867
        %v2362 = vunpack.c.0.s8 %v868
        %v2363 = vunpack.c.0.s8 %v869
        %v2364 = vunpack.c.1.s8 %v868
        %v2365 = vunpack.c.1.s8 %v869
        %v2366 = vunpack.c.2.s8 %v868
        %v2367 = vunpack.c.2.s8 %v869
        %v2368 = vunpack.c.3.s8 %v868
        %v2369 = vunpack.c.3.s8 %v869
        %v2370 = vunpack.c.0.s8 %v870
        %v2371 = vunpack.c.0.s8 %v871
        %v2372 = vunpack.c.1.s8 %v870
        %v2373 = vunpack.c.1.s8 %v871
        %v2374 = vunpack.c.2.s8 %v870
        %v2375 = vunpack.c.2.s8 %v871
        %v2376 = vunpack.c.3.s8 %v870
        %v2377 = vunpack.c.3.s8 %v871
        %v2378 = vunpack.c.0.s8 %v872
        %v2379 = vunpack.c.0.s8 %v873
        %v2380 = vunpack.c.1.s8 %v872
        %v2381 = vunpack.c.1.s8 %v873
        %v2382 = vunpack.c.2.s8 %v872
        %v2383 = vunpack.c.2.s8 %v873
        %v2384 = vunpack.c.3.s8 %v872
        %v2385 = vunpack.c.3.s8 %v873
        %v2386 = vunpack.c.0.s8 %v874
        %v2387 = vunpack.c.0.s8 %v875
        %v2388 = vunpack.c.1.s8 %v874
        %v2389 = vunpack.c.1.s8 %v875
        %v2390 = vunpack.c.2.s8 %v874
        %v2391 = vunpack.c.2.s8 %v875
        %v2392 = vunpack.c.3.s8 %v874
        %v2393 = vunpack.c.3.s8 %v875
        %v2394 = vunpack.c.0.s8 %v876
        %v2395 = vunpack.c.0.s8 %v877
        %v2396 = vunpack.c.1.s8 %v876
        %v2397 = vunpack.c.1.s8 %v877
        %v2398 = vunpack.c.2.s8 %v876
        %v2399 = vunpack.c.2.s8 %v877
        %v2400 = vunpack.c.3.s8 %v876
        %v2401 = vunpack.c.3.s8 %v877
        %v2402 = vunpack.c.0.s8 %v878
        %v2403 = vunpack.c.0.s8 %v879
        %v2404 = vunpack.c.1.s8 %v878
        %v2405 = vunpack.c.1.s8 %v879
        %v2406 = vunpack.c.2.s8 %v878
        %v2407 = vunpack.c.2.s8 %v879
        %v2408 = vunpack.c.3.s8 %v878
        %v2409 = vunpack.c.3.s8 %v879
        %v2410 = vunpack.c.0.s8 %v880
        %v2411 = vunpack.c.0.s8 %v881
        %v2412 = vunpack.c.1.s8 %v880
        %v2413 = vunpack.c.1.s8 %v881
        %v2414 = vunpack.c.2.s8 %v880
        %v2415 = vunpack.c.2.s8 %v881
        %v2416 = vunpack.c.3.s8 %v880
        %v2417 = vunpack.c.3.s8 %v881
        %v2418 = vcvt.s32.f32 %v882
        %v2419 = vcvt.s32.f32 %v883
        %v2420 = vcvt.s32.f32 %v884
        %v2421 = vcvt.s32.f32 %v885
        %v2422 = vcvt.s32.f32 %v886
        %v2423 = vcvt.s32.f32 %v887
        %v2424 = vcvt.s32.f32 %v888
        %v2425 = vcvt.s32.f32 %v889
        %v2426 = vcvt.s32.f32 %v890
        %v2427 = vcvt.s32.f32 %v891
        %v2428 = vcvt.s32.f32 %v892
        %v2429 = vcvt.s32.f32 %v893
        %v2430 = vcvt.s32.f32 %v894
        %v2431 = vcvt.s32.f32 %v895
        %v2432 = vcvt.s32.f32 %v896
        %v2433 = vcvt.s32.f32 %v897
        %v2434 = vcvt.s32.f32 %v898
        %v2435 = vcvt.s32.f32 %v899
        %v2436 = vcvt.s32.f32 %v900
        %v2437 = vcvt.s32.f32 %v901
        %v2438 = vcvt.s32.f32 %v902
        %v2439 = vcvt.s32.f32 %v903
        %v2440 = vcvt.s32.f32 %v904
        %v2441 = vcvt.s32.f32 %v905
        %v2442 = vcvt.s32.f32 %v906
        %v2443 = vcvt.s32.f32 %v907
        %v2444 = vcvt.s32.f32 %v908
        %v2445 = vcvt.s32.f32 %v909
        %v2446 = vcvt.s32.f32 %v910
        %v2447 = vcvt.s32.f32 %v911
        %v2448 = vcvt.s32.f32 %v912
        %v2449 = vcvt.s32.f32 %v913
        %v2450 = vcvt.s32.f32 %v914
        %v2451 = vcvt.s32.f32 %v915
        %v2452 = vcvt.s32.f32 %v916
        %v2453 = vcvt.s32.f32 %v917
        %v2454 = vcvt.s32.f32 %v918
        %v2455 = vcvt.s32.f32 %v919
        %v2456 = vcvt.s32.f32 %v920
        %v2457 = vcvt.s32.f32 %v921
        %v2458 = vcvt.s32.f32 %v922
        %v2459 = vcvt.s32.f32 %v923
        %v2460 = vcvt.s32.f32 %v924
        %v2461 = vcvt.s32.f32 %v925
        %v2462 = vcvt.s32.f32 %v926
        %v2463 = vcvt.s32.f32 %v927
        %v2464 = vcvt.s32.f32 %v928
        %v2465 = vcvt.s32.f32 %v929
        %v2466 = vcvt.s32.f32 %v930
        %v2467 = vcvt.s32.f32 %v931
        %v2468 = vcvt.s32.f32 %v932
        %v2469 = vcvt.s32.f32 %v933
        %v2470 = vcvt.s32.f32 %v934
        %v2471 = vcvt.s32.f32 %v935
        %v2472 = vcvt.s32.f32 %v936
        %v2473 = vcvt.s32.f32 %v937
        %v2474 = vcvt.s32.f32 %v938
        %v2475 = vcvt.s32.f32 %v939
        %v2476 = vcvt.s32.f32 %v940
        %v2477 = vcvt.s32.f32 %v941
        %v2478 = vcvt.s32.f32 %v942
        %v2479 = vcvt.s32.f32 %v943
        %v2480 = vcvt.s32.f32 %v944
        %v2481 = vcvt.s32.f32 %v945
        %v2482 = vcvt.s32.f32 %v946
        %v2483 = vcvt.s32.f32 %v947
        %v2484 = vcvt.s32.f32 %v948
        %v2485 = vcvt.s32.f32 %v949
        %v2486 = vcvt.s32.f32 %v950
        %v2487 = vcvt.s32.f32 %v951
        %v2488 = vcvt.s32.f32 %v952
        %v2489 = vcvt.s32.f32 %v953
        %v2490 = vcvt.s32.f32 %v954
        %v2491 = vcvt.s32.f32 %v955
        %v2492 = vcvt.s32.f32 %v956
        %v2493 = vcvt.s32.f32 %v957
        %v2494 = vcvt.s32.f32 %v958
        %v2495 = vcvt.s32.f32 %v959
        %v2496 = vcvt.s32.f32 %v960
        %v2497 = vcvt.s32.f32 %v961
        %v2498 = vcvt.s32.f32 %v962
        %v2499 = vcvt.s32.f32 %v963
        %v2500 = vcvt.s32.f32 %v964
        %v2501 = vcvt.s32.f32 %v965
        %v2502 = vcvt.s32.f32 %v966
        %v2503 = vcvt.s32.f32 %v967
        %v2504 = vcvt.s32.f32 %v968
        %v2505 = vcvt.s32.f32 %v969
        %v2506 = vcvt.s32.f32 %v970
        %v2507 = vcvt.s32.f32 %v971
        %v2508 = vcvt.s32.f32 %v972
        %v2509 = vcvt.s32.f32 %v973
        %v2510 = vcvt.s32.f32 %v974
        %v2511 = vcvt.s32.f32 %v975
        %v2512 = vcvt.s32.f32 %v976
        %v2513 = vcvt.s32.f32 %v977
        %v2514 = vcvt.s32.f32 %v978
        %v2515 = vcvt.s32.f32 %v979
        %v2516 = vcvt.s32.f32 %v980
        %v2517 = vcvt.s32.f32 %v981
        %v2518 = vcvt.s32.f32 %v982
        %v2519 = vcvt.s32.f32 %v983
        %v2520 = vcvt.s32.f32 %v984
        %v2521 = vcvt.s32.f32 %v985
        %v2522 = vcvt.s32.f32 %v986
        %v2523 = vcvt.s32.f32 %v987
        %v2524 = vcvt.s32.f32 %v988
        %v2525 = vcvt.s32.f32 %v989
        %v2526 = vcvt.s32.f32 %v990
        %v2527 = vcvt.s32.f32 %v991
        %v2528 = vcvt.s32.f32 %v992
        %v2529 = vcvt.s32.f32 %v993
        %v2530 = vcvt.s32.f32 %v994
        %v2531 = vcvt.s32.f32 %v995
        %v2532 = vcvt.s32.f32 %v996
        %v2533 = vcvt.s32.f32 %v997
        %v2534 = vcvt.s32.f32 %v998
        %v2535 = vcvt.s32.f32 %v999
        %v2536 = vcvt.s32.f32 %v1000
        %v2537 = vcvt.s32.f32 %v1001
        %v2538 = vcvt.s32.f32 %v1002
        %v2539 = vcvt.s32.f32 %v1003
        %v2540 = vcvt.s32.f32 %v1004
        %v2541 = vcvt.s32.f32 %v1005
        %v2542 = vcvt.s32.f32 %v1006
        %v2543 = vcvt.s32.f32 %v1007
        %v2544 = vcvt.s32.f32 %v1008
        %v2545 = vcvt.s32.f32 %v1009
        %v2546 = vcvt.s32.f32 %v1010
        %v2547 = vcvt.s32.f32 %v1011
        %v2548 = vcvt.s32.f32 %v1012
        %v2549 = vcvt.s32.f32 %v1013
        %v2550 = vcvt.s32.f32 %v1014
        %v2551 = vcvt.s32.f32 %v1015
        %v2552 = vcvt.s32.f32 %v1016
        %v2553 = vcvt.s32.f32 %v1017
        %v2554 = vcvt.s32.f32 %v1018
        %v2555 = vcvt.s32.f32 %v1019
        %v2556 = vcvt.s32.f32 %v1020
        %v2557 = vcvt.s32.f32 %v1021
        %v2558 = vcvt.s32.f32 %v1022
        %v2559 = vcvt.s32.f32 %v1023
        %v2560 = vcvt.s32.f32 %v1024
        %v2561 = vcvt.s32.f32 %v1025
        %v2562 = vcvt.s32.f32 %v1026
        %v2563 = vcvt.s32.f32 %v1027
        %v2564 = vcvt.s32.f32 %v1028
        %v2565 = vcvt.s32.f32 %v1029
        %v2566 = vcvt.s32.f32 %v1030
        %v2567 = vcvt.s32.f32 %v1031
        %v2568 = vcvt.s32.f32 %v1032
        %v2569 = vcvt.s32.f32 %v1033
        %v2570 = vcvt.s32.f32 %v1034
        %v2571 = vcvt.s32.f32 %v1035
        %v2572 = vcvt.s32.f32 %v1036
        %v2573 = vcvt.s32.f32 %v1037
        %v2574 = vcvt.s32.f32 %v1038
        %v2575 = vcvt.s32.f32 %v1039
        %v2576 = vcvt.s32.f32 %v1040
        %v2577 = vcvt.s32.f32 %v1041
        %v2578 = vcvt.s32.f32 %v1042
        %v2579 = vcvt.s32.f32 %v1043
        %v2580 = vcvt.s32.f32 %v1044
        %v2581 = vcvt.s32.f32 %v1045
        %v2582 = vcvt.s32.f32 %v1046
        %v2583 = vcvt.s32.f32 %v1047
        %v2584 = vcvt.s32.f32 %v1048
        %v2585 = vcvt.s32.f32 %v1049
        %v2586 = vcvt.s32.f32 %v1050
        %v2587 = vcvt.s32.f32 %v1051
        %v2588 = vcvt.s32.f32 %v1052
        %v2589 = vcvt.s32.f32 %v1053
        %v2590 = vcvt.s32.f32 %v1054
        %v2591 = vcvt.s32.f32 %v1055
        %v2592 = vcvt.s32.f32 %v1056
        %v2593 = vcvt.s32.f32 %v1057
        %v2594 = vcvt.s32.f32 %v1058
        %v2595 = vcvt.s32.f32 %v1059
        %v2596 = vcvt.s32.f32 %v1060
        %v2597 = vcvt.s32.f32 %v1061
        %v2598 = vcvt.s32.f32 %v1062
        %v2599 = vcvt.s32.f32 %v1063
        %v2600 = vcvt.s32.f32 %v1064
        %v2601 = vcvt.s32.f32 %v1065
        %v2602 = vcvt.s32.f32 %v1066
        %v2603 = vcvt.s32.f32 %v1067
        %v2604 = vcvt.s32.f32 %v1068
        %v2605 = vcvt.s32.f32 %v1069
        %v2606 = vcvt.s32.f32 %v1070
        %v2607 = vcvt.s32.f32 %v1071
        %v2608 = vcvt.s32.f32 %v1072
        %v2609 = vcvt.s32.f32 %v1073
        %v2610 = vcvt.s32.f32 %v1074
        %v2611 = vcvt.s32.f32 %v1075
        %v2612 = vcvt.s32.f32 %v1076
        %v2613 = vcvt.s32.f32 %v1077
        %v2614 = vcvt.s32.f32 %v1078
        %v2615 = vcvt.s32.f32 %v1079
        %v2616 = vcvt.s32.f32 %v1080
        %v2617 = vcvt.s32.f32 %v1081
        %v2618 = vcvt.s32.f32 %v1082
        %v2619 = vcvt.s32.f32 %v1083
        %v2620 = vcvt.s32.f32 %v1084
        %v2621 = vcvt.s32.f32 %v1085
        %v2622 = vcvt.s32.f32 %v1086
        %v2623 = vcvt.s32.f32 %v1087
        %v2624 = vcvt.s32.f32 %v1088
        %v2625 = vcvt.s32.f32 %v1089
        %v2626 = vcvt.s32.f32 %v1090
        %v2627 = vcvt.s32.f32 %v1091
        %v2628 = vcvt.s32.f32 %v1092
        %v2629 = vcvt.s32.f32 %v1093
        %v2630 = vcvt.s32.f32 %v1094
        %v2631 = vcvt.s32.f32 %v1095
        %v2632 = vcvt.s32.f32 %v1096
        %v2633 = vcvt.s32.f32 %v1097
        %v2634 = vcvt.s32.f32 %v1098
        %v2635 = vcvt.s32.f32 %v1099
        %v2636 = vcvt.s32.f32 %v1100
        %v2637 = vcvt.s32.f32 %v1101
        %v2638 = vcvt.s32.f32 %v1102
        %v2639 = vcvt.s32.f32 %v1103
        %v2640 = vcvt.s32.f32 %v1104
        %v2641 = vcvt.s32.f32 %v1105
        %v2642 = vcvt.s32.f32 %v1106
        %v2643 = vcvt.s32.f32 %v1107
        %v2644 = vcvt.s32.f32 %v1108
        %v2645 = vcvt.s32.f32 %v1109
        %v2646 = vcvt.s32.f32 %v1110
        %v2647 = vcvt.s32.f32 %v1111
        %v2648 = vcvt.s32.f32 %v1112
        %v2649 = vcvt.s32.f32 %v1113
        %v2650 = vcvt.s32.f32 %v1114
        %v2651 = vcvt.s32.f32 %v1115
        %v2652 = vcvt.s32.f32 %v1116
        %v2653 = vcvt.s32.f32 %v1117
        %v2654 = vcvt.s32.f32 %v1118
        %v2655 = vcvt.s32.f32 %v1119
        %v2656 = vcvt.s32.f32 %v1120
        %v2657 = vcvt.s32.f32 %v1121
        %v2658 = vcvt.s32.f32 %v1122
        %v2659 = vcvt.s32.f32 %v1123
        %v2660 = vcvt.s32.f32 %v1124
        %v2661 = vcvt.s32.f32 %v1125
        %v2662 = vcvt.s32.f32 %v1126
        %v2663 = vcvt.s32.f32 %v1127
        %v2664 = vcvt.s32.f32 %v1128
        %v2665 = vcvt.s32.f32 %v1129
        %v2666 = vcvt.s32.f32 %v1130
        %v2667 = vcvt.s32.f32 %v1131
        %v2668 = vcvt.s32.f32 %v1132
        %v2669 = vcvt.s32.f32 %v1133
        %v2670 = vcvt.s32.f32 %v1134
        %v2671 = vcvt.s32.f32 %v1135
        %v2672 = vcvt.s32.f32 %v1136
        %v2673 = vcvt.s32.f32 %v1137
        %v2674 = vcvt.s32.f32 %v1138
        %v2675 = vcvt.s32.f32 %v1139
        %v2676 = vcvt.s32.f32 %v1140
        %v2677 = vcvt.s32.f32 %v1141
        %v2678 = vcvt.s32.f32 %v1142
        %v2679 = vcvt.s32.f32 %v1143
        %v2680 = vcvt.s32.f32 %v1144
        %v2681 = vcvt.s32.f32 %v1145
        %v2682 = vcvt.s32.f32 %v1146
        %v2683 = vcvt.s32.f32 %v1147
        %v2684 = vcvt.s32.f32 %v1148
        %v2685 = vcvt.s32.f32 %v1149
        %v2686 = vcvt.s32.f32 %v1150
        %v2687 = vcvt.s32.f32 %v1151
        %v2688 = vcvt.s32.f32 %v1152
        %v2689 = vcvt.s32.f32 %v1153
        %v2690 = vcvt.s32.f32 %v1154
        %v2691 = vcvt.s32.f32 %v1155
        %v2692 = vcvt.s32.f32 %v1156
        %v2693 = vcvt.s32.f32 %v1157
        %v2694 = vcvt.s32.f32 %v1158
        %v2695 = vcvt.s32.f32 %v1159
        %v2696 = vcvt.s32.f32 %v1160
        %v2697 = vcvt.s32.f32 %v1161
        %v2698 = vcvt.s32.f32 %v1162
        %v2699 = vcvt.s32.f32 %v1163
        %v2700 = vcvt.s32.f32 %v1164
        %v2701 = vcvt.s32.f32 %v1165
        %v2702 = vcvt.s32.f32 %v1166
        %v2703 = vcvt.s32.f32 %v1167
        %v2704 = vcvt.s32.f32 %v1168
        %v2705 = vcvt.s32.f32 %v1169
        %v2706 = vcvt.s32.f32 %v1170
        %v2707 = vcvt.s32.f32 %v1171
        %v2708 = vcvt.s32.f32 %v1172
        %v2709 = vcvt.s32.f32 %v1173
        %v2710 = vcvt.s32.f32 %v1174
        %v2711 = vcvt.s32.f32 %v1175
        %v2712 = vcvt.s32.f32 %v1176
        %v2713 = vcvt.s32.f32 %v1177
        %v2714 = vcvt.s32.f32 %v1178
        %v2715 = vcvt.s32.f32 %v1179
        %v2716 = vcvt.s32.f32 %v1180
        %v2717 = vcvt.s32.f32 %v1181
        %v2718 = vcvt.s32.f32 %v1182
        %v2719 = vcvt.s32.f32 %v1183
        %v2720 = vcvt.s32.f32 %v1184
        %v2721 = vcvt.s32.f32 %v1185
        %v2722 = vcvt.s32.f32 %v1186
        %v2723 = vcvt.s32.f32 %v1187
        %v2724 = vcvt.s32.f32 %v1188
        %v2725 = vcvt.s32.f32 %v1189
        %v2726 = vcvt.s32.f32 %v1190
        %v2727 = vcvt.s32.f32 %v1191
        %v2728 = vcvt.s32.f32 %v1192
        %v2729 = vcvt.s32.f32 %v1193
        %v2730 = vcvt.s32.f32 %v1194
        %v2731 = vcvt.s32.f32 %v1195
        %v2732 = vcvt.s32.f32 %v1196
        %v2733 = vcvt.s32.f32 %v1197
        %v2734 = vcvt.s32.f32 %v1198
        %v2735 = vcvt.s32.f32 %v1199
        %v2736 = vcvt.s32.f32 %v1200
        %v2737 = vcvt.s32.f32 %v1201
        %v2738 = vcvt.s32.f32 %v1202
        %v2739 = vcvt.s32.f32 %v1203
        %v2740 = vcvt.s32.f32 %v1204
        %v2741 = vcvt.s32.f32 %v1205
        %v2742 = vcvt.s32.f32 %v1206
        %v2743 = vcvt.s32.f32 %v1207
        %v2744 = vcvt.s32.f32 %v1208
        %v2745 = vcvt.s32.f32 %v1209
        %v2746 = vcvt.s32.f32 %v1210
        %v2747 = vcvt.s32.f32 %v1211
        %v2748 = vcvt.s32.f32 %v1212
        %v2749 = vcvt.s32.f32 %v1213
        %v2750 = vcvt.s32.f32 %v1214
        %v2751 = vcvt.s32.f32 %v1215
        %v2752 = vcvt.s32.f32 %v1216
        %v2753 = vcvt.s32.f32 %v1217
        %v2754 = vcvt.s32.f32 %v1218
        %v2755 = vcvt.s32.f32 %v1219
        %v2756 = vcvt.s32.f32 %v1220
        %v2757 = vcvt.s32.f32 %v1221
        %v2758 = vcvt.s32.f32 %v1222
        %v2759 = vcvt.s32.f32 %v1223
        %v2760 = vcvt.s32.f32 %v1224
        %v2761 = vcvt.s32.f32 %v1225
        %v2762 = vcvt.s32.f32 %v1226
        %v2763 = vcvt.s32.f32 %v1227
        %v2764 = vcvt.s32.f32 %v1228
        %v2765 = vcvt.s32.f32 %v1229
        %v2766 = vcvt.s32.f32 %v1230
        %v2767 = vcvt.s32.f32 %v1231
        %v2768 = vcvt.s32.f32 %v1232
        %v2769 = vcvt.s32.f32 %v1233
        %v2770 = vcvt.s32.f32 %v1234
        %v2771 = vcvt.s32.f32 %v1235
        %v2772 = vcvt.s32.f32 %v1236
        %v2773 = vcvt.s32.f32 %v1237
        %v2774 = vcvt.s32.f32 %v1238
        %v2775 = vcvt.s32.f32 %v1239
        %v2776 = vcvt.s32.f32 %v1240
        %v2777 = vcvt.s32.f32 %v1241
        %v2778 = vcvt.s32.f32 %v1242
        %v2779 = vcvt.s32.f32 %v1243
        %v2780 = vcvt.s32.f32 %v1244
        %v2781 = vcvt.s32.f32 %v1245
        %v2782 = vcvt.s32.f32 %v1246
        %v2783 = vcvt.s32.f32 %v1247
        %v2784 = vcvt.s32.f32 %v1248
        %v2785 = vcvt.s32.f32 %v1249
        %v2786 = vcvt.s32.f32 %v1250
        %v2787 = vcvt.s32.f32 %v1251
        %v2788 = vcvt.s32.f32 %v1252
        %v2789 = vcvt.s32.f32 %v1253
        %v2790 = vcvt.s32.f32 %v1254
        %v2791 = vcvt.s32.f32 %v1255
        %v2792 = vcvt.s32.f32 %v1256
        %v2793 = vcvt.s32.f32 %v1257
        %v2794 = vcvt.s32.f32 %v1258
        %v2795 = vcvt.s32.f32 %v1259
        %v2796 = vcvt.s32.f32 %v1260
        %v2797 = vcvt.s32.f32 %v1261
        %v2798 = vcvt.s32.f32 %v1262
        %v2799 = vcvt.s32.f32 %v1263
        %v2800 = vcvt.s32.f32 %v1264
        %v2801 = vcvt.s32.f32 %v1265
        %v2802 = vcvt.s32.f32 %v1266
        %v2803 = vcvt.s32.f32 %v1267
        %v2804 = vcvt.s32.f32 %v1268
        %v2805 = vcvt.s32.f32 %v1269
        %v2806 = vcvt.s32.f32 %v1270
        %v2807 = vcvt.s32.f32 %v1271
        %v2808 = vcvt.s32.f32 %v1272
        %v2809 = vcvt.s32.f32 %v1273
        %v2810 = vcvt.s32.f32 %v1274
        %v2811 = vcvt.s32.f32 %v1275
        %v2812 = vcvt.s32.f32 %v1276
        %v2813 = vcvt.s32.f32 %v1277
        %v2814 = vcvt.s32.f32 %v1278
        %v2815 = vcvt.s32.f32 %v1279
        %v2816 = vcvt.s32.f32 %v1280
        %v2817 = vcvt.s32.f32 %v1281
        %v2818 = vcvt.s32.f32 %v1282
        %v2819 = vcvt.s32.f32 %v1283
        %v2820 = vcvt.s32.f32 %v1284
        %v2821 = vcvt.s32.f32 %v1285
        %v2822 = vcvt.s32.f32 %v1286
        %v2823 = vcvt.s32.f32 %v1287
        %v2824 = vcvt.s32.f32 %v1288
        %v2825 = vcvt.s32.f32 %v1289
        %v2826 = vcvt.s32.f32 %v1290
        %v2827 = vcvt.s32.f32 %v1291
        %v2828 = vcvt.s32.f32 %v1292
        %v2829 = vcvt.s32.f32 %v1293
        %v2830 = vcvt.s32.f32 %v1294
        %v2831 = vcvt.s32.f32 %v1295
        %v2832 = vcvt.s32.f32 %v1296
        %v2833 = vcvt.s32.f32 %v1297
        %v2834 = vcvt.s32.f32 %v1298
        %v2835 = vcvt.s32.f32 %v1299
        %v2836 = vcvt.s32.f32 %v1300
        %v2837 = vcvt.s32.f32 %v1301
        %v2838 = vcvt.s32.f32 %v1302
        %v2839 = vcvt.s32.f32 %v1303
        %v2840 = vcvt.s32.f32 %v1304
        %v2841 = vcvt.s32.f32 %v1305
        %v2842 = vcvt.s32.f32 %v1306
        %v2843 = vcvt.s32.f32 %v1307
        %v2844 = vcvt.s32.f32 %v1308
        %v2845 = vcvt.s32.f32 %v1309
        %v2846 = vcvt.s32.f32 %v1310
        %v2847 = vcvt.s32.f32 %v1311
        %v2848 = vcvt.s32.f32 %v1312
        %v2849 = vcvt.s32.f32 %v1313
        %v2850 = vcvt.s32.f32 %v1314
        %v2851 = vcvt.s32.f32 %v1315
        %v2852 = vcvt.s32.f32 %v1316
        %v2853 = vcvt.s32.f32 %v1317
        %v2854 = vcvt.s32.f32 %v1318
        %v2855 = vcvt.s32.f32 %v1319
        %v2856 = vcvt.s32.f32 %v1320
        %v2857 = vcvt.s32.f32 %v1321
        %v2858 = vcvt.s32.f32 %v1322
        %v2859 = vcvt.s32.f32 %v1323
        %v2860 = vcvt.s32.f32 %v1324
        %v2861 = vcvt.s32.f32 %v1325
        %v2862 = vcvt.s32.f32 %v1326
        %v2863 = vcvt.s32.f32 %v1327
        %v2864 = vcvt.s32.f32 %v1328
        %v2865 = vcvt.s32.f32 %v1329
        %v2866 = vcvt.s32.f32 %v1330
        %v2867 = vcvt.s32.f32 %v1331
        %v2868 = vcvt.s32.f32 %v1332
        %v2869 = vcvt.s32.f32 %v1333
        %v2870 = vcvt.s32.f32 %v1334
        %v2871 = vcvt.s32.f32 %v1335
        %v2872 = vcvt.s32.f32 %v1336
        %v2873 = vcvt.s32.f32 %v1337
        %v2874 = vcvt.s32.f32 %v1338
        %v2875 = vcvt.s32.f32 %v1339
        %v2876 = vcvt.s32.f32 %v1340
        %v2877 = vcvt.s32.f32 %v1341
        %v2878 = vcvt.s32.f32 %v1342
        %v2879 = vcvt.s32.f32 %v1343
        %v2880 = vcvt.s32.f32 %v1344
        %v2881 = vcvt.s32.f32 %v1345
        %v2882 = vcvt.s32.f32 %v1346
        %v2883 = vcvt.s32.f32 %v1347
        %v2884 = vcvt.s32.f32 %v1348
        %v2885 = vcvt.s32.f32 %v1349
        %v2886 = vcvt.s32.f32 %v1350
        %v2887 = vcvt.s32.f32 %v1351
        %v2888 = vcvt.s32.f32 %v1352
        %v2889 = vcvt.s32.f32 %v1353
        %v2890 = vcvt.s32.f32 %v1354
        %v2891 = vcvt.s32.f32 %v1355
        %v2892 = vcvt.s32.f32 %v1356
        %v2893 = vcvt.s32.f32 %v1357
        %v2894 = vcvt.s32.f32 %v1358
        %v2895 = vcvt.s32.f32 %v1359
        %v2896 = vcvt.s32.f32 %v1360
        %v2897 = vcvt.s32.f32 %v1361
        %v2898 = vcvt.s32.f32 %v1362
        %v2899 = vcvt.s32.f32 %v1363
        %v2900 = vcvt.s32.f32 %v1364
        %v2901 = vcvt.s32.f32 %v1365
        %v2902 = vcvt.s32.f32 %v1366
        %v2903 = vcvt.s32.f32 %v1367
        %v2904 = vcvt.s32.f32 %v1368
        %v2905 = vcvt.s32.f32 %v1369
        %v2906 = vcvt.s32.f32 %v1370
        %v2907 = vcvt.s32.f32 %v1371
        %v2908 = vcvt.s32.f32 %v1372
        %v2909 = vcvt.s32.f32 %v1373
        %v2910 = vcvt.s32.f32 %v1374
        %v2911 = vcvt.s32.f32 %v1375
        %v2912 = vcvt.s32.f32 %v1376
        %v2913 = vcvt.s32.f32 %v1377
        %v2914 = vcvt.s32.f32 %v1378
        %v2915 = vcvt.s32.f32 %v1379
        %v2916 = vcvt.s32.f32 %v1380
        %v2917 = vcvt.s32.f32 %v1381
        %v2918 = vcvt.s32.f32 %v1382
        %v2919 = vcvt.s32.f32 %v1383
        %v2920 = vcvt.s32.f32 %v1384
        %v2921 = vcvt.s32.f32 %v1385
        %v2922 = vcvt.s32.f32 %v1386
        %v2923 = vcvt.s32.f32 %v1387
        %v2924 = vcvt.s32.f32 %v1388
        %v2925 = vcvt.s32.f32 %v1389
        %v2926 = vcvt.s32.f32 %v1390
        %v2927 = vcvt.s32.f32 %v1391
        %v2928 = vcvt.s32.f32 %v1392
        %v2929 = vcvt.s32.f32 %v1393
        %v2930 = vcvt.s32.f32 %v1394
        %v2931 = vcvt.s32.f32 %v1395
        %v2932 = vcvt.s32.f32 %v1396
        %v2933 = vcvt.s32.f32 %v1397
        %v2934 = vcvt.s32.f32 %v1398
        %v2935 = vcvt.s32.f32 %v1399
        %v2936 = vcvt.s32.f32 %v1400
        %v2937 = vcvt.s32.f32 %v1401
        %v2938 = vcvt.s32.f32 %v1402
        %v2939 = vcvt.s32.f32 %v1403
        %v2940 = vcvt.s32.f32 %v1404
        %v2941 = vcvt.s32.f32 %v1405
        %v2942 = vcvt.s32.f32 %v1406
        %v2943 = vcvt.s32.f32 %v1407
        %v2944 = vcvt.s32.f32 %v1408
        %v2945 = vcvt.s32.f32 %v1409
        %v2946 = vcvt.s32.f32 %v1410
        %v2947 = vcvt.s32.f32 %v1411
        %v2948 = vcvt.s32.f32 %v1412
        %v2949 = vcvt.s32.f32 %v1413
        %v2950 = vcvt.s32.f32 %v1414
        %v2951 = vcvt.s32.f32 %v1415
        %v2952 = vcvt.s32.f32 %v1416
        %v2953 = vcvt.s32.f32 %v1417
        %v2954 = vcvt.s32.f32 %v1418
        %v2955 = vcvt.s32.f32 %v1419
        %v2956 = vcvt.s32.f32 %v1420
        %v2957 = vcvt.s32.f32 %v1421
        %v2958 = vcvt.s32.f32 %v1422
        %v2959 = vcvt.s32.f32 %v1423
        %v2960 = vcvt.s32.f32 %v1424
        %v2961 = vcvt.s32.f32 %v1425
        %v2962 = vcvt.s32.f32 %v1426
        %v2963 = vcvt.s32.f32 %v1427
        %v2964 = vcvt.s32.f32 %v1428
        %v2965 = vcvt.s32.f32 %v1429
        %v2966 = vcvt.s32.f32 %v1430
        %v2967 = vcvt.s32.f32 %v1431
        %v2968 = vcvt.s32.f32 %v1432
        %v2969 = vcvt.s32.f32 %v1433
        %v2970 = vcvt.s32.f32 %v1434
        %v2971 = vcvt.s32.f32 %v1435
        %v2972 = vcvt.s32.f32 %v1436
        %v2973 = vcvt.s32.f32 %v1437
        %v2974 = vcvt.s32.f32 %v1438
        %v2975 = vcvt.s32.f32 %v1439
        %v2976 = vcvt.s32.f32 %v1440
        %v2977 = vcvt.s32.f32 %v1441
        %v2978 = vcvt.s32.f32 %v1442
        %v2979 = vcvt.s32.f32 %v1443
        %v2980 = vcvt.s32.f32 %v1444
        %v2981 = vcvt.s32.f32 %v1445
        %v2982 = vcvt.s32.f32 %v1446
        %v2983 = vcvt.s32.f32 %v1447
        %v2984 = vcvt.s32.f32 %v1448
        %v2985 = vcvt.s32.f32 %v1449
        %v2986 = vcvt.s32.f32 %v1450
        %v2987 = vcvt.s32.f32 %v1451
        %v2988 = vcvt.s32.f32 %v1452
        %v2989 = vcvt.s32.f32 %v1453
        %v2990 = vcvt.s32.f32 %v1454
        %v2991 = vcvt.s32.f32 %v1455
        %v2992 = vcvt.s32.f32 %v1456
        %v2993 = vcvt.s32.f32 %v1457
        %v2994 = vcvt.s32.f32 %v1458
        %v2995 = vcvt.s32.f32 %v1459
        %v2996 = vcvt.s32.f32 %v1460
        %v2997 = vcvt.s32.f32 %v1461
        %v2998 = vcvt.s32.f32 %v1462
        %v2999 = vcvt.s32.f32 %v1463
        %v3000 = vcvt.s32.f32 %v1464
        %v3001 = vcvt.s32.f32 %v1465
        %v3002 = vcvt.s32.f32 %v1466
        %v3003 = vcvt.s32.f32 %v1467
        %v3004 = vcvt.s32.f32 %v1468
        %v3005 = vcvt.s32.f32 %v1469
        %v3006 = vcvt.s32.f32 %v1470
        %v3007 = vcvt.s32.f32 %v1471
        %v3008 = vcvt.s32.f32 %v1472
        %v3009 = vcvt.s32.f32 %v1473
        %v3010 = vcvt.s32.f32 %v1474
        %v3011 = vcvt.s32.f32 %v1475
        %v3012 = vcvt.s32.f32 %v1476
        %v3013 = vcvt.s32.f32 %v1477
        %v3014 = vcvt.s32.f32 %v1478
        %v3015 = vcvt.s32.f32 %v1479
        %v3016 = vcvt.s32.f32 %v1480
        %v3017 = vcvt.s32.f32 %v1481
        %v3018 = vcvt.s32.f32 %v1482
        %v3019 = vcvt.s32.f32 %v1483
        %v3020 = vcvt.s32.f32 %v1484
        %v3021 = vcvt.s32.f32 %v1485
        %v3022 = vcvt.s32.f32 %v1486
        %v3023 = vcvt.s32.f32 %v1487
        %v3024 = vcvt.s32.f32 %v1488
        %v3025 = vcvt.s32.f32 %v1489
        %v3026 = vcvt.s32.f32 %v1490
        %v3027 = vcvt.s32.f32 %v1491
        %v3028 = vcvt.s32.f32 %v1492
        %v3029 = vcvt.s32.f32 %v1493
        %v3030 = vcvt.s32.f32 %v1494
        %v3031 = vcvt.s32.f32 %v1495
        %v3032 = vcvt.s32.f32 %v1496
        %v3033 = vcvt.s32.f32 %v1497
        %v3034 = vcvt.s32.f32 %v1498
        %v3035 = vcvt.s32.f32 %v1499
        %v3036 = vcvt.s32.f32 %v1500
        %v3037 = vcvt.s32.f32 %v1501
        %v3038 = vcvt.s32.f32 %v1502
        %v3039 = vcvt.s32.f32 %v1503
        %v3040 = vcvt.s32.f32 %v1504
        %v3041 = vcvt.s32.f32 %v1505
        %v3042 = vcvt.s32.f32 %v1506
        %v3043 = vcvt.s32.f32 %v1507
        %v3044 = vcvt.s32.f32 %v1508
        %v3045 = vcvt.s32.f32 %v1509
        %v3046 = vcvt.s32.f32 %v1510
        %v3047 = vcvt.s32.f32 %v1511
        %v3048 = vcvt.s32.f32 %v1512
        %v3049 = vcvt.s32.f32 %v1513
        %v3050 = vcvt.s32.f32 %v1514
        %v3051 = vcvt.s32.f32 %v1515
        %v3052 = vcvt.s32.f32 %v1516
        %v3053 = vcvt.s32.f32 %v1517
        %v3054 = vcvt.s32.f32 %v1518
        %v3055 = vcvt.s32.f32 %v1519
        %v3056 = vcvt.s32.f32 %v1520
        %v3057 = vcvt.s32.f32 %v1521
        %v3058 = vcvt.s32.f32 %v1522
        %v3059 = vcvt.s32.f32 %v1523
        %v3060 = vcvt.s32.f32 %v1524
        %v3061 = vcvt.s32.f32 %v1525
        %v3062 = vcvt.s32.f32 %v1526
        %v3063 = vcvt.s32.f32 %v1527
        %v3064 = vcvt.s32.f32 %v1528
        %v3065 = vcvt.s32.f32 %v1529
        %v3066 = vcvt.s32.f32 %v1530
        %v3067 = vcvt.s32.f32 %v1531
        %v3068 = vcvt.s32.f32 %v1532
        %v3069 = vcvt.s32.f32 %v1533
        %v3070 = vcvt.s32.f32 %v1534
        %v3071 = vcvt.s32.f32 %v1535
        %v3072 = vcvt.s32.f32 %v1536
        %v3073 = vcvt.s32.f32 %v1537
        %v3074 = vcvt.s32.f32 %v1538
        %v3075 = vcvt.s32.f32 %v1539
        %v3076 = vcvt.s32.f32 %v1540
        %v3077 = vcvt.s32.f32 %v1541
        %v3078 = vcvt.s32.f32 %v1542
        %v3079 = vcvt.s32.f32 %v1543
        %v3080 = vcvt.s32.f32 %v1544
        %v3081 = vcvt.s32.f32 %v1545
        %v3082 = vcvt.s32.f32 %v1546
        %v3083 = vcvt.s32.f32 %v1547
        %v3084 = vcvt.s32.f32 %v1548
        %v3085 = vcvt.s32.f32 %v1549
        %v3086 = vcvt.s32.f32 %v1550
        %v3087 = vcvt.s32.f32 %v1551
        %v3088 = vcvt.s32.f32 %v1552
        %v3089 = vcvt.s32.f32 %v1553
        %v3090 = vcvt.s32.f32 %v1554
        %v3091 = vcvt.s32.f32 %v1555
        %v3092 = vcvt.s32.f32 %v1556
        %v3093 = vcvt.s32.f32 %v1557
        %v3094 = vcvt.s32.f32 %v1558
        %v3095 = vcvt.s32.f32 %v1559
        %v3096 = vcvt.s32.f32 %v1560
        %v3097 = vcvt.s32.f32 %v1561
        %v3098 = vcvt.s32.f32 %v1562
        %v3099 = vcvt.s32.f32 %v1563
        %v3100 = vcvt.s32.f32 %v1564
        %v3101 = vcvt.s32.f32 %v1565
        %v3102 = vcvt.s32.f32 %v1566
        %v3103 = vcvt.s32.f32 %v1567
        %v3104 = vcvt.s32.f32 %v1568
        %v3105 = vcvt.s32.f32 %v1569
        %v3106 = vcvt.s32.f32 %v1570
        %v3107 = vcvt.s32.f32 %v1571
        %v3108 = vcvt.s32.f32 %v1572
        %v3109 = vcvt.s32.f32 %v1573
        %v3110 = vcvt.s32.f32 %v1574
        %v3111 = vcvt.s32.f32 %v1575
        %v3112 = vcvt.s32.f32 %v1576
        %v3113 = vcvt.s32.f32 %v1577
        %v3114 = vcvt.s32.f32 %v1578
        %v3115 = vcvt.s32.f32 %v1579
        %v3116 = vcvt.s32.f32 %v1580
        %v3117 = vcvt.s32.f32 %v1581
        %v3118 = vcvt.s32.f32 %v1582
        %v3119 = vcvt.s32.f32 %v1583
        %v3120 = vcvt.s32.f32 %v1584
        %v3121 = vcvt.s32.f32 %v1585
        %v3122 = vcvt.s32.f32 %v1586
        %v3123 = vcvt.s32.f32 %v1587
        %v3124 = vcvt.s32.f32 %v1588
        %v3125 = vcvt.s32.f32 %v1589
        %v3126 = vcvt.s32.f32 %v1590
        %v3127 = vcvt.s32.f32 %v1591
        %v3128 = vcvt.s32.f32 %v1592
        %v3129 = vcvt.s32.f32 %v1593
        %v3130 = vcvt.s32.f32 %v1594
        %v3131 = vcvt.s32.f32 %v1595
        %v3132 = vcvt.s32.f32 %v1596
        %v3133 = vcvt.s32.f32 %v1597
        %v3134 = vcvt.s32.f32 %v1598
        %v3135 = vcvt.s32.f32 %v1599
        %v3136 = vcvt.s32.f32 %v1600
        %v3137 = vcvt.s32.f32 %v1601
        %v3138 = vcvt.s32.f32 %v1602
        %v3139 = vcvt.s32.f32 %v1603
        %v3140 = vcvt.s32.f32 %v1604
        %v3141 = vcvt.s32.f32 %v1605
        %v3142 = vcvt.s32.f32 %v1606
        %v3143 = vcvt.s32.f32 %v1607
        %v3144 = vcvt.s32.f32 %v1608
        %v3145 = vcvt.s32.f32 %v1609
        %v3146 = vcvt.s32.f32 %v1610
        %v3147 = vcvt.s32.f32 %v1611
        %v3148 = vcvt.s32.f32 %v1612
        %v3149 = vcvt.s32.f32 %v1613
        %v3150 = vcvt.s32.f32 %v1614
        %v3151 = vcvt.s32.f32 %v1615
        %v3152 = vcvt.s32.f32 %v1616
        %v3153 = vcvt.s32.f32 %v1617
        %v3154 = vcvt.s32.f32 %v1618
        %v3155 = vcvt.s32.f32 %v1619
        %v3156 = vcvt.s32.f32 %v1620
        %v3157 = vcvt.s32.f32 %v1621
        %v3158 = vcvt.s32.f32 %v1622
        %v3159 = vcvt.s32.f32 %v1623
        %v3160 = vcvt.s32.f32 %v1624
        %v3161 = vcvt.s32.f32 %v1625
        %v3162 = vcvt.s32.f32 %v1626
        %v3163 = vcvt.s32.f32 %v1627
        %v3164 = vcvt.s32.f32 %v1628
        %v3165 = vcvt.s32.f32 %v1629
        %v3166 = vcvt.s32.f32 %v1630
        %v3167 = vcvt.s32.f32 %v1631
        %v3168 = vcvt.s32.f32 %v1632
        %v3169 = vcvt.s32.f32 %v1633
        %v3170 = vcvt.s32.f32 %v1634
        %v3171 = vcvt.s32.f32 %v1635
        %v3172 = vcvt.s32.f32 %v1636
        %v3173 = vcvt.s32.f32 %v1637
        %v3174 = vcvt.s32.f32 %v1638
        %v3175 = vcvt.s32.f32 %v1639
        %v3176 = vcvt.s32.f32 %v1640
        %v3177 = vcvt.s32.f32 %v1641
        %v3178 = vcvt.s32.f32 %v1642
        %v3179 = vcvt.s32.f32 %v1643
        %v3180 = vcvt.s32.f32 %v1644
        %v3181 = vcvt.s32.f32 %v1645
        %v3182 = vcvt.s32.f32 %v1646
        %v3183 = vcvt.s32.f32 %v1647
        %v3184 = vcvt.s32.f32 %v1648
        %v3185 = vcvt.s32.f32 %v1649
        %v3186 = vcvt.s32.f32 %v1650
        %v3187 = vcvt.s32.f32 %v1651
        %v3188 = vcvt.s32.f32 %v1652
        %v3189 = vcvt.s32.f32 %v1653
        %v3190 = vcvt.s32.f32 %v1654
        %v3191 = vcvt.s32.f32 %v1655
        %v3192 = vcvt.s32.f32 %v1656
        %v3193 = vcvt.s32.f32 %v1657
        %v3194 = vcvt.s32.f32 %v1658
        %v3195 = vcvt.s32.f32 %v1659
        %v3196 = vcvt.s32.f32 %v1660
        %v3197 = vcvt.s32.f32 %v1661
        %v3198 = vcvt.s32.f32 %v1662
        %v3199 = vcvt.s32.f32 %v1663
        %v3200 = vcvt.s32.f32 %v1664
        %v3201 = vcvt.s32.f32 %v1665
        %v3202 = vcvt.s32.f32 %v1666
        %v3203 = vcvt.s32.f32 %v1667
        %v3204 = vcvt.s32.f32 %v1668
        %v3205 = vcvt.s32.f32 %v1669
        %v3206 = vcvt.s32.f32 %v1670
        %v3207 = vcvt.s32.f32 %v1671
        %v3208 = vcvt.s32.f32 %v1672
        %v3209 = vcvt.s32.f32 %v1673
        %v3210 = vcvt.s32.f32 %v1674
        %v3211 = vcvt.s32.f32 %v1675
        %v3212 = vcvt.s32.f32 %v1676
        %v3213 = vcvt.s32.f32 %v1677
        %v3214 = vcvt.s32.f32 %v1678
        %v3215 = vcvt.s32.f32 %v1679
        %v3216 = vcvt.s32.f32 %v1680
        %v3217 = vcvt.s32.f32 %v1681
        %v3218 = vcvt.s32.f32 %v1682
        %v3219 = vcvt.s32.f32 %v1683
        %v3220 = vcvt.s32.f32 %v1684
        %v3221 = vcvt.s32.f32 %v1685
        %v3222 = vcvt.s32.f32 %v1686
        %v3223 = vcvt.s32.f32 %v1687
        %v3224 = vcvt.s32.f32 %v1688
        %v3225 = vcvt.s32.f32 %v1689
        %v3226 = vcvt.s32.f32 %v1690
        %v3227 = vcvt.s32.f32 %v1691
        %v3228 = vcvt.s32.f32 %v1692
        %v3229 = vcvt.s32.f32 %v1693
        %v3230 = vcvt.s32.f32 %v1694
        %v3231 = vcvt.s32.f32 %v1695
        %v3232 = vcvt.s32.f32 %v1696
        %v3233 = vcvt.s32.f32 %v1697
        %v3234 = vcvt.s32.f32 %v1698
        %v3235 = vcvt.s32.f32 %v1699
        %v3236 = vcvt.s32.f32 %v1700
        %v3237 = vcvt.s32.f32 %v1701
        %v3238 = vcvt.s32.f32 %v1702
        %v3239 = vcvt.s32.f32 %v1703
        %v3240 = vcvt.s32.f32 %v1704
        %v3241 = vcvt.s32.f32 %v1705
        %v3242 = vcvt.s32.f32 %v1706
        %v3243 = vcvt.s32.f32 %v1707
        %v3244 = vcvt.s32.f32 %v1708
        %v3245 = vcvt.s32.f32 %v1709
        %v3246 = vcvt.s32.f32 %v1710
        %v3247 = vcvt.s32.f32 %v1711
        %v3248 = vcvt.s32.f32 %v1712
        %v3249 = vcvt.s32.f32 %v1713
        %v3250 = vcvt.s32.f32 %v1714
        %v3251 = vcvt.s32.f32 %v1715
        %v3252 = vcvt.s32.f32 %v1716
        %v3253 = vcvt.s32.f32 %v1717
        %v3254 = vcvt.s32.f32 %v1718
        %v3255 = vcvt.s32.f32 %v1719
        %v3256 = vcvt.s32.f32 %v1720
        %v3257 = vcvt.s32.f32 %v1721
        %v3258 = vcvt.s32.f32 %v1722
        %v3259 = vcvt.s32.f32 %v1723
        %v3260 = vcvt.s32.f32 %v1724
        %v3261 = vcvt.s32.f32 %v1725
        %v3262 = vcvt.s32.f32 %v1726
        %v3263 = vcvt.s32.f32 %v1727
        %v3264 = vcvt.s32.f32 %v1728
        %v3265 = vcvt.s32.f32 %v1729
        %v3266 = vcvt.s32.f32 %v1730
        %v3267 = vcvt.s32.f32 %v1731
        %v3268 = vcvt.s32.f32 %v1732
        %v3269 = vcvt.s32.f32 %v1733
        %v3270 = vcvt.s32.f32 %v1734
        %v3271 = vcvt.s32.f32 %v1735
        %v3272 = vcvt.s32.f32 %v1736
        %v3273 = vcvt.s32.f32 %v1737
        %v3274 = vcvt.s32.f32 %v1738
        %v3275 = vcvt.s32.f32 %v1739
        %v3276 = vcvt.s32.f32 %v1740
        %v3277 = vcvt.s32.f32 %v1741
        %v3278 = vcvt.s32.f32 %v1742
        %v3279 = vcvt.s32.f32 %v1743
        %v3280 = vcvt.s32.f32 %v1744
        %v3281 = vcvt.s32.f32 %v1745
        %v3282 = vcvt.s32.f32 %v1746
        %v3283 = vcvt.s32.f32 %v1747
        %v3284 = vcvt.s32.f32 %v1748
        %v3285 = vcvt.s32.f32 %v1749
        %v3286 = vcvt.s32.f32 %v1750
        %v3287 = vcvt.s32.f32 %v1751
        %v3288 = vcvt.s32.f32 %v1752
        %v3289 = vcvt.s32.f32 %v1753
        %v3290 = vcvt.s32.f32 %v1754
        %v3291 = vcvt.s32.f32 %v1755
        %v3292 = vcvt.s32.f32 %v1756
        %v3293 = vcvt.s32.f32 %v1757
        %v3294 = vcvt.s32.f32 %v1758
        %v3295 = vcvt.s32.f32 %v1759
        %v3296 = vcvt.s32.f32 %v1760
        %v3297 = vcvt.s32.f32 %v1761
        %v3298 = vcvt.s32.f32 %v1762
        %v3299 = vcvt.s32.f32 %v1763
        %v3300 = vcvt.s32.f32 %v1764
        %v3301 = vcvt.s32.f32 %v1765
        %v3302 = vcvt.s32.f32 %v1766
        %v3303 = vcvt.s32.f32 %v1767
        %v3304 = vcvt.s32.f32 %v1768
        %v3305 = vcvt.s32.f32 %v1769
        %v3306 = vcvt.s32.f32 %v1770
        %v3307 = vcvt.s32.f32 %v1771
        %v3308 = vcvt.s32.f32 %v1772
        %v3309 = vcvt.s32.f32 %v1773
        %v3310 = vcvt.s32.f32 %v1774
        %v3311 = vcvt.s32.f32 %v1775
        %v3312 = vcvt.s32.f32 %v1776
        %v3313 = vcvt.s32.f32 %v1777
        %v3314 = vcvt.s32.f32 %v1778
        %v3315 = vcvt.s32.f32 %v1779
        %v3316 = vcvt.s32.f32 %v1780
        %v3317 = vcvt.s32.f32 %v1781
        %v3318 = vcvt.s32.f32 %v1782
        %v3319 = vcvt.s32.f32 %v1783
        %v3320 = vcvt.s32.f32 %v1784
        %v3321 = vcvt.s32.f32 %v1785
        %v3322 = vcvt.s32.f32 %v1786
        %v3323 = vcvt.s32.f32 %v1787
        %v3324 = vcvt.s32.f32 %v1788
        %v3325 = vcvt.s32.f32 %v1789
        %v3326 = vcvt.s32.f32 %v1790
        %v3327 = vcvt.s32.f32 %v1791
        %v3328 = vcvt.s32.f32 %v1792
        %v3329 = vcvt.s32.f32 %v1793
        %v3330 = vcvt.s32.f32 %v1794
        %v3331 = vcvt.s32.f32 %v1795
        %v3332 = vcvt.s32.f32 %v1796
        %v3333 = vcvt.s32.f32 %v1797
        %v3334 = vcvt.s32.f32 %v1798
        %v3335 = vcvt.s32.f32 %v1799
        %v3336 = vcvt.s32.f32 %v1800
        %v3337 = vcvt.s32.f32 %v1801
        %v3338 = vcvt.s32.f32 %v1802
        %v3339 = vcvt.s32.f32 %v1803
        %v3340 = vcvt.s32.f32 %v1804
        %v3341 = vcvt.s32.f32 %v1805
        %v3342 = vcvt.s32.f32 %v1806
        %v3343 = vcvt.s32.f32 %v1807
        %v3344 = vcvt.s32.f32 %v1808
        %v3345 = vcvt.s32.f32 %v1809
        %v3346 = vcvt.s32.f32 %v1810
        %v3347 = vcvt.s32.f32 %v1811
        %v3348 = vcvt.s32.f32 %v1812
        %v3349 = vcvt.s32.f32 %v1813
        %v3350 = vcvt.s32.f32 %v1814
        %v3351 = vcvt.s32.f32 %v1815
        %v3352 = vcvt.s32.f32 %v1816
        %v3353 = vcvt.s32.f32 %v1817
        %v3354 = vcvt.s32.f32 %v1818
        %v3355 = vcvt.s32.f32 %v1819
        %v3356 = vcvt.s32.f32 %v1820
        %v3357 = vcvt.s32.f32 %v1821
        %v3358 = vcvt.s32.f32 %v1822
        %v3359 = vcvt.s32.f32 %v1823
        %v3360 = vcvt.s32.f32 %v1824
        %v3361 = vcvt.s32.f32 %v1825
        %v3362 = vcvt.s32.f32 %v1826
        %v3363 = vcvt.s32.f32 %v1827
        %v3364 = vcvt.s32.f32 %v1828
        %v3365 = vcvt.s32.f32 %v1829
        %v3366 = vcvt.s32.f32 %v1830
        %v3367 = vcvt.s32.f32 %v1831
        %v3368 = vcvt.s32.f32 %v1832
        %v3369 = vcvt.s32.f32 %v1833
        %v3370 = vcvt.s32.f32 %v1834
        %v3371 = vcvt.s32.f32 %v1835
        %v3372 = vcvt.s32.f32 %v1836
        %v3373 = vcvt.s32.f32 %v1837
        %v3374 = vcvt.s32.f32 %v1838
        %v3375 = vcvt.s32.f32 %v1839
        %v3376 = vcvt.s32.f32 %v1840
        %v3377 = vcvt.s32.f32 %v1841
        %v3378 = vcvt.s32.f32 %v1842
        %v3379 = vcvt.s32.f32 %v1843
        %v3380 = vcvt.s32.f32 %v1844
        %v3381 = vcvt.s32.f32 %v1845
        %v3382 = vcvt.s32.f32 %v1846
        %v3383 = vcvt.s32.f32 %v1847
        %v3384 = vcvt.s32.f32 %v1848
        %v3385 = vcvt.s32.f32 %v1849
        %v3386 = vcvt.s32.f32 %v1850
        %v3387 = vcvt.s32.f32 %v1851
        %v3388 = vcvt.s32.f32 %v1852
        %v3389 = vcvt.s32.f32 %v1853
        %v3390 = vcvt.s32.f32 %v1854
        %v3391 = vcvt.s32.f32 %v1855
        %v3392 = vcvt.s32.f32 %v1856
        %v3393 = vcvt.s32.f32 %v1857
        %v3394 = vcvt.s32.f32 %v1858
        %v3395 = vcvt.s32.f32 %v1859
        %v3396 = vcvt.s32.f32 %v1860
        %v3397 = vcvt.s32.f32 %v1861
        %v3398 = vcvt.s32.f32 %v1862
        %v3399 = vcvt.s32.f32 %v1863
        %v3400 = vcvt.s32.f32 %v1864
        %v3401 = vcvt.s32.f32 %v1865
        %v3402 = vcvt.s32.f32 %v1866
        %v3403 = vcvt.s32.f32 %v1867
        %v3404 = vcvt.s32.f32 %v1868
        %v3405 = vcvt.s32.f32 %v1869
        %v3406 = vcvt.s32.f32 %v1870
        %v3407 = vcvt.s32.f32 %v1871
        %v3408 = vcvt.s32.f32 %v1872
        %v3409 = vcvt.s32.f32 %v1873
        %v3410 = vcvt.s32.f32 %v1874
        %v3411 = vcvt.s32.f32 %v1875
        %v3412 = vcvt.s32.f32 %v1876
        %v3413 = vcvt.s32.f32 %v1877
        %v3414 = vcvt.s32.f32 %v1878
        %v3415 = vcvt.s32.f32 %v1879
        %v3416 = vcvt.s32.f32 %v1880
        %v3417 = vcvt.s32.f32 %v1881
        %v3418 = vcvt.s32.f32 %v1882
        %v3419 = vcvt.s32.f32 %v1883
        %v3420 = vcvt.s32.f32 %v1884
        %v3421 = vcvt.s32.f32 %v1885
        %v3422 = vcvt.s32.f32 %v1886
        %v3423 = vcvt.s32.f32 %v1887
        %v3424 = vcvt.s32.f32 %v1888
        %v3425 = vcvt.s32.f32 %v1889
        %v3426 = vcvt.s32.f32 %v1890
        %v3427 = vcvt.s32.f32 %v1891
        %v3428 = vcvt.s32.f32 %v1892
        %v3429 = vcvt.s32.f32 %v1893
        %v3430 = vcvt.s32.f32 %v1894
        %v3431 = vcvt.s32.f32 %v1895
        %v3432 = vcvt.s32.f32 %v1896
        %v3433 = vcvt.s32.f32 %v1897
        %v3434 = vcvt.s32.f32 %v1898
        %v3435 = vcvt.s32.f32 %v1899
        %v3436 = vcvt.s32.f32 %v1900
        %v3437 = vcvt.s32.f32 %v1901
        %v3438 = vcvt.s32.f32 %v1902
        %v3439 = vcvt.s32.f32 %v1903
        %v3440 = vcvt.s32.f32 %v1904
        %v3441 = vcvt.s32.f32 %v1905
        %v3442 = vcvt.s32.f32 %v1906
        %v3443 = vcvt.s32.f32 %v1907
        %v3444 = vcvt.s32.f32 %v1908
        %v3445 = vcvt.s32.f32 %v1909
        %v3446 = vcvt.s32.f32 %v1910
        %v3447 = vcvt.s32.f32 %v1911
        %v3448 = vcvt.s32.f32 %v1912
        %v3449 = vcvt.s32.f32 %v1913
        %v3450 = vcvt.s32.f32 %v1914
        %v3451 = vcvt.s32.f32 %v1915
        %v3452 = vcvt.s32.f32 %v1916
        %v3453 = vcvt.s32.f32 %v1917
        %v3454 = vcvt.s32.f32 %v1918
        %v3455 = vcvt.s32.f32 %v1919
        %v3456 = vcvt.s32.f32 %v1920
        %v3457 = vcvt.s32.f32 %v1921
        %v3458 = vcvt.s32.f32 %v1922
        %v3459 = vcvt.s32.f32 %v1923
        %v3460 = vcvt.s32.f32 %v1924
        %v3461 = vcvt.s32.f32 %v1925
        %v3462 = vcvt.s32.f32 %v1926
        %v3463 = vcvt.s32.f32 %v1927
        %v3464 = vcvt.s32.f32 %v1928
        %v3465 = vcvt.s32.f32 %v1929
        %v3466 = vcvt.s32.f32 %v1930
        %v3467 = vcvt.s32.f32 %v1931
        %v3468 = vcvt.s32.f32 %v1932
        %v3469 = vcvt.s32.f32 %v1933
        %v3470 = vcvt.s32.f32 %v1934
        %v3471 = vcvt.s32.f32 %v1935
        %v3472 = vcvt.s32.f32 %v1936
        %v3473 = vcvt.s32.f32 %v1937
        %v3474 = vcvt.s32.f32 %v1938
        %v3475 = vcvt.s32.f32 %v1939
        %v3476 = vcvt.s32.f32 %v1940
        %v3477 = vcvt.s32.f32 %v1941
        %v3478 = vcvt.s32.f32 %v1942
        %v3479 = vcvt.s32.f32 %v1943
        %v3480 = vcvt.s32.f32 %v1944
        %v3481 = vcvt.s32.f32 %v1945
        %v3482 = vcvt.s32.f32 %v1946
        %v3483 = vcvt.s32.f32 %v1947
        %v3484 = vcvt.s32.f32 %v1948
        %v3485 = vcvt.s32.f32 %v1949
        %v3486 = vcvt.s32.f32 %v1950
        %v3487 = vcvt.s32.f32 %v1951
        %v3488 = vcvt.s32.f32 %v1952
        %v3489 = vcvt.s32.f32 %v1953
        %v3490 = vcvt.s32.f32 %v1954
        %v3491 = vcvt.s32.f32 %v1955
        %v3492 = vcvt.s32.f32 %v1956
        %v3493 = vcvt.s32.f32 %v1957
        %v3494 = vcvt.s32.f32 %v1958
        %v3495 = vcvt.s32.f32 %v1959
        %v3496 = vcvt.s32.f32 %v1960
        %v3497 = vcvt.s32.f32 %v1961
        %v3498 = vcvt.s32.f32 %v1962
        %v3499 = vcvt.s32.f32 %v1963
        %v3500 = vcvt.s32.f32 %v1964
        %v3501 = vcvt.s32.f32 %v1965
        %v3502 = vcvt.s32.f32 %v1966
        %v3503 = vcvt.s32.f32 %v1967
        %v3504 = vcvt.s32.f32 %v1968
        %v3505 = vcvt.s32.f32 %v1969
        %v3506 = vcvt.s32.f32 %v1970
        %v3507 = vcvt.s32.f32 %v1971
        %v3508 = vcvt.s32.f32 %v1972
        %v3509 = vcvt.s32.f32 %v1973
        %v3510 = vcvt.s32.f32 %v1974
        %v3511 = vcvt.s32.f32 %v1975
        %v3512 = vcvt.s32.f32 %v1976
        %v3513 = vcvt.s32.f32 %v1977
        %v3514 = vcvt.s32.f32 %v1978
        %v3515 = vcvt.s32.f32 %v1979
        %v3516 = vcvt.s32.f32 %v1980
        %v3517 = vcvt.s32.f32 %v1981
        %v3518 = vcvt.s32.f32 %v1982
        %v3519 = vcvt.s32.f32 %v1983
        %v3520 = vcvt.s32.f32 %v1984
        %v3521 = vcvt.s32.f32 %v1985
        %v3522 = vcvt.s32.f32 %v1986
        %v3523 = vcvt.s32.f32 %v1987
        %v3524 = vcvt.s32.f32 %v1988
        %v3525 = vcvt.s32.f32 %v1989
        %v3526 = vcvt.s32.f32 %v1990
        %v3527 = vcvt.s32.f32 %v1991
        %v3528 = vcvt.s32.f32 %v1992
        %v3529 = vcvt.s32.f32 %v1993
        %v3530 = vcvt.s32.f32 %v1994
        %v3531 = vcvt.s32.f32 %v1995
        %v3532 = vcvt.s32.f32 %v1996
        %v3533 = vcvt.s32.f32 %v1997
        %v3534 = vcvt.s32.f32 %v1998
        %v3535 = vcvt.s32.f32 %v1999
        %v3536 = vcvt.s32.f32 %v2000
        %v3537 = vcvt.s32.f32 %v2001
        %v3538 = vcvt.s32.f32 %v2002
        %v3539 = vcvt.s32.f32 %v2003
        %v3540 = vcvt.s32.f32 %v2004
        %v3541 = vcvt.s32.f32 %v2005
        %v3542 = vcvt.s32.f32 %v2006
        %v3543 = vcvt.s32.f32 %v2007
        %v3544 = vcvt.s32.f32 %v2008
        %v3545 = vcvt.s32.f32 %v2009
        %v3546 = vcvt.s32.f32 %v2010
        %v3547 = vcvt.s32.f32 %v2011
        %v3548 = vcvt.s32.f32 %v2012
        %v3549 = vcvt.s32.f32 %v2013
        %v3550 = vcvt.s32.f32 %v2014
        %v3551 = vcvt.s32.f32 %v2015
        %v3552 = vcvt.s32.f32 %v2016
        %v3553 = vcvt.s32.f32 %v2017
        %v3554 = vcvt.s32.f32 %v2018
        %v3555 = vcvt.s32.f32 %v2019
        %v3556 = vcvt.s32.f32 %v2020
        %v3557 = vcvt.s32.f32 %v2021
        %v3558 = vcvt.s32.f32 %v2022
        %v3559 = vcvt.s32.f32 %v2023
        %v3560 = vcvt.s32.f32 %v2024
        %v3561 = vcvt.s32.f32 %v2025
        %v3562 = vcvt.s32.f32 %v2026
        %v3563 = vcvt.s32.f32 %v2027
        %v3564 = vcvt.s32.f32 %v2028
        %v3565 = vcvt.s32.f32 %v2029
        %v3566 = vcvt.s32.f32 %v2030
        %v3567 = vcvt.s32.f32 %v2031
        %v3568 = vcvt.s32.f32 %v2032
        %v3569 = vcvt.s32.f32 %v2033
        %v3570 = vcvt.s32.f32 %v2034
        %v3571 = vcvt.s32.f32 %v2035
        %v3572 = vcvt.s32.f32 %v2036
        %v3573 = vcvt.s32.f32 %v2037
        %v3574 = vcvt.s32.f32 %v2038
        %v3575 = vcvt.s32.f32 %v2039
        %v3576 = vcvt.s32.f32 %v2040
        %v3577 = vcvt.s32.f32 %v2041
        %v3578 = vcvt.s32.f32 %v2042
        %v3579 = vcvt.s32.f32 %v2043
        %v3580 = vcvt.s32.f32 %v2044
        %v3581 = vcvt.s32.f32 %v2045
        %v3582 = vcvt.s32.f32 %v2046
        %v3583 = vcvt.s32.f32 %v2047
        %v3584 = vcvt.s32.f32 %v2048
        %v3585 = vcvt.s32.f32 %v2049
        %v3586 = vcvt.s32.f32 %v2050
        %v3587 = vcvt.s32.f32 %v2051
        %v3588 = vcvt.s32.f32 %v2052
        %v3589 = vcvt.s32.f32 %v2053
        %v3590 = vcvt.s32.f32 %v2054
        %v3591 = vcvt.s32.f32 %v2055
        %v3592 = vcvt.s32.f32 %v2056
        %v3593 = vcvt.s32.f32 %v2057
        %v3594 = vcvt.s32.f32 %v2058
        %v3595 = vcvt.s32.f32 %v2059
        %v3596 = vcvt.s32.f32 %v2060
        %v3597 = vcvt.s32.f32 %v2061
        %v3598 = vcvt.s32.f32 %v2062
        %v3599 = vcvt.s32.f32 %v2063
        %v3600 = vcvt.s32.f32 %v2064
        %v3601 = vcvt.s32.f32 %v2065
        %v3602 = vcvt.s32.f32 %v2066
        %v3603 = vcvt.s32.f32 %v2067
        %v3604 = vcvt.s32.f32 %v2068
        %v3605 = vcvt.s32.f32 %v2069
        %v3606 = vcvt.s32.f32 %v2070
        %v3607 = vcvt.s32.f32 %v2071
        %v3608 = vcvt.s32.f32 %v2072
        %v3609 = vcvt.s32.f32 %v2073
        %v3610 = vcvt.s32.f32 %v2074
        %v3611 = vcvt.s32.f32 %v2075
        %v3612 = vcvt.s32.f32 %v2076
        %v3613 = vcvt.s32.f32 %v2077
        %v3614 = vcvt.s32.f32 %v2078
        %v3615 = vcvt.s32.f32 %v2079
        %v3616 = vcvt.s32.f32 %v2080
        %v3617 = vcvt.s32.f32 %v2081
        %v3618 = vcvt.s32.f32 %v2082
        %v3619 = vcvt.s32.f32 %v2083
        %v3620 = vcvt.s32.f32 %v2084
        %v3621 = vcvt.s32.f32 %v2085
        %v3622 = vcvt.s32.f32 %v2086
        %v3623 = vcvt.s32.f32 %v2087
        %v3624 = vcvt.s32.f32 %v2088
        %v3625 = vcvt.s32.f32 %v2089
        %v3626 = vcvt.s32.f32 %v2090
        %v3627 = vcvt.s32.f32 %v2091
        %v3628 = vcvt.s32.f32 %v2092
        %v3629 = vcvt.s32.f32 %v2093
        %v3630 = vcvt.s32.f32 %v2094
        %v3631 = vcvt.s32.f32 %v2095
        %v3632 = vcvt.s32.f32 %v2096
        %v3633 = vcvt.s32.f32 %v2097
        %v3634 = vcvt.s32.f32 %v2098
        %v3635 = vcvt.s32.f32 %v2099
        %v3636 = vcvt.s32.f32 %v2100
        %v3637 = vcvt.s32.f32 %v2101
        %v3638 = vcvt.s32.f32 %v2102
        %v3639 = vcvt.s32.f32 %v2103
        %v3640 = vcvt.s32.f32 %v2104
        %v3641 = vcvt.s32.f32 %v2105
        %v3642 = vcvt.s32.f32 %v2106
        %v3643 = vcvt.s32.f32 %v2107
        %v3644 = vcvt.s32.f32 %v2108
        %v3645 = vcvt.s32.f32 %v2109
        %v3646 = vcvt.s32.f32 %v2110
        %v3647 = vcvt.s32.f32 %v2111
        %v3648 = vcvt.s32.f32 %v2112
        %v3649 = vcvt.s32.f32 %v2113
        %v3650 = vcvt.s32.f32 %v2114
        %v3651 = vcvt.s32.f32 %v2115
        %v3652 = vcvt.s32.f32 %v2116
        %v3653 = vcvt.s32.f32 %v2117
        %v3654 = vcvt.s32.f32 %v2118
        %v3655 = vcvt.s32.f32 %v2119
        %v3656 = vcvt.s32.f32 %v2120
        %v3657 = vcvt.s32.f32 %v2121
        %v3658 = vcvt.s32.f32 %v2122
        %v3659 = vcvt.s32.f32 %v2123
        %v3660 = vcvt.s32.f32 %v2124
        %v3661 = vcvt.s32.f32 %v2125
        %v3662 = vcvt.s32.f32 %v2126
        %v3663 = vcvt.s32.f32 %v2127
        %v3664 = vcvt.s32.f32 %v2128
        %v3665 = vcvt.s32.f32 %v2129
        %v3666 = vcvt.s32.f32 %v2130
        %v3667 = vcvt.s32.f32 %v2131
        %v3668 = vcvt.s32.f32 %v2132
        %v3669 = vcvt.s32.f32 %v2133
        %v3670 = vcvt.s32.f32 %v2134
        %v3671 = vcvt.s32.f32 %v2135
        %v3672 = vcvt.s32.f32 %v2136
        %v3673 = vcvt.s32.f32 %v2137
        %v3674 = vcvt.s32.f32 %v2138
        %v3675 = vcvt.s32.f32 %v2139
        %v3676 = vcvt.s32.f32 %v2140
        %v3677 = vcvt.s32.f32 %v2141
        %v3678 = vcvt.s32.f32 %v2142
        %v3679 = vcvt.s32.f32 %v2143
        %v3680 = vcvt.s32.f32 %v2144
        %v3681 = vcvt.s32.f32 %v2145
        %v3682 = vcvt.s32.f32 %v2146
        %v3683 = vcvt.s32.f32 %v2147
        %v3684 = vcvt.s32.f32 %v2148
        %v3685 = vcvt.s32.f32 %v2149
        %v3686 = vcvt.s32.f32 %v2150
        %v3687 = vcvt.s32.f32 %v2151
        %v3688 = vcvt.s32.f32 %v2152
        %v3689 = vcvt.s32.f32 %v2153
        %v3690 = vcvt.s32.f32 %v2154
        %v3691 = vcvt.s32.f32 %v2155
        %v3692 = vcvt.s32.f32 %v2156
        %v3693 = vcvt.s32.f32 %v2157
        %v3694 = vcvt.s32.f32 %v2158
        %v3695 = vcvt.s32.f32 %v2159
        %v3696 = vcvt.s32.f32 %v2160
        %v3697 = vcvt.s32.f32 %v2161
        %v3698 = vcvt.s32.f32 %v2162
        %v3699 = vcvt.s32.f32 %v2163
        %v3700 = vcvt.s32.f32 %v2164
        %v3701 = vcvt.s32.f32 %v2165
        %v3702 = vcvt.s32.f32 %v2166
        %v3703 = vcvt.s32.f32 %v2167
        %v3704 = vcvt.s32.f32 %v2168
        %v3705 = vcvt.s32.f32 %v2169
        %v3706 = vcvt.s32.f32 %v2170
        %v3707 = vcvt.s32.f32 %v2171
        %v3708 = vcvt.s32.f32 %v2172
        %v3709 = vcvt.s32.f32 %v2173
        %v3710 = vcvt.s32.f32 %v2174
        %v3711 = vcvt.s32.f32 %v2175
        %v3712 = vcvt.s32.f32 %v2176
        %v3713 = vcvt.s32.f32 %v2177
        %v3714 = vcvt.s32.f32 %v2178
        %v3715 = vcvt.s32.f32 %v2179
        %v3716 = vcvt.s32.f32 %v2180
        %v3717 = vcvt.s32.f32 %v2181
        %v3718 = vcvt.s32.f32 %v2182
        %v3719 = vcvt.s32.f32 %v2183
        %v3720 = vcvt.s32.f32 %v2184
        %v3721 = vcvt.s32.f32 %v2185
        %v3722 = vcvt.s32.f32 %v2186
        %v3723 = vcvt.s32.f32 %v2187
        %v3724 = vcvt.s32.f32 %v2188
        %v3725 = vcvt.s32.f32 %v2189
        %v3726 = vcvt.s32.f32 %v2190
        %v3727 = vcvt.s32.f32 %v2191
        %v3728 = vcvt.s32.f32 %v2192
        %v3729 = vcvt.s32.f32 %v2193
        %v3730 = vcvt.s32.f32 %v2194
        %v3731 = vcvt.s32.f32 %v2195
        %v3732 = vcvt.s32.f32 %v2196
        %v3733 = vcvt.s32.f32 %v2197
        %v3734 = vcvt.s32.f32 %v2198
        %v3735 = vcvt.s32.f32 %v2199
        %v3736 = vcvt.s32.f32 %v2200
        %v3737 = vcvt.s32.f32 %v2201
        %v3738 = vcvt.s32.f32 %v2202
        %v3739 = vcvt.s32.f32 %v2203
        %v3740 = vcvt.s32.f32 %v2204
        %v3741 = vcvt.s32.f32 %v2205
        %v3742 = vcvt.s32.f32 %v2206
        %v3743 = vcvt.s32.f32 %v2207
        %v3744 = vcvt.s32.f32 %v2208
        %v3745 = vcvt.s32.f32 %v2209
        %v3746 = vcvt.s32.f32 %v2210
        %v3747 = vcvt.s32.f32 %v2211
        %v3748 = vcvt.s32.f32 %v2212
        %v3749 = vcvt.s32.f32 %v2213
        %v3750 = vcvt.s32.f32 %v2214
        %v3751 = vcvt.s32.f32 %v2215
        %v3752 = vcvt.s32.f32 %v2216
        %v3753 = vcvt.s32.f32 %v2217
        %v3754 = vcvt.s32.f32 %v2218
        %v3755 = vcvt.s32.f32 %v2219
        %v3756 = vcvt.s32.f32 %v2220
        %v3757 = vcvt.s32.f32 %v2221
        %v3758 = vcvt.s32.f32 %v2222
        %v3759 = vcvt.s32.f32 %v2223
        %v3760 = vcvt.s32.f32 %v2224
        %v3761 = vcvt.s32.f32 %v2225
        %v3762 = vcvt.s32.f32 %v2226
        %v3763 = vcvt.s32.f32 %v2227
        %v3764 = vcvt.s32.f32 %v2228
        %v3765 = vcvt.s32.f32 %v2229
        %v3766 = vcvt.s32.f32 %v2230
        %v3767 = vcvt.s32.f32 %v2231
        %v3768 = vcvt.s32.f32 %v2232
        %v3769 = vcvt.s32.f32 %v2233
        %v3770 = vcvt.s32.f32 %v2234
        %v3771 = vcvt.s32.f32 %v2235
        %v3772 = vcvt.s32.f32 %v2236
        %v3773 = vcvt.s32.f32 %v2237
        %v3774 = vcvt.s32.f32 %v2238
        %v3775 = vcvt.s32.f32 %v2239
        %v3776 = vcvt.s32.f32 %v2240
        %v3777 = vcvt.s32.f32 %v2241
        %v3778 = vcvt.s32.f32 %v2242
        %v3779 = vcvt.s32.f32 %v2243
        %v3780 = vcvt.s32.f32 %v2244
        %v3781 = vcvt.s32.f32 %v2245
        %v3782 = vcvt.s32.f32 %v2246
        %v3783 = vcvt.s32.f32 %v2247
        %v3784 = vcvt.s32.f32 %v2248
        %v3785 = vcvt.s32.f32 %v2249
        %v3786 = vcvt.s32.f32 %v2250
        %v3787 = vcvt.s32.f32 %v2251
        %v3788 = vcvt.s32.f32 %v2252
        %v3789 = vcvt.s32.f32 %v2253
        %v3790 = vcvt.s32.f32 %v2254
        %v3791 = vcvt.s32.f32 %v2255
        %v3792 = vcvt.s32.f32 %v2256
        %v3793 = vcvt.s32.f32 %v2257
        %v3794 = vcvt.s32.f32 %v2258
        %v3795 = vcvt.s32.f32 %v2259
        %v3796 = vcvt.s32.f32 %v2260
        %v3797 = vcvt.s32.f32 %v2261
        %v3798 = vcvt.s32.f32 %v2262
        %v3799 = vcvt.s32.f32 %v2263
        %v3800 = vcvt.s32.f32 %v2264
        %v3801 = vcvt.s32.f32 %v2265
        %v3802 = vcvt.s32.f32 %v2266
        %v3803 = vcvt.s32.f32 %v2267
        %v3804 = vcvt.s32.f32 %v2268
        %v3805 = vcvt.s32.f32 %v2269
        %v3806 = vcvt.s32.f32 %v2270
        %v3807 = vcvt.s32.f32 %v2271
        %v3808 = vcvt.s32.f32 %v2272
        %v3809 = vcvt.s32.f32 %v2273
        %v3810 = vcvt.s32.f32 %v2274
        %v3811 = vcvt.s32.f32 %v2275
        %v3812 = vcvt.s32.f32 %v2276
        %v3813 = vcvt.s32.f32 %v2277
        %v3814 = vcvt.s32.f32 %v2278
        %v3815 = vcvt.s32.f32 %v2279
        %v3816 = vcvt.s32.f32 %v2280
        %v3817 = vcvt.s32.f32 %v2281
        %v3818 = vcvt.s32.f32 %v2282
        %v3819 = vcvt.s32.f32 %v2283
        %v3820 = vcvt.s32.f32 %v2284
        %v3821 = vcvt.s32.f32 %v2285
        %v3822 = vcvt.s32.f32 %v2286
        %v3823 = vcvt.s32.f32 %v2287
        %v3824 = vcvt.s32.f32 %v2288
        %v3825 = vcvt.s32.f32 %v2289
        %v3826 = vcvt.s32.f32 %v2290
        %v3827 = vcvt.s32.f32 %v2291
        %v3828 = vcvt.s32.f32 %v2292
        %v3829 = vcvt.s32.f32 %v2293
        %v3830 = vcvt.s32.f32 %v2294
        %v3831 = vcvt.s32.f32 %v2295
        %v3832 = vcvt.s32.f32 %v2296
        %v3833 = vcvt.s32.f32 %v2297
        %v3834 = vcvt.s32.f32 %v2298
        %v3835 = vcvt.s32.f32 %v2299
        %v3836 = vcvt.s32.f32 %v2300
        %v3837 = vcvt.s32.f32 %v2301
        %v3838 = vcvt.s32.f32 %v2302
        %v3839 = vcvt.s32.f32 %v2303
        %v3840 = vcvt.s32.f32 %v2304
        %v3841 = vcvt.s32.f32 %v2305
        %v3842 = vcvt.s32.f32 %v2306
        %v3843 = vcvt.s32.f32 %v2307
        %v3844 = vcvt.s32.f32 %v2308
        %v3845 = vcvt.s32.f32 %v2309
        %v3846 = vcvt.s32.f32 %v2310
        %v3847 = vcvt.s32.f32 %v2311
        %v3848 = vcvt.s32.f32 %v2312
        %v3849 = vcvt.s32.f32 %v2313
        %v3850 = vcvt.s32.f32 %v2314
        %v3851 = vcvt.s32.f32 %v2315
        %v3852 = vcvt.s32.f32 %v2316
        %v3853 = vcvt.s32.f32 %v2317
        %v3854 = vcvt.s32.f32 %v2318
        %v3855 = vcvt.s32.f32 %v2319
        %v3856 = vcvt.s32.f32 %v2320
        %v3857 = vcvt.s32.f32 %v2321
        %v3858 = vcvt.s32.f32 %v2322
        %v3859 = vcvt.s32.f32 %v2323
        %v3860 = vcvt.s32.f32 %v2324
        %v3861 = vcvt.s32.f32 %v2325
        %v3862 = vcvt.s32.f32 %v2326
        %v3863 = vcvt.s32.f32 %v2327
        %v3864 = vcvt.s32.f32 %v2328
        %v3865 = vcvt.s32.f32 %v2329
        %v3866 = vcvt.s32.f32 %v2330
        %v3867 = vcvt.s32.f32 %v2331
        %v3868 = vcvt.s32.f32 %v2332
        %v3869 = vcvt.s32.f32 %v2333
        %v3870 = vcvt.s32.f32 %v2334
        %v3871 = vcvt.s32.f32 %v2335
        %v3872 = vcvt.s32.f32 %v2336
        %v3873 = vcvt.s32.f32 %v2337
        %v3874 = vcvt.s32.f32 %v2338
        %v3875 = vcvt.s32.f32 %v2339
        %v3876 = vcvt.s32.f32 %v2340
        %v3877 = vcvt.s32.f32 %v2341
        %v3878 = vcvt.s32.f32 %v2342
        %v3879 = vcvt.s32.f32 %v2343
        %v3880 = vcvt.s32.f32 %v2344
        %v3881 = vcvt.s32.f32 %v2345
        %v3882 = vcvt.s32.f32 %v2346
        %v3883 = vcvt.s32.f32 %v2347
        %v3884 = vcvt.s32.f32 %v2348
        %v3885 = vcvt.s32.f32 %v2349
        %v3886 = vcvt.s32.f32 %v2350
        %v3887 = vcvt.s32.f32 %v2351
        %v3888 = vcvt.s32.f32 %v2352
        %v3889 = vcvt.s32.f32 %v2353
        %v3890 = vcvt.s32.f32 %v2354
        %v3891 = vcvt.s32.f32 %v2355
        %v3892 = vcvt.s32.f32 %v2356
        %v3893 = vcvt.s32.f32 %v2357
        %v3894 = vcvt.s32.f32 %v2358
        %v3895 = vcvt.s32.f32 %v2359
        %v3896 = vcvt.s32.f32 %v2360
        %v3897 = vcvt.s32.f32 %v2361
        %v3898 = vcvt.s32.f32 %v2362
        %v3899 = vcvt.s32.f32 %v2363
        %v3900 = vcvt.s32.f32 %v2364
        %v3901 = vcvt.s32.f32 %v2365
        %v3902 = vcvt.s32.f32 %v2366
        %v3903 = vcvt.s32.f32 %v2367
        %v3904 = vcvt.s32.f32 %v2368
        %v3905 = vcvt.s32.f32 %v2369
        %v3906 = vcvt.s32.f32 %v2370
        %v3907 = vcvt.s32.f32 %v2371
        %v3908 = vcvt.s32.f32 %v2372
        %v3909 = vcvt.s32.f32 %v2373
        %v3910 = vcvt.s32.f32 %v2374
        %v3911 = vcvt.s32.f32 %v2375
        %v3912 = vcvt.s32.f32 %v2376
        %v3913 = vcvt.s32.f32 %v2377
        %v3914 = vcvt.s32.f32 %v2378
        %v3915 = vcvt.s32.f32 %v2379
        %v3916 = vcvt.s32.f32 %v2380
        %v3917 = vcvt.s32.f32 %v2381
        %v3918 = vcvt.s32.f32 %v2382
        %v3919 = vcvt.s32.f32 %v2383
        %v3920 = vcvt.s32.f32 %v2384
        %v3921 = vcvt.s32.f32 %v2385
        %v3922 = vcvt.s32.f32 %v2386
        %v3923 = vcvt.s32.f32 %v2387
        %v3924 = vcvt.s32.f32 %v2388
        %v3925 = vcvt.s32.f32 %v2389
        %v3926 = vcvt.s32.f32 %v2390
        %v3927 = vcvt.s32.f32 %v2391
        %v3928 = vcvt.s32.f32 %v2392
        %v3929 = vcvt.s32.f32 %v2393
        %v3930 = vcvt.s32.f32 %v2394
        %v3931 = vcvt.s32.f32 %v2395
        %v3932 = vcvt.s32.f32 %v2396
        %v3933 = vcvt.s32.f32 %v2397
        %v3934 = vcvt.s32.f32 %v2398
        %v3935 = vcvt.s32.f32 %v2399
        %v3936 = vcvt.s32.f32 %v2400
        %v3937 = vcvt.s32.f32 %v2401
        %v3938 = vcvt.s32.f32 %v2402
        %v3939 = vcvt.s32.f32 %v2403
        %v3940 = vcvt.s32.f32 %v2404
        %v3941 = vcvt.s32.f32 %v2405
        %v3942 = vcvt.s32.f32 %v2406
        %v3943 = vcvt.s32.f32 %v2407
        %v3944 = vcvt.s32.f32 %v2408
        %v3945 = vcvt.s32.f32 %v2409
        %v3946 = vcvt.s32.f32 %v2410
        %v3947 = vcvt.s32.f32 %v2411
        %v3948 = vcvt.s32.f32 %v2412
        %v3949 = vcvt.s32.f32 %v2413
        %v3950 = vcvt.s32.f32 %v2414
        %v3951 = vcvt.s32.f32 %v2415
        %v3952 = vcvt.s32.f32 %v2416
        %v3953 = vcvt.s32.f32 %v2417
        %v3954 = vpack.c.bf16 %v2420, %v2418
        %v3955 = vpack.c.bf16 %v2421, %v2419
        %v3956 = vpack.c.bf16 %v2424, %v2422
        %v3957 = vpack.c.bf16 %v2425, %v2423
        %v3958 = vpack.c.bf16 %v2428, %v2426
        %v3959 = vpack.c.bf16 %v2429, %v2427
        %v3960 = vpack.c.bf16 %v2432, %v2430
        %v3961 = vpack.c.bf16 %v2433, %v2431
        %v3962 = vpack.c.bf16 %v2436, %v2434
        %v3963 = vpack.c.bf16 %v2437, %v2435
        %v3964 = vpack.c.bf16 %v2440, %v2438
        %v3965 = vpack.c.bf16 %v2441, %v2439
        %v3966 = vpack.c.bf16 %v2444, %v2442
        %v3967 = vpack.c.bf16 %v2445, %v2443
        %v3968 = vpack.c.bf16 %v2448, %v2446
        %v3969 = vpack.c.bf16 %v2449, %v2447
        %v3970 = vpack.c.bf16 %v2452, %v2450
        %v3971 = vpack.c.bf16 %v2453, %v2451
        %v3972 = vpack.c.bf16 %v2456, %v2454
        %v3973 = vpack.c.bf16 %v2457, %v2455
        %v3974 = vpack.c.bf16 %v2460, %v2458
        %v3975 = vpack.c.bf16 %v2461, %v2459
        %v3976 = vpack.c.bf16 %v2464, %v2462
        %v3977 = vpack.c.bf16 %v2465, %v2463
        %v3978 = vpack.c.bf16 %v2468, %v2466
        %v3979 = vpack.c.bf16 %v2469, %v2467
        %v3980 = vpack.c.bf16 %v2472, %v2470
        %v3981 = vpack.c.bf16 %v2473, %v2471
        %v3982 = vpack.c.bf16 %v2476, %v2474
        %v3983 = vpack.c.bf16 %v2477, %v2475
        %v3984 = vpack.c.bf16 %v2480, %v2478
        %v3985 = vpack.c.bf16 %v2481, %v2479
        %v3986 = vpack.c.bf16 %v2484, %v2482
        %v3987 = vpack.c.bf16 %v2485, %v2483
        %v3988 = vpack.c.bf16 %v2488, %v2486
        %v3989 = vpack.c.bf16 %v2489, %v2487
        %v3990 = vpack.c.bf16 %v2492, %v2490
        %v3991 = vpack.c.bf16 %v2493, %v2491
        %v3992 = vpack.c.bf16 %v2496, %v2494
        %v3993 = vpack.c.bf16 %v2497, %v2495
        %v3994 = vpack.c.bf16 %v2500, %v2498
        %v3995 = vpack.c.bf16 %v2501, %v2499
        %v3996 = vpack.c.bf16 %v2504, %v2502
        %v3997 = vpack.c.bf16 %v2505, %v2503
        %v3998 = vpack.c.bf16 %v2508, %v2506
        %v3999 = vpack.c.bf16 %v2509, %v2507
        %v4000 = vpack.c.bf16 %v2512, %v2510
        %v4001 = vpack.c.bf16 %v2513, %v2511
        %v4002 = vpack.c.bf16 %v2516, %v2514
        %v4003 = vpack.c.bf16 %v2517, %v2515
        %v4004 = vpack.c.bf16 %v2520, %v2518
        %v4005 = vpack.c.bf16 %v2521, %v2519
        %v4006 = vpack.c.bf16 %v2524, %v2522
        %v4007 = vpack.c.bf16 %v2525, %v2523
        %v4008 = vpack.c.bf16 %v2528, %v2526
        %v4009 = vpack.c.bf16 %v2529, %v2527
        %v4010 = vpack.c.bf16 %v2532, %v2530
        %v4011 = vpack.c.bf16 %v2533, %v2531
        %v4012 = vpack.c.bf16 %v2536, %v2534
        %v4013 = vpack.c.bf16 %v2537, %v2535
        %v4014 = vpack.c.bf16 %v2540, %v2538
        %v4015 = vpack.c.bf16 %v2541, %v2539
        %v4016 = vpack.c.bf16 %v2544, %v2542
        %v4017 = vpack.c.bf16 %v2545, %v2543
        %v4018 = vpack.c.bf16 %v2548, %v2546
        %v4019 = vpack.c.bf16 %v2549, %v2547
        %v4020 = vpack.c.bf16 %v2552, %v2550
        %v4021 = vpack.c.bf16 %v2553, %v2551
        %v4022 = vpack.c.bf16 %v2556, %v2554
        %v4023 = vpack.c.bf16 %v2557, %v2555
        %v4024 = vpack.c.bf16 %v2560, %v2558
        %v4025 = vpack.c.bf16 %v2561, %v2559
        %v4026 = vpack.c.bf16 %v2564, %v2562
        %v4027 = vpack.c.bf16 %v2565, %v2563
        %v4028 = vpack.c.bf16 %v2568, %v2566
        %v4029 = vpack.c.bf16 %v2569, %v2567
        %v4030 = vpack.c.bf16 %v2572, %v2570
        %v4031 = vpack.c.bf16 %v2573, %v2571
        %v4032 = vpack.c.bf16 %v2576, %v2574
        %v4033 = vpack.c.bf16 %v2577, %v2575
        %v4034 = vpack.c.bf16 %v2580, %v2578
        %v4035 = vpack.c.bf16 %v2581, %v2579
        %v4036 = vpack.c.bf16 %v2584, %v2582
        %v4037 = vpack.c.bf16 %v2585, %v2583
        %v4038 = vpack.c.bf16 %v2588, %v2586
        %v4039 = vpack.c.bf16 %v2589, %v2587
        %v4040 = vpack.c.bf16 %v2592, %v2590
        %v4041 = vpack.c.bf16 %v2593, %v2591
        %v4042 = vpack.c.bf16 %v2596, %v2594
        %v4043 = vpack.c.bf16 %v2597, %v2595
        %v4044 = vpack.c.bf16 %v2600, %v2598
        %v4045 = vpack.c.bf16 %v2601, %v2599
        %v4046 = vpack.c.bf16 %v2604, %v2602
        %v4047 = vpack.c.bf16 %v2605, %v2603
        %v4048 = vpack.c.bf16 %v2608, %v2606
        %v4049 = vpack.c.bf16 %v2609, %v2607
        %v4050 = vpack.c.bf16 %v2612, %v2610
        %v4051 = vpack.c.bf16 %v2613, %v2611
        %v4052 = vpack.c.bf16 %v2616, %v2614
        %v4053 = vpack.c.bf16 %v2617, %v2615
        %v4054 = vpack.c.bf16 %v2620, %v2618
        %v4055 = vpack.c.bf16 %v2621, %v2619
        %v4056 = vpack.c.bf16 %v2624, %v2622
        %v4057 = vpack.c.bf16 %v2625, %v2623
        %v4058 = vpack.c.bf16 %v2628, %v2626
        %v4059 = vpack.c.bf16 %v2629, %v2627
        %v4060 = vpack.c.bf16 %v2632, %v2630
        %v4061 = vpack.c.bf16 %v2633, %v2631
        %v4062 = vpack.c.bf16 %v2636, %v2634
        %v4063 = vpack.c.bf16 %v2637, %v2635
        %v4064 = vpack.c.bf16 %v2640, %v2638
        %v4065 = vpack.c.bf16 %v2641, %v2639
        %v4066 = vpack.c.bf16 %v2644, %v2642
        %v4067 = vpack.c.bf16 %v2645, %v2643
        %v4068 = vpack.c.bf16 %v2648, %v2646
        %v4069 = vpack.c.bf16 %v2649, %v2647
        %v4070 = vpack.c.bf16 %v2652, %v2650
        %v4071 = vpack.c.bf16 %v2653, %v2651
        %v4072 = vpack.c.bf16 %v2656, %v2654
        %v4073 = vpack.c.bf16 %v2657, %v2655
        %v4074 = vpack.c.bf16 %v2660, %v2658
        %v4075 = vpack.c.bf16 %v2661, %v2659
        %v4076 = vpack.c.bf16 %v2664, %v2662
        %v4077 = vpack.c.bf16 %v2665, %v2663
        %v4078 = vpack.c.bf16 %v2668, %v2666
        %v4079 = vpack.c.bf16 %v2669, %v2667
        %v4080 = vpack.c.bf16 %v2672, %v2670
        %v4081 = vpack.c.bf16 %v2673, %v2671
        %v4082 = vpack.c.bf16 %v2676, %v2674
        %v4083 = vpack.c.bf16 %v2677, %v2675
        %v4084 = vpack.c.bf16 %v2680, %v2678
        %v4085 = vpack.c.bf16 %v2681, %v2679
        %v4086 = vpack.c.bf16 %v2684, %v2682
        %v4087 = vpack.c.bf16 %v2685, %v2683
        %v4088 = vpack.c.bf16 %v2688, %v2686
        %v4089 = vpack.c.bf16 %v2689, %v2687
        %v4090 = vpack.c.bf16 %v2692, %v2690
        %v4091 = vpack.c.bf16 %v2693, %v2691
        %v4092 = vpack.c.bf16 %v2696, %v2694
        %v4093 = vpack.c.bf16 %v2697, %v2695
        %v4094 = vpack.c.bf16 %v2700, %v2698
        %v4095 = vpack.c.bf16 %v2701, %v2699
        %v4096 = vpack.c.bf16 %v2704, %v2702
        %v4097 = vpack.c.bf16 %v2705, %v2703
        %v4098 = vpack.c.bf16 %v2708, %v2706
        %v4099 = vpack.c.bf16 %v2709, %v2707
        %v4100 = vpack.c.bf16 %v2712, %v2710
        %v4101 = vpack.c.bf16 %v2713, %v2711
        %v4102 = vpack.c.bf16 %v2716, %v2714
        %v4103 = vpack.c.bf16 %v2717, %v2715
        %v4104 = vpack.c.bf16 %v2720, %v2718
        %v4105 = vpack.c.bf16 %v2721, %v2719
        %v4106 = vpack.c.bf16 %v2724, %v2722
        %v4107 = vpack.c.bf16 %v2725, %v2723
        %v4108 = vpack.c.bf16 %v2728, %v2726
        %v4109 = vpack.c.bf16 %v2729, %v2727
        %v4110 = vpack.c.bf16 %v2732, %v2730
        %v4111 = vpack.c.bf16 %v2733, %v2731
        %v4112 = vpack.c.bf16 %v2736, %v2734
        %v4113 = vpack.c.bf16 %v2737, %v2735
        %v4114 = vpack.c.bf16 %v2740, %v2738
        %v4115 = vpack.c.bf16 %v2741, %v2739
        %v4116 = vpack.c.bf16 %v2744, %v2742
        %v4117 = vpack.c.bf16 %v2745, %v2743
        %v4118 = vpack.c.bf16 %v2748, %v2746
        %v4119 = vpack.c.bf16 %v2749, %v2747
        %v4120 = vpack.c.bf16 %v2752, %v2750
        %v4121 = vpack.c.bf16 %v2753, %v2751
        %v4122 = vpack.c.bf16 %v2756, %v2754
        %v4123 = vpack.c.bf16 %v2757, %v2755
        %v4124 = vpack.c.bf16 %v2760, %v2758
        %v4125 = vpack.c.bf16 %v2761, %v2759
        %v4126 = vpack.c.bf16 %v2764, %v2762
        %v4127 = vpack.c.bf16 %v2765, %v2763
        %v4128 = vpack.c.bf16 %v2768, %v2766
        %v4129 = vpack.c.bf16 %v2769, %v2767
        %v4130 = vpack.c.bf16 %v2772, %v2770
        %v4131 = vpack.c.bf16 %v2773, %v2771
        %v4132 = vpack.c.bf16 %v2776, %v2774
        %v4133 = vpack.c.bf16 %v2777, %v2775
        %v4134 = vpack.c.bf16 %v2780, %v2778
        %v4135 = vpack.c.bf16 %v2781, %v2779
        %v4136 = vpack.c.bf16 %v2784, %v2782
        %v4137 = vpack.c.bf16 %v2785, %v2783
        %v4138 = vpack.c.bf16 %v2788, %v2786
        %v4139 = vpack.c.bf16 %v2789, %v2787
        %v4140 = vpack.c.bf16 %v2792, %v2790
        %v4141 = vpack.c.bf16 %v2793, %v2791
        %v4142 = vpack.c.bf16 %v2796, %v2794
        %v4143 = vpack.c.bf16 %v2797, %v2795
        %v4144 = vpack.c.bf16 %v2800, %v2798
        %v4145 = vpack.c.bf16 %v2801, %v2799
        %v4146 = vpack.c.bf16 %v2804, %v2802
        %v4147 = vpack.c.bf16 %v2805, %v2803
        %v4148 = vpack.c.bf16 %v2808, %v2806
        %v4149 = vpack.c.bf16 %v2809, %v2807
        %v4150 = vpack.c.bf16 %v2812, %v2810
        %v4151 = vpack.c.bf16 %v2813, %v2811
        %v4152 = vpack.c.bf16 %v2816, %v2814
        %v4153 = vpack.c.bf16 %v2817, %v2815
        %v4154 = vpack.c.bf16 %v2820, %v2818
        %v4155 = vpack.c.bf16 %v2821, %v2819
        %v4156 = vpack.c.bf16 %v2824, %v2822
        %v4157 = vpack.c.bf16 %v2825, %v2823
        %v4158 = vpack.c.bf16 %v2828, %v2826
        %v4159 = vpack.c.bf16 %v2829, %v2827
        %v4160 = vpack.c.bf16 %v2832, %v2830
        %v4161 = vpack.c.bf16 %v2833, %v2831
        %v4162 = vpack.c.bf16 %v2836, %v2834
        %v4163 = vpack.c.bf16 %v2837, %v2835
        %v4164 = vpack.c.bf16 %v2840, %v2838
        %v4165 = vpack.c.bf16 %v2841, %v2839
        %v4166 = vpack.c.bf16 %v2844, %v2842
        %v4167 = vpack.c.bf16 %v2845, %v2843
        %v4168 = vpack.c.bf16 %v2848, %v2846
        %v4169 = vpack.c.bf16 %v2849, %v2847
        %v4170 = vpack.c.bf16 %v2852, %v2850
        %v4171 = vpack.c.bf16 %v2853, %v2851
        %v4172 = vpack.c.bf16 %v2856, %v2854
        %v4173 = vpack.c.bf16 %v2857, %v2855
        %v4174 = vpack.c.bf16 %v2860, %v2858
        %v4175 = vpack.c.bf16 %v2861, %v2859
        %v4176 = vpack.c.bf16 %v2864, %v2862
        %v4177 = vpack.c.bf16 %v2865, %v2863
        %v4178 = vpack.c.bf16 %v2868, %v2866
        %v4179 = vpack.c.bf16 %v2869, %v2867
        %v4180 = vpack.c.bf16 %v2872, %v2870
        %v4181 = vpack.c.bf16 %v2873, %v2871
        %v4182 = vpack.c.bf16 %v2876, %v2874
        %v4183 = vpack.c.bf16 %v2877, %v2875
        %v4184 = vpack.c.bf16 %v2880, %v2878
        %v4185 = vpack.c.bf16 %v2881, %v2879
        %v4186 = vpack.c.bf16 %v2884, %v2882
        %v4187 = vpack.c.bf16 %v2885, %v2883
        %v4188 = vpack.c.bf16 %v2888, %v2886
        %v4189 = vpack.c.bf16 %v2889, %v2887
        %v4190 = vpack.c.bf16 %v2892, %v2890
        %v4191 = vpack.c.bf16 %v2893, %v2891
        %v4192 = vpack.c.bf16 %v2896, %v2894
        %v4193 = vpack.c.bf16 %v2897, %v2895
        %v4194 = vpack.c.bf16 %v2900, %v2898
        %v4195 = vpack.c.bf16 %v2901, %v2899
        %v4196 = vpack.c.bf16 %v2904, %v2902
        %v4197 = vpack.c.bf16 %v2905, %v2903
        %v4198 = vpack.c.bf16 %v2908, %v2906
        %v4199 = vpack.c.bf16 %v2909, %v2907
        %v4200 = vpack.c.bf16 %v2912, %v2910
        %v4201 = vpack.c.bf16 %v2913, %v2911
        %v4202 = vpack.c.bf16 %v2916, %v2914
        %v4203 = vpack.c.bf16 %v2917, %v2915
        %v4204 = vpack.c.bf16 %v2920, %v2918
        %v4205 = vpack.c.bf16 %v2921, %v2919
        %v4206 = vpack.c.bf16 %v2924, %v2922
        %v4207 = vpack.c.bf16 %v2925, %v2923
        %v4208 = vpack.c.bf16 %v2928, %v2926
        %v4209 = vpack.c.bf16 %v2929, %v2927
        %v4210 = vpack.c.bf16 %v2932, %v2930
        %v4211 = vpack.c.bf16 %v2933, %v2931
        %v4212 = vpack.c.bf16 %v2936, %v2934
        %v4213 = vpack.c.bf16 %v2937, %v2935
        %v4214 = vpack.c.bf16 %v2940, %v2938
        %v4215 = vpack.c.bf16 %v2941, %v2939
        %v4216 = vpack.c.bf16 %v2944, %v2942
        %v4217 = vpack.c.bf16 %v2945, %v2943
        %v4218 = vpack.c.bf16 %v2948, %v2946
        %v4219 = vpack.c.bf16 %v2949, %v2947
        %v4220 = vpack.c.bf16 %v2952, %v2950
        %v4221 = vpack.c.bf16 %v2953, %v2951
        %v4222 = vpack.c.bf16 %v2956, %v2954
        %v4223 = vpack.c.bf16 %v2957, %v2955
        %v4224 = vpack.c.bf16 %v2960, %v2958
        %v4225 = vpack.c.bf16 %v2961, %v2959
        %v4226 = vpack.c.bf16 %v2964, %v2962
        %v4227 = vpack.c.bf16 %v2965, %v2963
        %v4228 = vpack.c.bf16 %v2968, %v2966
        %v4229 = vpack.c.bf16 %v2969, %v2967
        %v4230 = vpack.c.bf16 %v2972, %v2970
        %v4231 = vpack.c.bf16 %v2973, %v2971
        %v4232 = vpack.c.bf16 %v2976, %v2974
        %v4233 = vpack.c.bf16 %v2977, %v2975
        %v4234 = vpack.c.bf16 %v2980, %v2978
        %v4235 = vpack.c.bf16 %v2981, %v2979
        %v4236 = vpack.c.bf16 %v2984, %v2982
        %v4237 = vpack.c.bf16 %v2985, %v2983
        %v4238 = vpack.c.bf16 %v2988, %v2986
        %v4239 = vpack.c.bf16 %v2989, %v2987
        %v4240 = vpack.c.bf16 %v2992, %v2990
        %v4241 = vpack.c.bf16 %v2993, %v2991
        %v4242 = vpack.c.bf16 %v2996, %v2994
        %v4243 = vpack.c.bf16 %v2997, %v2995
        %v4244 = vpack.c.bf16 %v3000, %v2998
        %v4245 = vpack.c.bf16 %v3001, %v2999
        %v4246 = vpack.c.bf16 %v3004, %v3002
        %v4247 = vpack.c.bf16 %v3005, %v3003
        %v4248 = vpack.c.bf16 %v3008, %v3006
        %v4249 = vpack.c.bf16 %v3009, %v3007
        %v4250 = vpack.c.bf16 %v3012, %v3010
        %v4251 = vpack.c.bf16 %v3013, %v3011
        %v4252 = vpack.c.bf16 %v3016, %v3014
        %v4253 = vpack.c.bf16 %v3017, %v3015
        %v4254 = vpack.c.bf16 %v3020, %v3018
        %v4255 = vpack.c.bf16 %v3021, %v3019
        %v4256 = vpack.c.bf16 %v3024, %v3022
        %v4257 = vpack.c.bf16 %v3025, %v3023
        %v4258 = vpack.c.bf16 %v3028, %v3026
        %v4259 = vpack.c.bf16 %v3029, %v3027
        %v4260 = vpack.c.bf16 %v3032, %v3030
        %v4261 = vpack.c.bf16 %v3033, %v3031
        %v4262 = vpack.c.bf16 %v3036, %v3034
        %v4263 = vpack.c.bf16 %v3037, %v3035
        %v4264 = vpack.c.bf16 %v3040, %v3038
        %v4265 = vpack.c.bf16 %v3041, %v3039
        %v4266 = vpack.c.bf16 %v3044, %v3042
        %v4267 = vpack.c.bf16 %v3045, %v3043
        %v4268 = vpack.c.bf16 %v3048, %v3046
        %v4269 = vpack.c.bf16 %v3049, %v3047
        %v4270 = vpack.c.bf16 %v3052, %v3050
        %v4271 = vpack.c.bf16 %v3053, %v3051
        %v4272 = vpack.c.bf16 %v3056, %v3054
        %v4273 = vpack.c.bf16 %v3057, %v3055
        %v4274 = vpack.c.bf16 %v3060, %v3058
        %v4275 = vpack.c.bf16 %v3061, %v3059
        %v4276 = vpack.c.bf16 %v3064, %v3062
        %v4277 = vpack.c.bf16 %v3065, %v3063
        %v4278 = vpack.c.bf16 %v3068, %v3066
        %v4279 = vpack.c.bf16 %v3069, %v3067
        %v4280 = vpack.c.bf16 %v3072, %v3070
        %v4281 = vpack.c.bf16 %v3073, %v3071
        %v4282 = vpack.c.bf16 %v3076, %v3074
        %v4283 = vpack.c.bf16 %v3077, %v3075
        %v4284 = vpack.c.bf16 %v3080, %v3078
        %v4285 = vpack.c.bf16 %v3081, %v3079
        %v4286 = vpack.c.bf16 %v3084, %v3082
        %v4287 = vpack.c.bf16 %v3085, %v3083
        %v4288 = vpack.c.bf16 %v3088, %v3086
        %v4289 = vpack.c.bf16 %v3089, %v3087
        %v4290 = vpack.c.bf16 %v3092, %v3090
        %v4291 = vpack.c.bf16 %v3093, %v3091
        %v4292 = vpack.c.bf16 %v3096, %v3094
        %v4293 = vpack.c.bf16 %v3097, %v3095
        %v4294 = vpack.c.bf16 %v3100, %v3098
        %v4295 = vpack.c.bf16 %v3101, %v3099
        %v4296 = vpack.c.bf16 %v3104, %v3102
        %v4297 = vpack.c.bf16 %v3105, %v3103
        %v4298 = vpack.c.bf16 %v3108, %v3106
        %v4299 = vpack.c.bf16 %v3109, %v3107
        %v4300 = vpack.c.bf16 %v3112, %v3110
        %v4301 = vpack.c.bf16 %v3113, %v3111
        %v4302 = vpack.c.bf16 %v3116, %v3114
        %v4303 = vpack.c.bf16 %v3117, %v3115
        %v4304 = vpack.c.bf16 %v3120, %v3118
        %v4305 = vpack.c.bf16 %v3121, %v3119
        %v4306 = vpack.c.bf16 %v3124, %v3122
        %v4307 = vpack.c.bf16 %v3125, %v3123
        %v4308 = vpack.c.bf16 %v3128, %v3126
        %v4309 = vpack.c.bf16 %v3129, %v3127
        %v4310 = vpack.c.bf16 %v3132, %v3130
        %v4311 = vpack.c.bf16 %v3133, %v3131
        %v4312 = vpack.c.bf16 %v3136, %v3134
        %v4313 = vpack.c.bf16 %v3137, %v3135
        %v4314 = vpack.c.bf16 %v3140, %v3138
        %v4315 = vpack.c.bf16 %v3141, %v3139
        %v4316 = vpack.c.bf16 %v3144, %v3142
        %v4317 = vpack.c.bf16 %v3145, %v3143
        %v4318 = vpack.c.bf16 %v3148, %v3146
        %v4319 = vpack.c.bf16 %v3149, %v3147
        %v4320 = vpack.c.bf16 %v3152, %v3150
        %v4321 = vpack.c.bf16 %v3153, %v3151
        %v4322 = vpack.c.bf16 %v3156, %v3154
        %v4323 = vpack.c.bf16 %v3157, %v3155
        %v4324 = vpack.c.bf16 %v3160, %v3158
        %v4325 = vpack.c.bf16 %v3161, %v3159
        %v4326 = vpack.c.bf16 %v3164, %v3162
        %v4327 = vpack.c.bf16 %v3165, %v3163
        %v4328 = vpack.c.bf16 %v3168, %v3166
        %v4329 = vpack.c.bf16 %v3169, %v3167
        %v4330 = vpack.c.bf16 %v3172, %v3170
        %v4331 = vpack.c.bf16 %v3173, %v3171
        %v4332 = vpack.c.bf16 %v3176, %v3174
        %v4333 = vpack.c.bf16 %v3177, %v3175
        %v4334 = vpack.c.bf16 %v3180, %v3178
        %v4335 = vpack.c.bf16 %v3181, %v3179
        %v4336 = vpack.c.bf16 %v3184, %v3182
        %v4337 = vpack.c.bf16 %v3185, %v3183
        %v4338 = vpack.c.bf16 %v3188, %v3186
        %v4339 = vpack.c.bf16 %v3189, %v3187
        %v4340 = vpack.c.bf16 %v3192, %v3190
        %v4341 = vpack.c.bf16 %v3193, %v3191
        %v4342 = vpack.c.bf16 %v3196, %v3194
        %v4343 = vpack.c.bf16 %v3197, %v3195
        %v4344 = vpack.c.bf16 %v3200, %v3198
        %v4345 = vpack.c.bf16 %v3201, %v3199
        %v4346 = vpack.c.bf16 %v3204, %v3202
        %v4347 = vpack.c.bf16 %v3205, %v3203
        %v4348 = vpack.c.bf16 %v3208, %v3206
        %v4349 = vpack.c.bf16 %v3209, %v3207
        %v4350 = vpack.c.bf16 %v3212, %v3210
        %v4351 = vpack.c.bf16 %v3213, %v3211
        %v4352 = vpack.c.bf16 %v3216, %v3214
        %v4353 = vpack.c.bf16 %v3217, %v3215
        %v4354 = vpack.c.bf16 %v3220, %v3218
        %v4355 = vpack.c.bf16 %v3221, %v3219
        %v4356 = vpack.c.bf16 %v3224, %v3222
        %v4357 = vpack.c.bf16 %v3225, %v3223
        %v4358 = vpack.c.bf16 %v3228, %v3226
        %v4359 = vpack.c.bf16 %v3229, %v3227
        %v4360 = vpack.c.bf16 %v3232, %v3230
        %v4361 = vpack.c.bf16 %v3233, %v3231
        %v4362 = vpack.c.bf16 %v3236, %v3234
        %v4363 = vpack.c.bf16 %v3237, %v3235
        %v4364 = vpack.c.bf16 %v3240, %v3238
        %v4365 = vpack.c.bf16 %v3241, %v3239
        %v4366 = vpack.c.bf16 %v3244, %v3242
        %v4367 = vpack.c.bf16 %v3245, %v3243
        %v4368 = vpack.c.bf16 %v3248, %v3246
        %v4369 = vpack.c.bf16 %v3249, %v3247
        %v4370 = vpack.c.bf16 %v3252, %v3250
        %v4371 = vpack.c.bf16 %v3253, %v3251
        %v4372 = vpack.c.bf16 %v3256, %v3254
        %v4373 = vpack.c.bf16 %v3257, %v3255
        %v4374 = vpack.c.bf16 %v3260, %v3258
        %v4375 = vpack.c.bf16 %v3261, %v3259
        %v4376 = vpack.c.bf16 %v3264, %v3262
        %v4377 = vpack.c.bf16 %v3265, %v3263
        %v4378 = vpack.c.bf16 %v3268, %v3266
        %v4379 = vpack.c.bf16 %v3269, %v3267
        %v4380 = vpack.c.bf16 %v3272, %v3270
        %v4381 = vpack.c.bf16 %v3273, %v3271
        %v4382 = vpack.c.bf16 %v3276, %v3274
        %v4383 = vpack.c.bf16 %v3277, %v3275
        %v4384 = vpack.c.bf16 %v3280, %v3278
        %v4385 = vpack.c.bf16 %v3281, %v3279
        %v4386 = vpack.c.bf16 %v3284, %v3282
        %v4387 = vpack.c.bf16 %v3285, %v3283
        %v4388 = vpack.c.bf16 %v3288, %v3286
        %v4389 = vpack.c.bf16 %v3289, %v3287
        %v4390 = vpack.c.bf16 %v3292, %v3290
        %v4391 = vpack.c.bf16 %v3293, %v3291
        %v4392 = vpack.c.bf16 %v3296, %v3294
        %v4393 = vpack.c.bf16 %v3297, %v3295
        %v4394 = vpack.c.bf16 %v3300, %v3298
        %v4395 = vpack.c.bf16 %v3301, %v3299
        %v4396 = vpack.c.bf16 %v3304, %v3302
        %v4397 = vpack.c.bf16 %v3305, %v3303
        %v4398 = vpack.c.bf16 %v3308, %v3306
        %v4399 = vpack.c.bf16 %v3309, %v3307
        %v4400 = vpack.c.bf16 %v3312, %v3310
        %v4401 = vpack.c.bf16 %v3313, %v3311
        %v4402 = vpack.c.bf16 %v3316, %v3314
        %v4403 = vpack.c.bf16 %v3317, %v3315
        %v4404 = vpack.c.bf16 %v3320, %v3318
        %v4405 = vpack.c.bf16 %v3321, %v3319
        %v4406 = vpack.c.bf16 %v3324, %v3322
        %v4407 = vpack.c.bf16 %v3325, %v3323
        %v4408 = vpack.c.bf16 %v3328, %v3326
        %v4409 = vpack.c.bf16 %v3329, %v3327
        %v4410 = vpack.c.bf16 %v3332, %v3330
        %v4411 = vpack.c.bf16 %v3333, %v3331
        %v4412 = vpack.c.bf16 %v3336, %v3334
        %v4413 = vpack.c.bf16 %v3337, %v3335
        %v4414 = vpack.c.bf16 %v3340, %v3338
        %v4415 = vpack.c.bf16 %v3341, %v3339
        %v4416 = vpack.c.bf16 %v3344, %v3342
        %v4417 = vpack.c.bf16 %v3345, %v3343
        %v4418 = vpack.c.bf16 %v3348, %v3346
        %v4419 = vpack.c.bf16 %v3349, %v3347
        %v4420 = vpack.c.bf16 %v3352, %v3350
        %v4421 = vpack.c.bf16 %v3353, %v3351
        %v4422 = vpack.c.bf16 %v3356, %v3354
        %v4423 = vpack.c.bf16 %v3357, %v3355
        %v4424 = vpack.c.bf16 %v3360, %v3358
        %v4425 = vpack.c.bf16 %v3361, %v3359
        %v4426 = vpack.c.bf16 %v3364, %v3362
        %v4427 = vpack.c.bf16 %v3365, %v3363
        %v4428 = vpack.c.bf16 %v3368, %v3366
        %v4429 = vpack.c.bf16 %v3369, %v3367
        %v4430 = vpack.c.bf16 %v3372, %v3370
        %v4431 = vpack.c.bf16 %v3373, %v3371
        %v4432 = vpack.c.bf16 %v3376, %v3374
        %v4433 = vpack.c.bf16 %v3377, %v3375
        %v4434 = vpack.c.bf16 %v3380, %v3378
        %v4435 = vpack.c.bf16 %v3381, %v3379
        %v4436 = vpack.c.bf16 %v3384, %v3382
        %v4437 = vpack.c.bf16 %v3385, %v3383
        %v4438 = vpack.c.bf16 %v3388, %v3386
        %v4439 = vpack.c.bf16 %v3389, %v3387
        %v4440 = vpack.c.bf16 %v3392, %v3390
        %v4441 = vpack.c.bf16 %v3393, %v3391
        %v4442 = vpack.c.bf16 %v3396, %v3394
        %v4443 = vpack.c.bf16 %v3397, %v3395
        %v4444 = vpack.c.bf16 %v3400, %v3398
        %v4445 = vpack.c.bf16 %v3401, %v3399
        %v4446 = vpack.c.bf16 %v3404, %v3402
        %v4447 = vpack.c.bf16 %v3405, %v3403
        %v4448 = vpack.c.bf16 %v3408, %v3406
        %v4449 = vpack.c.bf16 %v3409, %v3407
        %v4450 = vpack.c.bf16 %v3412, %v3410
        %v4451 = vpack.c.bf16 %v3413, %v3411
        %v4452 = vpack.c.bf16 %v3416, %v3414
        %v4453 = vpack.c.bf16 %v3417, %v3415
        %v4454 = vpack.c.bf16 %v3420, %v3418
        %v4455 = vpack.c.bf16 %v3421, %v3419
        %v4456 = vpack.c.bf16 %v3424, %v3422
        %v4457 = vpack.c.bf16 %v3425, %v3423
        %v4458 = vpack.c.bf16 %v3428, %v3426
        %v4459 = vpack.c.bf16 %v3429, %v3427
        %v4460 = vpack.c.bf16 %v3432, %v3430
        %v4461 = vpack.c.bf16 %v3433, %v3431
        %v4462 = vpack.c.bf16 %v3436, %v3434
        %v4463 = vpack.c.bf16 %v3437, %v3435
        %v4464 = vpack.c.bf16 %v3440, %v3438
        %v4465 = vpack.c.bf16 %v3441, %v3439
        %v4466 = vpack.c.bf16 %v3444, %v3442
        %v4467 = vpack.c.bf16 %v3445, %v3443
        %v4468 = vpack.c.bf16 %v3448, %v3446
        %v4469 = vpack.c.bf16 %v3449, %v3447
        %v4470 = vpack.c.bf16 %v3452, %v3450
        %v4471 = vpack.c.bf16 %v3453, %v3451
        %v4472 = vpack.c.bf16 %v3456, %v3454
        %v4473 = vpack.c.bf16 %v3457, %v3455
        %v4474 = vpack.c.bf16 %v3460, %v3458
        %v4475 = vpack.c.bf16 %v3461, %v3459
        %v4476 = vpack.c.bf16 %v3464, %v3462
        %v4477 = vpack.c.bf16 %v3465, %v3463
        %v4478 = vpack.c.bf16 %v3468, %v3466
        %v4479 = vpack.c.bf16 %v3469, %v3467
        %v4480 = vpack.c.bf16 %v3472, %v3470
        %v4481 = vpack.c.bf16 %v3473, %v3471
        %v4482 = vpack.c.bf16 %v3476, %v3474
        %v4483 = vpack.c.bf16 %v3477, %v3475
        %v4484 = vpack.c.bf16 %v3480, %v3478
        %v4485 = vpack.c.bf16 %v3481, %v3479
        %v4486 = vpack.c.bf16 %v3484, %v3482
        %v4487 = vpack.c.bf16 %v3485, %v3483
        %v4488 = vpack.c.bf16 %v3488, %v3486
        %v4489 = vpack.c.bf16 %v3489, %v3487
        %v4490 = vpack.c.bf16 %v3492, %v3490
        %v4491 = vpack.c.bf16 %v3493, %v3491
        %v4492 = vpack.c.bf16 %v3496, %v3494
        %v4493 = vpack.c.bf16 %v3497, %v3495
        %v4494 = vpack.c.bf16 %v3500, %v3498
        %v4495 = vpack.c.bf16 %v3501, %v3499
        %v4496 = vpack.c.bf16 %v3504, %v3502
        %v4497 = vpack.c.bf16 %v3505, %v3503
        %v4498 = vpack.c.bf16 %v3508, %v3506
        %v4499 = vpack.c.bf16 %v3509, %v3507
        %v4500 = vpack.c.bf16 %v3512, %v3510
        %v4501 = vpack.c.bf16 %v3513, %v3511
        %v4502 = vpack.c.bf16 %v3516, %v3514
        %v4503 = vpack.c.bf16 %v3517, %v3515
        %v4504 = vpack.c.bf16 %v3520, %v3518
        %v4505 = vpack.c.bf16 %v3521, %v3519
        %v4506 = vpack.c.bf16 %v3524, %v3522
        %v4507 = vpack.c.bf16 %v3525, %v3523
        %v4508 = vpack.c.bf16 %v3528, %v3526
        %v4509 = vpack.c.bf16 %v3529, %v3527
        %v4510 = vpack.c.bf16 %v3532, %v3530
        %v4511 = vpack.c.bf16 %v3533, %v3531
        %v4512 = vpack.c.bf16 %v3536, %v3534
        %v4513 = vpack.c.bf16 %v3537, %v3535
        %v4514 = vpack.c.bf16 %v3540, %v3538
        %v4515 = vpack.c.bf16 %v3541, %v3539
        %v4516 = vpack.c.bf16 %v3544, %v3542
        %v4517 = vpack.c.bf16 %v3545, %v3543
        %v4518 = vpack.c.bf16 %v3548, %v3546
        %v4519 = vpack.c.bf16 %v3549, %v3547
        %v4520 = vpack.c.bf16 %v3552, %v3550
        %v4521 = vpack.c.bf16 %v3553, %v3551
        %v4522 = vpack.c.bf16 %v3556, %v3554
        %v4523 = vpack.c.bf16 %v3557, %v3555
        %v4524 = vpack.c.bf16 %v3560, %v3558
        %v4525 = vpack.c.bf16 %v3561, %v3559
        %v4526 = vpack.c.bf16 %v3564, %v3562
        %v4527 = vpack.c.bf16 %v3565, %v3563
        %v4528 = vpack.c.bf16 %v3568, %v3566
        %v4529 = vpack.c.bf16 %v3569, %v3567
        %v4530 = vpack.c.bf16 %v3572, %v3570
        %v4531 = vpack.c.bf16 %v3573, %v3571
        %v4532 = vpack.c.bf16 %v3576, %v3574
        %v4533 = vpack.c.bf16 %v3577, %v3575
        %v4534 = vpack.c.bf16 %v3580, %v3578
        %v4535 = vpack.c.bf16 %v3581, %v3579
        %v4536 = vpack.c.bf16 %v3584, %v3582
        %v4537 = vpack.c.bf16 %v3585, %v3583
        %v4538 = vpack.c.bf16 %v3588, %v3586
        %v4539 = vpack.c.bf16 %v3589, %v3587
        %v4540 = vpack.c.bf16 %v3592, %v3590
        %v4541 = vpack.c.bf16 %v3593, %v3591
        %v4542 = vpack.c.bf16 %v3596, %v3594
        %v4543 = vpack.c.bf16 %v3597, %v3595
        %v4544 = vpack.c.bf16 %v3600, %v3598
        %v4545 = vpack.c.bf16 %v3601, %v3599
        %v4546 = vpack.c.bf16 %v3604, %v3602
        %v4547 = vpack.c.bf16 %v3605, %v3603
        %v4548 = vpack.c.bf16 %v3608, %v3606
        %v4549 = vpack.c.bf16 %v3609, %v3607
        %v4550 = vpack.c.bf16 %v3612, %v3610
        %v4551 = vpack.c.bf16 %v3613, %v3611
        %v4552 = vpack.c.bf16 %v3616, %v3614
        %v4553 = vpack.c.bf16 %v3617, %v3615
        %v4554 = vpack.c.bf16 %v3620, %v3618
        %v4555 = vpack.c.bf16 %v3621, %v3619
        %v4556 = vpack.c.bf16 %v3624, %v3622
        %v4557 = vpack.c.bf16 %v3625, %v3623
        %v4558 = vpack.c.bf16 %v3628, %v3626
        %v4559 = vpack.c.bf16 %v3629, %v3627
        %v4560 = vpack.c.bf16 %v3632, %v3630
        %v4561 = vpack.c.bf16 %v3633, %v3631
        %v4562 = vpack.c.bf16 %v3636, %v3634
        %v4563 = vpack.c.bf16 %v3637, %v3635
        %v4564 = vpack.c.bf16 %v3640, %v3638
        %v4565 = vpack.c.bf16 %v3641, %v3639
        %v4566 = vpack.c.bf16 %v3644, %v3642
        %v4567 = vpack.c.bf16 %v3645, %v3643
        %v4568 = vpack.c.bf16 %v3648, %v3646
        %v4569 = vpack.c.bf16 %v3649, %v3647
        %v4570 = vpack.c.bf16 %v3652, %v3650
        %v4571 = vpack.c.bf16 %v3653, %v3651
        %v4572 = vpack.c.bf16 %v3656, %v3654
        %v4573 = vpack.c.bf16 %v3657, %v3655
        %v4574 = vpack.c.bf16 %v3660, %v3658
        %v4575 = vpack.c.bf16 %v3661, %v3659
        %v4576 = vpack.c.bf16 %v3664, %v3662
        %v4577 = vpack.c.bf16 %v3665, %v3663
        %v4578 = vpack.c.bf16 %v3668, %v3666
        %v4579 = vpack.c.bf16 %v3669, %v3667
        %v4580 = vpack.c.bf16 %v3672, %v3670
        %v4581 = vpack.c.bf16 %v3673, %v3671
        %v4582 = vpack.c.bf16 %v3676, %v3674
        %v4583 = vpack.c.bf16 %v3677, %v3675
        %v4584 = vpack.c.bf16 %v3680, %v3678
        %v4585 = vpack.c.bf16 %v3681, %v3679
        %v4586 = vpack.c.bf16 %v3684, %v3682
        %v4587 = vpack.c.bf16 %v3685, %v3683
        %v4588 = vpack.c.bf16 %v3688, %v3686
        %v4589 = vpack.c.bf16 %v3689, %v3687
        %v4590 = vpack.c.bf16 %v3692, %v3690
        %v4591 = vpack.c.bf16 %v3693, %v3691
        %v4592 = vpack.c.bf16 %v3696, %v3694
        %v4593 = vpack.c.bf16 %v3697, %v3695
        %v4594 = vpack.c.bf16 %v3700, %v3698
        %v4595 = vpack.c.bf16 %v3701, %v3699
        %v4596 = vpack.c.bf16 %v3704, %v3702
        %v4597 = vpack.c.bf16 %v3705, %v3703
        %v4598 = vpack.c.bf16 %v3708, %v3706
        %v4599 = vpack.c.bf16 %v3709, %v3707
        %v4600 = vpack.c.bf16 %v3712, %v3710
        %v4601 = vpack.c.bf16 %v3713, %v3711
        %v4602 = vpack.c.bf16 %v3716, %v3714
        %v4603 = vpack.c.bf16 %v3717, %v3715
        %v4604 = vpack.c.bf16 %v3720, %v3718
        %v4605 = vpack.c.bf16 %v3721, %v3719
        %v4606 = vpack.c.bf16 %v3724, %v3722
        %v4607 = vpack.c.bf16 %v3725, %v3723
        %v4608 = vpack.c.bf16 %v3728, %v3726
        %v4609 = vpack.c.bf16 %v3729, %v3727
        %v4610 = vpack.c.bf16 %v3732, %v3730
        %v4611 = vpack.c.bf16 %v3733, %v3731
        %v4612 = vpack.c.bf16 %v3736, %v3734
        %v4613 = vpack.c.bf16 %v3737, %v3735
        %v4614 = vpack.c.bf16 %v3740, %v3738
        %v4615 = vpack.c.bf16 %v3741, %v3739
        %v4616 = vpack.c.bf16 %v3744, %v3742
        %v4617 = vpack.c.bf16 %v3745, %v3743
        %v4618 = vpack.c.bf16 %v3748, %v3746
        %v4619 = vpack.c.bf16 %v3749, %v3747
        %v4620 = vpack.c.bf16 %v3752, %v3750
        %v4621 = vpack.c.bf16 %v3753, %v3751
        %v4622 = vpack.c.bf16 %v3756, %v3754
        %v4623 = vpack.c.bf16 %v3757, %v3755
        %v4624 = vpack.c.bf16 %v3760, %v3758
        %v4625 = vpack.c.bf16 %v3761, %v3759
        %v4626 = vpack.c.bf16 %v3764, %v3762
        %v4627 = vpack.c.bf16 %v3765, %v3763
        %v4628 = vpack.c.bf16 %v3768, %v3766
        %v4629 = vpack.c.bf16 %v3769, %v3767
        %v4630 = vpack.c.bf16 %v3772, %v3770
        %v4631 = vpack.c.bf16 %v3773, %v3771
        %v4632 = vpack.c.bf16 %v3776, %v3774
        %v4633 = vpack.c.bf16 %v3777, %v3775
        %v4634 = vpack.c.bf16 %v3780, %v3778
        %v4635 = vpack.c.bf16 %v3781, %v3779
        %v4636 = vpack.c.bf16 %v3784, %v3782
        %v4637 = vpack.c.bf16 %v3785, %v3783
        %v4638 = vpack.c.bf16 %v3788, %v3786
        %v4639 = vpack.c.bf16 %v3789, %v3787
        %v4640 = vpack.c.bf16 %v3792, %v3790
        %v4641 = vpack.c.bf16 %v3793, %v3791
        %v4642 = vpack.c.bf16 %v3796, %v3794
        %v4643 = vpack.c.bf16 %v3797, %v3795
        %v4644 = vpack.c.bf16 %v3800, %v3798
        %v4645 = vpack.c.bf16 %v3801, %v3799
        %v4646 = vpack.c.bf16 %v3804, %v3802
        %v4647 = vpack.c.bf16 %v3805, %v3803
        %v4648 = vpack.c.bf16 %v3808, %v3806
        %v4649 = vpack.c.bf16 %v3809, %v3807
        %v4650 = vpack.c.bf16 %v3812, %v3810
        %v4651 = vpack.c.bf16 %v3813, %v3811
        %v4652 = vpack.c.bf16 %v3816, %v3814
        %v4653 = vpack.c.bf16 %v3817, %v3815
        %v4654 = vpack.c.bf16 %v3820, %v3818
        %v4655 = vpack.c.bf16 %v3821, %v3819
        %v4656 = vpack.c.bf16 %v3824, %v3822
        %v4657 = vpack.c.bf16 %v3825, %v3823
        %v4658 = vpack.c.bf16 %v3828, %v3826
        %v4659 = vpack.c.bf16 %v3829, %v3827
        %v4660 = vpack.c.bf16 %v3832, %v3830
        %v4661 = vpack.c.bf16 %v3833, %v3831
        %v4662 = vpack.c.bf16 %v3836, %v3834
        %v4663 = vpack.c.bf16 %v3837, %v3835
        %v4664 = vpack.c.bf16 %v3840, %v3838
        %v4665 = vpack.c.bf16 %v3841, %v3839
        %v4666 = vpack.c.bf16 %v3844, %v3842
        %v4667 = vpack.c.bf16 %v3845, %v3843
        %v4668 = vpack.c.bf16 %v3848, %v3846
        %v4669 = vpack.c.bf16 %v3849, %v3847
        %v4670 = vpack.c.bf16 %v3852, %v3850
        %v4671 = vpack.c.bf16 %v3853, %v3851
        %v4672 = vpack.c.bf16 %v3856, %v3854
        %v4673 = vpack.c.bf16 %v3857, %v3855
        %v4674 = vpack.c.bf16 %v3860, %v3858
        %v4675 = vpack.c.bf16 %v3861, %v3859
        %v4676 = vpack.c.bf16 %v3864, %v3862
        %v4677 = vpack.c.bf16 %v3865, %v3863
        %v4678 = vpack.c.bf16 %v3868, %v3866
        %v4679 = vpack.c.bf16 %v3869, %v3867
        %v4680 = vpack.c.bf16 %v3872, %v3870
        %v4681 = vpack.c.bf16 %v3873, %v3871
        %v4682 = vpack.c.bf16 %v3876, %v3874
        %v4683 = vpack.c.bf16 %v3877, %v3875
        %v4684 = vpack.c.bf16 %v3880, %v3878
        %v4685 = vpack.c.bf16 %v3881, %v3879
        %v4686 = vpack.c.bf16 %v3884, %v3882
        %v4687 = vpack.c.bf16 %v3885, %v3883
        %v4688 = vpack.c.bf16 %v3888, %v3886
        %v4689 = vpack.c.bf16 %v3889, %v3887
        %v4690 = vpack.c.bf16 %v3892, %v3890
        %v4691 = vpack.c.bf16 %v3893, %v3891
        %v4692 = vpack.c.bf16 %v3896, %v3894
        %v4693 = vpack.c.bf16 %v3897, %v3895
        %v4694 = vpack.c.bf16 %v3900, %v3898
        %v4695 = vpack.c.bf16 %v3901, %v3899
        %v4696 = vpack.c.bf16 %v3904, %v3902
        %v4697 = vpack.c.bf16 %v3905, %v3903
        %v4698 = vpack.c.bf16 %v3908, %v3906
        %v4699 = vpack.c.bf16 %v3909, %v3907
        %v4700 = vpack.c.bf16 %v3912, %v3910
        %v4701 = vpack.c.bf16 %v3913, %v3911
        %v4702 = vpack.c.bf16 %v3916, %v3914
        %v4703 = vpack.c.bf16 %v3917, %v3915
        %v4704 = vpack.c.bf16 %v3920, %v3918
        %v4705 = vpack.c.bf16 %v3921, %v3919
        %v4706 = vpack.c.bf16 %v3924, %v3922
        %v4707 = vpack.c.bf16 %v3925, %v3923
        %v4708 = vpack.c.bf16 %v3928, %v3926
        %v4709 = vpack.c.bf16 %v3929, %v3927
        %v4710 = vpack.c.bf16 %v3932, %v3930
        %v4711 = vpack.c.bf16 %v3933, %v3931
        %v4712 = vpack.c.bf16 %v3936, %v3934
        %v4713 = vpack.c.bf16 %v3937, %v3935
        %v4714 = vpack.c.bf16 %v3940, %v3938
        %v4715 = vpack.c.bf16 %v3941, %v3939
        %v4716 = vpack.c.bf16 %v3944, %v3942
        %v4717 = vpack.c.bf16 %v3945, %v3943
        %v4718 = vpack.c.bf16 %v3948, %v3946
        %v4719 = vpack.c.bf16 %v3949, %v3947
        %v4720 = vpack.c.bf16 %v3952, %v3950
        %v4721 = vpack.c.bf16 %v3953, %v3951
        %v4722 = vld [vmem:[#allocation2] sm:$0xff]
        %v4723 = vld [vmem:[#allocation2 + $0x8] sm:$0xff]
        %v4724 = vld [vmem:[#allocation2 + $0x10] sm:$0xff]
        %v4725 = vld [vmem:[#allocation2 + $0x18] sm:$0xff]
        %v4726 = vld [vmem:[%s419] sm:$0xff]
        %v4727 = vld [vmem:[%s419 + $0x8] sm:$0xff]
        %v4728 = vld [vmem:[%s419 + $0x10] sm:$0xff]
        %v4729 = vld [vmem:[%s419 + $0x18] sm:$0xff]
        %v4730 = vld [vmem:[%s419 + $0x20] sm:$0xff]
        %v4731 = vld [vmem:[%s419 + $0x28] sm:$0xff]
        %v4732 = vld [vmem:[%s419 + $0x30] sm:$0xff]
        %v4733 = vld [vmem:[%s419 + $0x38] sm:$0xff]
        %v4734 = vld [vmem:[%s419 + $0x40] sm:$0xff]
        %v4735 = vld [vmem:[%s419 + $0x48] sm:$0xff]
        %v4736 = vld [vmem:[%s419 + $0x50] sm:$0xff]
        %v4737 = vld [vmem:[%s419 + $0x58] sm:$0xff]
        %v4738 = vld [vmem:[%s419 + $0x60] sm:$0xff]
        %v4739 = vld [vmem:[%s419 + $0x68] sm:$0xff]
        %v4740 = vld [vmem:[%s419 + $0x70] sm:$0xff]
        %v4741 = vld [vmem:[%s419 + $0x78] sm:$0xff]
        %v4742 = vld [vmem:[%s419 + $0x80] sm:$0xff]
        %v4743 = vld [vmem:[%s419 + $0x88] sm:$0xff]
        %v4744 = vld [vmem:[%s419 + $0x90] sm:$0xff]
        %v4745 = vld [vmem:[%s419 + $0x98] sm:$0xff]
        %v4746 = vld [vmem:[%s419 + $0xa0] sm:$0xff]
        %v4747 = vld [vmem:[%s419 + $0xa8] sm:$0xff]
        %v4748 = vld [vmem:[%s419 + $0xb0] sm:$0xff]
        %v4749 = vld [vmem:[%s419 + $0xb8] sm:$0xff]
        %v4750 = vld [vmem:[%s419 + $0xc0] sm:$0xff]
        %v4751 = vld [vmem:[%s419 + $0xc8] sm:$0xff]
        %v4752 = vld [vmem:[%s419 + $0xd0] sm:$0xff]
        %v4753 = vld [vmem:[%s419 + $0xd8] sm:$0xff]
        %v4754 = vld [vmem:[%s419 + $0xe0] sm:$0xff]
        %v4755 = vld [vmem:[%s419 + $0xe8] sm:$0xff]
        %v4756 = vld [vmem:[%s419 + $0xf0] sm:$0xff]
        %v4757 = vld [vmem:[%s419 + $0xf8] sm:$0xff]
        %v4758 = vld [vmem:[%s419 + $0x100] sm:$0xff]
        %v4759 = vld [vmem:[%s419 + $0x108] sm:$0xff]
        %v4760 = vld [vmem:[%s419 + $0x110] sm:$0xff]
        %v4761 = vld [vmem:[%s419 + $0x118] sm:$0xff]
        %v4762 = vld [vmem:[%s419 + $0x120] sm:$0xff]
        %v4763 = vld [vmem:[%s419 + $0x128] sm:$0xff]
        %v4764 = vld [vmem:[%s419 + $0x130] sm:$0xff]
        %v4765 = vld [vmem:[%s419 + $0x138] sm:$0xff]
        %v4766 = vld [vmem:[%s419 + $0x140] sm:$0xff]
        %v4767 = vld [vmem:[%s419 + $0x148] sm:$0xff]
        %v4768 = vld [vmem:[%s419 + $0x150] sm:$0xff]
        %v4769 = vld [vmem:[%s419 + $0x158] sm:$0xff]
        %v4770 = vld [vmem:[%s419 + $0x160] sm:$0xff]
        %v4771 = vld [vmem:[%s419 + $0x168] sm:$0xff]
        %v4772 = vld [vmem:[%s419 + $0x170] sm:$0xff]
        %v4773 = vld [vmem:[%s419 + $0x178] sm:$0xff]
        %v4822 = vunpack.c.l.b16 %v4726
        %v4823 = vunpack.c.h.b16 %v4726
        %v4824 = vunpack.c.l.b16 %v4727
        %v4825 = vunpack.c.h.b16 %v4727
        %v4826 = vunpack.c.l.b16 %v4728
        %v4827 = vunpack.c.h.b16 %v4728
        %v4828 = vunpack.c.l.b16 %v4729
        %v4829 = vunpack.c.h.b16 %v4729
        %v4830 = vunpack.c.l.b16 %v4730
        %v4831 = vunpack.c.h.b16 %v4730
        %v4832 = vunpack.c.l.b16 %v4731
        %v4833 = vunpack.c.h.b16 %v4731
        %v4834 = vunpack.c.l.b16 %v4732
        %v4835 = vunpack.c.h.b16 %v4732
        %v4836 = vunpack.c.l.b16 %v4733
        %v4837 = vunpack.c.h.b16 %v4733
        %v4838 = vunpack.c.l.b16 %v4734
        %v4839 = vunpack.c.h.b16 %v4734
        %v4840 = vunpack.c.l.b16 %v4735
        %v4841 = vunpack.c.h.b16 %v4735
        %v4842 = vunpack.c.l.b16 %v4736
        %v4843 = vunpack.c.h.b16 %v4736
        %v4844 = vunpack.c.l.b16 %v4737
        %v4845 = vunpack.c.h.b16 %v4737
        %v4846 = vunpack.c.l.b16 %v4738
        %v4847 = vunpack.c.h.b16 %v4738
        %v4848 = vunpack.c.l.b16 %v4739
        %v4849 = vunpack.c.h.b16 %v4739
        %v4850 = vunpack.c.l.b16 %v4740
        %v4851 = vunpack.c.h.b16 %v4740
        %v4852 = vunpack.c.l.b16 %v4741
        %v4853 = vunpack.c.h.b16 %v4741
        %v4854 = vunpack.c.l.b16 %v4742
        %v4855 = vunpack.c.h.b16 %v4742
        %v4856 = vunpack.c.l.b16 %v4743
        %v4857 = vunpack.c.h.b16 %v4743
        %v4858 = vunpack.c.l.b16 %v4744
        %v4859 = vunpack.c.h.b16 %v4744
        %v4860 = vunpack.c.l.b16 %v4745
        %v4861 = vunpack.c.h.b16 %v4745
        %v4862 = vunpack.c.l.b16 %v4746
        %v4863 = vunpack.c.h.b16 %v4746
        %v4864 = vunpack.c.l.b16 %v4747
        %v4865 = vunpack.c.h.b16 %v4747
        %v4866 = vunpack.c.l.b16 %v4748
        %v4867 = vunpack.c.h.b16 %v4748
        %v4868 = vunpack.c.l.b16 %v4749
        %v4869 = vunpack.c.h.b16 %v4749
        %v4870 = vunpack.c.l.b16 %v4750
        %v4871 = vunpack.c.h.b16 %v4750
        %v4872 = vunpack.c.l.b16 %v4751
        %v4873 = vunpack.c.h.b16 %v4751
        %v4874 = vunpack.c.l.b16 %v4752
        %v4875 = vunpack.c.h.b16 %v4752
        %v4876 = vunpack.c.l.b16 %v4753
        %v4877 = vunpack.c.h.b16 %v4753
        %v4878 = vunpack.c.l.b16 %v4754
        %v4879 = vunpack.c.h.b16 %v4754
        %v4880 = vunpack.c.l.b16 %v4755
        %v4881 = vunpack.c.h.b16 %v4755
        %v4882 = vunpack.c.l.b16 %v4756
        %v4883 = vunpack.c.h.b16 %v4756
        %v4884 = vunpack.c.l.b16 %v4757
        %v4885 = vunpack.c.h.b16 %v4757
        %v4886 = vunpack.c.l.b16 %v4758
        %v4887 = vunpack.c.h.b16 %v4758
        %v4888 = vunpack.c.l.b16 %v4759
        %v4889 = vunpack.c.h.b16 %v4759
        %v4890 = vunpack.c.l.b16 %v4760
        %v4891 = vunpack.c.h.b16 %v4760
        %v4892 = vunpack.c.l.b16 %v4761
        %v4893 = vunpack.c.h.b16 %v4761
        %v4894 = vunpack.c.l.b16 %v4762
        %v4895 = vunpack.c.h.b16 %v4762
        %v4896 = vunpack.c.l.b16 %v4763
        %v4897 = vunpack.c.h.b16 %v4763
        %v4898 = vunpack.c.l.b16 %v4764
        %v4899 = vunpack.c.h.b16 %v4764
        %v4900 = vunpack.c.l.b16 %v4765
        %v4901 = vunpack.c.h.b16 %v4765
        %v4902 = vunpack.c.l.b16 %v4766
        %v4903 = vunpack.c.h.b16 %v4766
        %v4904 = vunpack.c.l.b16 %v4767
        %v4905 = vunpack.c.h.b16 %v4767
        %v4906 = vunpack.c.l.b16 %v4768
        %v4907 = vunpack.c.h.b16 %v4768
        %v4908 = vunpack.c.l.b16 %v4769
        %v4909 = vunpack.c.h.b16 %v4769
        %v4910 = vunpack.c.l.b16 %v4770
        %v4911 = vunpack.c.h.b16 %v4770
        %v4912 = vunpack.c.l.b16 %v4771
        %v4913 = vunpack.c.h.b16 %v4771
        %v4914 = vunpack.c.l.b16 %v4772
        %v4915 = vunpack.c.h.b16 %v4772
        %v4916 = vunpack.c.l.b16 %v4773
        %v4917 = vunpack.c.h.b16 %v4773
        %v4918 = vpack.c.b16 %v4870, %v4822
        %v4919 = vpack.c.b16 %v4871, %v4823
        %v4920 = vpack.c.b16 %v4872, %v4824
        %v4921 = vpack.c.b16 %v4873, %v4825
        %v4922 = vpack.c.b16 %v4874, %v4826
        %v4923 = vpack.c.b16 %v4875, %v4827
        %v4924 = vpack.c.b16 %v4876, %v4828
        %v4925 = vpack.c.b16 %v4877, %v4829
        %v4926 = vpack.c.b16 %v4878, %v4830
        %v4927 = vpack.c.b16 %v4879, %v4831
        %v4928 = vpack.c.b16 %v4880, %v4832
        %v4929 = vpack.c.b16 %v4881, %v4833
        %v4930 = vpack.c.b16 %v4882, %v4834
        %v4931 = vpack.c.b16 %v4883, %v4835
        %v4932 = vpack.c.b16 %v4884, %v4836
        %v4933 = vpack.c.b16 %v4885, %v4837
        %v4934 = vpack.c.b16 %v4886, %v4838
        %v4935 = vpack.c.b16 %v4887, %v4839
        %v4936 = vpack.c.b16 %v4888, %v4840
        %v4937 = vpack.c.b16 %v4889, %v4841
        %v4938 = vpack.c.b16 %v4890, %v4842
        %v4939 = vpack.c.b16 %v4891, %v4843
        %v4940 = vpack.c.b16 %v4892, %v4844
        %v4941 = vpack.c.b16 %v4893, %v4845
        %v4942 = vpack.c.b16 %v4894, %v4846
        %v4943 = vpack.c.b16 %v4895, %v4847
        %v4944 = vpack.c.b16 %v4896, %v4848
        %v4945 = vpack.c.b16 %v4897, %v4849
        %v4946 = vpack.c.b16 %v4898, %v4850
        %v4947 = vpack.c.b16 %v4899, %v4851
        %v4948 = vpack.c.b16 %v4900, %v4852
        %v4949 = vpack.c.b16 %v4901, %v4853
        %v4950 = vpack.c.b16 %v4902, %v4854
        %v4951 = vpack.c.b16 %v4903, %v4855
        %v4952 = vpack.c.b16 %v4904, %v4856
        %v4953 = vpack.c.b16 %v4905, %v4857
        %v4954 = vpack.c.b16 %v4906, %v4858
        %v4955 = vpack.c.b16 %v4907, %v4859
        %v4956 = vpack.c.b16 %v4908, %v4860
        %v4957 = vpack.c.b16 %v4909, %v4861
        %v4958 = vpack.c.b16 %v4910, %v4862
        %v4959 = vpack.c.b16 %v4911, %v4863
        %v4960 = vpack.c.b16 %v4912, %v4864
        %v4961 = vpack.c.b16 %v4913, %v4865
        %v4962 = vpack.c.b16 %v4914, %v4866
        %v4963 = vpack.c.b16 %v4915, %v4867
        %v4964 = vpack.c.b16 %v4916, %v4868
        %v4965 = vpack.c.b16 %v4917, %v4869
        %5014 = vmatpush.bf16.msra.mxu0 %v3968
        %5015 = vmatpush.bf16.msra.mxu0 %v3966
        %5016 = vmatpush.bf16.msra.mxu0 %v3964
        %5017 = vmatpush.bf16.msra.mxu0 %v3962
        %5018 = vmatpush.bf16.msra.mxu0 %v3960
        %5019 = vmatpush.bf16.msra.mxu0 %v3958
        %5020 = vmatpush.bf16.msra.mxu0 %v3956
        %5021 = vmatpush.bf16.msra.mxu0 %v3954
        %5022 = vmatmul.bf16.gmra.mxu0 %v4918
        %v5023 = vpop.f32.mrf.mxu0
        %v5024 = vadd.f32 0.0, %v5023
        %v5025 = vpop.f32.mrf.mxu0
        %v5026 = vadd.f32 0.0, %v5025
        %5027 = vdwg.mxu0
        %5028 = vmatpush.bf16.msra.mxu0 %v3984
        %5029 = vmatpush.bf16.msra.mxu0 %v3982
        %5030 = vmatpush.bf16.msra.mxu0 %v3980
        %5031 = vmatpush.bf16.msra.mxu0 %v3978
        %5032 = vmatpush.bf16.msra.mxu0 %v3976
        %5033 = vmatpush.bf16.msra.mxu0 %v3974
        %5034 = vmatpush.bf16.msra.mxu0 %v3972
        %5035 = vmatpush.bf16.msra.mxu0 %v3970
        %5036 = vmatmul.bf16.gmra.mxu0 %v4919
        %v5037 = vpop.f32.mrf.mxu0
        %v5038 = vadd.f32 %v5024, %v5037
        %v5039 = vpop.f32.mrf.mxu0
        %v5040 = vadd.f32 %v5026, %v5039
        %5041 = vdwg.mxu0
        %5042 = vmatpush.bf16.msra.mxu0 %v4000
        %5043 = vmatpush.bf16.msra.mxu0 %v3998
        %5044 = vmatpush.bf16.msra.mxu0 %v3996
        %5045 = vmatpush.bf16.msra.mxu0 %v3994
        %5046 = vmatpush.bf16.msra.mxu0 %v3992
        %5047 = vmatpush.bf16.msra.mxu0 %v3990
        %5048 = vmatpush.bf16.msra.mxu0 %v3988
        %5049 = vmatpush.bf16.msra.mxu0 %v3986
        %5050 = vmatmul.bf16.gmra.mxu0 %v4920
        %v5051 = vpop.f32.mrf.mxu0
        %v5052 = vadd.f32 %v5038, %v5051
        %v5053 = vpop.f32.mrf.mxu0
        %v5054 = vadd.f32 %v5040, %v5053
        %5055 = vdwg.mxu0
        %5056 = vmatpush.bf16.msra.mxu0 %v4016
        %5057 = vmatpush.bf16.msra.mxu0 %v4014
        %5058 = vmatpush.bf16.msra.mxu0 %v4012
        %5059 = vmatpush.bf16.msra.mxu0 %v4010
        %5060 = vmatpush.bf16.msra.mxu0 %v4008
        %5061 = vmatpush.bf16.msra.mxu0 %v4006
        %5062 = vmatpush.bf16.msra.mxu0 %v4004
        %5063 = vmatpush.bf16.msra.mxu0 %v4002
        %5064 = vmatmul.bf16.gmra.mxu0 %v4921
        %v5065 = vpop.f32.mrf.mxu0
        %v5066 = vadd.f32 %v5052, %v5065
        %v5067 = vpop.f32.mrf.mxu0
        %v5068 = vadd.f32 %v5054, %v5067
        %5069 = vdwg.mxu0
        %5070 = vmatpush.bf16.msra.mxu0 %v4032
        %5071 = vmatpush.bf16.msra.mxu0 %v4030
        %5072 = vmatpush.bf16.msra.mxu0 %v4028
        %5073 = vmatpush.bf16.msra.mxu0 %v4026
        %5074 = vmatpush.bf16.msra.mxu0 %v4024
        %5075 = vmatpush.bf16.msra.mxu0 %v4022
        %5076 = vmatpush.bf16.msra.mxu0 %v4020
        %5077 = vmatpush.bf16.msra.mxu0 %v4018
        %5078 = vmatmul.bf16.gmra.mxu0 %v4922
        %v5079 = vpop.f32.mrf.mxu0
        %v5080 = vadd.f32 %v5066, %v5079
        %v5081 = vpop.f32.mrf.mxu0
        %v5082 = vadd.f32 %v5068, %v5081
        %5083 = vdwg.mxu0
        %5084 = vmatpush.bf16.msra.mxu0 %v4048
        %5085 = vmatpush.bf16.msra.mxu0 %v4046
        %5086 = vmatpush.bf16.msra.mxu0 %v4044
        %5087 = vmatpush.bf16.msra.mxu0 %v4042
        %5088 = vmatpush.bf16.msra.mxu0 %v4040
        %5089 = vmatpush.bf16.msra.mxu0 %v4038
        %5090 = vmatpush.bf16.msra.mxu0 %v4036
        %5091 = vmatpush.bf16.msra.mxu0 %v4034
        %5092 = vmatmul.bf16.gmra.mxu0 %v4923
        %v5093 = vpop.f32.mrf.mxu0
        %v5094 = vadd.f32 %v5080, %v5093
        %v5095 = vpop.f32.mrf.mxu0
        %v5096 = vadd.f32 %v5082, %v5095
        %5097 = vdwg.mxu0
        %5098 = vmatpush.bf16.msra.mxu0 %v4064
        %5099 = vmatpush.bf16.msra.mxu0 %v4062
        %5100 = vmatpush.bf16.msra.mxu0 %v4060
        %5101 = vmatpush.bf16.msra.mxu0 %v4058
        %5102 = vmatpush.bf16.msra.mxu0 %v4056
        %5103 = vmatpush.bf16.msra.mxu0 %v4054
        %5104 = vmatpush.bf16.msra.mxu0 %v4052
        %5105 = vmatpush.bf16.msra.mxu0 %v4050
        %5106 = vmatmul.bf16.gmra.mxu0 %v4924
        %v5107 = vpop.f32.mrf.mxu0
        %v5108 = vadd.f32 %v5094, %v5107
        %v5109 = vpop.f32.mrf.mxu0
        %v5110 = vadd.f32 %v5096, %v5109
        %5111 = vdwg.mxu0
        %5112 = vmatpush.bf16.msra.mxu0 %v4080
        %5113 = vmatpush.bf16.msra.mxu0 %v4078
        %5114 = vmatpush.bf16.msra.mxu0 %v4076
        %5115 = vmatpush.bf16.msra.mxu0 %v4074
        %5116 = vmatpush.bf16.msra.mxu0 %v4072
        %5117 = vmatpush.bf16.msra.mxu0 %v4070
        %5118 = vmatpush.bf16.msra.mxu0 %v4068
        %5119 = vmatpush.bf16.msra.mxu0 %v4066
        %5120 = vmatmul.bf16.gmra.mxu0 %v4925
        %v5121 = vpop.f32.mrf.mxu0
        %v5122 = vadd.f32 %v5108, %v5121
        %v5123 = vpop.f32.mrf.mxu0
        %v5124 = vadd.f32 %v5110, %v5123
        %5125 = vdwg.mxu0
        %5126 = vmatpush.bf16.msra.mxu0 %v4096
        %5127 = vmatpush.bf16.msra.mxu0 %v4094
        %5128 = vmatpush.bf16.msra.mxu0 %v4092
        %5129 = vmatpush.bf16.msra.mxu0 %v4090
        %5130 = vmatpush.bf16.msra.mxu0 %v4088
        %5131 = vmatpush.bf16.msra.mxu0 %v4086
        %5132 = vmatpush.bf16.msra.mxu0 %v4084
        %5133 = vmatpush.bf16.msra.mxu0 %v4082
        %5134 = vmatmul.bf16.gmra.mxu0 %v4926
        %v5135 = vpop.f32.mrf.mxu0
        %v5136 = vadd.f32 %v5122, %v5135
        %v5137 = vpop.f32.mrf.mxu0
        %v5138 = vadd.f32 %v5124, %v5137
        %5139 = vdwg.mxu0
        %5140 = vmatpush.bf16.msra.mxu0 %v4112
        %5141 = vmatpush.bf16.msra.mxu0 %v4110
        %5142 = vmatpush.bf16.msra.mxu0 %v4108
        %5143 = vmatpush.bf16.msra.mxu0 %v4106
        %5144 = vmatpush.bf16.msra.mxu0 %v4104
        %5145 = vmatpush.bf16.msra.mxu0 %v4102
        %5146 = vmatpush.bf16.msra.mxu0 %v4100
        %5147 = vmatpush.bf16.msra.mxu0 %v4098
        %5148 = vmatmul.bf16.gmra.mxu0 %v4927
        %v5149 = vpop.f32.mrf.mxu0
        %v5150 = vadd.f32 %v5136, %v5149
        %v5151 = vpop.f32.mrf.mxu0
        %v5152 = vadd.f32 %v5138, %v5151
        %5153 = vdwg.mxu0
        %5154 = vmatpush.bf16.msra.mxu0 %v4128
        %5155 = vmatpush.bf16.msra.mxu0 %v4126
        %5156 = vmatpush.bf16.msra.mxu0 %v4124
        %5157 = vmatpush.bf16.msra.mxu0 %v4122
        %5158 = vmatpush.bf16.msra.mxu0 %v4120
        %5159 = vmatpush.bf16.msra.mxu0 %v4118
        %5160 = vmatpush.bf16.msra.mxu0 %v4116
        %5161 = vmatpush.bf16.msra.mxu0 %v4114
        %5162 = vmatmul.bf16.gmra.mxu0 %v4928
        %v5163 = vpop.f32.mrf.mxu0
        %v5164 = vadd.f32 %v5150, %v5163
        %v5165 = vpop.f32.mrf.mxu0
        %v5166 = vadd.f32 %v5152, %v5165
        %5167 = vdwg.mxu0
        %5168 = vmatpush.bf16.msra.mxu0 %v4144
        %5169 = vmatpush.bf16.msra.mxu0 %v4142
        %5170 = vmatpush.bf16.msra.mxu0 %v4140
        %5171 = vmatpush.bf16.msra.mxu0 %v4138
        %5172 = vmatpush.bf16.msra.mxu0 %v4136
        %5173 = vmatpush.bf16.msra.mxu0 %v4134
        %5174 = vmatpush.bf16.msra.mxu0 %v4132
        %5175 = vmatpush.bf16.msra.mxu0 %v4130
        %5176 = vmatmul.bf16.gmra.mxu0 %v4929
        %v5177 = vpop.f32.mrf.mxu0
        %v5178 = vadd.f32 %v5164, %v5177
        %v5179 = vpop.f32.mrf.mxu0
        %v5180 = vadd.f32 %v5166, %v5179
        %5181 = vdwg.mxu0
        %5182 = vmatpush.bf16.msra.mxu0 %v4160
        %5183 = vmatpush.bf16.msra.mxu0 %v4158
        %5184 = vmatpush.bf16.msra.mxu0 %v4156
        %5185 = vmatpush.bf16.msra.mxu0 %v4154
        %5186 = vmatpush.bf16.msra.mxu0 %v4152
        %5187 = vmatpush.bf16.msra.mxu0 %v4150
        %5188 = vmatpush.bf16.msra.mxu0 %v4148
        %5189 = vmatpush.bf16.msra.mxu0 %v4146
        %5190 = vmatmul.bf16.gmra.mxu0 %v4930
        %v5191 = vpop.f32.mrf.mxu0
        %v5192 = vadd.f32 %v5178, %v5191
        %v5193 = vpop.f32.mrf.mxu0
        %v5194 = vadd.f32 %v5180, %v5193
        %5195 = vdwg.mxu0
        %5196 = vmatpush.bf16.msra.mxu0 %v4176
        %5197 = vmatpush.bf16.msra.mxu0 %v4174
        %5198 = vmatpush.bf16.msra.mxu0 %v4172
        %5199 = vmatpush.bf16.msra.mxu0 %v4170
        %5200 = vmatpush.bf16.msra.mxu0 %v4168
        %5201 = vmatpush.bf16.msra.mxu0 %v4166
        %5202 = vmatpush.bf16.msra.mxu0 %v4164
        %5203 = vmatpush.bf16.msra.mxu0 %v4162
        %5204 = vmatmul.bf16.gmra.mxu0 %v4931
        %v5205 = vpop.f32.mrf.mxu0
        %v5206 = vadd.f32 %v5192, %v5205
        %v5207 = vpop.f32.mrf.mxu0
        %v5208 = vadd.f32 %v5194, %v5207
        %5209 = vdwg.mxu0
        %5210 = vmatpush.bf16.msra.mxu0 %v4192
        %5211 = vmatpush.bf16.msra.mxu0 %v4190
        %5212 = vmatpush.bf16.msra.mxu0 %v4188
        %5213 = vmatpush.bf16.msra.mxu0 %v4186
        %5214 = vmatpush.bf16.msra.mxu0 %v4184
        %5215 = vmatpush.bf16.msra.mxu0 %v4182
        %5216 = vmatpush.bf16.msra.mxu0 %v4180
        %5217 = vmatpush.bf16.msra.mxu0 %v4178
        %5218 = vmatmul.bf16.gmra.mxu0 %v4932
        %v5219 = vpop.f32.mrf.mxu0
        %v5220 = vadd.f32 %v5206, %v5219
        %v5221 = vpop.f32.mrf.mxu0
        %v5222 = vadd.f32 %v5208, %v5221
        %5223 = vdwg.mxu0
        %5224 = vmatpush.bf16.msra.mxu0 %v4208
        %5225 = vmatpush.bf16.msra.mxu0 %v4206
        %5226 = vmatpush.bf16.msra.mxu0 %v4204
        %5227 = vmatpush.bf16.msra.mxu0 %v4202
        %5228 = vmatpush.bf16.msra.mxu0 %v4200
        %5229 = vmatpush.bf16.msra.mxu0 %v4198
        %5230 = vmatpush.bf16.msra.mxu0 %v4196
        %5231 = vmatpush.bf16.msra.mxu0 %v4194
        %5232 = vmatmul.bf16.gmra.mxu0 %v4933
        %v5233 = vpop.f32.mrf.mxu0
        %v5234 = vadd.f32 %v5220, %v5233
        %v5235 = vpop.f32.mrf.mxu0
        %v5236 = vadd.f32 %v5222, %v5235
        %5237 = vdwg.mxu0
        %5238 = vmatpush.bf16.msra.mxu0 %v4224
        %5239 = vmatpush.bf16.msra.mxu0 %v4222
        %5240 = vmatpush.bf16.msra.mxu0 %v4220
        %5241 = vmatpush.bf16.msra.mxu0 %v4218
        %5242 = vmatpush.bf16.msra.mxu0 %v4216
        %5243 = vmatpush.bf16.msra.mxu0 %v4214
        %5244 = vmatpush.bf16.msra.mxu0 %v4212
        %5245 = vmatpush.bf16.msra.mxu0 %v4210
        %5246 = vmatmul.bf16.gmra.mxu0 %v4934
        %v5247 = vpop.f32.mrf.mxu0
        %v5248 = vadd.f32 %v5234, %v5247
        %v5249 = vpop.f32.mrf.mxu0
        %v5250 = vadd.f32 %v5236, %v5249
        %5251 = vdwg.mxu0
        %5252 = vmatpush.bf16.msra.mxu0 %v4240
        %5253 = vmatpush.bf16.msra.mxu0 %v4238
        %5254 = vmatpush.bf16.msra.mxu0 %v4236
        %5255 = vmatpush.bf16.msra.mxu0 %v4234
        %5256 = vmatpush.bf16.msra.mxu0 %v4232
        %5257 = vmatpush.bf16.msra.mxu0 %v4230
        %5258 = vmatpush.bf16.msra.mxu0 %v4228
        %5259 = vmatpush.bf16.msra.mxu0 %v4226
        %5260 = vmatmul.bf16.gmra.mxu0 %v4935
        %v5261 = vpop.f32.mrf.mxu0
        %v5262 = vadd.f32 %v5248, %v5261
        %v5263 = vpop.f32.mrf.mxu0
        %v5264 = vadd.f32 %v5250, %v5263
        %5265 = vdwg.mxu0
        %5266 = vmatpush.bf16.msra.mxu0 %v4256
        %5267 = vmatpush.bf16.msra.mxu0 %v4254
        %5268 = vmatpush.bf16.msra.mxu0 %v4252
        %5269 = vmatpush.bf16.msra.mxu0 %v4250
        %5270 = vmatpush.bf16.msra.mxu0 %v4248
        %5271 = vmatpush.bf16.msra.mxu0 %v4246
        %5272 = vmatpush.bf16.msra.mxu0 %v4244
        %5273 = vmatpush.bf16.msra.mxu0 %v4242
        %5274 = vmatmul.bf16.gmra.mxu0 %v4936
        %v5275 = vpop.f32.mrf.mxu0
        %v5276 = vadd.f32 %v5262, %v5275
        %v5277 = vpop.f32.mrf.mxu0
        %v5278 = vadd.f32 %v5264, %v5277
        %5279 = vdwg.mxu0
        %5280 = vmatpush.bf16.msra.mxu0 %v4272
        %5281 = vmatpush.bf16.msra.mxu0 %v4270
        %5282 = vmatpush.bf16.msra.mxu0 %v4268
        %5283 = vmatpush.bf16.msra.mxu0 %v4266
        %5284 = vmatpush.bf16.msra.mxu0 %v4264
        %5285 = vmatpush.bf16.msra.mxu0 %v4262
        %5286 = vmatpush.bf16.msra.mxu0 %v4260
        %5287 = vmatpush.bf16.msra.mxu0 %v4258
        %5288 = vmatmul.bf16.gmra.mxu0 %v4937
        %v5289 = vpop.f32.mrf.mxu0
        %v5290 = vadd.f32 %v5276, %v5289
        %v5291 = vpop.f32.mrf.mxu0
        %v5292 = vadd.f32 %v5278, %v5291
        %5293 = vdwg.mxu0
        %5294 = vmatpush.bf16.msra.mxu0 %v4288
        %5295 = vmatpush.bf16.msra.mxu0 %v4286
        %5296 = vmatpush.bf16.msra.mxu0 %v4284
        %5297 = vmatpush.bf16.msra.mxu0 %v4282
        %5298 = vmatpush.bf16.msra.mxu0 %v4280
        %5299 = vmatpush.bf16.msra.mxu0 %v4278
        %5300 = vmatpush.bf16.msra.mxu0 %v4276
        %5301 = vmatpush.bf16.msra.mxu0 %v4274
        %5302 = vmatmul.bf16.gmra.mxu0 %v4938
        %v5303 = vpop.f32.mrf.mxu0
        %v5304 = vadd.f32 %v5290, %v5303
        %v5305 = vpop.f32.mrf.mxu0
        %v5306 = vadd.f32 %v5292, %v5305
        %5307 = vdwg.mxu0
        %5308 = vmatpush.bf16.msra.mxu0 %v4304
        %5309 = vmatpush.bf16.msra.mxu0 %v4302
        %5310 = vmatpush.bf16.msra.mxu0 %v4300
        %5311 = vmatpush.bf16.msra.mxu0 %v4298
        %5312 = vmatpush.bf16.msra.mxu0 %v4296
        %5313 = vmatpush.bf16.msra.mxu0 %v4294
        %5314 = vmatpush.bf16.msra.mxu0 %v4292
        %5315 = vmatpush.bf16.msra.mxu0 %v4290
        %5316 = vmatmul.bf16.gmra.mxu0 %v4939
        %v5317 = vpop.f32.mrf.mxu0
        %v5318 = vadd.f32 %v5304, %v5317
        %v5319 = vpop.f32.mrf.mxu0
        %v5320 = vadd.f32 %v5306, %v5319
        %5321 = vdwg.mxu0
        %5322 = vmatpush.bf16.msra.mxu0 %v4320
        %5323 = vmatpush.bf16.msra.mxu0 %v4318
        %5324 = vmatpush.bf16.msra.mxu0 %v4316
        %5325 = vmatpush.bf16.msra.mxu0 %v4314
        %5326 = vmatpush.bf16.msra.mxu0 %v4312
        %5327 = vmatpush.bf16.msra.mxu0 %v4310
        %5328 = vmatpush.bf16.msra.mxu0 %v4308
        %5329 = vmatpush.bf16.msra.mxu0 %v4306
        %5330 = vmatmul.bf16.gmra.mxu0 %v4940
        %v5331 = vpop.f32.mrf.mxu0
        %v5332 = vadd.f32 %v5318, %v5331
        %v5333 = vpop.f32.mrf.mxu0
        %v5334 = vadd.f32 %v5320, %v5333
        %5335 = vdwg.mxu0
        %5336 = vmatpush.bf16.msra.mxu0 %v4336
        %5337 = vmatpush.bf16.msra.mxu0 %v4334
        %5338 = vmatpush.bf16.msra.mxu0 %v4332
        %5339 = vmatpush.bf16.msra.mxu0 %v4330
        %5340 = vmatpush.bf16.msra.mxu0 %v4328
        %5341 = vmatpush.bf16.msra.mxu0 %v4326
        %5342 = vmatpush.bf16.msra.mxu0 %v4324
        %5343 = vmatpush.bf16.msra.mxu0 %v4322
        %5344 = vmatmul.bf16.gmra.mxu0 %v4941
        %v5345 = vpop.f32.mrf.mxu0
        %v5346 = vadd.f32 %v5332, %v5345
        %v5347 = vpop.f32.mrf.mxu0
        %v5348 = vadd.f32 %v5334, %v5347
        %5349 = vdwg.mxu0
        %5350 = vmatpush.bf16.msra.mxu0 %v4352
        %5351 = vmatpush.bf16.msra.mxu0 %v4350
        %5352 = vmatpush.bf16.msra.mxu0 %v4348
        %5353 = vmatpush.bf16.msra.mxu0 %v4346
        %5354 = vmatpush.bf16.msra.mxu0 %v4344
        %5355 = vmatpush.bf16.msra.mxu0 %v4342
        %5356 = vmatpush.bf16.msra.mxu0 %v4340
        %5357 = vmatpush.bf16.msra.mxu0 %v4338
        %5358 = vmatmul.bf16.gmra.mxu0 %v4942
        %v5359 = vpop.f32.mrf.mxu0
        %v5360 = vadd.f32 %v5346, %v5359
        %v5361 = vpop.f32.mrf.mxu0
        %v5362 = vadd.f32 %v5348, %v5361
        %5363 = vdwg.mxu0
        %5364 = vmatpush.bf16.msra.mxu0 %v4368
        %5365 = vmatpush.bf16.msra.mxu0 %v4366
        %5366 = vmatpush.bf16.msra.mxu0 %v4364
        %5367 = vmatpush.bf16.msra.mxu0 %v4362
        %5368 = vmatpush.bf16.msra.mxu0 %v4360
        %5369 = vmatpush.bf16.msra.mxu0 %v4358
        %5370 = vmatpush.bf16.msra.mxu0 %v4356
        %5371 = vmatpush.bf16.msra.mxu0 %v4354
        %5372 = vmatmul.bf16.gmra.mxu0 %v4943
        %v5373 = vpop.f32.mrf.mxu0
        %v5374 = vadd.f32 %v5360, %v5373
        %v5375 = vpop.f32.mrf.mxu0
        %v5376 = vadd.f32 %v5362, %v5375
        %5377 = vdwg.mxu0
        %5378 = vmatpush.bf16.msra.mxu0 %v4384
        %5379 = vmatpush.bf16.msra.mxu0 %v4382
        %5380 = vmatpush.bf16.msra.mxu0 %v4380
        %5381 = vmatpush.bf16.msra.mxu0 %v4378
        %5382 = vmatpush.bf16.msra.mxu0 %v4376
        %5383 = vmatpush.bf16.msra.mxu0 %v4374
        %5384 = vmatpush.bf16.msra.mxu0 %v4372
        %5385 = vmatpush.bf16.msra.mxu0 %v4370
        %5386 = vmatmul.bf16.gmra.mxu0 %v4944
        %v5387 = vpop.f32.mrf.mxu0
        %v5388 = vadd.f32 %v5374, %v5387
        %v5389 = vpop.f32.mrf.mxu0
        %v5390 = vadd.f32 %v5376, %v5389
        %5391 = vdwg.mxu0
        %5392 = vmatpush.bf16.msra.mxu0 %v4400
        %5393 = vmatpush.bf16.msra.mxu0 %v4398
        %5394 = vmatpush.bf16.msra.mxu0 %v4396
        %5395 = vmatpush.bf16.msra.mxu0 %v4394
        %5396 = vmatpush.bf16.msra.mxu0 %v4392
        %5397 = vmatpush.bf16.msra.mxu0 %v4390
        %5398 = vmatpush.bf16.msra.mxu0 %v4388
        %5399 = vmatpush.bf16.msra.mxu0 %v4386
        %5400 = vmatmul.bf16.gmra.mxu0 %v4945
        %v5401 = vpop.f32.mrf.mxu0
        %v5402 = vadd.f32 %v5388, %v5401
        %v5403 = vpop.f32.mrf.mxu0
        %v5404 = vadd.f32 %v5390, %v5403
        %5405 = vdwg.mxu0
        %5406 = vmatpush.bf16.msra.mxu0 %v4416
        %5407 = vmatpush.bf16.msra.mxu0 %v4414
        %5408 = vmatpush.bf16.msra.mxu0 %v4412
        %5409 = vmatpush.bf16.msra.mxu0 %v4410
        %5410 = vmatpush.bf16.msra.mxu0 %v4408
        %5411 = vmatpush.bf16.msra.mxu0 %v4406
        %5412 = vmatpush.bf16.msra.mxu0 %v4404
        %5413 = vmatpush.bf16.msra.mxu0 %v4402
        %5414 = vmatmul.bf16.gmra.mxu0 %v4946
        %v5415 = vpop.f32.mrf.mxu0
        %v5416 = vadd.f32 %v5402, %v5415
        %v5417 = vpop.f32.mrf.mxu0
        %v5418 = vadd.f32 %v5404, %v5417
        %5419 = vdwg.mxu0
        %5420 = vmatpush.bf16.msra.mxu0 %v4432
        %5421 = vmatpush.bf16.msra.mxu0 %v4430
        %5422 = vmatpush.bf16.msra.mxu0 %v4428
        %5423 = vmatpush.bf16.msra.mxu0 %v4426
        %5424 = vmatpush.bf16.msra.mxu0 %v4424
        %5425 = vmatpush.bf16.msra.mxu0 %v4422
        %5426 = vmatpush.bf16.msra.mxu0 %v4420
        %5427 = vmatpush.bf16.msra.mxu0 %v4418
        %5428 = vmatmul.bf16.gmra.mxu0 %v4947
        %v5429 = vpop.f32.mrf.mxu0
        %v5430 = vadd.f32 %v5416, %v5429
        %v5431 = vpop.f32.mrf.mxu0
        %v5432 = vadd.f32 %v5418, %v5431
        %5433 = vdwg.mxu0
        %5434 = vmatpush.bf16.msra.mxu0 %v4448
        %5435 = vmatpush.bf16.msra.mxu0 %v4446
        %5436 = vmatpush.bf16.msra.mxu0 %v4444
        %5437 = vmatpush.bf16.msra.mxu0 %v4442
        %5438 = vmatpush.bf16.msra.mxu0 %v4440
        %5439 = vmatpush.bf16.msra.mxu0 %v4438
        %5440 = vmatpush.bf16.msra.mxu0 %v4436
        %5441 = vmatpush.bf16.msra.mxu0 %v4434
        %5442 = vmatmul.bf16.gmra.mxu0 %v4948
        %v5443 = vpop.f32.mrf.mxu0
        %v5444 = vadd.f32 %v5430, %v5443
        %v5445 = vpop.f32.mrf.mxu0
        %v5446 = vadd.f32 %v5432, %v5445
        %5447 = vdwg.mxu0
        %5448 = vmatpush.bf16.msra.mxu0 %v4464
        %5449 = vmatpush.bf16.msra.mxu0 %v4462
        %5450 = vmatpush.bf16.msra.mxu0 %v4460
        %5451 = vmatpush.bf16.msra.mxu0 %v4458
        %5452 = vmatpush.bf16.msra.mxu0 %v4456
        %5453 = vmatpush.bf16.msra.mxu0 %v4454
        %5454 = vmatpush.bf16.msra.mxu0 %v4452
        %5455 = vmatpush.bf16.msra.mxu0 %v4450
        %5456 = vmatmul.bf16.gmra.mxu0 %v4949
        %v5457 = vpop.f32.mrf.mxu0
        %v5458 = vadd.f32 %v5444, %v5457
        %v5459 = vpop.f32.mrf.mxu0
        %v5460 = vadd.f32 %v5446, %v5459
        %5461 = vdwg.mxu0
        %5462 = vmatpush.bf16.msra.mxu0 %v4480
        %5463 = vmatpush.bf16.msra.mxu0 %v4478
        %5464 = vmatpush.bf16.msra.mxu0 %v4476
        %5465 = vmatpush.bf16.msra.mxu0 %v4474
        %5466 = vmatpush.bf16.msra.mxu0 %v4472
        %5467 = vmatpush.bf16.msra.mxu0 %v4470
        %5468 = vmatpush.bf16.msra.mxu0 %v4468
        %5469 = vmatpush.bf16.msra.mxu0 %v4466
        %5470 = vmatmul.bf16.gmra.mxu0 %v4950
        %v5471 = vpop.f32.mrf.mxu0
        %v5472 = vadd.f32 %v5458, %v5471
        %v5473 = vpop.f32.mrf.mxu0
        %v5474 = vadd.f32 %v5460, %v5473
        %5475 = vdwg.mxu0
        %5476 = vmatpush.bf16.msra.mxu0 %v4496
        %5477 = vmatpush.bf16.msra.mxu0 %v4494
        %5478 = vmatpush.bf16.msra.mxu0 %v4492
        %5479 = vmatpush.bf16.msra.mxu0 %v4490
        %5480 = vmatpush.bf16.msra.mxu0 %v4488
        %5481 = vmatpush.bf16.msra.mxu0 %v4486
        %5482 = vmatpush.bf16.msra.mxu0 %v4484
        %5483 = vmatpush.bf16.msra.mxu0 %v4482
        %5484 = vmatmul.bf16.gmra.mxu0 %v4951
        %v5485 = vpop.f32.mrf.mxu0
        %v5486 = vadd.f32 %v5472, %v5485
        %v5487 = vpop.f32.mrf.mxu0
        %v5488 = vadd.f32 %v5474, %v5487
        %5489 = vdwg.mxu0
        %5490 = vmatpush.bf16.msra.mxu0 %v4512
        %5491 = vmatpush.bf16.msra.mxu0 %v4510
        %5492 = vmatpush.bf16.msra.mxu0 %v4508
        %5493 = vmatpush.bf16.msra.mxu0 %v4506
        %5494 = vmatpush.bf16.msra.mxu0 %v4504
        %5495 = vmatpush.bf16.msra.mxu0 %v4502
        %5496 = vmatpush.bf16.msra.mxu0 %v4500
        %5497 = vmatpush.bf16.msra.mxu0 %v4498
        %5498 = vmatmul.bf16.gmra.mxu0 %v4952
        %v5499 = vpop.f32.mrf.mxu0
        %v5500 = vadd.f32 %v5486, %v5499
        %v5501 = vpop.f32.mrf.mxu0
        %v5502 = vadd.f32 %v5488, %v5501
        %5503 = vdwg.mxu0
        %5504 = vmatpush.bf16.msra.mxu0 %v4528
        %5505 = vmatpush.bf16.msra.mxu0 %v4526
        %5506 = vmatpush.bf16.msra.mxu0 %v4524
        %5507 = vmatpush.bf16.msra.mxu0 %v4522
        %5508 = vmatpush.bf16.msra.mxu0 %v4520
        %5509 = vmatpush.bf16.msra.mxu0 %v4518
        %5510 = vmatpush.bf16.msra.mxu0 %v4516
        %5511 = vmatpush.bf16.msra.mxu0 %v4514
        %5512 = vmatmul.bf16.gmra.mxu0 %v4953
        %v5513 = vpop.f32.mrf.mxu0
        %v5514 = vadd.f32 %v5500, %v5513
        %v5515 = vpop.f32.mrf.mxu0
        %v5516 = vadd.f32 %v5502, %v5515
        %5517 = vdwg.mxu0
        %5518 = vmatpush.bf16.msra.mxu0 %v4544
        %5519 = vmatpush.bf16.msra.mxu0 %v4542
        %5520 = vmatpush.bf16.msra.mxu0 %v4540
        %5521 = vmatpush.bf16.msra.mxu0 %v4538
        %5522 = vmatpush.bf16.msra.mxu0 %v4536
        %5523 = vmatpush.bf16.msra.mxu0 %v4534
        %5524 = vmatpush.bf16.msra.mxu0 %v4532
        %5525 = vmatpush.bf16.msra.mxu0 %v4530
        %5526 = vmatmul.bf16.gmra.mxu0 %v4954
        %v5527 = vpop.f32.mrf.mxu0
        %v5528 = vadd.f32 %v5514, %v5527
        %v5529 = vpop.f32.mrf.mxu0
        %v5530 = vadd.f32 %v5516, %v5529
        %5531 = vdwg.mxu0
        %5532 = vmatpush.bf16.msra.mxu0 %v4560
        %5533 = vmatpush.bf16.msra.mxu0 %v4558
        %5534 = vmatpush.bf16.msra.mxu0 %v4556
        %5535 = vmatpush.bf16.msra.mxu0 %v4554
        %5536 = vmatpush.bf16.msra.mxu0 %v4552
        %5537 = vmatpush.bf16.msra.mxu0 %v4550
        %5538 = vmatpush.bf16.msra.mxu0 %v4548
        %5539 = vmatpush.bf16.msra.mxu0 %v4546
        %5540 = vmatmul.bf16.gmra.mxu0 %v4955
        %v5541 = vpop.f32.mrf.mxu0
        %v5542 = vadd.f32 %v5528, %v5541
        %v5543 = vpop.f32.mrf.mxu0
        %v5544 = vadd.f32 %v5530, %v5543
        %5545 = vdwg.mxu0
        %5546 = vmatpush.bf16.msra.mxu0 %v4576
        %5547 = vmatpush.bf16.msra.mxu0 %v4574
        %5548 = vmatpush.bf16.msra.mxu0 %v4572
        %5549 = vmatpush.bf16.msra.mxu0 %v4570
        %5550 = vmatpush.bf16.msra.mxu0 %v4568
        %5551 = vmatpush.bf16.msra.mxu0 %v4566
        %5552 = vmatpush.bf16.msra.mxu0 %v4564
        %5553 = vmatpush.bf16.msra.mxu0 %v4562
        %5554 = vmatmul.bf16.gmra.mxu0 %v4956
        %v5555 = vpop.f32.mrf.mxu0
        %v5556 = vadd.f32 %v5542, %v5555
        %v5557 = vpop.f32.mrf.mxu0
        %v5558 = vadd.f32 %v5544, %v5557
        %5559 = vdwg.mxu0
        %5560 = vmatpush.bf16.msra.mxu0 %v4592
        %5561 = vmatpush.bf16.msra.mxu0 %v4590
        %5562 = vmatpush.bf16.msra.mxu0 %v4588
        %5563 = vmatpush.bf16.msra.mxu0 %v4586
        %5564 = vmatpush.bf16.msra.mxu0 %v4584
        %5565 = vmatpush.bf16.msra.mxu0 %v4582
        %5566 = vmatpush.bf16.msra.mxu0 %v4580
        %5567 = vmatpush.bf16.msra.mxu0 %v4578
        %5568 = vmatmul.bf16.gmra.mxu0 %v4957
        %v5569 = vpop.f32.mrf.mxu0
        %v5570 = vadd.f32 %v5556, %v5569
        %v5571 = vpop.f32.mrf.mxu0
        %v5572 = vadd.f32 %v5558, %v5571
        %5573 = vdwg.mxu0
        %5574 = vmatpush.bf16.msra.mxu0 %v4608
        %5575 = vmatpush.bf16.msra.mxu0 %v4606
        %5576 = vmatpush.bf16.msra.mxu0 %v4604
        %5577 = vmatpush.bf16.msra.mxu0 %v4602
        %5578 = vmatpush.bf16.msra.mxu0 %v4600
        %5579 = vmatpush.bf16.msra.mxu0 %v4598
        %5580 = vmatpush.bf16.msra.mxu0 %v4596
        %5581 = vmatpush.bf16.msra.mxu0 %v4594
        %5582 = vmatmul.bf16.gmra.mxu0 %v4958
        %v5583 = vpop.f32.mrf.mxu0
        %v5584 = vadd.f32 %v5570, %v5583
        %v5585 = vpop.f32.mrf.mxu0
        %v5586 = vadd.f32 %v5572, %v5585
        %5587 = vdwg.mxu0
        %5588 = vmatpush.bf16.msra.mxu0 %v4624
        %5589 = vmatpush.bf16.msra.mxu0 %v4622
        %5590 = vmatpush.bf16.msra.mxu0 %v4620
        %5591 = vmatpush.bf16.msra.mxu0 %v4618
        %5592 = vmatpush.bf16.msra.mxu0 %v4616
        %5593 = vmatpush.bf16.msra.mxu0 %v4614
        %5594 = vmatpush.bf16.msra.mxu0 %v4612
        %5595 = vmatpush.bf16.msra.mxu0 %v4610
        %5596 = vmatmul.bf16.gmra.mxu0 %v4959
        %v5597 = vpop.f32.mrf.mxu0
        %v5598 = vadd.f32 %v5584, %v5597
        %v5599 = vpop.f32.mrf.mxu0
        %v5600 = vadd.f32 %v5586, %v5599
        %5601 = vdwg.mxu0
        %5602 = vmatpush.bf16.msra.mxu0 %v4640
        %5603 = vmatpush.bf16.msra.mxu0 %v4638
        %5604 = vmatpush.bf16.msra.mxu0 %v4636
        %5605 = vmatpush.bf16.msra.mxu0 %v4634
        %5606 = vmatpush.bf16.msra.mxu0 %v4632
        %5607 = vmatpush.bf16.msra.mxu0 %v4630
        %5608 = vmatpush.bf16.msra.mxu0 %v4628
        %5609 = vmatpush.bf16.msra.mxu0 %v4626
        %5610 = vmatmul.bf16.gmra.mxu0 %v4960
        %v5611 = vpop.f32.mrf.mxu0
        %v5612 = vadd.f32 %v5598, %v5611
        %v5613 = vpop.f32.mrf.mxu0
        %v5614 = vadd.f32 %v5600, %v5613
        %5615 = vdwg.mxu0
        %5616 = vmatpush.bf16.msra.mxu0 %v4656
        %5617 = vmatpush.bf16.msra.mxu0 %v4654
        %5618 = vmatpush.bf16.msra.mxu0 %v4652
        %5619 = vmatpush.bf16.msra.mxu0 %v4650
        %5620 = vmatpush.bf16.msra.mxu0 %v4648
        %5621 = vmatpush.bf16.msra.mxu0 %v4646
        %5622 = vmatpush.bf16.msra.mxu0 %v4644
        %5623 = vmatpush.bf16.msra.mxu0 %v4642
        %5624 = vmatmul.bf16.gmra.mxu0 %v4961
        %v5625 = vpop.f32.mrf.mxu0
        %v5626 = vadd.f32 %v5612, %v5625
        %v5627 = vpop.f32.mrf.mxu0
        %v5628 = vadd.f32 %v5614, %v5627
        %5629 = vdwg.mxu0
        %5630 = vmatpush.bf16.msra.mxu0 %v4672
        %5631 = vmatpush.bf16.msra.mxu0 %v4670
        %5632 = vmatpush.bf16.msra.mxu0 %v4668
        %5633 = vmatpush.bf16.msra.mxu0 %v4666
        %5634 = vmatpush.bf16.msra.mxu0 %v4664
        %5635 = vmatpush.bf16.msra.mxu0 %v4662
        %5636 = vmatpush.bf16.msra.mxu0 %v4660
        %5637 = vmatpush.bf16.msra.mxu0 %v4658
        %5638 = vmatmul.bf16.gmra.mxu0 %v4962
        %v5639 = vpop.f32.mrf.mxu0
        %v5640 = vadd.f32 %v5626, %v5639
        %v5641 = vpop.f32.mrf.mxu0
        %v5642 = vadd.f32 %v5628, %v5641
        %5643 = vdwg.mxu0
        %5644 = vmatpush.bf16.msra.mxu0 %v4688
        %5645 = vmatpush.bf16.msra.mxu0 %v4686
        %5646 = vmatpush.bf16.msra.mxu0 %v4684
        %5647 = vmatpush.bf16.msra.mxu0 %v4682
        %5648 = vmatpush.bf16.msra.mxu0 %v4680
        %5649 = vmatpush.bf16.msra.mxu0 %v4678
        %5650 = vmatpush.bf16.msra.mxu0 %v4676
        %5651 = vmatpush.bf16.msra.mxu0 %v4674
        %5652 = vmatmul.bf16.gmra.mxu0 %v4963
        %v5653 = vpop.f32.mrf.mxu0
        %v5654 = vadd.f32 %v5640, %v5653
        %v5655 = vpop.f32.mrf.mxu0
        %v5656 = vadd.f32 %v5642, %v5655
        %5657 = vdwg.mxu0
        %5658 = vmatpush.bf16.msra.mxu0 %v4704
        %5659 = vmatpush.bf16.msra.mxu0 %v4702
        %5660 = vmatpush.bf16.msra.mxu0 %v4700
        %5661 = vmatpush.bf16.msra.mxu0 %v4698
        %5662 = vmatpush.bf16.msra.mxu0 %v4696
        %5663 = vmatpush.bf16.msra.mxu0 %v4694
        %5664 = vmatpush.bf16.msra.mxu0 %v4692
        %5665 = vmatpush.bf16.msra.mxu0 %v4690
        %5666 = vmatmul.bf16.gmra.mxu0 %v4964
        %v5667 = vpop.f32.mrf.mxu0
        %v5668 = vadd.f32 %v5654, %v5667
        %v5669 = vpop.f32.mrf.mxu0
        %v5670 = vadd.f32 %v5656, %v5669
        %5671 = vdwg.mxu0
        %5672 = vmatpush.bf16.msra.mxu0 %v4720
        %5673 = vmatpush.bf16.msra.mxu0 %v4718
        %5674 = vmatpush.bf16.msra.mxu0 %v4716
        %5675 = vmatpush.bf16.msra.mxu0 %v4714
        %5676 = vmatpush.bf16.msra.mxu0 %v4712
        %5677 = vmatpush.bf16.msra.mxu0 %v4710
        %5678 = vmatpush.bf16.msra.mxu0 %v4708
        %5679 = vmatpush.bf16.msra.mxu0 %v4706
        %5680 = vmatmul.bf16.gmra.mxu0 %v4965
        %v5681 = vpop.f32.mrf.mxu0
        %v5682 = vadd.f32 %v5668, %v5681
        %v5683 = vpop.f32.mrf.mxu0
        %v5684 = vadd.f32 %v5670, %v5683
        %5685 = vdwg.mxu0
        %5686 = vmatpush.bf16.msra.mxu0 %v3969
        %5687 = vmatpush.bf16.msra.mxu0 %v3967
        %5688 = vmatpush.bf16.msra.mxu0 %v3965
        %5689 = vmatpush.bf16.msra.mxu0 %v3963
        %5690 = vmatpush.bf16.msra.mxu0 %v3961
        %5691 = vmatpush.bf16.msra.mxu0 %v3959
        %5692 = vmatpush.bf16.msra.mxu0 %v3957
        %5693 = vmatpush.bf16.msra.mxu0 %v3955
        %5694 = vmatmul.bf16.gmra.mxu0 %v4918
        %v5695 = vpop.f32.mrf.mxu0
        %v5696 = vadd.f32 0.0, %v5695
        %v5697 = vpop.f32.mrf.mxu0
        %v5698 = vadd.f32 0.0, %v5697
        %5699 = vdwg.mxu0
        %5700 = vmatpush.bf16.msra.mxu0 %v3985
        %5701 = vmatpush.bf16.msra.mxu0 %v3983
        %5702 = vmatpush.bf16.msra.mxu0 %v3981
        %5703 = vmatpush.bf16.msra.mxu0 %v3979
        %5704 = vmatpush.bf16.msra.mxu0 %v3977
        %5705 = vmatpush.bf16.msra.mxu0 %v3975
        %5706 = vmatpush.bf16.msra.mxu0 %v3973
        %5707 = vmatpush.bf16.msra.mxu0 %v3971
        %5708 = vmatmul.bf16.gmra.mxu0 %v4919
        %v5709 = vpop.f32.mrf.mxu0
        %v5710 = vadd.f32 %v5696, %v5709
        %v5711 = vpop.f32.mrf.mxu0
        %v5712 = vadd.f32 %v5698, %v5711
        %5713 = vdwg.mxu0
        %5714 = vmatpush.bf16.msra.mxu0 %v4001
        %5715 = vmatpush.bf16.msra.mxu0 %v3999
        %5716 = vmatpush.bf16.msra.mxu0 %v3997
        %5717 = vmatpush.bf16.msra.mxu0 %v3995
        %5718 = vmatpush.bf16.msra.mxu0 %v3993
        %5719 = vmatpush.bf16.msra.mxu0 %v3991
        %5720 = vmatpush.bf16.msra.mxu0 %v3989
        %5721 = vmatpush.bf16.msra.mxu0 %v3987
        %5722 = vmatmul.bf16.gmra.mxu0 %v4920
        %v5723 = vpop.f32.mrf.mxu0
        %v5724 = vadd.f32 %v5710, %v5723
        %v5725 = vpop.f32.mrf.mxu0
        %v5726 = vadd.f32 %v5712, %v5725
        %5727 = vdwg.mxu0
        %5728 = vmatpush.bf16.msra.mxu0 %v4017
        %5729 = vmatpush.bf16.msra.mxu0 %v4015
        %5730 = vmatpush.bf16.msra.mxu0 %v4013
        %5731 = vmatpush.bf16.msra.mxu0 %v4011
        %5732 = vmatpush.bf16.msra.mxu0 %v4009
        %5733 = vmatpush.bf16.msra.mxu0 %v4007
        %5734 = vmatpush.bf16.msra.mxu0 %v4005
        %5735 = vmatpush.bf16.msra.mxu0 %v4003
        %5736 = vmatmul.bf16.gmra.mxu0 %v4921
        %v5737 = vpop.f32.mrf.mxu0
        %v5738 = vadd.f32 %v5724, %v5737
        %v5739 = vpop.f32.mrf.mxu0
        %v5740 = vadd.f32 %v5726, %v5739
        %5741 = vdwg.mxu0
        %5742 = vmatpush.bf16.msra.mxu0 %v4033
        %5743 = vmatpush.bf16.msra.mxu0 %v4031
        %5744 = vmatpush.bf16.msra.mxu0 %v4029
        %5745 = vmatpush.bf16.msra.mxu0 %v4027
        %5746 = vmatpush.bf16.msra.mxu0 %v4025
        %5747 = vmatpush.bf16.msra.mxu0 %v4023
        %5748 = vmatpush.bf16.msra.mxu0 %v4021
        %5749 = vmatpush.bf16.msra.mxu0 %v4019
        %5750 = vmatmul.bf16.gmra.mxu0 %v4922
        %v5751 = vpop.f32.mrf.mxu0
        %v5752 = vadd.f32 %v5738, %v5751
        %v5753 = vpop.f32.mrf.mxu0
        %v5754 = vadd.f32 %v5740, %v5753
        %5755 = vdwg.mxu0
        %5756 = vmatpush.bf16.msra.mxu0 %v4049
        %5757 = vmatpush.bf16.msra.mxu0 %v4047
        %5758 = vmatpush.bf16.msra.mxu0 %v4045
        %5759 = vmatpush.bf16.msra.mxu0 %v4043
        %5760 = vmatpush.bf16.msra.mxu0 %v4041
        %5761 = vmatpush.bf16.msra.mxu0 %v4039
        %5762 = vmatpush.bf16.msra.mxu0 %v4037
        %5763 = vmatpush.bf16.msra.mxu0 %v4035
        %5764 = vmatmul.bf16.gmra.mxu0 %v4923
        %v5765 = vpop.f32.mrf.mxu0
        %v5766 = vadd.f32 %v5752, %v5765
        %v5767 = vpop.f32.mrf.mxu0
        %v5768 = vadd.f32 %v5754, %v5767
        %5769 = vdwg.mxu0
        %5770 = vmatpush.bf16.msra.mxu0 %v4065
        %5771 = vmatpush.bf16.msra.mxu0 %v4063
        %5772 = vmatpush.bf16.msra.mxu0 %v4061
        %5773 = vmatpush.bf16.msra.mxu0 %v4059
        %5774 = vmatpush.bf16.msra.mxu0 %v4057
        %5775 = vmatpush.bf16.msra.mxu0 %v4055
        %5776 = vmatpush.bf16.msra.mxu0 %v4053
        %5777 = vmatpush.bf16.msra.mxu0 %v4051
        %5778 = vmatmul.bf16.gmra.mxu0 %v4924
        %v5779 = vpop.f32.mrf.mxu0
        %v5780 = vadd.f32 %v5766, %v5779
        %v5781 = vpop.f32.mrf.mxu0
        %v5782 = vadd.f32 %v5768, %v5781
        %5783 = vdwg.mxu0
        %5784 = vmatpush.bf16.msra.mxu0 %v4081
        %5785 = vmatpush.bf16.msra.mxu0 %v4079
        %5786 = vmatpush.bf16.msra.mxu0 %v4077
        %5787 = vmatpush.bf16.msra.mxu0 %v4075
        %5788 = vmatpush.bf16.msra.mxu0 %v4073
        %5789 = vmatpush.bf16.msra.mxu0 %v4071
        %5790 = vmatpush.bf16.msra.mxu0 %v4069
        %5791 = vmatpush.bf16.msra.mxu0 %v4067
        %5792 = vmatmul.bf16.gmra.mxu0 %v4925
        %v5793 = vpop.f32.mrf.mxu0
        %v5794 = vadd.f32 %v5780, %v5793
        %v5795 = vpop.f32.mrf.mxu0
        %v5796 = vadd.f32 %v5782, %v5795
        %5797 = vdwg.mxu0
        %5798 = vmatpush.bf16.msra.mxu0 %v4097
        %5799 = vmatpush.bf16.msra.mxu0 %v4095
        %5800 = vmatpush.bf16.msra.mxu0 %v4093
        %5801 = vmatpush.bf16.msra.mxu0 %v4091
        %5802 = vmatpush.bf16.msra.mxu0 %v4089
        %5803 = vmatpush.bf16.msra.mxu0 %v4087
        %5804 = vmatpush.bf16.msra.mxu0 %v4085
        %5805 = vmatpush.bf16.msra.mxu0 %v4083
        %5806 = vmatmul.bf16.gmra.mxu0 %v4926
        %v5807 = vpop.f32.mrf.mxu0
        %v5808 = vadd.f32 %v5794, %v5807
        %v5809 = vpop.f32.mrf.mxu0
        %v5810 = vadd.f32 %v5796, %v5809
        %5811 = vdwg.mxu0
        %5812 = vmatpush.bf16.msra.mxu0 %v4113
        %5813 = vmatpush.bf16.msra.mxu0 %v4111
        %5814 = vmatpush.bf16.msra.mxu0 %v4109
        %5815 = vmatpush.bf16.msra.mxu0 %v4107
        %5816 = vmatpush.bf16.msra.mxu0 %v4105
        %5817 = vmatpush.bf16.msra.mxu0 %v4103
        %5818 = vmatpush.bf16.msra.mxu0 %v4101
        %5819 = vmatpush.bf16.msra.mxu0 %v4099
        %5820 = vmatmul.bf16.gmra.mxu0 %v4927
        %v5821 = vpop.f32.mrf.mxu0
        %v5822 = vadd.f32 %v5808, %v5821
        %v5823 = vpop.f32.mrf.mxu0
        %v5824 = vadd.f32 %v5810, %v5823
        %5825 = vdwg.mxu0
        %5826 = vmatpush.bf16.msra.mxu0 %v4129
        %5827 = vmatpush.bf16.msra.mxu0 %v4127
        %5828 = vmatpush.bf16.msra.mxu0 %v4125
        %5829 = vmatpush.bf16.msra.mxu0 %v4123
        %5830 = vmatpush.bf16.msra.mxu0 %v4121
        %5831 = vmatpush.bf16.msra.mxu0 %v4119
        %5832 = vmatpush.bf16.msra.mxu0 %v4117
        %5833 = vmatpush.bf16.msra.mxu0 %v4115
        %5834 = vmatmul.bf16.gmra.mxu0 %v4928
        %v5835 = vpop.f32.mrf.mxu0
        %v5836 = vadd.f32 %v5822, %v5835
        %v5837 = vpop.f32.mrf.mxu0
        %v5838 = vadd.f32 %v5824, %v5837
        %5839 = vdwg.mxu0
        %5840 = vmatpush.bf16.msra.mxu0 %v4145
        %5841 = vmatpush.bf16.msra.mxu0 %v4143
        %5842 = vmatpush.bf16.msra.mxu0 %v4141
        %5843 = vmatpush.bf16.msra.mxu0 %v4139
        %5844 = vmatpush.bf16.msra.mxu0 %v4137
        %5845 = vmatpush.bf16.msra.mxu0 %v4135
        %5846 = vmatpush.bf16.msra.mxu0 %v4133
        %5847 = vmatpush.bf16.msra.mxu0 %v4131
        %5848 = vmatmul.bf16.gmra.mxu0 %v4929
        %v5849 = vpop.f32.mrf.mxu0
        %v5850 = vadd.f32 %v5836, %v5849
        %v5851 = vpop.f32.mrf.mxu0
        %v5852 = vadd.f32 %v5838, %v5851
        %5853 = vdwg.mxu0
        %5854 = vmatpush.bf16.msra.mxu0 %v4161
        %5855 = vmatpush.bf16.msra.mxu0 %v4159
        %5856 = vmatpush.bf16.msra.mxu0 %v4157
        %5857 = vmatpush.bf16.msra.mxu0 %v4155
        %5858 = vmatpush.bf16.msra.mxu0 %v4153
        %5859 = vmatpush.bf16.msra.mxu0 %v4151
        %5860 = vmatpush.bf16.msra.mxu0 %v4149
        %5861 = vmatpush.bf16.msra.mxu0 %v4147
        %5862 = vmatmul.bf16.gmra.mxu0 %v4930
        %v5863 = vpop.f32.mrf.mxu0
        %v5864 = vadd.f32 %v5850, %v5863
        %v5865 = vpop.f32.mrf.mxu0
        %v5866 = vadd.f32 %v5852, %v5865
        %5867 = vdwg.mxu0
        %5868 = vmatpush.bf16.msra.mxu0 %v4177
        %5869 = vmatpush.bf16.msra.mxu0 %v4175
        %5870 = vmatpush.bf16.msra.mxu0 %v4173
        %5871 = vmatpush.bf16.msra.mxu0 %v4171
        %5872 = vmatpush.bf16.msra.mxu0 %v4169
        %5873 = vmatpush.bf16.msra.mxu0 %v4167
        %5874 = vmatpush.bf16.msra.mxu0 %v4165
        %5875 = vmatpush.bf16.msra.mxu0 %v4163
        %5876 = vmatmul.bf16.gmra.mxu0 %v4931
        %v5877 = vpop.f32.mrf.mxu0
        %v5878 = vadd.f32 %v5864, %v5877
        %v5879 = vpop.f32.mrf.mxu0
        %v5880 = vadd.f32 %v5866, %v5879
        %5881 = vdwg.mxu0
        %5882 = vmatpush.bf16.msra.mxu0 %v4193
        %5883 = vmatpush.bf16.msra.mxu0 %v4191
        %5884 = vmatpush.bf16.msra.mxu0 %v4189
        %5885 = vmatpush.bf16.msra.mxu0 %v4187
        %5886 = vmatpush.bf16.msra.mxu0 %v4185
        %5887 = vmatpush.bf16.msra.mxu0 %v4183
        %5888 = vmatpush.bf16.msra.mxu0 %v4181
        %5889 = vmatpush.bf16.msra.mxu0 %v4179
        %5890 = vmatmul.bf16.gmra.mxu0 %v4932
        %v5891 = vpop.f32.mrf.mxu0
        %v5892 = vadd.f32 %v5878, %v5891
        %v5893 = vpop.f32.mrf.mxu0
        %v5894 = vadd.f32 %v5880, %v5893
        %5895 = vdwg.mxu0
        %5896 = vmatpush.bf16.msra.mxu0 %v4209
        %5897 = vmatpush.bf16.msra.mxu0 %v4207
        %5898 = vmatpush.bf16.msra.mxu0 %v4205
        %5899 = vmatpush.bf16.msra.mxu0 %v4203
        %5900 = vmatpush.bf16.msra.mxu0 %v4201
        %5901 = vmatpush.bf16.msra.mxu0 %v4199
        %5902 = vmatpush.bf16.msra.mxu0 %v4197
        %5903 = vmatpush.bf16.msra.mxu0 %v4195
        %5904 = vmatmul.bf16.gmra.mxu0 %v4933
        %v5905 = vpop.f32.mrf.mxu0
        %v5906 = vadd.f32 %v5892, %v5905
        %v5907 = vpop.f32.mrf.mxu0
        %v5908 = vadd.f32 %v5894, %v5907
        %5909 = vdwg.mxu0
        %5910 = vmatpush.bf16.msra.mxu0 %v4225
        %5911 = vmatpush.bf16.msra.mxu0 %v4223
        %5912 = vmatpush.bf16.msra.mxu0 %v4221
        %5913 = vmatpush.bf16.msra.mxu0 %v4219
        %5914 = vmatpush.bf16.msra.mxu0 %v4217
        %5915 = vmatpush.bf16.msra.mxu0 %v4215
        %5916 = vmatpush.bf16.msra.mxu0 %v4213
        %5917 = vmatpush.bf16.msra.mxu0 %v4211
        %5918 = vmatmul.bf16.gmra.mxu0 %v4934
        %v5919 = vpop.f32.mrf.mxu0
        %v5920 = vadd.f32 %v5906, %v5919
        %v5921 = vpop.f32.mrf.mxu0
        %v5922 = vadd.f32 %v5908, %v5921
        %5923 = vdwg.mxu0
        %5924 = vmatpush.bf16.msra.mxu0 %v4241
        %5925 = vmatpush.bf16.msra.mxu0 %v4239
        %5926 = vmatpush.bf16.msra.mxu0 %v4237
        %5927 = vmatpush.bf16.msra.mxu0 %v4235
        %5928 = vmatpush.bf16.msra.mxu0 %v4233
        %5929 = vmatpush.bf16.msra.mxu0 %v4231
        %5930 = vmatpush.bf16.msra.mxu0 %v4229
        %5931 = vmatpush.bf16.msra.mxu0 %v4227
        %5932 = vmatmul.bf16.gmra.mxu0 %v4935
        %v5933 = vpop.f32.mrf.mxu0
        %v5934 = vadd.f32 %v5920, %v5933
        %v5935 = vpop.f32.mrf.mxu0
        %v5936 = vadd.f32 %v5922, %v5935
        %5937 = vdwg.mxu0
        %5938 = vmatpush.bf16.msra.mxu0 %v4257
        %5939 = vmatpush.bf16.msra.mxu0 %v4255
        %5940 = vmatpush.bf16.msra.mxu0 %v4253
        %5941 = vmatpush.bf16.msra.mxu0 %v4251
        %5942 = vmatpush.bf16.msra.mxu0 %v4249
        %5943 = vmatpush.bf16.msra.mxu0 %v4247
        %5944 = vmatpush.bf16.msra.mxu0 %v4245
        %5945 = vmatpush.bf16.msra.mxu0 %v4243
        %5946 = vmatmul.bf16.gmra.mxu0 %v4936
        %v5947 = vpop.f32.mrf.mxu0
        %v5948 = vadd.f32 %v5934, %v5947
        %v5949 = vpop.f32.mrf.mxu0
        %v5950 = vadd.f32 %v5936, %v5949
        %5951 = vdwg.mxu0
        %5952 = vmatpush.bf16.msra.mxu0 %v4273
        %5953 = vmatpush.bf16.msra.mxu0 %v4271
        %5954 = vmatpush.bf16.msra.mxu0 %v4269
        %5955 = vmatpush.bf16.msra.mxu0 %v4267
        %5956 = vmatpush.bf16.msra.mxu0 %v4265
        %5957 = vmatpush.bf16.msra.mxu0 %v4263
        %5958 = vmatpush.bf16.msra.mxu0 %v4261
        %5959 = vmatpush.bf16.msra.mxu0 %v4259
        %5960 = vmatmul.bf16.gmra.mxu0 %v4937
        %v5961 = vpop.f32.mrf.mxu0
        %v5962 = vadd.f32 %v5948, %v5961
        %v5963 = vpop.f32.mrf.mxu0
        %v5964 = vadd.f32 %v5950, %v5963
        %5965 = vdwg.mxu0
        %5966 = vmatpush.bf16.msra.mxu0 %v4289
        %5967 = vmatpush.bf16.msra.mxu0 %v4287
        %5968 = vmatpush.bf16.msra.mxu0 %v4285
        %5969 = vmatpush.bf16.msra.mxu0 %v4283
        %5970 = vmatpush.bf16.msra.mxu0 %v4281
        %5971 = vmatpush.bf16.msra.mxu0 %v4279
        %5972 = vmatpush.bf16.msra.mxu0 %v4277
        %5973 = vmatpush.bf16.msra.mxu0 %v4275
        %5974 = vmatmul.bf16.gmra.mxu0 %v4938
        %v5975 = vpop.f32.mrf.mxu0
        %v5976 = vadd.f32 %v5962, %v5975
        %v5977 = vpop.f32.mrf.mxu0
        %v5978 = vadd.f32 %v5964, %v5977
        %5979 = vdwg.mxu0
        %5980 = vmatpush.bf16.msra.mxu0 %v4305
        %5981 = vmatpush.bf16.msra.mxu0 %v4303
        %5982 = vmatpush.bf16.msra.mxu0 %v4301
        %5983 = vmatpush.bf16.msra.mxu0 %v4299
        %5984 = vmatpush.bf16.msra.mxu0 %v4297
        %5985 = vmatpush.bf16.msra.mxu0 %v4295
        %5986 = vmatpush.bf16.msra.mxu0 %v4293
        %5987 = vmatpush.bf16.msra.mxu0 %v4291
        %5988 = vmatmul.bf16.gmra.mxu0 %v4939
        %v5989 = vpop.f32.mrf.mxu0
        %v5990 = vadd.f32 %v5976, %v5989
        %v5991 = vpop.f32.mrf.mxu0
        %v5992 = vadd.f32 %v5978, %v5991
        %5993 = vdwg.mxu0
        %5994 = vmatpush.bf16.msra.mxu0 %v4321
        %5995 = vmatpush.bf16.msra.mxu0 %v4319
        %5996 = vmatpush.bf16.msra.mxu0 %v4317
        %5997 = vmatpush.bf16.msra.mxu0 %v4315
        %5998 = vmatpush.bf16.msra.mxu0 %v4313
        %5999 = vmatpush.bf16.msra.mxu0 %v4311
        %6000 = vmatpush.bf16.msra.mxu0 %v4309
        %6001 = vmatpush.bf16.msra.mxu0 %v4307
        %6002 = vmatmul.bf16.gmra.mxu0 %v4940
        %v6003 = vpop.f32.mrf.mxu0
        %v6004 = vadd.f32 %v5990, %v6003
        %v6005 = vpop.f32.mrf.mxu0
        %v6006 = vadd.f32 %v5992, %v6005
        %6007 = vdwg.mxu0
        %6008 = vmatpush.bf16.msra.mxu0 %v4337
        %6009 = vmatpush.bf16.msra.mxu0 %v4335
        %6010 = vmatpush.bf16.msra.mxu0 %v4333
        %6011 = vmatpush.bf16.msra.mxu0 %v4331
        %6012 = vmatpush.bf16.msra.mxu0 %v4329
        %6013 = vmatpush.bf16.msra.mxu0 %v4327
        %6014 = vmatpush.bf16.msra.mxu0 %v4325
        %6015 = vmatpush.bf16.msra.mxu0 %v4323
        %6016 = vmatmul.bf16.gmra.mxu0 %v4941
        %v6017 = vpop.f32.mrf.mxu0
        %v6018 = vadd.f32 %v6004, %v6017
        %v6019 = vpop.f32.mrf.mxu0
        %v6020 = vadd.f32 %v6006, %v6019
        %6021 = vdwg.mxu0
        %6022 = vmatpush.bf16.msra.mxu0 %v4353
        %6023 = vmatpush.bf16.msra.mxu0 %v4351
        %6024 = vmatpush.bf16.msra.mxu0 %v4349
        %6025 = vmatpush.bf16.msra.mxu0 %v4347
        %6026 = vmatpush.bf16.msra.mxu0 %v4345
        %6027 = vmatpush.bf16.msra.mxu0 %v4343
        %6028 = vmatpush.bf16.msra.mxu0 %v4341
        %6029 = vmatpush.bf16.msra.mxu0 %v4339
        %6030 = vmatmul.bf16.gmra.mxu0 %v4942
        %v6031 = vpop.f32.mrf.mxu0
        %v6032 = vadd.f32 %v6018, %v6031
        %v6033 = vpop.f32.mrf.mxu0
        %v6034 = vadd.f32 %v6020, %v6033
        %6035 = vdwg.mxu0
        %6036 = vmatpush.bf16.msra.mxu0 %v4369
        %6037 = vmatpush.bf16.msra.mxu0 %v4367
        %6038 = vmatpush.bf16.msra.mxu0 %v4365
        %6039 = vmatpush.bf16.msra.mxu0 %v4363
        %6040 = vmatpush.bf16.msra.mxu0 %v4361
        %6041 = vmatpush.bf16.msra.mxu0 %v4359
        %6042 = vmatpush.bf16.msra.mxu0 %v4357
        %6043 = vmatpush.bf16.msra.mxu0 %v4355
        %6044 = vmatmul.bf16.gmra.mxu0 %v4943
        %v6045 = vpop.f32.mrf.mxu0
        %v6046 = vadd.f32 %v6032, %v6045
        %v6047 = vpop.f32.mrf.mxu0
        %v6048 = vadd.f32 %v6034, %v6047
        %6049 = vdwg.mxu0
        %6050 = vmatpush.bf16.msra.mxu0 %v4385
        %6051 = vmatpush.bf16.msra.mxu0 %v4383
        %6052 = vmatpush.bf16.msra.mxu0 %v4381
        %6053 = vmatpush.bf16.msra.mxu0 %v4379
        %6054 = vmatpush.bf16.msra.mxu0 %v4377
        %6055 = vmatpush.bf16.msra.mxu0 %v4375
        %6056 = vmatpush.bf16.msra.mxu0 %v4373
        %6057 = vmatpush.bf16.msra.mxu0 %v4371
        %6058 = vmatmul.bf16.gmra.mxu0 %v4944
        %v6059 = vpop.f32.mrf.mxu0
        %v6060 = vadd.f32 %v6046, %v6059
        %v6061 = vpop.f32.mrf.mxu0
        %v6062 = vadd.f32 %v6048, %v6061
        %6063 = vdwg.mxu0
        %6064 = vmatpush.bf16.msra.mxu0 %v4401
        %6065 = vmatpush.bf16.msra.mxu0 %v4399
        %6066 = vmatpush.bf16.msra.mxu0 %v4397
        %6067 = vmatpush.bf16.msra.mxu0 %v4395
        %6068 = vmatpush.bf16.msra.mxu0 %v4393
        %6069 = vmatpush.bf16.msra.mxu0 %v4391
        %6070 = vmatpush.bf16.msra.mxu0 %v4389
        %6071 = vmatpush.bf16.msra.mxu0 %v4387
        %6072 = vmatmul.bf16.gmra.mxu0 %v4945
        %v6073 = vpop.f32.mrf.mxu0
        %v6074 = vadd.f32 %v6060, %v6073
        %v6075 = vpop.f32.mrf.mxu0
        %v6076 = vadd.f32 %v6062, %v6075
        %6077 = vdwg.mxu0
        %6078 = vmatpush.bf16.msra.mxu0 %v4417
        %6079 = vmatpush.bf16.msra.mxu0 %v4415
        %6080 = vmatpush.bf16.msra.mxu0 %v4413
        %6081 = vmatpush.bf16.msra.mxu0 %v4411
        %6082 = vmatpush.bf16.msra.mxu0 %v4409
        %6083 = vmatpush.bf16.msra.mxu0 %v4407
        %6084 = vmatpush.bf16.msra.mxu0 %v4405
        %6085 = vmatpush.bf16.msra.mxu0 %v4403
        %6086 = vmatmul.bf16.gmra.mxu0 %v4946
        %v6087 = vpop.f32.mrf.mxu0
        %v6088 = vadd.f32 %v6074, %v6087
        %v6089 = vpop.f32.mrf.mxu0
        %v6090 = vadd.f32 %v6076, %v6089
        %6091 = vdwg.mxu0
        %6092 = vmatpush.bf16.msra.mxu0 %v4433
        %6093 = vmatpush.bf16.msra.mxu0 %v4431
        %6094 = vmatpush.bf16.msra.mxu0 %v4429
        %6095 = vmatpush.bf16.msra.mxu0 %v4427
        %6096 = vmatpush.bf16.msra.mxu0 %v4425
        %6097 = vmatpush.bf16.msra.mxu0 %v4423
        %6098 = vmatpush.bf16.msra.mxu0 %v4421
        %6099 = vmatpush.bf16.msra.mxu0 %v4419
        %6100 = vmatmul.bf16.gmra.mxu0 %v4947
        %v6101 = vpop.f32.mrf.mxu0
        %v6102 = vadd.f32 %v6088, %v6101
        %v6103 = vpop.f32.mrf.mxu0
        %v6104 = vadd.f32 %v6090, %v6103
        %6105 = vdwg.mxu0
        %6106 = vmatpush.bf16.msra.mxu0 %v4449
        %6107 = vmatpush.bf16.msra.mxu0 %v4447
        %6108 = vmatpush.bf16.msra.mxu0 %v4445
        %6109 = vmatpush.bf16.msra.mxu0 %v4443
        %6110 = vmatpush.bf16.msra.mxu0 %v4441
        %6111 = vmatpush.bf16.msra.mxu0 %v4439
        %6112 = vmatpush.bf16.msra.mxu0 %v4437
        %6113 = vmatpush.bf16.msra.mxu0 %v4435
        %6114 = vmatmul.bf16.gmra.mxu0 %v4948
        %v6115 = vpop.f32.mrf.mxu0
        %v6116 = vadd.f32 %v6102, %v6115
        %v6117 = vpop.f32.mrf.mxu0
        %v6118 = vadd.f32 %v6104, %v6117
        %6119 = vdwg.mxu0
        %6120 = vmatpush.bf16.msra.mxu0 %v4465
        %6121 = vmatpush.bf16.msra.mxu0 %v4463
        %6122 = vmatpush.bf16.msra.mxu0 %v4461
        %6123 = vmatpush.bf16.msra.mxu0 %v4459
        %6124 = vmatpush.bf16.msra.mxu0 %v4457
        %6125 = vmatpush.bf16.msra.mxu0 %v4455
        %6126 = vmatpush.bf16.msra.mxu0 %v4453
        %6127 = vmatpush.bf16.msra.mxu0 %v4451
        %6128 = vmatmul.bf16.gmra.mxu0 %v4949
        %v6129 = vpop.f32.mrf.mxu0
        %v6130 = vadd.f32 %v6116, %v6129
        %v6131 = vpop.f32.mrf.mxu0
        %v6132 = vadd.f32 %v6118, %v6131
        %6133 = vdwg.mxu0
        %6134 = vmatpush.bf16.msra.mxu0 %v4481
        %6135 = vmatpush.bf16.msra.mxu0 %v4479
        %6136 = vmatpush.bf16.msra.mxu0 %v4477
        %6137 = vmatpush.bf16.msra.mxu0 %v4475
        %6138 = vmatpush.bf16.msra.mxu0 %v4473
        %6139 = vmatpush.bf16.msra.mxu0 %v4471
        %6140 = vmatpush.bf16.msra.mxu0 %v4469
        %6141 = vmatpush.bf16.msra.mxu0 %v4467
        %6142 = vmatmul.bf16.gmra.mxu0 %v4950
        %v6143 = vpop.f32.mrf.mxu0
        %v6144 = vadd.f32 %v6130, %v6143
        %v6145 = vpop.f32.mrf.mxu0
        %v6146 = vadd.f32 %v6132, %v6145
        %6147 = vdwg.mxu0
        %6148 = vmatpush.bf16.msra.mxu0 %v4497
        %6149 = vmatpush.bf16.msra.mxu0 %v4495
        %6150 = vmatpush.bf16.msra.mxu0 %v4493
        %6151 = vmatpush.bf16.msra.mxu0 %v4491
        %6152 = vmatpush.bf16.msra.mxu0 %v4489
        %6153 = vmatpush.bf16.msra.mxu0 %v4487
        %6154 = vmatpush.bf16.msra.mxu0 %v4485
        %6155 = vmatpush.bf16.msra.mxu0 %v4483
        %6156 = vmatmul.bf16.gmra.mxu0 %v4951
        %v6157 = vpop.f32.mrf.mxu0
        %v6158 = vadd.f32 %v6144, %v6157
        %v6159 = vpop.f32.mrf.mxu0
        %v6160 = vadd.f32 %v6146, %v6159
        %6161 = vdwg.mxu0
        %6162 = vmatpush.bf16.msra.mxu0 %v4513
        %6163 = vmatpush.bf16.msra.mxu0 %v4511
        %6164 = vmatpush.bf16.msra.mxu0 %v4509
        %6165 = vmatpush.bf16.msra.mxu0 %v4507
        %6166 = vmatpush.bf16.msra.mxu0 %v4505
        %6167 = vmatpush.bf16.msra.mxu0 %v4503
        %6168 = vmatpush.bf16.msra.mxu0 %v4501
        %6169 = vmatpush.bf16.msra.mxu0 %v4499
        %6170 = vmatmul.bf16.gmra.mxu0 %v4952
        %v6171 = vpop.f32.mrf.mxu0
        %v6172 = vadd.f32 %v6158, %v6171
        %v6173 = vpop.f32.mrf.mxu0
        %v6174 = vadd.f32 %v6160, %v6173
        %6175 = vdwg.mxu0
        %6176 = vmatpush.bf16.msra.mxu0 %v4529
        %6177 = vmatpush.bf16.msra.mxu0 %v4527
        %6178 = vmatpush.bf16.msra.mxu0 %v4525
        %6179 = vmatpush.bf16.msra.mxu0 %v4523
        %6180 = vmatpush.bf16.msra.mxu0 %v4521
        %6181 = vmatpush.bf16.msra.mxu0 %v4519
        %6182 = vmatpush.bf16.msra.mxu0 %v4517
        %6183 = vmatpush.bf16.msra.mxu0 %v4515
        %6184 = vmatmul.bf16.gmra.mxu0 %v4953
        %v6185 = vpop.f32.mrf.mxu0
        %v6186 = vadd.f32 %v6172, %v6185
        %v6187 = vpop.f32.mrf.mxu0
        %v6188 = vadd.f32 %v6174, %v6187
        %6189 = vdwg.mxu0
        %6190 = vmatpush.bf16.msra.mxu0 %v4545
        %6191 = vmatpush.bf16.msra.mxu0 %v4543
        %6192 = vmatpush.bf16.msra.mxu0 %v4541
        %6193 = vmatpush.bf16.msra.mxu0 %v4539
        %6194 = vmatpush.bf16.msra.mxu0 %v4537
        %6195 = vmatpush.bf16.msra.mxu0 %v4535
        %6196 = vmatpush.bf16.msra.mxu0 %v4533
        %6197 = vmatpush.bf16.msra.mxu0 %v4531
        %6198 = vmatmul.bf16.gmra.mxu0 %v4954
        %v6199 = vpop.f32.mrf.mxu0
        %v6200 = vadd.f32 %v6186, %v6199
        %v6201 = vpop.f32.mrf.mxu0
        %v6202 = vadd.f32 %v6188, %v6201
        %6203 = vdwg.mxu0
        %6204 = vmatpush.bf16.msra.mxu0 %v4561
        %6205 = vmatpush.bf16.msra.mxu0 %v4559
        %6206 = vmatpush.bf16.msra.mxu0 %v4557
        %6207 = vmatpush.bf16.msra.mxu0 %v4555
        %6208 = vmatpush.bf16.msra.mxu0 %v4553
        %6209 = vmatpush.bf16.msra.mxu0 %v4551
        %6210 = vmatpush.bf16.msra.mxu0 %v4549
        %6211 = vmatpush.bf16.msra.mxu0 %v4547
        %6212 = vmatmul.bf16.gmra.mxu0 %v4955
        %v6213 = vpop.f32.mrf.mxu0
        %v6214 = vadd.f32 %v6200, %v6213
        %v6215 = vpop.f32.mrf.mxu0
        %v6216 = vadd.f32 %v6202, %v6215
        %6217 = vdwg.mxu0
        %6218 = vmatpush.bf16.msra.mxu0 %v4577
        %6219 = vmatpush.bf16.msra.mxu0 %v4575
        %6220 = vmatpush.bf16.msra.mxu0 %v4573
        %6221 = vmatpush.bf16.msra.mxu0 %v4571
        %6222 = vmatpush.bf16.msra.mxu0 %v4569
        %6223 = vmatpush.bf16.msra.mxu0 %v4567
        %6224 = vmatpush.bf16.msra.mxu0 %v4565
        %6225 = vmatpush.bf16.msra.mxu0 %v4563
        %6226 = vmatmul.bf16.gmra.mxu0 %v4956
        %v6227 = vpop.f32.mrf.mxu0
        %v6228 = vadd.f32 %v6214, %v6227
        %v6229 = vpop.f32.mrf.mxu0
        %v6230 = vadd.f32 %v6216, %v6229
        %6231 = vdwg.mxu0
        %6232 = vmatpush.bf16.msra.mxu0 %v4593
        %6233 = vmatpush.bf16.msra.mxu0 %v4591
        %6234 = vmatpush.bf16.msra.mxu0 %v4589
        %6235 = vmatpush.bf16.msra.mxu0 %v4587
        %6236 = vmatpush.bf16.msra.mxu0 %v4585
        %6237 = vmatpush.bf16.msra.mxu0 %v4583
        %6238 = vmatpush.bf16.msra.mxu0 %v4581
        %6239 = vmatpush.bf16.msra.mxu0 %v4579
        %6240 = vmatmul.bf16.gmra.mxu0 %v4957
        %v6241 = vpop.f32.mrf.mxu0
        %v6242 = vadd.f32 %v6228, %v6241
        %v6243 = vpop.f32.mrf.mxu0
        %v6244 = vadd.f32 %v6230, %v6243
        %6245 = vdwg.mxu0
        %6246 = vmatpush.bf16.msra.mxu0 %v4609
        %6247 = vmatpush.bf16.msra.mxu0 %v4607
        %6248 = vmatpush.bf16.msra.mxu0 %v4605
        %6249 = vmatpush.bf16.msra.mxu0 %v4603
        %6250 = vmatpush.bf16.msra.mxu0 %v4601
        %6251 = vmatpush.bf16.msra.mxu0 %v4599
        %6252 = vmatpush.bf16.msra.mxu0 %v4597
        %6253 = vmatpush.bf16.msra.mxu0 %v4595
        %6254 = vmatmul.bf16.gmra.mxu0 %v4958
        %v6255 = vpop.f32.mrf.mxu0
        %v6256 = vadd.f32 %v6242, %v6255
        %v6257 = vpop.f32.mrf.mxu0
        %v6258 = vadd.f32 %v6244, %v6257
        %6259 = vdwg.mxu0
        %6260 = vmatpush.bf16.msra.mxu0 %v4625
        %6261 = vmatpush.bf16.msra.mxu0 %v4623
        %6262 = vmatpush.bf16.msra.mxu0 %v4621
        %6263 = vmatpush.bf16.msra.mxu0 %v4619
        %6264 = vmatpush.bf16.msra.mxu0 %v4617
        %6265 = vmatpush.bf16.msra.mxu0 %v4615
        %6266 = vmatpush.bf16.msra.mxu0 %v4613
        %6267 = vmatpush.bf16.msra.mxu0 %v4611
        %6268 = vmatmul.bf16.gmra.mxu0 %v4959
        %v6269 = vpop.f32.mrf.mxu0
        %v6270 = vadd.f32 %v6256, %v6269
        %v6271 = vpop.f32.mrf.mxu0
        %v6272 = vadd.f32 %v6258, %v6271
        %6273 = vdwg.mxu0
        %6274 = vmatpush.bf16.msra.mxu0 %v4641
        %6275 = vmatpush.bf16.msra.mxu0 %v4639
        %6276 = vmatpush.bf16.msra.mxu0 %v4637
        %6277 = vmatpush.bf16.msra.mxu0 %v4635
        %6278 = vmatpush.bf16.msra.mxu0 %v4633
        %6279 = vmatpush.bf16.msra.mxu0 %v4631
        %6280 = vmatpush.bf16.msra.mxu0 %v4629
        %6281 = vmatpush.bf16.msra.mxu0 %v4627
        %6282 = vmatmul.bf16.gmra.mxu0 %v4960
        %v6283 = vpop.f32.mrf.mxu0
        %v6284 = vadd.f32 %v6270, %v6283
        %v6285 = vpop.f32.mrf.mxu0
        %v6286 = vadd.f32 %v6272, %v6285
        %6287 = vdwg.mxu0
        %6288 = vmatpush.bf16.msra.mxu0 %v4657
        %6289 = vmatpush.bf16.msra.mxu0 %v4655
        %6290 = vmatpush.bf16.msra.mxu0 %v4653
        %6291 = vmatpush.bf16.msra.mxu0 %v4651
        %6292 = vmatpush.bf16.msra.mxu0 %v4649
        %6293 = vmatpush.bf16.msra.mxu0 %v4647
        %6294 = vmatpush.bf16.msra.mxu0 %v4645
        %6295 = vmatpush.bf16.msra.mxu0 %v4643
        %6296 = vmatmul.bf16.gmra.mxu0 %v4961
        %v6297 = vpop.f32.mrf.mxu0
        %v6298 = vadd.f32 %v6284, %v6297
        %v6299 = vpop.f32.mrf.mxu0
        %v6300 = vadd.f32 %v6286, %v6299
        %6301 = vdwg.mxu0
        %6302 = vmatpush.bf16.msra.mxu0 %v4673
        %6303 = vmatpush.bf16.msra.mxu0 %v4671
        %6304 = vmatpush.bf16.msra.mxu0 %v4669
        %6305 = vmatpush.bf16.msra.mxu0 %v4667
        %6306 = vmatpush.bf16.msra.mxu0 %v4665
        %6307 = vmatpush.bf16.msra.mxu0 %v4663
        %6308 = vmatpush.bf16.msra.mxu0 %v4661
        %6309 = vmatpush.bf16.msra.mxu0 %v4659
        %6310 = vmatmul.bf16.gmra.mxu0 %v4962
        %v6311 = vpop.f32.mrf.mxu0
        %v6312 = vadd.f32 %v6298, %v6311
        %v6313 = vpop.f32.mrf.mxu0
        %v6314 = vadd.f32 %v6300, %v6313
        %6315 = vdwg.mxu0
        %6316 = vmatpush.bf16.msra.mxu0 %v4689
        %6317 = vmatpush.bf16.msra.mxu0 %v4687
        %6318 = vmatpush.bf16.msra.mxu0 %v4685
        %6319 = vmatpush.bf16.msra.mxu0 %v4683
        %6320 = vmatpush.bf16.msra.mxu0 %v4681
        %6321 = vmatpush.bf16.msra.mxu0 %v4679
        %6322 = vmatpush.bf16.msra.mxu0 %v4677
        %6323 = vmatpush.bf16.msra.mxu0 %v4675
        %6324 = vmatmul.bf16.gmra.mxu0 %v4963
        %v6325 = vpop.f32.mrf.mxu0
        %v6326 = vadd.f32 %v6312, %v6325
        %v6327 = vpop.f32.mrf.mxu0
        %v6328 = vadd.f32 %v6314, %v6327
        %6329 = vdwg.mxu0
        %6330 = vmatpush.bf16.msra.mxu0 %v4705
        %6331 = vmatpush.bf16.msra.mxu0 %v4703
        %6332 = vmatpush.bf16.msra.mxu0 %v4701
        %6333 = vmatpush.bf16.msra.mxu0 %v4699
        %6334 = vmatpush.bf16.msra.mxu0 %v4697
        %6335 = vmatpush.bf16.msra.mxu0 %v4695
        %6336 = vmatpush.bf16.msra.mxu0 %v4693
        %6337 = vmatpush.bf16.msra.mxu0 %v4691
        %6338 = vmatmul.bf16.gmra.mxu0 %v4964
        %v6339 = vpop.f32.mrf.mxu0
        %v6340 = vadd.f32 %v6326, %v6339
        %v6341 = vpop.f32.mrf.mxu0
        %v6342 = vadd.f32 %v6328, %v6341
        %6343 = vdwg.mxu0
        %6344 = vmatpush.bf16.msra.mxu0 %v4721
        %6345 = vmatpush.bf16.msra.mxu0 %v4719
        %6346 = vmatpush.bf16.msra.mxu0 %v4717
        %6347 = vmatpush.bf16.msra.mxu0 %v4715
        %6348 = vmatpush.bf16.msra.mxu0 %v4713
        %6349 = vmatpush.bf16.msra.mxu0 %v4711
        %6350 = vmatpush.bf16.msra.mxu0 %v4709
        %6351 = vmatpush.bf16.msra.mxu0 %v4707
        %6352 = vmatmul.bf16.gmra.mxu0 %v4965
        %v6353 = vpop.f32.mrf.mxu0
        %v6354 = vadd.f32 %v6340, %v6353
        %v6355 = vpop.f32.mrf.mxu0
        %v6356 = vadd.f32 %v6342, %v6355
        %6357 = vdwg.mxu0
        %v6358 = vadd.f32 %v4722, %v5682
        %v6359 = vadd.f32 %v4723, %v6354
        %v6360 = vadd.f32 %v4724, %v5684
        %v6361 = vadd.f32 %v4725, %v6356
        %6362 = vst [vmem:[#allocation2] sm:$0xff] %v6358
        %6363 = vst [vmem:[#allocation2 + $0x8] sm:$0xff] %v6359
        %6364 = vst [vmem:[#allocation2 + $0x10] sm:$0xff] %v6360
        %6365 = vst [vmem:[#allocation2 + $0x18] sm:$0xff] %v6361
        %p6366 = scmp.eq.s32.totalorder %s27, 1
        // Predicated region
        $region92: #{mlp_forward.1} parent=62 // pred_check
          %p6367 = pneg %p6366
        $region93: #{mlp_forward.1} parent=62 // pred_check_branch
          %6369 = sbr.rel (%p6367) target = $region95
        $region94: #{mlp_forward.1} parent=62 // pred_region
          %v6370 = vld [vmem:[#allocation2] sm:$0xff]
          %v6371 = vld [vmem:[#allocation2 + $0x8] sm:$0xff]
          %v6372 = vld [vmem:[#allocation2 + $0x10] sm:$0xff]
          %v6373 = vld [vmem:[#allocation2 + $0x18] sm:$0xff]
          %v6374 = vld [vmem:[#allocation6] sm:$0x3]
          %v6376 = vperm.slane %v6374, 0
          %v6377 = vperm.slane %v6374, 1
          %v6380 = vmul.f32 %v6370, %v6376
          %v6381 = vmul.f32 %v6371, %v6377
          %v6382 = vmul.f32 %v6372, %v6376
          %v6383 = vmul.f32 %v6373, %v6377
          %v6384 = vld [vmem:[#allocation8] sm:$0x3]
          %v6386 = vperm.slane %v6384, 0
          %v6387 = vperm.slane %v6384, 1
          %v6390 = vadd.f32 %v6380, %v6386
          %v6391 = vadd.f32 %v6381, %v6387
          %v6392 = vadd.f32 %v6382, %v6386
          %v6393 = vadd.f32 %v6383, %v6387
          %v6394 = vmax.f32 %v6390, 0.0
          %v6395 = vmax.f32 %v6391, 0.0
          %v6396 = vmax.f32 %v6392, 0.0
          %v6397 = vmax.f32 %v6393, 0.0
          %v6398 = vpack.c.bf16 %v6396, %v6394
          %v6399 = vpack.c.bf16 %v6397, %v6395
          %v6400 = vld [vmem:[#allocation9] sm:$0xf]
          %v6401 = vld [vmem:[#allocation9 + $0x4] sm:$0xf]
          %v6402 = vld [vmem:[#allocation9 + $0x8] sm:$0xf]
          %v6403 = vld [vmem:[#allocation9 + $0xc] sm:$0xf]
          %v6404 = vld [vmem:[#allocation9 + $0x10] sm:$0xf]
          %v6405 = vld [vmem:[#allocation9 + $0x14] sm:$0xf]
          %v6406 = vld [vmem:[#allocation9 + $0x18] sm:$0xf]
          %v6407 = vld [vmem:[#allocation9 + $0x1c] sm:$0xf]
          %v6408 = vld [vmem:[#allocation9 + $0x20] sm:$0xf]
          %v6409 = vld [vmem:[#allocation9 + $0x24] sm:$0xf]
          %v6410 = vld [vmem:[#allocation9 + $0x28] sm:$0xf]
          %v6411 = vld [vmem:[#allocation9 + $0x2c] sm:$0xf]
          %v6412 = vld [vmem:[#allocation9 + $0x30] sm:$0xf]
          %v6413 = vld [vmem:[#allocation9 + $0x34] sm:$0xf]
          %v6414 = vld [vmem:[#allocation9 + $0x38] sm:$0xf]
          %v6415 = vld [vmem:[#allocation9 + $0x3c] sm:$0xf]
          %v6416 = vld [vmem:[#allocation9 + $0x40] sm:$0xf]
          %v6417 = vld [vmem:[#allocation9 + $0x44] sm:$0xf]
          %v6418 = vld [vmem:[#allocation9 + $0x48] sm:$0xf]
          %v6419 = vld [vmem:[#allocation9 + $0x4c] sm:$0xf]
          %v6420 = vld [vmem:[#allocation9 + $0x50] sm:$0xf]
          %v6421 = vld [vmem:[#allocation9 + $0x54] sm:$0xf]
          %v6422 = vld [vmem:[#allocation9 + $0x58] sm:$0xf]
          %v6423 = vld [vmem:[#allocation9 + $0x5c] sm:$0xf]
          %v6424 = vld [vmem:[#allocation9 + $0x60] sm:$0xf]
          %v6425 = vld [vmem:[#allocation9 + $0x64] sm:$0xf]
          %v6426 = vld [vmem:[#allocation9 + $0x68] sm:$0xf]
          %v6427 = vld [vmem:[#allocation9 + $0x6c] sm:$0xf]
          %v6428 = vld [vmem:[#allocation9 + $0x70] sm:$0xf]
          %v6429 = vld [vmem:[#allocation9 + $0x74] sm:$0xf]
          %v6430 = vld [vmem:[#allocation9 + $0x78] sm:$0xf]
          %v6431 = vld [vmem:[#allocation9 + $0x7c] sm:$0xf]
          %v6432 = vld [vmem:[#allocation11] sm:$0x1]
          %v6434 = vperm.slane %v6432, 0
          %v6468 = vunpack.c.l.b16 %v6400
          %v6469 = vunpack.c.l.b16 %v6401
          %v6470 = vunpack.c.l.b16 %v6402
          %v6471 = vunpack.c.l.b16 %v6403
          %v6472 = vunpack.c.l.b16 %v6404
          %v6473 = vunpack.c.l.b16 %v6405
          %v6474 = vunpack.c.l.b16 %v6406
          %v6475 = vunpack.c.l.b16 %v6407
          %v6476 = vunpack.c.l.b16 %v6408
          %v6477 = vunpack.c.l.b16 %v6409
          %v6478 = vunpack.c.l.b16 %v6410
          %v6479 = vunpack.c.l.b16 %v6411
          %v6480 = vunpack.c.l.b16 %v6412
          %v6481 = vunpack.c.l.b16 %v6413
          %v6482 = vunpack.c.l.b16 %v6414
          %v6483 = vunpack.c.l.b16 %v6415
          %v6484 = vunpack.c.l.b16 %v6416
          %v6485 = vunpack.c.l.b16 %v6417
          %v6486 = vunpack.c.l.b16 %v6418
          %v6487 = vunpack.c.l.b16 %v6419
          %v6488 = vunpack.c.l.b16 %v6420
          %v6489 = vunpack.c.l.b16 %v6421
          %v6490 = vunpack.c.l.b16 %v6422
          %v6491 = vunpack.c.l.b16 %v6423
          %v6492 = vunpack.c.l.b16 %v6424
          %v6493 = vunpack.c.l.b16 %v6425
          %v6494 = vunpack.c.l.b16 %v6426
          %v6495 = vunpack.c.l.b16 %v6427
          %v6496 = vunpack.c.l.b16 %v6428
          %v6497 = vunpack.c.l.b16 %v6429
          %v6498 = vunpack.c.l.b16 %v6430
          %v6499 = vunpack.c.l.b16 %v6431
          %v6500 = vpack.c.b16 %v6469, %v6468
          %v6501 = vpack.c.b16 %v6471, %v6470
          %v6502 = vpack.c.b16 %v6473, %v6472
          %v6503 = vpack.c.b16 %v6475, %v6474
          %v6504 = vpack.c.b16 %v6477, %v6476
          %v6505 = vpack.c.b16 %v6479, %v6478
          %v6506 = vpack.c.b16 %v6481, %v6480
          %v6507 = vpack.c.b16 %v6483, %v6482
          %v6508 = vpack.c.b16 %v6485, %v6484
          %v6509 = vpack.c.b16 %v6487, %v6486
          %v6510 = vpack.c.b16 %v6489, %v6488
          %v6511 = vpack.c.b16 %v6491, %v6490
          %v6512 = vpack.c.b16 %v6493, %v6492
          %v6513 = vpack.c.b16 %v6495, %v6494
          %v6514 = vpack.c.b16 %v6497, %v6496
          %v6515 = vpack.c.b16 %v6499, %v6498
          %6532 = vmatpush.bf16.msra.mxu0 %v6507
          %6533 = vmatpush.bf16.msra.mxu0 %v6506
          %6534 = vmatpush.bf16.msra.mxu0 %v6505
          %6535 = vmatpush.bf16.msra.mxu0 %v6504
          %6536 = vmatpush.bf16.msra.mxu0 %v6503
          %6537 = vmatpush.bf16.msra.mxu0 %v6502
          %6538 = vmatpush.bf16.msra.mxu0 %v6501
          %6539 = vmatpush.bf16.msra.mxu0 %v6500
          %6540 = vmatmul.bf16.gmra.mxu0 %v6398
          %v6541 = vpop.f32.mrf.mxu0
          %v6542 = vadd.f32 %v6434, %v6541
          %v6543 = vpop.f32.mrf.mxu0
          %v6544 = vadd.f32 %v6434, %v6543
          %6545 = vdwg.mxu0
          %6546 = vmatpush.bf16.msra.mxu0 %v6515
          %6547 = vmatpush.bf16.msra.mxu0 %v6514
          %6548 = vmatpush.bf16.msra.mxu0 %v6513
          %6549 = vmatpush.bf16.msra.mxu0 %v6512
          %6550 = vmatpush.bf16.msra.mxu0 %v6511
          %6551 = vmatpush.bf16.msra.mxu0 %v6510
          %6552 = vmatpush.bf16.msra.mxu0 %v6509
          %6553 = vmatpush.bf16.msra.mxu0 %v6508
          %6554 = vmatmul.bf16.gmra.mxu0 %v6399
          %v6555 = vpop.f32.mrf.mxu0
          %v6556 = vadd.f32 %v6542, %v6555
          %v6557 = vpop.f32.mrf.mxu0
          %v6558 = vadd.f32 %v6544, %v6557
          %6559 = vdwg.mxu0
          %6560 = vst [vmem:[%s488] sm:$0xff] %v6556
          %6561 = vst [vmem:[%s488 + $0x8] sm:$0xff] %v6558
        $region95: #{mlp_forward.1} parent=62 // pred_fallthru
          _
        %s6562 = smul.u32 2, %s26
        %p6563 = scmp.lt.s32.totalorder %s6562, 1
        %s6564 = scalar_select %p6563, %s6562, 1
        %s6565 = smul.addr %s6564, 8
        %s6566 = scalar_lea.vmem %s6, %s6565
        // Predicated region
        $region96: #{mlp_forward.1} parent=62 // pred_check
          %p6567 = pneg %p190
        $region97: #{mlp_forward.1} parent=62 // pred_check_branch
          %6569 = sbr.rel (%p6567) target = $region99
        $region98: #{mlp_forward.1} parent=62 // pred_region
          %s6570 = smul.u32 2, %s26
        $region99: #{mlp_forward.1} parent=62 // pred_fallthru
          _
        // Predicated region
        $region100: #{mlp_forward.1} parent=62 // pred_check
          %p6571 = pneg %p190
        $region101: #{mlp_forward.1} parent=62 // pred_check_branch
          %6573 = sbr.rel (%p6571) target = $region103
        $region102: #{mlp_forward.1} parent=62 // pred_region
          %s6574 = smul.u32 2, %s26
          %p6575 = scmp.lt.s32.totalorder %s6574, 1
          %s6576 = scalar_select %p6575, %s6574, 1
          %s6577 = smul.addr %s6576, 8
          %s6578 = scalar_lea.vmem %s6, %s6577
        $region103: #{mlp_forward.1} parent=62 // pred_fallthru
          _
      $region63: #{mlp_forward.1} parent=5 // pred_fallthru
        _
      %p6579 = scmp.le.s32.totalorder 2, %s17
      // Predicated region
      $region104: #{mlp_forward.1} parent=5 // pred_check
        %p6580 = pneg %p6579
      $region105: #{mlp_forward.1} parent=5 // pred_check_branch
        %6582 = sbr.rel (%p6580) target = $region107
      $region106: #{mlp_forward.1} parent=5 // pred_region
        %s6583 = ssub.s32 %s17, 2
      $region107: #{mlp_forward.1} parent=5 // pred_fallthru
        _
    $region6: #{mlp_forward.1} parent=1 // loop_footer
      %s21 = sadd.s32 1, %s17
    $region7: #{mlp_forward.1} parent=1 // loop_footer_branch
      %16 = sbr.rel target = $region3
    $region8: #{mlp_forward.1} parent=1 // loop_exit
      _
    %6584 = vsyncpa [#allocation5], 1
    %s6585 = scalar_lea.sflag [#allocation5], 1
    %6586 = vsyncpa %s6585, 1
    %6587 = vsyncpa [#allocation7], 1
    %6588 = vsyncpa [#allocation10], 1

</llo_original>
